<compile_context>
chip_gen: v6e
topology: v6e:2x2x1
jax: 0.10.0
libtpu: 0.0.40
codegen_flags: <defaults>
</compile_context>

<pallas_src>
import jax
import jax.numpy as jnp
from jax import lax
from jax.experimental import pallas as pl
from jax.experimental.pallas import tpu as pltpu


# ---------------------------------------------------------------------------
# Fused kernel: for each N tile, loop over the K=27 kernel offsets; per offset
#   y   = relu(W_aug @ g_k)            (all M pointwise conv+BN+ReLU branches, one MXU matmul;
#                                        invalid neighbours give g_k = 0 -> y = 0)
#   y  *= kw_k                          (channelwise conv weight per offset)
#   acc += sum over the M branch groups (sublane-aligned since C % 8 == 0)
# then out = relu(relu(acc * s_out + b_out) + x_residual).
# ---------------------------------------------------------------------------
def _multiconv_kernel(xg_ref, w_ref, kw_ref, so_ref, bo_ref, x_ref, out_ref, acc_ref):
    # xg_ref : (K, C+1, TN)  gathered [x, 1] per kernel offset (zero sentinel where no neighbour)
    # w_ref  : (M*C, C+1)    folded pointwise weights [W1*s1 | b1] for all M branches stacked
    # kw_ref : (K, M*C, 1)   channelwise kernel weights (branches stacked on sublanes)
    # so_ref, bo_ref: (C, 1) folded output-BN scale / offset
    # x_ref  : (C, TN)       residual (inplanes == planes -> residual is x itself)
    # out_ref: (C, TN)       acc_ref: VMEM (C, TN) f32 scratch
    K = xg_ref.shape[0]
    C = out_ref.shape[0]
    M = w_ref.shape[0] // C

    acc_ref[...] = jnp.zeros_like(acc_ref)
    w = w_ref[...]                                           # resident; hoisted out of the loop

    for k in range(K):                                       # K reduction unrolled in the body
        # All M pointwise branches in one MXU matmul; bias + valid mask folded into the gather.
        y = jnp.dot(w, xg_ref[k], preferred_element_type=jnp.float32)     # (M*C, TN) f32
        y = jnp.maximum(y, 0.0) * kw_ref[k]                  # ReLU + channelwise weight
        contrib = y[0:C]
        for m in range(1, M):                                # fold M branches (C % 8 == 0 -> aligned)
            contrib = contrib + y[m * C:(m + 1) * C]
        acc_ref[...] += contrib

    res = jnp.maximum(acc_ref[...] * so_ref[...] + bo_ref[...], 0.0)      # out_bn_relu
    res = res + x_ref[...]                                                # += residual
    out_ref[...] = jnp.maximum(res, 0.0).astype(out_ref.dtype)            # final ReLU


def _round_up(x, m):
    return (x + m - 1) // m * m


def _fold_bn(gamma, beta, mean, var, eps=1e-5):
    s = gamma / jnp.sqrt(var + eps)
    return s, beta - mean * s


def multiconv_forward(feats, w1, bn1, kw, bn_out, nbr_idx, nbr_valid, *,
                      tn=2048, compute_dtype=jnp.bfloat16):
    """MultiConv forward (inplanes == planes, eval-mode BN).

    feats:     (N, C)       sparse-tensor features x.F
    w1:        (M, C, C)    per-branch 1x1 conv weights (y = x @ w1[m], no conv bias in ME)
    bn1:       tuple (gamma, beta, mean, var), each (M, C)
    kw:        (M, K, C)    per-branch channelwise-conv kernels (K = kernel_size**3)
    bn_out:    tuple (gamma, beta, mean, var), each (C,)
    nbr_idx:   (K, N) int32 neighbor index per kernel offset
    nbr_valid: (K, N) bool  neighbor-exists mask per kernel offset
    Returns (N, C) float32.
    """
    N, C = feats.shape
    M = w1.shape[0]
    K = nbr_idx.shape[0]
    MC = M * C
    C1 = C + 1

    # ---- host-side parameter folding (tiny tensors) ------------------------
    s1, b1 = _fold_bn(*bn1)                                                  # (M, C)
    w_fold = (jnp.transpose(w1, (0, 2, 1)) * s1[:, :, None]).reshape(MC, C)
    b_fold = b1.reshape(MC, 1)
    w_aug = jnp.concatenate([w_fold, b_fold], axis=1).astype(compute_dtype)  # (M*C, C+1)
    kw_stack = jnp.transpose(kw, (1, 0, 2)).reshape(K, MC, 1).astype(jnp.float32)
    so, bo = _fold_bn(*bn_out)
    so = so.reshape(C, 1).astype(jnp.float32)
    bo = bo.reshape(C, 1).astype(jnp.float32)

    # ---- tile size: large tiles, but >= 2 tiles when N allows (v7x megacore) ----
    tn = _round_up(min(tn, max(128, _round_up(N, 128) // 2)), 128)
    n_pad = _round_up(N, tn)
    grid_n = n_pad // tn

    # ---- gather fused with branch recompute ---------------------------------
    # Gather table is [x | 1] plus a zero sentinel row N; invalid offsets index the sentinel so
    # the in-kernel relu(W_aug @ g) is already zero for missing neighbours (and the BN bias
    # comes out of the matmul via the ones-column).
    x_aug = jnp.concatenate([feats.astype(compute_dtype),
                             jnp.ones((N, 1), compute_dtype)], axis=1)       # (N, C+1)
    x_aug = jnp.concatenate([x_aug, jnp.zeros((1, C1), compute_dtype)], axis=0)  # row N = sentinel
    idx_eff = jnp.where(nbr_valid, jnp.clip(nbr_idx, 0, N - 1), N).astype(jnp.int32)
    idx_p = jnp.pad(idx_eff, ((0, 0), (0, n_pad - N)), constant_values=N)    # (K, Npad)
    # TODO(synk): XLA-side glue for the sparse kernel-map gather (no Pallas equivalent).
    xg = jnp.take(x_aug, idx_p, axis=0)                                      # (K, Npad, C+1)
    xg = jnp.transpose(xg, (0, 2, 1))                                        # (K, C+1, Npad)

    x_cn = jnp.pad(feats.astype(jnp.float32).T, ((0, 0), (0, n_pad - N)))    # (C, Npad) residual

    out_cn = pl.pallas_call(
        _multiconv_kernel,
        out_shape=jax.ShapeDtypeStruct((C, n_pad), jnp.float32),
        grid_spec=pltpu.PrefetchScalarGridSpec(
            num_scalar_prefetch=0,
            grid=(grid_n,),
            in_specs=[
                pl.BlockSpec((K, C1, tn), lambda i: (0, 0, i)),   # gathered [x|1] stream
                pl.BlockSpec((MC, C1), lambda i: (0, 0)),         # folded pointwise weights (resident)
                pl.BlockSpec((K, MC, 1), lambda i: (0, 0, 0)),    # channelwise kernels (resident)
                pl.BlockSpec((C, 1), lambda i: (0, 0)),           # out-BN scale (resident)
                pl.BlockSpec((C, 1), lambda i: (0, 0)),           # out-BN offset (resident)
                pl.BlockSpec((C, tn), lambda i: (0, i)),          # residual x
            ],
            out_specs=pl.BlockSpec((C, tn), lambda i: (0, i)),
            scratch_shapes=[pltpu.VMEM((C, tn), jnp.float32)],
        ),
        compiler_params=pltpu.CompilerParams(
            dimension_semantics=("parallel",),
            vmem_limit_bytes=48 * 1024 * 1024,   # safe on v5e/v6e (128 MiB) and v7x (64 MiB)
        ),
    )(xg, w_aug, kw_stack, so, bo, x_cn)

    return out_cn[:, :N].T                                                   # (N, C)


def build_synthetic_kernel_map(N, K):
    """Deterministic stand-in for MinkowskiEngine's coordinate-manager kernel map."""
    idx_rows, valid_rows = [], []
    ar = jnp.arange(N, dtype=jnp.int32)
    for k in range(K):
        if k == K // 2:                                  # center offset: identity, always present
            idx_rows.append(ar)
            valid_rows.append(jnp.ones((N,), bool))
        else:
            shift = (7 * k + 3) % N
            idx_rows.append((ar + shift) % N)
            valid_rows.append((ar % 5) != (k % 5))       # ~20% of pairs missing per offset
    return jnp.stack(idx_rows), jnp.stack(valid_rows)


def multiconv_reference(feats, w1, bn1, kw, bn_out, nbr_idx, nbr_valid):
    """Pure-JAX reference of the PyTorch MultiConv forward (inplanes == planes, eval BN)."""
    s1, b1 = _fold_bn(*bn1)
    so, bo = _fold_bn(*bn_out)
    M = w1.shape[0]
    out = jnp.zeros_like(feats)
    for m in range(M):
        y = jnp.maximum(jnp.dot(feats, w1[m], precision=lax.Precision.HIGHEST)
                        * s1[m] + b1[m], 0.0)                                # (N, C)
        g = y[nbr_idx] * nbr_valid[..., None]                                # (K, N, C)
        out = out + jnp.sum(g * kw[m][:, None, :], axis=0)                   # channelwise conv
    out = jnp.maximum(out * so + bo, 0.0)                                    # out_bn_relu
    out = jnp.maximum(out + feats, 0.0)                                      # residual + ReLU
    return out


if __name__ == "__main__":
    # Small config consistent with the module: inplanes == planes == 32, M = 4 branches,
    # channelwise kernel_size = 3 in 3D -> K = 27 offsets, N = 200 sparse points (not a
    # multiple of the tile -> exercises the >=2-tile clamp and the padding path).
    M, C, K, N = 4, 32, 27, 200

    key = jax.random.PRNGKey(0)
    ks = jax.random.split(key, 11)
    feats = jax.random.normal(ks[0], (N, C), jnp.float32)                    # x.F
    w1 = 0.2 * jax.random.normal(ks[1], (M, C, C), jnp.float32)
    bn1 = (1.0 + 0.1 * jax.random.normal(ks[2], (M, C), jnp.float32),        # gamma
           0.1 * jax.random.normal(ks[3], (M, C), jnp.float32),              # beta
           0.1 * jax.random.normal(ks[4], (M, C), jnp.float32),              # running mean
           0.5 + jnp.abs(jax.random.normal(ks[5], (M, C), jnp.float32)))     # running var
    kw = 0.2 * jax.random.normal(ks[6], (M, K, C), jnp.float32)
    bn_out = (1.0 + 0.1 * jax.random.normal(ks[7], (C,), jnp.float32),
              0.1 * jax.random.normal(ks[8], (C,), jnp.float32),
              0.1 * jax.random.normal(ks[9], (C,), jnp.float32),
              0.5 + jnp.abs(jax.random.normal(ks[10], (C,), jnp.float32)))

    nbr_idx, nbr_valid = build_synthetic_kernel_map(N, K)

    ref = multiconv_reference(feats, w1, bn1, kw, bn_out, nbr_idx, nbr_valid)

    # f32 path (tn clamps to 128 -> 2 N-tiles; exercises padding of the last tile).
    out_f32 = multiconv_forward(feats, w1, bn1, kw, bn_out, nbr_idx, nbr_valid,
                                compute_dtype=jnp.float32)
    out_f32 = jax.block_until_ready(out_f32)
    assert out_f32.shape == (N, C)
    assert jnp.allclose(out_f32, ref, atol=5e-2, rtol=2e-2), \
        float(jnp.max(jnp.abs(out_f32 - ref)))

    # Default bf16 path: halves the dominant gathered-x HBM stream on all generations
    # (accumulation stays f32 inside the kernel via preferred_element_type).
    out_bf16 = multiconv_forward(feats, w1, bn1, kw, bn_out, nbr_idx, nbr_valid)
    out_bf16 = jax.block_until_ready(out_bf16)
    assert out_bf16.shape == (N, C)
    assert jnp.allclose(out_bf16, ref, atol=2e-1, rtol=5e-2), \
        float(jnp.max(jnp.abs(out_bf16 - ref)))

    print("KERNEL_OK")
</pallas_src>

<mosaic_0001>
module attributes {stable_mosaic.version = 11 : i64} {
  func.func @_multiconv_kernel(%arg0: i32, %arg1: memref<27x33x128xf32, #tpu.memory_space<vmem>>, %arg2: memref<128x33xf32, #tpu.memory_space<vmem>>, %arg3: memref<27x128x1xf32, #tpu.memory_space<vmem>>, %arg4: memref<32x1xf32, #tpu.memory_space<vmem>>, %arg5: memref<32x1xf32, #tpu.memory_space<vmem>>, %arg6: memref<32x128xf32, #tpu.memory_space<vmem>>, %arg7: memref<32x128xf32, #tpu.memory_space<vmem>>, %arg8: memref<32x128xf32, #tpu.memory_space<vmem>>) attributes {dimension_semantics = [#tpu.dimension_semantics<parallel>], iteration_bounds = array<i64: 2>, scalar_prefetch = 0 : i64, scratch_operands = 1 : i64, tpu.core_type = #tpu.core_type<tc>, window_params = [{transform_indices = @transform_0, window_bounds = array<i64: 27, 33, 128>}, {pipeline_mode = #tpu.pipeline_mode<synchronous>, transform_indices = @transform_1, window_bounds = array<i64: 128, 33>}, {pipeline_mode = #tpu.pipeline_mode<synchronous>, transform_indices = @transform_2, window_bounds = array<i64: 27, 128, 1>}, {pipeline_mode = #tpu.pipeline_mode<synchronous>, transform_indices = @transform_3, window_bounds = array<i64: 32, 1>}, {pipeline_mode = #tpu.pipeline_mode<synchronous>, transform_indices = @transform_4, window_bounds = array<i64: 32, 1>}, {transform_indices = @transform_5, window_bounds = array<i64: 32, 128>}, {transform_indices = @transform_6, window_bounds = array<i64: 32, 128>}]} {
    %cst = arith.constant 0.000000e+00 : f32
    %0 = vector.broadcast %cst : f32 to vector<32x128xf32>
    %c0 = arith.constant 0 : index
    %c0_0 = arith.constant 0 : index
    %1 = vector.load %arg8[%c0, %c0_0] : memref<32x128xf32, #tpu.memory_space<vmem>>, vector<32x128xf32>
    tpu.vector_store %arg8[%c0, %c0_0], %0 {strides = array<i32>} : memref<32x128xf32, #tpu.memory_space<vmem>>, vector<32x128xf32>,
    %c0_1 = arith.constant 0 : index
    %c0_2 = arith.constant 0 : index
    %2 = vector.load %arg2[%c0_1, %c0_2] : memref<128x33xf32, #tpu.memory_space<vmem>>, vector<128x33xf32>
    %c0_3 = arith.constant 0 : index
    %c0_4 = arith.constant 0 : index
    %c0_5 = arith.constant 0 : index
    %3 = vector.load %arg1[%c0_3, %c0_4, %c0_5] : memref<27x33x128xf32, #tpu.memory_space<vmem>>, vector<1x33x128xf32>
    %4 = vector.shape_cast %3 : vector<1x33x128xf32> to vector<33x128xf32>
    %cst_6 = arith.constant dense<0.000000e+00> : vector<128x128xf32>
    %5 = tpu.matmul %2, %4, %cst_6 {dimension_numbers = #tpu.dot_dimension_numbers<[1], [0], [0], [1], [0, 0, 1, 1], [], []>} : vector<128x33xf32>, vector<33x128xf32>, vector<128x128xf32> -> vector<128x128xf32>
    %cst_7 = arith.constant 0.000000e+00 : f32
    %6 = vector.broadcast %cst_7 : f32 to vector<128x128xf32>
    %7 = arith.maximumf %5, %6 : vector<128x128xf32>
    %c0_8 = arith.constant 0 : index
    %c0_9 = arith.constant 0 : index
    %c0_10 = arith.constant 0 : index
    %8 = vector.load %arg3[%c0_8, %c0_9, %c0_10] : memref<27x128x1xf32, #tpu.memory_space<vmem>>, vector<1x128x1xf32>
    %9 = vector.shape_cast %8 : vector<1x128x1xf32> to vector<128x1xf32>
    %10 = vector.broadcast %9 : vector<128x1xf32> to vector<128x128xf32>
    %11 = arith.mulf %7, %10 : vector<128x128xf32>
    %12 = vector.extract_strided_slice %11 {offsets = [0, 0], sizes = [32, 128], strides = [1, 1]} : vector<128x128xf32> to vector<32x128xf32>
    %13 = vector.extract_strided_slice %11 {offsets = [32, 0], sizes = [32, 128], strides = [1, 1]} : vector<128x128xf32> to vector<32x128xf32>
    %14 = arith.addf %12, %13 : vector<32x128xf32>
    %15 = vector.extract_strided_slice %11 {offsets = [64, 0], sizes = [32, 128], strides = [1, 1]} : vector<128x128xf32> to vector<32x128xf32>
    %16 = arith.addf %14, %15 : vector<32x128xf32>
    %17 = vector.extract_strided_slice %11 {offsets = [96, 0], sizes = [32, 128], strides = [1, 1]} : vector<128x128xf32> to vector<32x128xf32>
    %18 = arith.addf %16, %17 : vector<32x128xf32>
    %c0_11 = arith.constant 0 : index
    %c0_12 = arith.constant 0 : index
    %19 = vector.load %arg8[%c0_11, %c0_12] : memref<32x128xf32, #tpu.memory_space<vmem>>, vector<32x128xf32>
    %20 = arith.addf %19, %18 : vector<32x128xf32>
    %c0_13 = arith.constant 0 : index
    %c0_14 = arith.constant 0 : index
    %21 = vector.load %arg8[%c0_13, %c0_14] : memref<32x128xf32, #tpu.memory_space<vmem>>, vector<32x128xf32>
    tpu.vector_store %arg8[%c0_13, %c0_14], %20 {strides = array<i32>} : memref<32x128xf32, #tpu.memory_space<vmem>>, vector<32x128xf32>,
    %c1 = arith.constant 1 : index
    %c0_15 = arith.constant 0 : index
    %c0_16 = arith.constant 0 : index
    %22 = vector.load %arg1[%c1, %c0_15, %c0_16] : memref<27x33x128xf32, #tpu.memory_space<vmem>>, vector<1x33x128xf32>
    %23 = vector.shape_cast %22 : vector<1x33x128xf32> to vector<33x128xf32>
    %cst_17 = arith.constant dense<0.000000e+00> : vector<128x128xf32>
    %24 = tpu.matmul %2, %23, %cst_17 {dimension_numbers = #tpu.dot_dimension_numbers<[1], [0], [0], [1], [0, 0, 1, 1], [], []>} : vector<128x33xf32>, vector<33x128xf32>, vector<128x128xf32> -> vector<128x128xf32>
    %cst_18 = arith.constant 0.000000e+00 : f32
    %25 = vector.broadcast %cst_18 : f32 to vector<128x128xf32>
    %26 = arith.maximumf %24, %25 : vector<128x128xf32>
    %c1_19 = arith.constant 1 : index
    %c0_20 = arith.constant 0 : index
    %c0_21 = arith.constant 0 : index
    %27 = vector.load %arg3[%c1_19, %c0_20, %c0_21] : memref<27x128x1xf32, #tpu.memory_space<vmem>>, vector<1x128x1xf32>
    %28 = vector.shape_cast %27 : vector<1x128x1xf32> to vector<128x1xf32>
    %29 = vector.broadcast %28 : vector<128x1xf32> to vector<128x128xf32>
    %30 = arith.mulf %26, %29 : vector<128x128xf32>
    %31 = vector.extract_strided_slice %30 {offsets = [0, 0], sizes = [32, 128], strides = [1, 1]} : vector<128x128xf32> to vector<32x128xf32>
    %32 = vector.extract_strided_slice %30 {offsets = [32, 0], sizes = [32, 128], strides = [1, 1]} : vector<128x128xf32> to vector<32x128xf32>
    %33 = arith.addf %31, %32 : vector<32x128xf32>
    %34 = vector.extract_strided_slice %30 {offsets = [64, 0], sizes = [32, 128], strides = [1, 1]} : vector<128x128xf32> to vector<32x128xf32>
    %35 = arith.addf %33, %34 : vector<32x128xf32>
    %36 = vector.extract_strided_slice %30 {offsets = [96, 0], sizes = [32, 128], strides = [1, 1]} : vector<128x128xf32> to vector<32x128xf32>
    %37 = arith.addf %35, %36 : vector<32x128xf32>
    %c0_22 = arith.constant 0 : index
    %c0_23 = arith.constant 0 : index
    %38 = vector.load %arg8[%c0_22, %c0_23] : memref<32x128xf32, #tpu.memory_space<vmem>>, vector<32x128xf32>
    %39 = arith.addf %38, %37 : vector<32x128xf32>
    %c0_24 = arith.constant 0 : index
    %c0_25 = arith.constant 0 : index
    %40 = vector.load %arg8[%c0_24, %c0_25] : memref<32x128xf32, #tpu.memory_space<vmem>>, vector<32x128xf32>
    tpu.vector_store %arg8[%c0_24, %c0_25], %39 {strides = array<i32>} : memref<32x128xf32, #tpu.memory_space<vmem>>, vector<32x128xf32>,
    %c2 = arith.constant 2 : index
    %c0_26 = arith.constant 0 : index
    %c0_27 = arith.constant 0 : index
    %41 = vector.load %arg1[%c2, %c0_26, %c0_27] : memref<27x33x128xf32, #tpu.memory_space<vmem>>, vector<1x33x128xf32>
    %42 = vector.shape_cast %41 : vector<1x33x128xf32> to vector<33x128xf32>
    %cst_28 = arith.constant dense<0.000000e+00> : vector<128x128xf32>
    %43 = tpu.matmul %2, %42, %cst_28 {dimension_numbers = #tpu.dot_dimension_numbers<[1], [0], [0], [1], [0, 0, 1, 1], [], []>} : vector<128x33xf32>, vector<33x128xf32>, vector<128x128xf32> -> vector<128x128xf32>
    %cst_29 = arith.constant 0.000000e+00 : f32
    %44 = vector.broadcast %cst_29 : f32 to vector<128x128xf32>
    %45 = arith.maximumf %43, %44 : vector<128x128xf32>
    %c2_30 = arith.constant 2 : index
    %c0_31 = arith.constant 0 : index
    %c0_32 = arith.constant 0 : index
    %46 = vector.load %arg3[%c2_30, %c0_31, %c0_32] : memref<27x128x1xf32, #tpu.memory_space<vmem>>, vector<1x128x1xf32>
    %47 = vector.shape_cast %46 : vector<1x128x1xf32> to vector<128x1xf32>
    %48 = vector.broadcast %47 : vector<128x1xf32> to vector<128x128xf32>
    %49 = arith.mulf %45, %48 : vector<128x128xf32>
    %50 = vector.extract_strided_slice %49 {offsets = [0, 0], sizes = [32, 128], strides = [1, 1]} : vector<128x128xf32> to vector<32x128xf32>
    %51 = vector.extract_strided_slice %49 {offsets = [32, 0], sizes = [32, 128], strides = [1, 1]} : vector<128x128xf32> to vector<32x128xf32>
    %52 = arith.addf %50, %51 : vector<32x128xf32>
    %53 = vector.extract_strided_slice %49 {offsets = [64, 0], sizes = [32, 128], strides = [1, 1]} : vector<128x128xf32> to vector<32x128xf32>
    %54 = arith.addf %52, %53 : vector<32x128xf32>
    %55 = vector.extract_strided_slice %49 {offsets = [96, 0], sizes = [32, 128], strides = [1, 1]} : vector<128x128xf32> to vector<32x128xf32>
    %56 = arith.addf %54, %55 : vector<32x128xf32>
    %c0_33 = arith.constant 0 : index
    %c0_34 = arith.constant 0 : index
    %57 = vector.load %arg8[%c0_33, %c0_34] : memref<32x128xf32, #tpu.memory_space<vmem>>, vector<32x128xf32>
    %58 = arith.addf %57, %56 : vector<32x128xf32>
    %c0_35 = arith.constant 0 : index
    %c0_36 = arith.constant 0 : index
    %59 = vector.load %arg8[%c0_35, %c0_36] : memref<32x128xf32, #tpu.memory_space<vmem>>, vector<32x128xf32>
    tpu.vector_store %arg8[%c0_35, %c0_36], %58 {strides = array<i32>} : memref<32x128xf32, #tpu.memory_space<vmem>>, vector<32x128xf32>,
    %c3 = arith.constant 3 : index
    %c0_37 = arith.constant 0 : index
    %c0_38 = arith.constant 0 : index
    %60 = vector.load %arg1[%c3, %c0_37, %c0_38] : memref<27x33x128xf32, #tpu.memory_space<vmem>>, vector<1x33x128xf32>
    %61 = vector.shape_cast %60 : vector<1x33x128xf32> to vector<33x128xf32>
    %cst_39 = arith.constant dense<0.000000e+00> : vector<128x128xf32>
    %62 = tpu.matmul %2, %61, %cst_39 {dimension_numbers = #tpu.dot_dimension_numbers<[1], [0], [0], [1], [0, 0, 1, 1], [], []>} : vector<128x33xf32>, vector<33x128xf32>, vector<128x128xf32> -> vector<128x128xf32>
    %cst_40 = arith.constant 0.000000e+00 : f32
    %63 = vector.broadcast %cst_40 : f32 to vector<128x128xf32>
    %64 = arith.maximumf %62, %63 : vector<128x128xf32>
    %c3_41 = arith.constant 3 : index
    %c0_42 = arith.constant 0 : index
    %c0_43 = arith.constant 0 : index
    %65 = vector.load %arg3[%c3_41, %c0_42, %c0_43] : memref<27x128x1xf32, #tpu.memory_space<vmem>>, vector<1x128x1xf32>
    %66 = vector.shape_cast %65 : vector<1x128x1xf32> to vector<128x1xf32>
    %67 = vector.broadcast %66 : vector<128x1xf32> to vector<128x128xf32>
    %68 = arith.mulf %64, %67 : vector<128x128xf32>
    %69 = vector.extract_strided_slice %68 {offsets = [0, 0], sizes = [32, 128], strides = [1, 1]} : vector<128x128xf32> to vector<32x128xf32>
    %70 = vector.extract_strided_slice %68 {offsets = [32, 0], sizes = [32, 128], strides = [1, 1]} : vector<128x128xf32> to vector<32x128xf32>
    %71 = arith.addf %69, %70 : vector<32x128xf32>
    %72 = vector.extract_strided_slice %68 {offsets = [64, 0], sizes = [32, 128], strides = [1, 1]} : vector<128x128xf32> to vector<32x128xf32>
    %73 = arith.addf %71, %72 : vector<32x128xf32>
    %74 = vector.extract_strided_slice %68 {offsets = [96, 0], sizes = [32, 128], strides = [1, 1]} : vector<128x128xf32> to vector<32x128xf32>
    %75 = arith.addf %73, %74 : vector<32x128xf32>
    %c0_44 = arith.constant 0 : index
    %c0_45 = arith.constant 0 : index
    %76 = vector.load %arg8[%c0_44, %c0_45] : memref<32x128xf32, #tpu.memory_space<vmem>>, vector<32x128xf32>
    %77 = arith.addf %76, %75 : vector<32x128xf32>
    %c0_46 = arith.constant 0 : index
    %c0_47 = arith.constant 0 : index
    %78 = vector.load %arg8[%c0_46, %c0_47] : memref<32x128xf32, #tpu.memory_space<vmem>>, vector<32x128xf32>
    tpu.vector_store %arg8[%c0_46, %c0_47], %77 {strides = array<i32>} : memref<32x128xf32, #tpu.memory_space<vmem>>, vector<32x128xf32>,
    %c4 = arith.constant 4 : index
    %c0_48 = arith.constant 0 : index
    %c0_49 = arith.constant 0 : index
    %79 = vector.load %arg1[%c4, %c0_48, %c0_49] : memref<27x33x128xf32, #tpu.memory_space<vmem>>, vector<1x33x128xf32>
    %80 = vector.shape_cast %79 : vector<1x33x128xf32> to vector<33x128xf32>
    %cst_50 = arith.constant dense<0.000000e+00> : vector<128x128xf32>
    %81 = tpu.matmul %2, %80, %cst_50 {dimension_numbers = #tpu.dot_dimension_numbers<[1], [0], [0], [1], [0, 0, 1, 1], [], []>} : vector<128x33xf32>, vector<33x128xf32>, vector<128x128xf32> -> vector<128x128xf32>
    %cst_51 = arith.constant 0.000000e+00 : f32
    %82 = vector.broadcast %cst_51 : f32 to vector<128x128xf32>
    %83 = arith.maximumf %81, %82 : vector<128x128xf32>
    %c4_52 = arith.constant 4 : index
    %c0_53 = arith.constant 0 : index
    %c0_54 = arith.constant 0 : index
    %84 = vector.load %arg3[%c4_52, %c0_53, %c0_54] : memref<27x128x1xf32, #tpu.memory_space<vmem>>, vector<1x128x1xf32>
    %85 = vector.shape_cast %84 : vector<1x128x1xf32> to vector<128x1xf32>
    %86 = vector.broadcast %85 : vector<128x1xf32> to vector<128x128xf32>
    %87 = arith.mulf %83, %86 : vector<128x128xf32>
    %88 = vector.extract_strided_slice %87 {offsets = [0, 0], sizes = [32, 128], strides = [1, 1]} : vector<128x128xf32> to vector<32x128xf32>
    %89 = vector.extract_strided_slice %87 {offsets = [32, 0], sizes = [32, 128], strides = [1, 1]} : vector<128x128xf32> to vector<32x128xf32>
    %90 = arith.addf %88, %89 : vector<32x128xf32>
    %91 = vector.extract_strided_slice %87 {offsets = [64, 0], sizes = [32, 128], strides = [1, 1]} : vector<128x128xf32> to vector<32x128xf32>
    %92 = arith.addf %90, %91 : vector<32x128xf32>
    %93 = vector.extract_strided_slice %87 {offsets = [96, 0], sizes = [32, 128], strides = [1, 1]} : vector<128x128xf32> to vector<32x128xf32>
    %94 = arith.addf %92, %93 : vector<32x128xf32>
    %c0_55 = arith.constant 0 : index
    %c0_56 = arith.constant 0 : index
    %95 = vector.load %arg8[%c0_55, %c0_56] : memref<32x128xf32, #tpu.memory_space<vmem>>, vector<32x128xf32>
    %96 = arith.addf %95, %94 : vector<32x128xf32>
    %c0_57 = arith.constant 0 : index
    %c0_58 = arith.constant 0 : index
    %97 = vector.load %arg8[%c0_57, %c0_58] : memref<32x128xf32, #tpu.memory_space<vmem>>, vector<32x128xf32>
    tpu.vector_store %arg8[%c0_57, %c0_58], %96 {strides = array<i32>} : memref<32x128xf32, #tpu.memory_space<vmem>>, vector<32x128xf32>,
    %c5 = arith.constant 5 : index
    %c0_59 = arith.constant 0 : index
    %c0_60 = arith.constant 0 : index
    %98 = vector.load %arg1[%c5, %c0_59, %c0_60] : memref<27x33x128xf32, #tpu.memory_space<vmem>>, vector<1x33x128xf32>
    %99 = vector.shape_cast %98 : vector<1x33x128xf32> to vector<33x128xf32>
    %cst_61 = arith.constant dense<0.000000e+00> : vector<128x128xf32>
    %100 = tpu.matmul %2, %99, %cst_61 {dimension_numbers = #tpu.dot_dimension_numbers<[1], [0], [0], [1], [0, 0, 1, 1], [], []>} : vector<128x33xf32>, vector<33x128xf32>, vector<128x128xf32> -> vector<128x128xf32>
    %cst_62 = arith.constant 0.000000e+00 : f32
    %101 = vector.broadcast %cst_62 : f32 to vector<128x128xf32>
    %102 = arith.maximumf %100, %101 : vector<128x128xf32>
    %c5_63 = arith.constant 5 : index
    %c0_64 = arith.constant 0 : index
    %c0_65 = arith.constant 0 : index
    %103 = vector.load %arg3[%c5_63, %c0_64, %c0_65] : memref<27x128x1xf32, #tpu.memory_space<vmem>>, vector<1x128x1xf32>
    %104 = vector.shape_cast %103 : vector<1x128x1xf32> to vector<128x1xf32>
    %105 = vector.broadcast %104 : vector<128x1xf32> to vector<128x128xf32>
    %106 = arith.mulf %102, %105 : vector<128x128xf32>
    %107 = vector.extract_strided_slice %106 {offsets = [0, 0], sizes = [32, 128], strides = [1, 1]} : vector<128x128xf32> to vector<32x128xf32>
    %108 = vector.extract_strided_slice %106 {offsets = [32, 0], sizes = [32, 128], strides = [1, 1]} : vector<128x128xf32> to vector<32x128xf32>
    %109 = arith.addf %107, %108 : vector<32x128xf32>
    %110 = vector.extract_strided_slice %106 {offsets = [64, 0], sizes = [32, 128], strides = [1, 1]} : vector<128x128xf32> to vector<32x128xf32>
    %111 = arith.addf %109, %110 : vector<32x128xf32>
    %112 = vector.extract_strided_slice %106 {offsets = [96, 0], sizes = [32, 128], strides = [1, 1]} : vector<128x128xf32> to vector<32x128xf32>
    %113 = arith.addf %111, %112 : vector<32x128xf32>
    %c0_66 = arith.constant 0 : index
    %c0_67 = arith.constant 0 : index
    %114 = vector.load %arg8[%c0_66, %c0_67] : memref<32x128xf32, #tpu.memory_space<vmem>>, vector<32x128xf32>
    %115 = arith.addf %114, %113 : vector<32x128xf32>
    %c0_68 = arith.constant 0 : index
    %c0_69 = arith.constant 0 : index
    %116 = vector.load %arg8[%c0_68, %c0_69] : memref<32x128xf32, #tpu.memory_space<vmem>>, vector<32x128xf32>
    tpu.vector_store %arg8[%c0_68, %c0_69], %115 {strides = array<i32>} : memref<32x128xf32, #tpu.memory_space<vmem>>, vector<32x128xf32>,
    %c6 = arith.constant 6 : index
    %c0_70 = arith.constant 0 : index
    %c0_71 = arith.constant 0 : index
    %117 = vector.load %arg1[%c6, %c0_70, %c0_71] : memref<27x33x128xf32, #tpu.memory_space<vmem>>, vector<1x33x128xf32>
    %118 = vector.shape_cast %117 : vector<1x33x128xf32> to vector<33x128xf32>
    %cst_72 = arith.constant dense<0.000000e+00> : vector<128x128xf32>
    %119 = tpu.matmul %2, %118, %cst_72 {dimension_numbers = #tpu.dot_dimension_numbers<[1], [0], [0], [1], [0, 0, 1, 1], [], []>} : vector<128x33xf32>, vector<33x128xf32>, vector<128x128xf32> -> vector<128x128xf32>
    %cst_73 = arith.constant 0.000000e+00 : f32
    %120 = vector.broadcast %cst_73 : f32 to vector<128x128xf32>
    %121 = arith.maximumf %119, %120 : vector<128x128xf32>
    %c6_74 = arith.constant 6 : index
    %c0_75 = arith.constant 0 : index
    %c0_76 = arith.constant 0 : index
    %122 = vector.load %arg3[%c6_74, %c0_75, %c0_76] : memref<27x128x1xf32, #tpu.memory_space<vmem>>, vector<1x128x1xf32>
    %123 = vector.shape_cast %122 : vector<1x128x1xf32> to vector<128x1xf32>
    %124 = vector.broadcast %123 : vector<128x1xf32> to vector<128x128xf32>
    %125 = arith.mulf %121, %124 : vector<128x128xf32>
    %126 = vector.extract_strided_slice %125 {offsets = [0, 0], sizes = [32, 128], strides = [1, 1]} : vector<128x128xf32> to vector<32x128xf32>
    %127 = vector.extract_strided_slice %125 {offsets = [32, 0], sizes = [32, 128], strides = [1, 1]} : vector<128x128xf32> to vector<32x128xf32>
    %128 = arith.addf %126, %127 : vector<32x128xf32>
    %129 = vector.extract_strided_slice %125 {offsets = [64, 0], sizes = [32, 128], strides = [1, 1]} : vector<128x128xf32> to vector<32x128xf32>
    %130 = arith.addf %128, %129 : vector<32x128xf32>
    %131 = vector.extract_strided_slice %125 {offsets = [96, 0], sizes = [32, 128], strides = [1, 1]} : vector<128x128xf32> to vector<32x128xf32>
    %132 = arith.addf %130, %131 : vector<32x128xf32>
    %c0_77 = arith.constant 0 : index
    %c0_78 = arith.constant 0 : index
    %133 = vector.load %arg8[%c0_77, %c0_78] : memref<32x128xf32, #tpu.memory_space<vmem>>, vector<32x128xf32>
    %134 = arith.addf %133, %132 : vector<32x128xf32>
    %c0_79 = arith.constant 0 : index
    %c0_80 = arith.constant 0 : index
    %135 = vector.load %arg8[%c0_79, %c0_80] : memref<32x128xf32, #tpu.memory_space<vmem>>, vector<32x128xf32>
    tpu.vector_store %arg8[%c0_79, %c0_80], %134 {strides = array<i32>} : memref<32x128xf32, #tpu.memory_space<vmem>>, vector<32x128xf32>,
    %c7 = arith.constant 7 : index
    %c0_81 = arith.constant 0 : index
    %c0_82 = arith.constant 0 : index
    %136 = vector.load %arg1[%c7, %c0_81, %c0_82] : memref<27x33x128xf32, #tpu.memory_space<vmem>>, vector<1x33x128xf32>
    %137 = vector.shape_cast %136 : vector<1x33x128xf32> to vector<33x128xf32>
    %cst_83 = arith.constant dense<0.000000e+00> : vector<128x128xf32>
    %138 = tpu.matmul %2, %137, %cst_83 {dimension_numbers = #tpu.dot_dimension_numbers<[1], [0], [0], [1], [0, 0, 1, 1], [], []>} : vector<128x33xf32>, vector<33x128xf32>, vector<128x128xf32> -> vector<128x128xf32>
    %cst_84 = arith.constant 0.000000e+00 : f32
    %139 = vector.broadcast %cst_84 : f32 to vector<128x128xf32>
    %140 = arith.maximumf %138, %139 : vector<128x128xf32>
    %c7_85 = arith.constant 7 : index
    %c0_86 = arith.constant 0 : index
    %c0_87 = arith.constant 0 : index
    %141 = vector.load %arg3[%c7_85, %c0_86, %c0_87] : memref<27x128x1xf32, #tpu.memory_space<vmem>>, vector<1x128x1xf32>
    %142 = vector.shape_cast %141 : vector<1x128x1xf32> to vector<128x1xf32>
    %143 = vector.broadcast %142 : vector<128x1xf32> to vector<128x128xf32>
    %144 = arith.mulf %140, %143 : vector<128x128xf32>
    %145 = vector.extract_strided_slice %144 {offsets = [0, 0], sizes = [32, 128], strides = [1, 1]} : vector<128x128xf32> to vector<32x128xf32>
    %146 = vector.extract_strided_slice %144 {offsets = [32, 0], sizes = [32, 128], strides = [1, 1]} : vector<128x128xf32> to vector<32x128xf32>
    %147 = arith.addf %145, %146 : vector<32x128xf32>
    %148 = vector.extract_strided_slice %144 {offsets = [64, 0], sizes = [32, 128], strides = [1, 1]} : vector<128x128xf32> to vector<32x128xf32>
    %149 = arith.addf %147, %148 : vector<32x128xf32>
    %150 = vector.extract_strided_slice %144 {offsets = [96, 0], sizes = [32, 128], strides = [1, 1]} : vector<128x128xf32> to vector<32x128xf32>
    %151 = arith.addf %149, %150 : vector<32x128xf32>
    %c0_88 = arith.constant 0 : index
    %c0_89 = arith.constant 0 : index
    %152 = vector.load %arg8[%c0_88, %c0_89] : memref<32x128xf32, #tpu.memory_space<vmem>>, vector<32x128xf32>
    %153 = arith.addf %152, %151 : vector<32x128xf32>
    %c0_90 = arith.constant 0 : index
    %c0_91 = arith.constant 0 : index
    %154 = vector.load %arg8[%c0_90, %c0_91] : memref<32x128xf32, #tpu.memory_space<vmem>>, vector<32x128xf32>
    tpu.vector_store %arg8[%c0_90, %c0_91], %153 {strides = array<i32>} : memref<32x128xf32, #tpu.memory_space<vmem>>, vector<32x128xf32>,
    %c8 = arith.constant 8 : index
    %c0_92 = arith.constant 0 : index
    %c0_93 = arith.constant 0 : index
    %155 = vector.load %arg1[%c8, %c0_92, %c0_93] : memref<27x33x128xf32, #tpu.memory_space<vmem>>, vector<1x33x128xf32>
    %156 = vector.shape_cast %155 : vector<1x33x128xf32> to vector<33x128xf32>
    %cst_94 = arith.constant dense<0.000000e+00> : vector<128x128xf32>
    %157 = tpu.matmul %2, %156, %cst_94 {dimension_numbers = #tpu.dot_dimension_numbers<[1], [0], [0], [1], [0, 0, 1, 1], [], []>} : vector<128x33xf32>, vector<33x128xf32>, vector<128x128xf32> -> vector<128x128xf32>
    %cst_95 = arith.constant 0.000000e+00 : f32
    %158 = vector.broadcast %cst_95 : f32 to vector<128x128xf32>
    %159 = arith.maximumf %157, %158 : vector<128x128xf32>
    %c8_96 = arith.constant 8 : index
    %c0_97 = arith.constant 0 : index
    %c0_98 = arith.constant 0 : index
    %160 = vector.load %arg3[%c8_96, %c0_97, %c0_98] : memref<27x128x1xf32, #tpu.memory_space<vmem>>, vector<1x128x1xf32>
    %161 = vector.shape_cast %160 : vector<1x128x1xf32> to vector<128x1xf32>
    %162 = vector.broadcast %161 : vector<128x1xf32> to vector<128x128xf32>
    %163 = arith.mulf %159, %162 : vector<128x128xf32>
    %164 = vector.extract_strided_slice %163 {offsets = [0, 0], sizes = [32, 128], strides = [1, 1]} : vector<128x128xf32> to vector<32x128xf32>
    %165 = vector.extract_strided_slice %163 {offsets = [32, 0], sizes = [32, 128], strides = [1, 1]} : vector<128x128xf32> to vector<32x128xf32>
    %166 = arith.addf %164, %165 : vector<32x128xf32>
    %167 = vector.extract_strided_slice %163 {offsets = [64, 0], sizes = [32, 128], strides = [1, 1]} : vector<128x128xf32> to vector<32x128xf32>
    %168 = arith.addf %166, %167 : vector<32x128xf32>
    %169 = vector.extract_strided_slice %163 {offsets = [96, 0], sizes = [32, 128], strides = [1, 1]} : vector<128x128xf32> to vector<32x128xf32>
    %170 = arith.addf %168, %169 : vector<32x128xf32>
    %c0_99 = arith.constant 0 : index
    %c0_100 = arith.constant 0 : index
    %171 = vector.load %arg8[%c0_99, %c0_100] : memref<32x128xf32, #tpu.memory_space<vmem>>, vector<32x128xf32>
    %172 = arith.addf %171, %170 : vector<32x128xf32>
    %c0_101 = arith.constant 0 : index
    %c0_102 = arith.constant 0 : index
    %173 = vector.load %arg8[%c0_101, %c0_102] : memref<32x128xf32, #tpu.memory_space<vmem>>, vector<32x128xf32>
    tpu.vector_store %arg8[%c0_101, %c0_102], %172 {strides = array<i32>} : memref<32x128xf32, #tpu.memory_space<vmem>>, vector<32x128xf32>,
    %c9 = arith.constant 9 : index
    %c0_103 = arith.constant 0 : index
    %c0_104 = arith.constant 0 : index
    %174 = vector.load %arg1[%c9, %c0_103, %c0_104] : memref<27x33x128xf32, #tpu.memory_space<vmem>>, vector<1x33x128xf32>
    %175 = vector.shape_cast %174 : vector<1x33x128xf32> to vector<33x128xf32>
    %cst_105 = arith.constant dense<0.000000e+00> : vector<128x128xf32>
    %176 = tpu.matmul %2, %175, %cst_105 {dimension_numbers = #tpu.dot_dimension_numbers<[1], [0], [0], [1], [0, 0, 1, 1], [], []>} : vector<128x33xf32>, vector<33x128xf32>, vector<128x128xf32> -> vector<128x128xf32>
    %cst_106 = arith.constant 0.000000e+00 : f32
    %177 = vector.broadcast %cst_106 : f32 to vector<128x128xf32>
    %178 = arith.maximumf %176, %177 : vector<128x128xf32>
    %c9_107 = arith.constant 9 : index
    %c0_108 = arith.constant 0 : index
    %c0_109 = arith.constant 0 : index
    %179 = vector.load %arg3[%c9_107, %c0_108, %c0_109] : memref<27x128x1xf32, #tpu.memory_space<vmem>>, vector<1x128x1xf32>
    %180 = vector.shape_cast %179 : vector<1x128x1xf32> to vector<128x1xf32>
    %181 = vector.broadcast %180 : vector<128x1xf32> to vector<128x128xf32>
    %182 = arith.mulf %178, %181 : vector<128x128xf32>
    %183 = vector.extract_strided_slice %182 {offsets = [0, 0], sizes = [32, 128], strides = [1, 1]} : vector<128x128xf32> to vector<32x128xf32>
    %184 = vector.extract_strided_slice %182 {offsets = [32, 0], sizes = [32, 128], strides = [1, 1]} : vector<128x128xf32> to vector<32x128xf32>
    %185 = arith.addf %183, %184 : vector<32x128xf32>
    %186 = vector.extract_strided_slice %182 {offsets = [64, 0], sizes = [32, 128], strides = [1, 1]} : vector<128x128xf32> to vector<32x128xf32>
    %187 = arith.addf %185, %186 : vector<32x128xf32>
    %188 = vector.extract_strided_slice %182 {offsets = [96, 0], sizes = [32, 128], strides = [1, 1]} : vector<128x128xf32> to vector<32x128xf32>
    %189 = arith.addf %187, %188 : vector<32x128xf32>
    %c0_110 = arith.constant 0 : index
    %c0_111 = arith.constant 0 : index
    %190 = vector.load %arg8[%c0_110, %c0_111] : memref<32x128xf32, #tpu.memory_space<vmem>>, vector<32x128xf32>
    %191 = arith.addf %190, %189 : vector<32x128xf32>
    %c0_112 = arith.constant 0 : index
    %c0_113 = arith.constant 0 : index
    %192 = vector.load %arg8[%c0_112, %c0_113] : memref<32x128xf32, #tpu.memory_space<vmem>>, vector<32x128xf32>
    tpu.vector_store %arg8[%c0_112, %c0_113], %191 {strides = array<i32>} : memref<32x128xf32, #tpu.memory_space<vmem>>, vector<32x128xf32>,
    %c10 = arith.constant 10 : index
    %c0_114 = arith.constant 0 : index
    %c0_115 = arith.constant 0 : index
    %193 = vector.load %arg1[%c10, %c0_114, %c0_115] : memref<27x33x128xf32, #tpu.memory_space<vmem>>, vector<1x33x128xf32>
    %194 = vector.shape_cast %193 : vector<1x33x128xf32> to vector<33x128xf32>
    %cst_116 = arith.constant dense<0.000000e+00> : vector<128x128xf32>
    %195 = tpu.matmul %2, %194, %cst_116 {dimension_numbers = #tpu.dot_dimension_numbers<[1], [0], [0], [1], [0, 0, 1, 1], [], []>} : vector<128x33xf32>, vector<33x128xf32>, vector<128x128xf32> -> vector<128x128xf32>
    %cst_117 = arith.constant 0.000000e+00 : f32
    %196 = vector.broadcast %cst_117 : f32 to vector<128x128xf32>
    %197 = arith.maximumf %195, %196 : vector<128x128xf32>
    %c10_118 = arith.constant 10 : index
    %c0_119 = arith.constant 0 : index
    %c0_120 = arith.constant 0 : index
    %198 = vector.load %arg3[%c10_118, %c0_119, %c0_120] : memref<27x128x1xf32, #tpu.memory_space<vmem>>, vector<1x128x1xf32>
    %199 = vector.shape_cast %198 : vector<1x128x1xf32> to vector<128x1xf32>
    %200 = vector.broadcast %199 : vector<128x1xf32> to vector<128x128xf32>
    %201 = arith.mulf %197, %200 : vector<128x128xf32>
    %202 = vector.extract_strided_slice %201 {offsets = [0, 0], sizes = [32, 128], strides = [1, 1]} : vector<128x128xf32> to vector<32x128xf32>
    %203 = vector.extract_strided_slice %201 {offsets = [32, 0], sizes = [32, 128], strides = [1, 1]} : vector<128x128xf32> to vector<32x128xf32>
    %204 = arith.addf %202, %203 : vector<32x128xf32>
    %205 = vector.extract_strided_slice %201 {offsets = [64, 0], sizes = [32, 128], strides = [1, 1]} : vector<128x128xf32> to vector<32x128xf32>
    %206 = arith.addf %204, %205 : vector<32x128xf32>
    %207 = vector.extract_strided_slice %201 {offsets = [96, 0], sizes = [32, 128], strides = [1, 1]} : vector<128x128xf32> to vector<32x128xf32>
    %208 = arith.addf %206, %207 : vector<32x128xf32>
    %c0_121 = arith.constant 0 : index
    %c0_122 = arith.constant 0 : index
    %209 = vector.load %arg8[%c0_121, %c0_122] : memref<32x128xf32, #tpu.memory_space<vmem>>, vector<32x128xf32>
    %210 = arith.addf %209, %208 : vector<32x128xf32>
    %c0_123 = arith.constant 0 : index
    %c0_124 = arith.constant 0 : index
    %211 = vector.load %arg8[%c0_123, %c0_124] : memref<32x128xf32, #tpu.memory_space<vmem>>, vector<32x128xf32>
    tpu.vector_store %arg8[%c0_123, %c0_124], %210 {strides = array<i32>} : memref<32x128xf32, #tpu.memory_space<vmem>>, vector<32x128xf32>,
    %c11 = arith.constant 11 : index
    %c0_125 = arith.constant 0 : index
    %c0_126 = arith.constant 0 : index
    %212 = vector.load %arg1[%c11, %c0_125, %c0_126] : memref<27x33x128xf32, #tpu.memory_space<vmem>>, vector<1x33x128xf32>
    %213 = vector.shape_cast %212 : vector<1x33x128xf32> to vector<33x128xf32>
    %cst_127 = arith.constant dense<0.000000e+00> : vector<128x128xf32>
    %214 = tpu.matmul %2, %213, %cst_127 {dimension_numbers = #tpu.dot_dimension_numbers<[1], [0], [0], [1], [0, 0, 1, 1], [], []>} : vector<128x33xf32>, vector<33x128xf32>, vector<128x128xf32> -> vector<128x128xf32>
    %cst_128 = arith.constant 0.000000e+00 : f32
    %215 = vector.broadcast %cst_128 : f32 to vector<128x128xf32>
    %216 = arith.maximumf %214, %215 : vector<128x128xf32>
    %c11_129 = arith.constant 11 : index
    %c0_130 = arith.constant 0 : index
    %c0_131 = arith.constant 0 : index
    %217 = vector.load %arg3[%c11_129, %c0_130, %c0_131] : memref<27x128x1xf32, #tpu.memory_space<vmem>>, vector<1x128x1xf32>
    %218 = vector.shape_cast %217 : vector<1x128x1xf32> to vector<128x1xf32>
    %219 = vector.broadcast %218 : vector<128x1xf32> to vector<128x128xf32>
    %220 = arith.mulf %216, %219 : vector<128x128xf32>
    %221 = vector.extract_strided_slice %220 {offsets = [0, 0], sizes = [32, 128], strides = [1, 1]} : vector<128x128xf32> to vector<32x128xf32>
    %222 = vector.extract_strided_slice %220 {offsets = [32, 0], sizes = [32, 128], strides = [1, 1]} : vector<128x128xf32> to vector<32x128xf32>
    %223 = arith.addf %221, %222 : vector<32x128xf32>
    %224 = vector.extract_strided_slice %220 {offsets = [64, 0], sizes = [32, 128], strides = [1, 1]} : vector<128x128xf32> to vector<32x128xf32>
    %225 = arith.addf %223, %224 : vector<32x128xf32>
    %226 = vector.extract_strided_slice %220 {offsets = [96, 0], sizes = [32, 128], strides = [1, 1]} : vector<128x128xf32> to vector<32x128xf32>
    %227 = arith.addf %225, %226 : vector<32x128xf32>
    %c0_132 = arith.constant 0 : index
    %c0_133 = arith.constant 0 : index
    %228 = vector.load %arg8[%c0_132, %c0_133] : memref<32x128xf32, #tpu.memory_space<vmem>>, vector<32x128xf32>
    %229 = arith.addf %228, %227 : vector<32x128xf32>
    %c0_134 = arith.constant 0 : index
    %c0_135 = arith.constant 0 : index
    %230 = vector.load %arg8[%c0_134, %c0_135] : memref<32x128xf32, #tpu.memory_space<vmem>>, vector<32x128xf32>
    tpu.vector_store %arg8[%c0_134, %c0_135], %229 {strides = array<i32>} : memref<32x128xf32, #tpu.memory_space<vmem>>, vector<32x128xf32>,
    %c12 = arith.constant 12 : index
    %c0_136 = arith.constant 0 : index
    %c0_137 = arith.constant 0 : index
    %231 = vector.load %arg1[%c12, %c0_136, %c0_137] : memref<27x33x128xf32, #tpu.memory_space<vmem>>, vector<1x33x128xf32>
    %232 = vector.shape_cast %231 : vector<1x33x128xf32> to vector<33x128xf32>
    %cst_138 = arith.constant dense<0.000000e+00> : vector<128x128xf32>
    %233 = tpu.matmul %2, %232, %cst_138 {dimension_numbers = #tpu.dot_dimension_numbers<[1], [0], [0], [1], [0, 0, 1, 1], [], []>} : vector<128x33xf32>, vector<33x128xf32>, vector<128x128xf32> -> vector<128x128xf32>
    %cst_139 = arith.constant 0.000000e+00 : f32
    %234 = vector.broadcast %cst_139 : f32 to vector<128x128xf32>
    %235 = arith.maximumf %233, %234 : vector<128x128xf32>
    %c12_140 = arith.constant 12 : index
    %c0_141 = arith.constant 0 : index
    %c0_142 = arith.constant 0 : index
    %236 = vector.load %arg3[%c12_140, %c0_141, %c0_142] : memref<27x128x1xf32, #tpu.memory_space<vmem>>, vector<1x128x1xf32>
    %237 = vector.shape_cast %236 : vector<1x128x1xf32> to vector<128x1xf32>
    %238 = vector.broadcast %237 : vector<128x1xf32> to vector<128x128xf32>
    %239 = arith.mulf %235, %238 : vector<128x128xf32>
    %240 = vector.extract_strided_slice %239 {offsets = [0, 0], sizes = [32, 128], strides = [1, 1]} : vector<128x128xf32> to vector<32x128xf32>
    %241 = vector.extract_strided_slice %239 {offsets = [32, 0], sizes = [32, 128], strides = [1, 1]} : vector<128x128xf32> to vector<32x128xf32>
    %242 = arith.addf %240, %241 : vector<32x128xf32>
    %243 = vector.extract_strided_slice %239 {offsets = [64, 0], sizes = [32, 128], strides = [1, 1]} : vector<128x128xf32> to vector<32x128xf32>
    %244 = arith.addf %242, %243 : vector<32x128xf32>
    %245 = vector.extract_strided_slice %239 {offsets = [96, 0], sizes = [32, 128], strides = [1, 1]} : vector<128x128xf32> to vector<32x128xf32>
    %246 = arith.addf %244, %245 : vector<32x128xf32>
    %c0_143 = arith.constant 0 : index
    %c0_144 = arith.constant 0 : index
    %247 = vector.load %arg8[%c0_143, %c0_144] : memref<32x128xf32, #tpu.memory_space<vmem>>, vector<32x128xf32>
    %248 = arith.addf %247, %246 : vector<32x128xf32>
    %c0_145 = arith.constant 0 : index
    %c0_146 = arith.constant 0 : index
    %249 = vector.load %arg8[%c0_145, %c0_146] : memref<32x128xf32, #tpu.memory_space<vmem>>, vector<32x128xf32>
    tpu.vector_store %arg8[%c0_145, %c0_146], %248 {strides = array<i32>} : memref<32x128xf32, #tpu.memory_space<vmem>>, vector<32x128xf32>,
    %c13 = arith.constant 13 : index
    %c0_147 = arith.constant 0 : index
    %c0_148 = arith.constant 0 : index
    %250 = vector.load %arg1[%c13, %c0_147, %c0_148] : memref<27x33x128xf32, #tpu.memory_space<vmem>>, vector<1x33x128xf32>
    %251 = vector.shape_cast %250 : vector<1x33x128xf32> to vector<33x128xf32>
    %cst_149 = arith.constant dense<0.000000e+00> : vector<128x128xf32>
    %252 = tpu.matmul %2, %251, %cst_149 {dimension_numbers = #tpu.dot_dimension_numbers<[1], [0], [0], [1], [0, 0, 1, 1], [], []>} : vector<128x33xf32>, vector<33x128xf32>, vector<128x128xf32> -> vector<128x128xf32>
    %cst_150 = arith.constant 0.000000e+00 : f32
    %253 = vector.broadcast %cst_150 : f32 to vector<128x128xf32>
    %254 = arith.maximumf %252, %253 : vector<128x128xf32>
    %c13_151 = arith.constant 13 : index
    %c0_152 = arith.constant 0 : index
    %c0_153 = arith.constant 0 : index
    %255 = vector.load %arg3[%c13_151, %c0_152, %c0_153] : memref<27x128x1xf32, #tpu.memory_space<vmem>>, vector<1x128x1xf32>
    %256 = vector.shape_cast %255 : vector<1x128x1xf32> to vector<128x1xf32>
    %257 = vector.broadcast %256 : vector<128x1xf32> to vector<128x128xf32>
    %258 = arith.mulf %254, %257 : vector<128x128xf32>
    %259 = vector.extract_strided_slice %258 {offsets = [0, 0], sizes = [32, 128], strides = [1, 1]} : vector<128x128xf32> to vector<32x128xf32>
    %260 = vector.extract_strided_slice %258 {offsets = [32, 0], sizes = [32, 128], strides = [1, 1]} : vector<128x128xf32> to vector<32x128xf32>
    %261 = arith.addf %259, %260 : vector<32x128xf32>
    %262 = vector.extract_strided_slice %258 {offsets = [64, 0], sizes = [32, 128], strides = [1, 1]} : vector<128x128xf32> to vector<32x128xf32>
    %263 = arith.addf %261, %262 : vector<32x128xf32>
    %264 = vector.extract_strided_slice %258 {offsets = [96, 0], sizes = [32, 128], strides = [1, 1]} : vector<128x128xf32> to vector<32x128xf32>
    %265 = arith.addf %263, %264 : vector<32x128xf32>
    %c0_154 = arith.constant 0 : index
    %c0_155 = arith.constant 0 : index
    %266 = vector.load %arg8[%c0_154, %c0_155] : memref<32x128xf32, #tpu.memory_space<vmem>>, vector<32x128xf32>
    %267 = arith.addf %266, %265 : vector<32x128xf32>
    %c0_156 = arith.constant 0 : index
    %c0_157 = arith.constant 0 : index
    %268 = vector.load %arg8[%c0_156, %c0_157] : memref<32x128xf32, #tpu.memory_space<vmem>>, vector<32x128xf32>
    tpu.vector_store %arg8[%c0_156, %c0_157], %267 {strides = array<i32>} : memref<32x128xf32, #tpu.memory_space<vmem>>, vector<32x128xf32>,
    %c14 = arith.constant 14 : index
    %c0_158 = arith.constant 0 : index
    %c0_159 = arith.constant 0 : index
    %269 = vector.load %arg1[%c14, %c0_158, %c0_159] : memref<27x33x128xf32, #tpu.memory_space<vmem>>, vector<1x33x128xf32>
    %270 = vector.shape_cast %269 : vector<1x33x128xf32> to vector<33x128xf32>
    %cst_160 = arith.constant dense<0.000000e+00> : vector<128x128xf32>
    %271 = tpu.matmul %2, %270, %cst_160 {dimension_numbers = #tpu.dot_dimension_numbers<[1], [0], [0], [1], [0, 0, 1, 1], [], []>} : vector<128x33xf32>, vector<33x128xf32>, vector<128x128xf32> -> vector<128x128xf32>
    %cst_161 = arith.constant 0.000000e+00 : f32
    %272 = vector.broadcast %cst_161 : f32 to vector<128x128xf32>
    %273 = arith.maximumf %271, %272 : vector<128x128xf32>
    %c14_162 = arith.constant 14 : index
    %c0_163 = arith.constant 0 : index
    %c0_164 = arith.constant 0 : index
    %274 = vector.load %arg3[%c14_162, %c0_163, %c0_164] : memref<27x128x1xf32, #tpu.memory_space<vmem>>, vector<1x128x1xf32>
    %275 = vector.shape_cast %274 : vector<1x128x1xf32> to vector<128x1xf32>
    %276 = vector.broadcast %275 : vector<128x1xf32> to vector<128x128xf32>
    %277 = arith.mulf %273, %276 : vector<128x128xf32>
    %278 = vector.extract_strided_slice %277 {offsets = [0, 0], sizes = [32, 128], strides = [1, 1]} : vector<128x128xf32> to vector<32x128xf32>
    %279 = vector.extract_strided_slice %277 {offsets = [32, 0], sizes = [32, 128], strides = [1, 1]} : vector<128x128xf32> to vector<32x128xf32>
    %280 = arith.addf %278, %279 : vector<32x128xf32>
    %281 = vector.extract_strided_slice %277 {offsets = [64, 0], sizes = [32, 128], strides = [1, 1]} : vector<128x128xf32> to vector<32x128xf32>
    %282 = arith.addf %280, %281 : vector<32x128xf32>
    %283 = vector.extract_strided_slice %277 {offsets = [96, 0], sizes = [32, 128], strides = [1, 1]} : vector<128x128xf32> to vector<32x128xf32>
    %284 = arith.addf %282, %283 : vector<32x128xf32>
    %c0_165 = arith.constant 0 : index
    %c0_166 = arith.constant 0 : index
    %285 = vector.load %arg8[%c0_165, %c0_166] : memref<32x128xf32, #tpu.memory_space<vmem>>, vector<32x128xf32>
    %286 = arith.addf %285, %284 : vector<32x128xf32>
    %c0_167 = arith.constant 0 : index
    %c0_168 = arith.constant 0 : index
    %287 = vector.load %arg8[%c0_167, %c0_168] : memref<32x128xf32, #tpu.memory_space<vmem>>, vector<32x128xf32>
    tpu.vector_store %arg8[%c0_167, %c0_168], %286 {strides = array<i32>} : memref<32x128xf32, #tpu.memory_space<vmem>>, vector<32x128xf32>,
    %c15 = arith.constant 15 : index
    %c0_169 = arith.constant 0 : index
    %c0_170 = arith.constant 0 : index
    %288 = vector.load %arg1[%c15, %c0_169, %c0_170] : memref<27x33x128xf32, #tpu.memory_space<vmem>>, vector<1x33x128xf32>
    %289 = vector.shape_cast %288 : vector<1x33x128xf32> to vector<33x128xf32>
    %cst_171 = arith.constant dense<0.000000e+00> : vector<128x128xf32>
    %290 = tpu.matmul %2, %289, %cst_171 {dimension_numbers = #tpu.dot_dimension_numbers<[1], [0], [0], [1], [0, 0, 1, 1], [], []>} : vector<128x33xf32>, vector<33x128xf32>, vector<128x128xf32> -> vector<128x128xf32>
    %cst_172 = arith.constant 0.000000e+00 : f32
    %291 = vector.broadcast %cst_172 : f32 to vector<128x128xf32>
    %292 = arith.maximumf %290, %291 : vector<128x128xf32>
    %c15_173 = arith.constant 15 : index
    %c0_174 = arith.constant 0 : index
    %c0_175 = arith.constant 0 : index
    %293 = vector.load %arg3[%c15_173, %c0_174, %c0_175] : memref<27x128x1xf32, #tpu.memory_space<vmem>>, vector<1x128x1xf32>
    %294 = vector.shape_cast %293 : vector<1x128x1xf32> to vector<128x1xf32>
    %295 = vector.broadcast %294 : vector<128x1xf32> to vector<128x128xf32>
    %296 = arith.mulf %292, %295 : vector<128x128xf32>
    %297 = vector.extract_strided_slice %296 {offsets = [0, 0], sizes = [32, 128], strides = [1, 1]} : vector<128x128xf32> to vector<32x128xf32>
    %298 = vector.extract_strided_slice %296 {offsets = [32, 0], sizes = [32, 128], strides = [1, 1]} : vector<128x128xf32> to vector<32x128xf32>
    %299 = arith.addf %297, %298 : vector<32x128xf32>
    %300 = vector.extract_strided_slice %296 {offsets = [64, 0], sizes = [32, 128], strides = [1, 1]} : vector<128x128xf32> to vector<32x128xf32>
    %301 = arith.addf %299, %300 : vector<32x128xf32>
    %302 = vector.extract_strided_slice %296 {offsets = [96, 0], sizes = [32, 128], strides = [1, 1]} : vector<128x128xf32> to vector<32x128xf32>
    %303 = arith.addf %301, %302 : vector<32x128xf32>
    %c0_176 = arith.constant 0 : index
    %c0_177 = arith.constant 0 : index
    %304 = vector.load %arg8[%c0_176, %c0_177] : memref<32x128xf32, #tpu.memory_space<vmem>>, vector<32x128xf32>
    %305 = arith.addf %304, %303 : vector<32x128xf32>
    %c0_178 = arith.constant 0 : index
    %c0_179 = arith.constant 0 : index
    %306 = vector.load %arg8[%c0_178, %c0_179] : memref<32x128xf32, #tpu.memory_space<vmem>>, vector<32x128xf32>
    tpu.vector_store %arg8[%c0_178, %c0_179], %305 {strides = array<i32>} : memref<32x128xf32, #tpu.memory_space<vmem>>, vector<32x128xf32>,
    %c16 = arith.constant 16 : index
    %c0_180 = arith.constant 0 : index
    %c0_181 = arith.constant 0 : index
    %307 = vector.load %arg1[%c16, %c0_180, %c0_181] : memref<27x33x128xf32, #tpu.memory_space<vmem>>, vector<1x33x128xf32>
    %308 = vector.shape_cast %307 : vector<1x33x128xf32> to vector<33x128xf32>
    %cst_182 = arith.constant dense<0.000000e+00> : vector<128x128xf32>
    %309 = tpu.matmul %2, %308, %cst_182 {dimension_numbers = #tpu.dot_dimension_numbers<[1], [0], [0], [1], [0, 0, 1, 1], [], []>} : vector<128x33xf32>, vector<33x128xf32>, vector<128x128xf32> -> vector<128x128xf32>
    %cst_183 = arith.constant 0.000000e+00 : f32
    %310 = vector.broadcast %cst_183 : f32 to vector<128x128xf32>
    %311 = arith.maximumf %309, %310 : vector<128x128xf32>
    %c16_184 = arith.constant 16 : index
    %c0_185 = arith.constant 0 : index
    %c0_186 = arith.constant 0 : index
    %312 = vector.load %arg3[%c16_184, %c0_185, %c0_186] : memref<27x128x1xf32, #tpu.memory_space<vmem>>, vector<1x128x1xf32>
    %313 = vector.shape_cast %312 : vector<1x128x1xf32> to vector<128x1xf32>
    %314 = vector.broadcast %313 : vector<128x1xf32> to vector<128x128xf32>
    %315 = arith.mulf %311, %314 : vector<128x128xf32>
    %316 = vector.extract_strided_slice %315 {offsets = [0, 0], sizes = [32, 128], strides = [1, 1]} : vector<128x128xf32> to vector<32x128xf32>
    %317 = vector.extract_strided_slice %315 {offsets = [32, 0], sizes = [32, 128], strides = [1, 1]} : vector<128x128xf32> to vector<32x128xf32>
    %318 = arith.addf %316, %317 : vector<32x128xf32>
    %319 = vector.extract_strided_slice %315 {offsets = [64, 0], sizes = [32, 128], strides = [1, 1]} : vector<128x128xf32> to vector<32x128xf32>
    %320 = arith.addf %318, %319 : vector<32x128xf32>
    %321 = vector.extract_strided_slice %315 {offsets = [96, 0], sizes = [32, 128], strides = [1, 1]} : vector<128x128xf32> to vector<32x128xf32>
    %322 = arith.addf %320, %321 : vector<32x128xf32>
    %c0_187 = arith.constant 0 : index
    %c0_188 = arith.constant 0 : index
    %323 = vector.load %arg8[%c0_187, %c0_188] : memref<32x128xf32, #tpu.memory_space<vmem>>, vector<32x128xf32>
    %324 = arith.addf %323, %322 : vector<32x128xf32>
    %c0_189 = arith.constant 0 : index
    %c0_190 = arith.constant 0 : index
    %325 = vector.load %arg8[%c0_189, %c0_190] : memref<32x128xf32, #tpu.memory_space<vmem>>, vector<32x128xf32>
    tpu.vector_store %arg8[%c0_189, %c0_190], %324 {strides = array<i32>} : memref<32x128xf32, #tpu.memory_space<vmem>>, vector<32x128xf32>,
    %c17 = arith.constant 17 : index
    %c0_191 = arith.constant 0 : index
    %c0_192 = arith.constant 0 : index
    %326 = vector.load %arg1[%c17, %c0_191, %c0_192] : memref<27x33x128xf32, #tpu.memory_space<vmem>>, vector<1x33x128xf32>
    %327 = vector.shape_cast %326 : vector<1x33x128xf32> to vector<33x128xf32>
    %cst_193 = arith.constant dense<0.000000e+00> : vector<128x128xf32>
    %328 = tpu.matmul %2, %327, %cst_193 {dimension_numbers = #tpu.dot_dimension_numbers<[1], [0], [0], [1], [0, 0, 1, 1], [], []>} : vector<128x33xf32>, vector<33x128xf32>, vector<128x128xf32> -> vector<128x128xf32>
    %cst_194 = arith.constant 0.000000e+00 : f32
    %329 = vector.broadcast %cst_194 : f32 to vector<128x128xf32>
    %330 = arith.maximumf %328, %329 : vector<128x128xf32>
    %c17_195 = arith.constant 17 : index
    %c0_196 = arith.constant 0 : index
    %c0_197 = arith.constant 0 : index
    %331 = vector.load %arg3[%c17_195, %c0_196, %c0_197] : memref<27x128x1xf32, #tpu.memory_space<vmem>>, vector<1x128x1xf32>
    %332 = vector.shape_cast %331 : vector<1x128x1xf32> to vector<128x1xf32>
    %333 = vector.broadcast %332 : vector<128x1xf32> to vector<128x128xf32>
    %334 = arith.mulf %330, %333 : vector<128x128xf32>
    %335 = vector.extract_strided_slice %334 {offsets = [0, 0], sizes = [32, 128], strides = [1, 1]} : vector<128x128xf32> to vector<32x128xf32>
    %336 = vector.extract_strided_slice %334 {offsets = [32, 0], sizes = [32, 128], strides = [1, 1]} : vector<128x128xf32> to vector<32x128xf32>
    %337 = arith.addf %335, %336 : vector<32x128xf32>
    %338 = vector.extract_strided_slice %334 {offsets = [64, 0], sizes = [32, 128], strides = [1, 1]} : vector<128x128xf32> to vector<32x128xf32>
    %339 = arith.addf %337, %338 : vector<32x128xf32>
    %340 = vector.extract_strided_slice %334 {offsets = [96, 0], sizes = [32, 128], strides = [1, 1]} : vector<128x128xf32> to vector<32x128xf32>
    %341 = arith.addf %339, %340 : vector<32x128xf32>
    %c0_198 = arith.constant 0 : index
    %c0_199 = arith.constant 0 : index
    %342 = vector.load %arg8[%c0_198, %c0_199] : memref<32x128xf32, #tpu.memory_space<vmem>>, vector<32x128xf32>
    %343 = arith.addf %342, %341 : vector<32x128xf32>
    %c0_200 = arith.constant 0 : index
    %c0_201 = arith.constant 0 : index
    %344 = vector.load %arg8[%c0_200, %c0_201] : memref<32x128xf32, #tpu.memory_space<vmem>>, vector<32x128xf32>
    tpu.vector_store %arg8[%c0_200, %c0_201], %343 {strides = array<i32>} : memref<32x128xf32, #tpu.memory_space<vmem>>, vector<32x128xf32>,
    %c18 = arith.constant 18 : index
    %c0_202 = arith.constant 0 : index
    %c0_203 = arith.constant 0 : index
    %345 = vector.load %arg1[%c18, %c0_202, %c0_203] : memref<27x33x128xf32, #tpu.memory_space<vmem>>, vector<1x33x128xf32>
    %346 = vector.shape_cast %345 : vector<1x33x128xf32> to vector<33x128xf32>
    %cst_204 = arith.constant dense<0.000000e+00> : vector<128x128xf32>
    %347 = tpu.matmul %2, %346, %cst_204 {dimension_numbers = #tpu.dot_dimension_numbers<[1], [0], [0], [1], [0, 0, 1, 1], [], []>} : vector<128x33xf32>, vector<33x128xf32>, vector<128x128xf32> -> vector<128x128xf32>
    %cst_205 = arith.constant 0.000000e+00 : f32
    %348 = vector.broadcast %cst_205 : f32 to vector<128x128xf32>
    %349 = arith.maximumf %347, %348 : vector<128x128xf32>
    %c18_206 = arith.constant 18 : index
    %c0_207 = arith.constant 0 : index
    %c0_208 = arith.constant 0 : index
    %350 = vector.load %arg3[%c18_206, %c0_207, %c0_208] : memref<27x128x1xf32, #tpu.memory_space<vmem>>, vector<1x128x1xf32>
    %351 = vector.shape_cast %350 : vector<1x128x1xf32> to vector<128x1xf32>
    %352 = vector.broadcast %351 : vector<128x1xf32> to vector<128x128xf32>
    %353 = arith.mulf %349, %352 : vector<128x128xf32>
    %354 = vector.extract_strided_slice %353 {offsets = [0, 0], sizes = [32, 128], strides = [1, 1]} : vector<128x128xf32> to vector<32x128xf32>
    %355 = vector.extract_strided_slice %353 {offsets = [32, 0], sizes = [32, 128], strides = [1, 1]} : vector<128x128xf32> to vector<32x128xf32>
    %356 = arith.addf %354, %355 : vector<32x128xf32>
    %357 = vector.extract_strided_slice %353 {offsets = [64, 0], sizes = [32, 128], strides = [1, 1]} : vector<128x128xf32> to vector<32x128xf32>
    %358 = arith.addf %356, %357 : vector<32x128xf32>
    %359 = vector.extract_strided_slice %353 {offsets = [96, 0], sizes = [32, 128], strides = [1, 1]} : vector<128x128xf32> to vector<32x128xf32>
    %360 = arith.addf %358, %359 : vector<32x128xf32>
    %c0_209 = arith.constant 0 : index
    %c0_210 = arith.constant 0 : index
    %361 = vector.load %arg8[%c0_209, %c0_210] : memref<32x128xf32, #tpu.memory_space<vmem>>, vector<32x128xf32>
    %362 = arith.addf %361, %360 : vector<32x128xf32>
    %c0_211 = arith.constant 0 : index
    %c0_212 = arith.constant 0 : index
    %363 = vector.load %arg8[%c0_211, %c0_212] : memref<32x128xf32, #tpu.memory_space<vmem>>, vector<32x128xf32>
    tpu.vector_store %arg8[%c0_211, %c0_212], %362 {strides = array<i32>} : memref<32x128xf32, #tpu.memory_space<vmem>>, vector<32x128xf32>,
    %c19 = arith.constant 19 : index
    %c0_213 = arith.constant 0 : index
    %c0_214 = arith.constant 0 : index
    %364 = vector.load %arg1[%c19, %c0_213, %c0_214] : memref<27x33x128xf32, #tpu.memory_space<vmem>>, vector<1x33x128xf32>
    %365 = vector.shape_cast %364 : vector<1x33x128xf32> to vector<33x128xf32>
    %cst_215 = arith.constant dense<0.000000e+00> : vector<128x128xf32>
    %366 = tpu.matmul %2, %365, %cst_215 {dimension_numbers = #tpu.dot_dimension_numbers<[1], [0], [0], [1], [0, 0, 1, 1], [], []>} : vector<128x33xf32>, vector<33x128xf32>, vector<128x128xf32> -> vector<128x128xf32>
    %cst_216 = arith.constant 0.000000e+00 : f32
    %367 = vector.broadcast %cst_216 : f32 to vector<128x128xf32>
    %368 = arith.maximumf %366, %367 : vector<128x128xf32>
    %c19_217 = arith.constant 19 : index
    %c0_218 = arith.constant 0 : index
    %c0_219 = arith.constant 0 : index
    %369 = vector.load %arg3[%c19_217, %c0_218, %c0_219] : memref<27x128x1xf32, #tpu.memory_space<vmem>>, vector<1x128x1xf32>
    %370 = vector.shape_cast %369 : vector<1x128x1xf32> to vector<128x1xf32>
    %371 = vector.broadcast %370 : vector<128x1xf32> to vector<128x128xf32>
    %372 = arith.mulf %368, %371 : vector<128x128xf32>
    %373 = vector.extract_strided_slice %372 {offsets = [0, 0], sizes = [32, 128], strides = [1, 1]} : vector<128x128xf32> to vector<32x128xf32>
    %374 = vector.extract_strided_slice %372 {offsets = [32, 0], sizes = [32, 128], strides = [1, 1]} : vector<128x128xf32> to vector<32x128xf32>
    %375 = arith.addf %373, %374 : vector<32x128xf32>
    %376 = vector.extract_strided_slice %372 {offsets = [64, 0], sizes = [32, 128], strides = [1, 1]} : vector<128x128xf32> to vector<32x128xf32>
    %377 = arith.addf %375, %376 : vector<32x128xf32>
    %378 = vector.extract_strided_slice %372 {offsets = [96, 0], sizes = [32, 128], strides = [1, 1]} : vector<128x128xf32> to vector<32x128xf32>
    %379 = arith.addf %377, %378 : vector<32x128xf32>
    %c0_220 = arith.constant 0 : index
    %c0_221 = arith.constant 0 : index
    %380 = vector.load %arg8[%c0_220, %c0_221] : memref<32x128xf32, #tpu.memory_space<vmem>>, vector<32x128xf32>
    %381 = arith.addf %380, %379 : vector<32x128xf32>
    %c0_222 = arith.constant 0 : index
    %c0_223 = arith.constant 0 : index
    %382 = vector.load %arg8[%c0_222, %c0_223] : memref<32x128xf32, #tpu.memory_space<vmem>>, vector<32x128xf32>
    tpu.vector_store %arg8[%c0_222, %c0_223], %381 {strides = array<i32>} : memref<32x128xf32, #tpu.memory_space<vmem>>, vector<32x128xf32>,
    %c20 = arith.constant 20 : index
    %c0_224 = arith.constant 0 : index
    %c0_225 = arith.constant 0 : index
    %383 = vector.load %arg1[%c20, %c0_224, %c0_225] : memref<27x33x128xf32, #tpu.memory_space<vmem>>, vector<1x33x128xf32>
    %384 = vector.shape_cast %383 : vector<1x33x128xf32> to vector<33x128xf32>
    %cst_226 = arith.constant dense<0.000000e+00> : vector<128x128xf32>
    %385 = tpu.matmul %2, %384, %cst_226 {dimension_numbers = #tpu.dot_dimension_numbers<[1], [0], [0], [1], [0, 0, 1, 1], [], []>} : vector<128x33xf32>, vector<33x128xf32>, vector<128x128xf32> -> vector<128x128xf32>
    %cst_227 = arith.constant 0.000000e+00 : f32
    %386 = vector.broadcast %cst_227 : f32 to vector<128x128xf32>
    %387 = arith.maximumf %385, %386 : vector<128x128xf32>
    %c20_228 = arith.constant 20 : index
    %c0_229 = arith.constant 0 : index
    %c0_230 = arith.constant 0 : index
    %388 = vector.load %arg3[%c20_228, %c0_229, %c0_230] : memref<27x128x1xf32, #tpu.memory_space<vmem>>, vector<1x128x1xf32>
    %389 = vector.shape_cast %388 : vector<1x128x1xf32> to vector<128x1xf32>
    %390 = vector.broadcast %389 : vector<128x1xf32> to vector<128x128xf32>
    %391 = arith.mulf %387, %390 : vector<128x128xf32>
    %392 = vector.extract_strided_slice %391 {offsets = [0, 0], sizes = [32, 128], strides = [1, 1]} : vector<128x128xf32> to vector<32x128xf32>
    %393 = vector.extract_strided_slice %391 {offsets = [32, 0], sizes = [32, 128], strides = [1, 1]} : vector<128x128xf32> to vector<32x128xf32>
    %394 = arith.addf %392, %393 : vector<32x128xf32>
    %395 = vector.extract_strided_slice %391 {offsets = [64, 0], sizes = [32, 128], strides = [1, 1]} : vector<128x128xf32> to vector<32x128xf32>
    %396 = arith.addf %394, %395 : vector<32x128xf32>
    %397 = vector.extract_strided_slice %391 {offsets = [96, 0], sizes = [32, 128], strides = [1, 1]} : vector<128x128xf32> to vector<32x128xf32>
    %398 = arith.addf %396, %397 : vector<32x128xf32>
    %c0_231 = arith.constant 0 : index
    %c0_232 = arith.constant 0 : index
    %399 = vector.load %arg8[%c0_231, %c0_232] : memref<32x128xf32, #tpu.memory_space<vmem>>, vector<32x128xf32>
    %400 = arith.addf %399, %398 : vector<32x128xf32>
    %c0_233 = arith.constant 0 : index
    %c0_234 = arith.constant 0 : index
    %401 = vector.load %arg8[%c0_233, %c0_234] : memref<32x128xf32, #tpu.memory_space<vmem>>, vector<32x128xf32>
    tpu.vector_store %arg8[%c0_233, %c0_234], %400 {strides = array<i32>} : memref<32x128xf32, #tpu.memory_space<vmem>>, vector<32x128xf32>,
    %c21 = arith.constant 21 : index
    %c0_235 = arith.constant 0 : index
    %c0_236 = arith.constant 0 : index
    %402 = vector.load %arg1[%c21, %c0_235, %c0_236] : memref<27x33x128xf32, #tpu.memory_space<vmem>>, vector<1x33x128xf32>
    %403 = vector.shape_cast %402 : vector<1x33x128xf32> to vector<33x128xf32>
    %cst_237 = arith.constant dense<0.000000e+00> : vector<128x128xf32>
    %404 = tpu.matmul %2, %403, %cst_237 {dimension_numbers = #tpu.dot_dimension_numbers<[1], [0], [0], [1], [0, 0, 1, 1], [], []>} : vector<128x33xf32>, vector<33x128xf32>, vector<128x128xf32> -> vector<128x128xf32>
    %cst_238 = arith.constant 0.000000e+00 : f32
    %405 = vector.broadcast %cst_238 : f32 to vector<128x128xf32>
    %406 = arith.maximumf %404, %405 : vector<128x128xf32>
    %c21_239 = arith.constant 21 : index
    %c0_240 = arith.constant 0 : index
    %c0_241 = arith.constant 0 : index
    %407 = vector.load %arg3[%c21_239, %c0_240, %c0_241] : memref<27x128x1xf32, #tpu.memory_space<vmem>>, vector<1x128x1xf32>
    %408 = vector.shape_cast %407 : vector<1x128x1xf32> to vector<128x1xf32>
    %409 = vector.broadcast %408 : vector<128x1xf32> to vector<128x128xf32>
    %410 = arith.mulf %406, %409 : vector<128x128xf32>
    %411 = vector.extract_strided_slice %410 {offsets = [0, 0], sizes = [32, 128], strides = [1, 1]} : vector<128x128xf32> to vector<32x128xf32>
    %412 = vector.extract_strided_slice %410 {offsets = [32, 0], sizes = [32, 128], strides = [1, 1]} : vector<128x128xf32> to vector<32x128xf32>
    %413 = arith.addf %411, %412 : vector<32x128xf32>
    %414 = vector.extract_strided_slice %410 {offsets = [64, 0], sizes = [32, 128], strides = [1, 1]} : vector<128x128xf32> to vector<32x128xf32>
    %415 = arith.addf %413, %414 : vector<32x128xf32>
    %416 = vector.extract_strided_slice %410 {offsets = [96, 0], sizes = [32, 128], strides = [1, 1]} : vector<128x128xf32> to vector<32x128xf32>
    %417 = arith.addf %415, %416 : vector<32x128xf32>
    %c0_242 = arith.constant 0 : index
    %c0_243 = arith.constant 0 : index
    %418 = vector.load %arg8[%c0_242, %c0_243] : memref<32x128xf32, #tpu.memory_space<vmem>>, vector<32x128xf32>
    %419 = arith.addf %418, %417 : vector<32x128xf32>
    %c0_244 = arith.constant 0 : index
    %c0_245 = arith.constant 0 : index
    %420 = vector.load %arg8[%c0_244, %c0_245] : memref<32x128xf32, #tpu.memory_space<vmem>>, vector<32x128xf32>
    tpu.vector_store %arg8[%c0_244, %c0_245], %419 {strides = array<i32>} : memref<32x128xf32, #tpu.memory_space<vmem>>, vector<32x128xf32>,
    %c22 = arith.constant 22 : index
    %c0_246 = arith.constant 0 : index
    %c0_247 = arith.constant 0 : index
    %421 = vector.load %arg1[%c22, %c0_246, %c0_247] : memref<27x33x128xf32, #tpu.memory_space<vmem>>, vector<1x33x128xf32>
    %422 = vector.shape_cast %421 : vector<1x33x128xf32> to vector<33x128xf32>
    %cst_248 = arith.constant dense<0.000000e+00> : vector<128x128xf32>
    %423 = tpu.matmul %2, %422, %cst_248 {dimension_numbers = #tpu.dot_dimension_numbers<[1], [0], [0], [1], [0, 0, 1, 1], [], []>} : vector<128x33xf32>, vector<33x128xf32>, vector<128x128xf32> -> vector<128x128xf32>
    %cst_249 = arith.constant 0.000000e+00 : f32
    %424 = vector.broadcast %cst_249 : f32 to vector<128x128xf32>
    %425 = arith.maximumf %423, %424 : vector<128x128xf32>
    %c22_250 = arith.constant 22 : index
    %c0_251 = arith.constant 0 : index
    %c0_252 = arith.constant 0 : index
    %426 = vector.load %arg3[%c22_250, %c0_251, %c0_252] : memref<27x128x1xf32, #tpu.memory_space<vmem>>, vector<1x128x1xf32>
    %427 = vector.shape_cast %426 : vector<1x128x1xf32> to vector<128x1xf32>
    %428 = vector.broadcast %427 : vector<128x1xf32> to vector<128x128xf32>
    %429 = arith.mulf %425, %428 : vector<128x128xf32>
    %430 = vector.extract_strided_slice %429 {offsets = [0, 0], sizes = [32, 128], strides = [1, 1]} : vector<128x128xf32> to vector<32x128xf32>
    %431 = vector.extract_strided_slice %429 {offsets = [32, 0], sizes = [32, 128], strides = [1, 1]} : vector<128x128xf32> to vector<32x128xf32>
    %432 = arith.addf %430, %431 : vector<32x128xf32>
    %433 = vector.extract_strided_slice %429 {offsets = [64, 0], sizes = [32, 128], strides = [1, 1]} : vector<128x128xf32> to vector<32x128xf32>
    %434 = arith.addf %432, %433 : vector<32x128xf32>
    %435 = vector.extract_strided_slice %429 {offsets = [96, 0], sizes = [32, 128], strides = [1, 1]} : vector<128x128xf32> to vector<32x128xf32>
    %436 = arith.addf %434, %435 : vector<32x128xf32>
    %c0_253 = arith.constant 0 : index
    %c0_254 = arith.constant 0 : index
    %437 = vector.load %arg8[%c0_253, %c0_254] : memref<32x128xf32, #tpu.memory_space<vmem>>, vector<32x128xf32>
    %438 = arith.addf %437, %436 : vector<32x128xf32>
    %c0_255 = arith.constant 0 : index
    %c0_256 = arith.constant 0 : index
    %439 = vector.load %arg8[%c0_255, %c0_256] : memref<32x128xf32, #tpu.memory_space<vmem>>, vector<32x128xf32>
    tpu.vector_store %arg8[%c0_255, %c0_256], %438 {strides = array<i32>} : memref<32x128xf32, #tpu.memory_space<vmem>>, vector<32x128xf32>,
    %c23 = arith.constant 23 : index
    %c0_257 = arith.constant 0 : index
    %c0_258 = arith.constant 0 : index
    %440 = vector.load %arg1[%c23, %c0_257, %c0_258] : memref<27x33x128xf32, #tpu.memory_space<vmem>>, vector<1x33x128xf32>
    %441 = vector.shape_cast %440 : vector<1x33x128xf32> to vector<33x128xf32>
    %cst_259 = arith.constant dense<0.000000e+00> : vector<128x128xf32>
    %442 = tpu.matmul %2, %441, %cst_259 {dimension_numbers = #tpu.dot_dimension_numbers<[1], [0], [0], [1], [0, 0, 1, 1], [], []>} : vector<128x33xf32>, vector<33x128xf32>, vector<128x128xf32> -> vector<128x128xf32>
    %cst_260 = arith.constant 0.000000e+00 : f32
    %443 = vector.broadcast %cst_260 : f32 to vector<128x128xf32>
    %444 = arith.maximumf %442, %443 : vector<128x128xf32>
    %c23_261 = arith.constant 23 : index
    %c0_262 = arith.constant 0 : index
    %c0_263 = arith.constant 0 : index
    %445 = vector.load %arg3[%c23_261, %c0_262, %c0_263] : memref<27x128x1xf32, #tpu.memory_space<vmem>>, vector<1x128x1xf32>
    %446 = vector.shape_cast %445 : vector<1x128x1xf32> to vector<128x1xf32>
    %447 = vector.broadcast %446 : vector<128x1xf32> to vector<128x128xf32>
    %448 = arith.mulf %444, %447 : vector<128x128xf32>
    %449 = vector.extract_strided_slice %448 {offsets = [0, 0], sizes = [32, 128], strides = [1, 1]} : vector<128x128xf32> to vector<32x128xf32>
    %450 = vector.extract_strided_slice %448 {offsets = [32, 0], sizes = [32, 128], strides = [1, 1]} : vector<128x128xf32> to vector<32x128xf32>
    %451 = arith.addf %449, %450 : vector<32x128xf32>
    %452 = vector.extract_strided_slice %448 {offsets = [64, 0], sizes = [32, 128], strides = [1, 1]} : vector<128x128xf32> to vector<32x128xf32>
    %453 = arith.addf %451, %452 : vector<32x128xf32>
    %454 = vector.extract_strided_slice %448 {offsets = [96, 0], sizes = [32, 128], strides = [1, 1]} : vector<128x128xf32> to vector<32x128xf32>
    %455 = arith.addf %453, %454 : vector<32x128xf32>
    %c0_264 = arith.constant 0 : index
    %c0_265 = arith.constant 0 : index
    %456 = vector.load %arg8[%c0_264, %c0_265] : memref<32x128xf32, #tpu.memory_space<vmem>>, vector<32x128xf32>
    %457 = arith.addf %456, %455 : vector<32x128xf32>
    %c0_266 = arith.constant 0 : index
    %c0_267 = arith.constant 0 : index
    %458 = vector.load %arg8[%c0_266, %c0_267] : memref<32x128xf32, #tpu.memory_space<vmem>>, vector<32x128xf32>
    tpu.vector_store %arg8[%c0_266, %c0_267], %457 {strides = array<i32>} : memref<32x128xf32, #tpu.memory_space<vmem>>, vector<32x128xf32>,
    %c24 = arith.constant 24 : index
    %c0_268 = arith.constant 0 : index
    %c0_269 = arith.constant 0 : index
    %459 = vector.load %arg1[%c24, %c0_268, %c0_269] : memref<27x33x128xf32, #tpu.memory_space<vmem>>, vector<1x33x128xf32>
    %460 = vector.shape_cast %459 : vector<1x33x128xf32> to vector<33x128xf32>
    %cst_270 = arith.constant dense<0.000000e+00> : vector<128x128xf32>
    %461 = tpu.matmul %2, %460, %cst_270 {dimension_numbers = #tpu.dot_dimension_numbers<[1], [0], [0], [1], [0, 0, 1, 1], [], []>} : vector<128x33xf32>, vector<33x128xf32>, vector<128x128xf32> -> vector<128x128xf32>
    %cst_271 = arith.constant 0.000000e+00 : f32
    %462 = vector.broadcast %cst_271 : f32 to vector<128x128xf32>
    %463 = arith.maximumf %461, %462 : vector<128x128xf32>
    %c24_272 = arith.constant 24 : index
    %c0_273 = arith.constant 0 : index
    %c0_274 = arith.constant 0 : index
    %464 = vector.load %arg3[%c24_272, %c0_273, %c0_274] : memref<27x128x1xf32, #tpu.memory_space<vmem>>, vector<1x128x1xf32>
    %465 = vector.shape_cast %464 : vector<1x128x1xf32> to vector<128x1xf32>
    %466 = vector.broadcast %465 : vector<128x1xf32> to vector<128x128xf32>
    %467 = arith.mulf %463, %466 : vector<128x128xf32>
    %468 = vector.extract_strided_slice %467 {offsets = [0, 0], sizes = [32, 128], strides = [1, 1]} : vector<128x128xf32> to vector<32x128xf32>
    %469 = vector.extract_strided_slice %467 {offsets = [32, 0], sizes = [32, 128], strides = [1, 1]} : vector<128x128xf32> to vector<32x128xf32>
    %470 = arith.addf %468, %469 : vector<32x128xf32>
    %471 = vector.extract_strided_slice %467 {offsets = [64, 0], sizes = [32, 128], strides = [1, 1]} : vector<128x128xf32> to vector<32x128xf32>
    %472 = arith.addf %470, %471 : vector<32x128xf32>
    %473 = vector.extract_strided_slice %467 {offsets = [96, 0], sizes = [32, 128], strides = [1, 1]} : vector<128x128xf32> to vector<32x128xf32>
    %474 = arith.addf %472, %473 : vector<32x128xf32>
    %c0_275 = arith.constant 0 : index
    %c0_276 = arith.constant 0 : index
    %475 = vector.load %arg8[%c0_275, %c0_276] : memref<32x128xf32, #tpu.memory_space<vmem>>, vector<32x128xf32>
    %476 = arith.addf %475, %474 : vector<32x128xf32>
    %c0_277 = arith.constant 0 : index
    %c0_278 = arith.constant 0 : index
    %477 = vector.load %arg8[%c0_277, %c0_278] : memref<32x128xf32, #tpu.memory_space<vmem>>, vector<32x128xf32>
    tpu.vector_store %arg8[%c0_277, %c0_278], %476 {strides = array<i32>} : memref<32x128xf32, #tpu.memory_space<vmem>>, vector<32x128xf32>,
    %c25 = arith.constant 25 : index
    %c0_279 = arith.constant 0 : index
    %c0_280 = arith.constant 0 : index
    %478 = vector.load %arg1[%c25, %c0_279, %c0_280] : memref<27x33x128xf32, #tpu.memory_space<vmem>>, vector<1x33x128xf32>
    %479 = vector.shape_cast %478 : vector<1x33x128xf32> to vector<33x128xf32>
    %cst_281 = arith.constant dense<0.000000e+00> : vector<128x128xf32>
    %480 = tpu.matmul %2, %479, %cst_281 {dimension_numbers = #tpu.dot_dimension_numbers<[1], [0], [0], [1], [0, 0, 1, 1], [], []>} : vector<128x33xf32>, vector<33x128xf32>, vector<128x128xf32> -> vector<128x128xf32>
    %cst_282 = arith.constant 0.000000e+00 : f32
    %481 = vector.broadcast %cst_282 : f32 to vector<128x128xf32>
    %482 = arith.maximumf %480, %481 : vector<128x128xf32>
    %c25_283 = arith.constant 25 : index
    %c0_284 = arith.constant 0 : index
    %c0_285 = arith.constant 0 : index
    %483 = vector.load %arg3[%c25_283, %c0_284, %c0_285] : memref<27x128x1xf32, #tpu.memory_space<vmem>>, vector<1x128x1xf32>
    %484 = vector.shape_cast %483 : vector<1x128x1xf32> to vector<128x1xf32>
    %485 = vector.broadcast %484 : vector<128x1xf32> to vector<128x128xf32>
    %486 = arith.mulf %482, %485 : vector<128x128xf32>
    %487 = vector.extract_strided_slice %486 {offsets = [0, 0], sizes = [32, 128], strides = [1, 1]} : vector<128x128xf32> to vector<32x128xf32>
    %488 = vector.extract_strided_slice %486 {offsets = [32, 0], sizes = [32, 128], strides = [1, 1]} : vector<128x128xf32> to vector<32x128xf32>
    %489 = arith.addf %487, %488 : vector<32x128xf32>
    %490 = vector.extract_strided_slice %486 {offsets = [64, 0], sizes = [32, 128], strides = [1, 1]} : vector<128x128xf32> to vector<32x128xf32>
    %491 = arith.addf %489, %490 : vector<32x128xf32>
    %492 = vector.extract_strided_slice %486 {offsets = [96, 0], sizes = [32, 128], strides = [1, 1]} : vector<128x128xf32> to vector<32x128xf32>
    %493 = arith.addf %491, %492 : vector<32x128xf32>
    %c0_286 = arith.constant 0 : index
    %c0_287 = arith.constant 0 : index
    %494 = vector.load %arg8[%c0_286, %c0_287] : memref<32x128xf32, #tpu.memory_space<vmem>>, vector<32x128xf32>
    %495 = arith.addf %494, %493 : vector<32x128xf32>
    %c0_288 = arith.constant 0 : index
    %c0_289 = arith.constant 0 : index
    %496 = vector.load %arg8[%c0_288, %c0_289] : memref<32x128xf32, #tpu.memory_space<vmem>>, vector<32x128xf32>
    tpu.vector_store %arg8[%c0_288, %c0_289], %495 {strides = array<i32>} : memref<32x128xf32, #tpu.memory_space<vmem>>, vector<32x128xf32>,
    %c26 = arith.constant 26 : index
    %c0_290 = arith.constant 0 : index
    %c0_291 = arith.constant 0 : index
    %497 = vector.load %arg1[%c26, %c0_290, %c0_291] : memref<27x33x128xf32, #tpu.memory_space<vmem>>, vector<1x33x128xf32>
    %498 = vector.shape_cast %497 : vector<1x33x128xf32> to vector<33x128xf32>
    %cst_292 = arith.constant dense<0.000000e+00> : vector<128x128xf32>
    %499 = tpu.matmul %2, %498, %cst_292 {dimension_numbers = #tpu.dot_dimension_numbers<[1], [0], [0], [1], [0, 0, 1, 1], [], []>} : vector<128x33xf32>, vector<33x128xf32>, vector<128x128xf32> -> vector<128x128xf32>
    %cst_293 = arith.constant 0.000000e+00 : f32
    %500 = vector.broadcast %cst_293 : f32 to vector<128x128xf32>
    %501 = arith.maximumf %499, %500 : vector<128x128xf32>
    %c26_294 = arith.constant 26 : index
    %c0_295 = arith.constant 0 : index
    %c0_296 = arith.constant 0 : index
    %502 = vector.load %arg3[%c26_294, %c0_295, %c0_296] : memref<27x128x1xf32, #tpu.memory_space<vmem>>, vector<1x128x1xf32>
    %503 = vector.shape_cast %502 : vector<1x128x1xf32> to vector<128x1xf32>
    %504 = vector.broadcast %503 : vector<128x1xf32> to vector<128x128xf32>
    %505 = arith.mulf %501, %504 : vector<128x128xf32>
    %506 = vector.extract_strided_slice %505 {offsets = [0, 0], sizes = [32, 128], strides = [1, 1]} : vector<128x128xf32> to vector<32x128xf32>
    %507 = vector.extract_strided_slice %505 {offsets = [32, 0], sizes = [32, 128], strides = [1, 1]} : vector<128x128xf32> to vector<32x128xf32>
    %508 = arith.addf %506, %507 : vector<32x128xf32>
    %509 = vector.extract_strided_slice %505 {offsets = [64, 0], sizes = [32, 128], strides = [1, 1]} : vector<128x128xf32> to vector<32x128xf32>
    %510 = arith.addf %508, %509 : vector<32x128xf32>
    %511 = vector.extract_strided_slice %505 {offsets = [96, 0], sizes = [32, 128], strides = [1, 1]} : vector<128x128xf32> to vector<32x128xf32>
    %512 = arith.addf %510, %511 : vector<32x128xf32>
    %c0_297 = arith.constant 0 : index
    %c0_298 = arith.constant 0 : index
    %513 = vector.load %arg8[%c0_297, %c0_298] : memref<32x128xf32, #tpu.memory_space<vmem>>, vector<32x128xf32>
    %514 = arith.addf %513, %512 : vector<32x128xf32>
    %c0_299 = arith.constant 0 : index
    %c0_300 = arith.constant 0 : index
    %515 = vector.load %arg8[%c0_299, %c0_300] : memref<32x128xf32, #tpu.memory_space<vmem>>, vector<32x128xf32>
    tpu.vector_store %arg8[%c0_299, %c0_300], %514 {strides = array<i32>} : memref<32x128xf32, #tpu.memory_space<vmem>>, vector<32x128xf32>,
    %c0_301 = arith.constant 0 : index
    %c0_302 = arith.constant 0 : index
    %516 = vector.load %arg8[%c0_301, %c0_302] : memref<32x128xf32, #tpu.memory_space<vmem>>, vector<32x128xf32>
    %c0_303 = arith.constant 0 : index
    %c0_304 = arith.constant 0 : index
    %517 = vector.load %arg4[%c0_303, %c0_304] : memref<32x1xf32, #tpu.memory_space<vmem>>, vector<32x1xf32>
    %518 = vector.broadcast %517 : vector<32x1xf32> to vector<32x128xf32>
    %519 = arith.mulf %516, %518 : vector<32x128xf32>
    %c0_305 = arith.constant 0 : index
    %c0_306 = arith.constant 0 : index
    %520 = vector.load %arg5[%c0_305, %c0_306] : memref<32x1xf32, #tpu.memory_space<vmem>>, vector<32x1xf32>
    %521 = vector.broadcast %520 : vector<32x1xf32> to vector<32x128xf32>
    %522 = arith.addf %519, %521 : vector<32x128xf32>
    %cst_307 = arith.constant 0.000000e+00 : f32
    %523 = vector.broadcast %cst_307 : f32 to vector<32x128xf32>
    %524 = arith.maximumf %522, %523 : vector<32x128xf32>
    %c0_308 = arith.constant 0 : index
    %c0_309 = arith.constant 0 : index
    %525 = vector.load %arg6[%c0_308, %c0_309] : memref<32x128xf32, #tpu.memory_space<vmem>>, vector<32x128xf32>
    %526 = arith.addf %524, %525 : vector<32x128xf32>
    %cst_310 = arith.constant 0.000000e+00 : f32
    %527 = vector.broadcast %cst_310 : f32 to vector<32x128xf32>
    %528 = arith.maximumf %526, %527 : vector<32x128xf32>
    %c0_311 = arith.constant 0 : index
    %c0_312 = arith.constant 0 : index
    %529 = vector.load %arg7[%c0_311, %c0_312] : memref<32x128xf32, #tpu.memory_space<vmem>>, vector<32x128xf32>
    tpu.vector_store %arg7[%c0_311, %c0_312], %528 {strides = array<i32>} : memref<32x128xf32, #tpu.memory_space<vmem>>, vector<32x128xf32>,
    return
  }
  func.func @transform_0(%arg0: i32) -> (i32, i32, i32) {
    %c0_i32 = arith.constant 0 : i32
    %c0_i32_0 = arith.constant 0 : i32
    %c0_i32_1 = arith.constant 0 : i32
    return %c0_i32, %c0_i32_0, %arg0 : i32, i32, i32
  }
  func.func @transform_1(%arg0: i32) -> (i32, i32) {
    %c0_i32 = arith.constant 0 : i32
    %c0_i32_0 = arith.constant 0 : i32
    %c0_i32_1 = arith.constant 0 : i32
    return %c0_i32, %c0_i32_0 : i32, i32
  }
  func.func @transform_2(%arg0: i32) -> (i32, i32, i32) {
    %c0_i32 = arith.constant 0 : i32
    %c0_i32_0 = arith.constant 0 : i32
    %c0_i32_1 = arith.constant 0 : i32
    %c0_i32_2 = arith.constant 0 : i32
    return %c0_i32, %c0_i32_0, %c0_i32_1 : i32, i32, i32
  }
  func.func @transform_3(%arg0: i32) -> (i32, i32) {
    %c0_i32 = arith.constant 0 : i32
    %c0_i32_0 = arith.constant 0 : i32
    %c0_i32_1 = arith.constant 0 : i32
    return %c0_i32, %c0_i32_0 : i32, i32
  }
  func.func @transform_4(%arg0: i32) -> (i32, i32) {
    %c0_i32 = arith.constant 0 : i32
    %c0_i32_0 = arith.constant 0 : i32
    %c0_i32_1 = arith.constant 0 : i32
    return %c0_i32, %c0_i32_0 : i32, i32
  }
  func.func @transform_5(%arg0: i32) -> (i32, i32) {
    %c0_i32 = arith.constant 0 : i32
    %c0_i32_0 = arith.constant 0 : i32
    return %c0_i32, %arg0 : i32, i32
  }
  func.func @transform_6(%arg0: i32) -> (i32, i32) {
    %c0_i32 = arith.constant 0 : i32
    %c0_i32_0 = arith.constant 0 : i32
    return %c0_i32, %arg0 : i32, i32
  }
}

</mosaic_0001>

<llo_original>
// kernel: tpu_custom_call.1
$region0: #{tpu_custom_call.1}
  #allocation0 [shape = 'u32[]', space=smem, size = 0x4, offset = 0x4, fixed_abs, tag = 'smem constant byte address 0x4 - core index']
  #allocation1 [shape = 'u32[144,128]{1,0:T(1,128)}', space=vmem, size = 0x12000, scoped, tag = 'internal scratch']
  #allocation2 [shape = 'f32[32,128]{1,0:T(8,128)}', space=vmem, size = 0x4000, scoped, tag = 'scratch operand']
  %s0 = inlined_call_operand.vmem [shape: f32[27,33,256], index: 0, kind: input, shape index: {}]
  %s1 = inlined_call_operand.vmem [shape: f32[128,33], index: 1, kind: input, shape index: {}]
  %s2 = inlined_call_operand.vmem [shape: f32[27,128,1], index: 2, kind: input, shape index: {}]
  %s3 = inlined_call_operand.vmem [shape: f32[32,1], index: 3, kind: input, shape index: {}]
  %s4 = inlined_call_operand.vmem [shape: f32[32,1], index: 4, kind: input, shape index: {}]
  %s5 = inlined_call_operand.vmem [shape: f32[32,256], index: 5, kind: input, shape index: {}]
  %s6 = inlined_call_operand.hbm [shape: f32[32,256], index: 6, kind: output, shape index: {}]
  %s7 = sld [smem:[#allocation0]]
  $region133: #{tpu_custom_call.1} parent=0
    _
  %s9 = ssub.s32 1, %s7
  %s10 = scalar_select 0, %s9, %s7
  $region1: #{tpu_custom_call.1} parent=0
    #allocation3 [shape = 'u8[1105920]{0}', space=vmem, size = 0x10e000, scoped, tag = 'input window, operand 0']
    #allocation4 [shape = 'u8[32768]{0}', space=vmem, size = 0x8000, scoped, tag = 'input window, operand 5']
    #allocation5 [shape = 'u8[32768]{0}', space=vmem, size = 0x8000, scoped, tag = 'output window, operand 0']
    #allocation6 [shape = 's32[2]{0}', space=sflag, size = 0x8, scoped, tag = 'scoped memory for tpu_custom_call.1']
    %11 = vsyncpa [#allocation6], 0
    %s12 = scalar_lea.sflag [#allocation6], 1
    %13 = vsyncpa %s12, 0
    loop: start=0, step=1, limit=4
    $region2: #{tpu_custom_call.1} parent=1 // loop_pre_header
      _
    $region3: #{tpu_custom_call.1} parent=1 // loop_header
      %s15 = sphi 0, %s19
      %p16 = scmp.ge.s32.totalorder %s15, 4
      %s25 = sphi 0, %s27
      %s28 = sphi 0, %s25
      %s29 = sphi 0, %s28
      %s45 = sphi 0, %s29
      %s49 = sphi 0, %s49
      %s51 = sphi 0, %s49
      %s52 = sphi 0, %s51
      %s66 = sphi 0, %s52
      %s70 = sphi 0, %s70
      %s72 = sphi 0, %s70
      %s73 = sphi 0, %s72
      %s87 = sphi 0, %s73
      %s91 = sphi 0, %s91
      %s93 = sphi 0, %s91
      %s94 = sphi 0, %s93
      %s108 = sphi 0, %s94
      %s112 = sphi 0, %s112
      %s114 = sphi 0, %s112
      %s115 = sphi 0, %s114
      %s129 = sphi 0, %s115
      %s135 = sphi 0, %s137
      %s138 = sphi 0, %s135
      %s139 = sphi 0, %s138
      %s155 = sphi 0, %s139
      %s161 = sphi 0, %s163
      %s164 = sphi 0, %s161
      %s165 = sphi 0, %s164
      %s181 = sphi 0, %s165
    $region4: #{tpu_custom_call.1} parent=1 // loop_header_branch
      %18 = sbr.rel (%p16) target = $region8
    $region5: #{tpu_custom_call.1} parent=1 // loop_body
      %s20 = ssub.s32 %s15, 1
      %s21 = ssub.s32 %s15, 2
      %s22 = sadd.s32 %s15, 1
      %s23 = ssub.s32 %s15, %s22
      %p24 = scmp.eq.s32.totalorder %s23, 0
      %s26 = sadd.s32 %s25, 1
      %s27 = scalar_select %p24, %s25, %s26
      %p30 = pneg %p24
      %p31 = scmp.eq.s32.totalorder %s15, 1
      %p32 = por %p30, %p31
      %p33 = scmp.ne.s32.totalorder %s25, %s28
      %p34 = scmp.eq.s32.totalorder %s15, 0
      %p35 = por %p33, %p34
      %p36 = scmp.ne.s32.totalorder %s25, %s28
      %p37 = scmp.eq.s32.totalorder %s20, 1
      %p38 = por %p36, %p37
      %p39 = scmp.ne.s32.totalorder %s28, %s29
      %p40 = scmp.eq.s32.totalorder %s20, 0
      %p41 = por %p39, %p40
      %p42 = scmp.ne.s32.totalorder %s28, %s29
      %p43 = scmp.eq.s32.totalorder %s21, 1
      %p44 = por %p42, %p43
      %p46 = scmp.ne.s32.totalorder %s29, %s45
      %p47 = scmp.eq.s32.totalorder %s21, 0
      %p48 = por %p46, %p47
      %s50 = sadd.s32 %s49, 1
      %p53 = scmp.eq.s32.totalorder %s15, 1
      %p54 = scmp.ne.s32.totalorder %s49, %s51
      %p55 = scmp.eq.s32.totalorder %s15, 0
      %p56 = por %p54, %p55
      %p57 = scmp.ne.s32.totalorder %s49, %s51
      %p58 = scmp.eq.s32.totalorder %s20, 1
      %p59 = por %p57, %p58
      %p60 = scmp.ne.s32.totalorder %s51, %s52
      %p61 = scmp.eq.s32.totalorder %s20, 0
      %p62 = por %p60, %p61
      %p63 = scmp.ne.s32.totalorder %s51, %s52
      %p64 = scmp.eq.s32.totalorder %s21, 1
      %p65 = por %p63, %p64
      %p67 = scmp.ne.s32.totalorder %s52, %s66
      %p68 = scmp.eq.s32.totalorder %s21, 0
      %p69 = por %p67, %p68
      %s71 = sadd.s32 %s70, 1
      %p74 = scmp.eq.s32.totalorder %s15, 1
      %p75 = scmp.ne.s32.totalorder %s70, %s72
      %p76 = scmp.eq.s32.totalorder %s15, 0
      %p77 = por %p75, %p76
      %p78 = scmp.ne.s32.totalorder %s70, %s72
      %p79 = scmp.eq.s32.totalorder %s20, 1
      %p80 = por %p78, %p79
      %p81 = scmp.ne.s32.totalorder %s72, %s73
      %p82 = scmp.eq.s32.totalorder %s20, 0
      %p83 = por %p81, %p82
      %p84 = scmp.ne.s32.totalorder %s72, %s73
      %p85 = scmp.eq.s32.totalorder %s21, 1
      %p86 = por %p84, %p85
      %p88 = scmp.ne.s32.totalorder %s73, %s87
      %p89 = scmp.eq.s32.totalorder %s21, 0
      %p90 = por %p88, %p89
      %s92 = sadd.s32 %s91, 1
      %p95 = scmp.eq.s32.totalorder %s15, 1
      %p96 = scmp.ne.s32.totalorder %s91, %s93
      %p97 = scmp.eq.s32.totalorder %s15, 0
      %p98 = por %p96, %p97
      %p99 = scmp.ne.s32.totalorder %s91, %s93
      %p100 = scmp.eq.s32.totalorder %s20, 1
      %p101 = por %p99, %p100
      %p102 = scmp.ne.s32.totalorder %s93, %s94
      %p103 = scmp.eq.s32.totalorder %s20, 0
      %p104 = por %p102, %p103
      %p105 = scmp.ne.s32.totalorder %s93, %s94
      %p106 = scmp.eq.s32.totalorder %s21, 1
      %p107 = por %p105, %p106
      %p109 = scmp.ne.s32.totalorder %s94, %s108
      %p110 = scmp.eq.s32.totalorder %s21, 0
      %p111 = por %p109, %p110
      %s113 = sadd.s32 %s112, 1
      %p116 = scmp.eq.s32.totalorder %s15, 1
      %p117 = scmp.ne.s32.totalorder %s112, %s114
      %p118 = scmp.eq.s32.totalorder %s15, 0
      %p119 = por %p117, %p118
      %p120 = scmp.ne.s32.totalorder %s112, %s114
      %p121 = scmp.eq.s32.totalorder %s20, 1
      %p122 = por %p120, %p121
      %p123 = scmp.ne.s32.totalorder %s114, %s115
      %p124 = scmp.eq.s32.totalorder %s20, 0
      %p125 = por %p123, %p124
      %p126 = scmp.ne.s32.totalorder %s114, %s115
      %p127 = scmp.eq.s32.totalorder %s21, 1
      %p128 = por %p126, %p127
      %p130 = scmp.ne.s32.totalorder %s115, %s129
      %p131 = scmp.eq.s32.totalorder %s21, 0
      %p132 = por %p130, %p131
      %s133 = ssub.s32 %s15, %s22
      %p134 = scmp.eq.s32.totalorder %s133, 0
      %s136 = sadd.s32 %s135, 1
      %s137 = scalar_select %p134, %s135, %s136
      %p140 = pneg %p134
      %p141 = scmp.eq.s32.totalorder %s15, 1
      %p142 = por %p140, %p141
      %p143 = scmp.ne.s32.totalorder %s135, %s138
      %p144 = scmp.eq.s32.totalorder %s15, 0
      %p145 = por %p143, %p144
      %p146 = scmp.ne.s32.totalorder %s135, %s138
      %p147 = scmp.eq.s32.totalorder %s20, 1
      %p148 = por %p146, %p147
      %p149 = scmp.ne.s32.totalorder %s138, %s139
      %p150 = scmp.eq.s32.totalorder %s20, 0
      %p151 = por %p149, %p150
      %p152 = scmp.ne.s32.totalorder %s138, %s139
      %p153 = scmp.eq.s32.totalorder %s21, 1
      %p154 = por %p152, %p153
      %p156 = scmp.ne.s32.totalorder %s139, %s155
      %p157 = scmp.eq.s32.totalorder %s21, 0
      %p158 = por %p156, %p157
      %s159 = ssub.s32 %s15, %s22
      %p160 = scmp.eq.s32.totalorder %s159, 0
      %s162 = sadd.s32 %s161, 1
      %s163 = scalar_select %p160, %s161, %s162
      %p166 = pneg %p160
      %p167 = scmp.eq.s32.totalorder %s15, 1
      %p168 = por %p166, %p167
      %p169 = scmp.ne.s32.totalorder %s161, %s164
      %p170 = scmp.eq.s32.totalorder %s15, 0
      %p171 = por %p169, %p170
      %p172 = scmp.ne.s32.totalorder %s161, %s164
      %p173 = scmp.eq.s32.totalorder %s20, 1
      %p174 = por %p172, %p173
      %p175 = scmp.ne.s32.totalorder %s164, %s165
      %p176 = scmp.eq.s32.totalorder %s20, 0
      %p177 = por %p175, %p176
      %p178 = scmp.ne.s32.totalorder %s164, %s165
      %p179 = scmp.eq.s32.totalorder %s21, 1
      %p180 = por %p178, %p179
      %p182 = scmp.ne.s32.totalorder %s165, %s181
      %p183 = scmp.eq.s32.totalorder %s21, 0
      %p184 = por %p182, %p183
      %p185 = scmp.le.s32.totalorder 1, %s15
      %p186 = scmp.lt.s32.totalorder %s15, 3
      %p187 = pnand %p185, %p186
      %p188 = pneg %p187
      // Predicated region
      $region9: #{tpu_custom_call.1} parent=5 // pred_check
        _
      $region10: #{tpu_custom_call.1} parent=5 // pred_check_branch
        %190 = sbr.rel (%p187) target = $region12
      $region11: #{tpu_custom_call.1} parent=5 // pred_region
        %s191 = ssub.s32 %s15, 1
        // Predicated region
        $region13: #{tpu_custom_call.1} parent=11 // pred_check
          %p192 = pneg %p62
        $region14: #{tpu_custom_call.1} parent=11 // pred_check_branch
          %194 = sbr.rel (%p192) target = $region16
        $region15: #{tpu_custom_call.1} parent=11 // pred_region
          _
        $region16: #{tpu_custom_call.1} parent=11 // pred_fallthru
          _
        // Predicated region
        $region17: #{tpu_custom_call.1} parent=11 // pred_check
          %p195 = pneg %p83
        $region18: #{tpu_custom_call.1} parent=11 // pred_check_branch
          %197 = sbr.rel (%p195) target = $region20
        $region19: #{tpu_custom_call.1} parent=11 // pred_region
          _
        $region20: #{tpu_custom_call.1} parent=11 // pred_fallthru
          _
        // Predicated region
        $region21: #{tpu_custom_call.1} parent=11 // pred_check
          %p198 = pneg %p104
        $region22: #{tpu_custom_call.1} parent=11 // pred_check_branch
          %200 = sbr.rel (%p198) target = $region24
        $region23: #{tpu_custom_call.1} parent=11 // pred_region
          _
        $region24: #{tpu_custom_call.1} parent=11 // pred_fallthru
          _
        // Predicated region
        $region25: #{tpu_custom_call.1} parent=11 // pred_check
          %p201 = pneg %p125
        $region26: #{tpu_custom_call.1} parent=11 // pred_check_branch
          %203 = sbr.rel (%p201) target = $region28
        $region27: #{tpu_custom_call.1} parent=11 // pred_region
          _
        $region28: #{tpu_custom_call.1} parent=11 // pred_fallthru
          _
      $region12: #{tpu_custom_call.1} parent=5 // pred_fallthru
        _
      %p204 = scmp.lt.s32.totalorder %s15, 2
      // Predicated region
      $region29: #{tpu_custom_call.1} parent=5 // pred_check
        %p205 = pneg %p204
      $region30: #{tpu_custom_call.1} parent=5 // pred_check_branch
        %207 = sbr.rel (%p205) target = $region32
      $region31: #{tpu_custom_call.1} parent=5 // pred_region
        // Predicated region
        $region33: #{tpu_custom_call.1} parent=31 // pred_check
          %p208 = pneg %p35
        $region34: #{tpu_custom_call.1} parent=31 // pred_check_branch
          %210 = sbr.rel (%p208) target = $region36
        $region35: #{tpu_custom_call.1} parent=31 // pred_region
          %s211 = sand.u32 %s25, 1
          %s212 = sand.u32 %s25, 1
          %s213 = smul.addr %s212, 1080
          %s214 = scalar_lea.vmem [#allocation3], %s213
          %s215 = smul.addr %s15, 8
          %s216 = scalar_lea.vmem %s0, %s215
          // Predicated region
          $region37: #{tpu_custom_call.1} parent=35 // pred_check
            _
          $region38: #{tpu_custom_call.1} parent=35 // pred_check_branch
            %218 = sbr.rel (0) target = $region40
          $region39: #{tpu_custom_call.1} parent=35 // pred_region
            // Predicated region
            $region41: #{tpu_custom_call.1} parent=39 // pred_check
              _
            $region42: #{tpu_custom_call.1} parent=39 // pred_check_branch
              %220 = sbr.rel (0) target = $region44
            $region43: #{tpu_custom_call.1} parent=39 // pred_region
              // Predicated region
              $region56: #{tpu_custom_call.1} parent=43 // pred_check
                _
              $region57: #{tpu_custom_call.1} parent=43 // pred_check_branch
                %504 = sbr.rel (0) target = $region59
              $region58: #{tpu_custom_call.1} parent=43 // pred_region
                loop: start=0, step=1, limit=1
                $region60: #{tpu_custom_call.1} parent=58 // loop_pre_header
                  _
                $region61: #{tpu_custom_call.1} parent=58 // loop_header
                  %s506 = sphi 0, %s510
                  %p507 = scmp.ge.s32.totalorder %s506, 1
                  %s511 = sphi %s216, %s216
                  %s512 = sphi %s214, %s214
                $region62: #{tpu_custom_call.1} parent=58 // loop_header_branch
                  %509 = sbr.rel (%p507) target = $region66
                $region63: #{tpu_custom_call.1} parent=58 // loop_body
                  %v513 = vld [vmem:[%s511] sm:$0xff]
                  %514 = vst [vmem:[%s512] sm:$0xff] %v513
                  %v515 = vld [vmem:[%s511 + $0x10] sm:$0xff]
                  %516 = vst [vmem:[%s512 + $0x8] sm:$0xff] %v515
                  %v517 = vld [vmem:[%s511 + $0x20] sm:$0xff]
                  %518 = vst [vmem:[%s512 + $0x10] sm:$0xff] %v517
                  %v519 = vld [vmem:[%s511 + $0x30] sm:$0xff]
                  %520 = vst [vmem:[%s512 + $0x18] sm:$0xff] %v519
                  %v521 = vld [vmem:[%s511 + $0x40] sm:$0xff]
                  %522 = vst [vmem:[%s512 + $0x20] sm:$0xff] %v521
                  %v523 = vld [vmem:[%s511 + $0x50] sm:$0xff]
                  %524 = vst [vmem:[%s512 + $0x28] sm:$0xff] %v523
                  %v525 = vld [vmem:[%s511 + $0x60] sm:$0xff]
                  %526 = vst [vmem:[%s512 + $0x30] sm:$0xff] %v525
                  %v527 = vld [vmem:[%s511 + $0x70] sm:$0xff]
                  %528 = vst [vmem:[%s512 + $0x38] sm:$0xff] %v527
                  %v529 = vld [vmem:[%s511 + $0x80] sm:$0xff]
                  %530 = vst [vmem:[%s512 + $0x40] sm:$0xff] %v529
                  %v531 = vld [vmem:[%s511 + $0x90] sm:$0xff]
                  %532 = vst [vmem:[%s512 + $0x48] sm:$0xff] %v531
                  %v533 = vld [vmem:[%s511 + $0xa0] sm:$0xff]
                  %534 = vst [vmem:[%s512 + $0x50] sm:$0xff] %v533
                  %v535 = vld [vmem:[%s511 + $0xb0] sm:$0xff]
                  %536 = vst [vmem:[%s512 + $0x58] sm:$0xff] %v535
                  %v537 = vld [vmem:[%s511 + $0xc0] sm:$0xff]
                  %538 = vst [vmem:[%s512 + $0x60] sm:$0xff] %v537
                  %v539 = vld [vmem:[%s511 + $0xd0] sm:$0xff]
                  %540 = vst [vmem:[%s512 + $0x68] sm:$0xff] %v539
                  %v541 = vld [vmem:[%s511 + $0xe0] sm:$0xff]
                  %542 = vst [vmem:[%s512 + $0x70] sm:$0xff] %v541
                  %v543 = vld [vmem:[%s511 + $0xf0] sm:$0xff]
                  %544 = vst [vmem:[%s512 + $0x78] sm:$0xff] %v543
                  %v545 = vld [vmem:[%s511 + $0x100] sm:$0xff]
                  %546 = vst [vmem:[%s512 + $0x80] sm:$0xff] %v545
                  %v547 = vld [vmem:[%s511 + $0x110] sm:$0xff]
                  %548 = vst [vmem:[%s512 + $0x88] sm:$0xff] %v547
                  %v549 = vld [vmem:[%s511 + $0x120] sm:$0xff]
                  %550 = vst [vmem:[%s512 + $0x90] sm:$0xff] %v549
                  %v551 = vld [vmem:[%s511 + $0x130] sm:$0xff]
                  %552 = vst [vmem:[%s512 + $0x98] sm:$0xff] %v551
                  %v553 = vld [vmem:[%s511 + $0x140] sm:$0xff]
                  %554 = vst [vmem:[%s512 + $0xa0] sm:$0xff] %v553
                  %v555 = vld [vmem:[%s511 + $0x150] sm:$0xff]
                  %556 = vst [vmem:[%s512 + $0xa8] sm:$0xff] %v555
                  %v557 = vld [vmem:[%s511 + $0x160] sm:$0xff]
                  %558 = vst [vmem:[%s512 + $0xb0] sm:$0xff] %v557
                  %v559 = vld [vmem:[%s511 + $0x170] sm:$0xff]
                  %560 = vst [vmem:[%s512 + $0xb8] sm:$0xff] %v559
                  %v561 = vld [vmem:[%s511 + $0x180] sm:$0xff]
                  %562 = vst [vmem:[%s512 + $0xc0] sm:$0xff] %v561
                  %v563 = vld [vmem:[%s511 + $0x190] sm:$0xff]
                  %564 = vst [vmem:[%s512 + $0xc8] sm:$0xff] %v563
                  %v565 = vld [vmem:[%s511 + $0x1a0] sm:$0xff]
                  %566 = vst [vmem:[%s512 + $0xd0] sm:$0xff] %v565
                  %v567 = vld [vmem:[%s511 + $0x1b0] sm:$0xff]
                  %568 = vst [vmem:[%s512 + $0xd8] sm:$0xff] %v567
                  %v569 = vld [vmem:[%s511 + $0x1c0] sm:$0xff]
                  %570 = vst [vmem:[%s512 + $0xe0] sm:$0xff] %v569
                  %v571 = vld [vmem:[%s511 + $0x1d0] sm:$0xff]
                  %572 = vst [vmem:[%s512 + $0xe8] sm:$0xff] %v571
                  %v573 = vld [vmem:[%s511 + $0x1e0] sm:$0xff]
                  %574 = vst [vmem:[%s512 + $0xf0] sm:$0xff] %v573
                  %v575 = vld [vmem:[%s511 + $0x1f0] sm:$0xff]
                  %576 = vst [vmem:[%s512 + $0xf8] sm:$0xff] %v575
                  %v577 = vld [vmem:[%s511 + $0x200] sm:$0xff]
                  %578 = vst [vmem:[%s512 + $0x100] sm:$0xff] %v577
                  %v579 = vld [vmem:[%s511 + $0x210] sm:$0xff]
                  %580 = vst [vmem:[%s512 + $0x108] sm:$0xff] %v579
                  %v581 = vld [vmem:[%s511 + $0x220] sm:$0xff]
                  %582 = vst [vmem:[%s512 + $0x110] sm:$0xff] %v581
                  %v583 = vld [vmem:[%s511 + $0x230] sm:$0xff]
                  %584 = vst [vmem:[%s512 + $0x118] sm:$0xff] %v583
                  %v585 = vld [vmem:[%s511 + $0x240] sm:$0xff]
                  %586 = vst [vmem:[%s512 + $0x120] sm:$0xff] %v585
                  %v587 = vld [vmem:[%s511 + $0x250] sm:$0xff]
                  %588 = vst [vmem:[%s512 + $0x128] sm:$0xff] %v587
                  %v589 = vld [vmem:[%s511 + $0x260] sm:$0xff]
                  %590 = vst [vmem:[%s512 + $0x130] sm:$0xff] %v589
                  %v591 = vld [vmem:[%s511 + $0x270] sm:$0xff]
                  %592 = vst [vmem:[%s512 + $0x138] sm:$0xff] %v591
                  %v593 = vld [vmem:[%s511 + $0x280] sm:$0xff]
                  %594 = vst [vmem:[%s512 + $0x140] sm:$0xff] %v593
                  %v595 = vld [vmem:[%s511 + $0x290] sm:$0xff]
                  %596 = vst [vmem:[%s512 + $0x148] sm:$0xff] %v595
                  %v597 = vld [vmem:[%s511 + $0x2a0] sm:$0xff]
                  %598 = vst [vmem:[%s512 + $0x150] sm:$0xff] %v597
                  %v599 = vld [vmem:[%s511 + $0x2b0] sm:$0xff]
                  %600 = vst [vmem:[%s512 + $0x158] sm:$0xff] %v599
                  %v601 = vld [vmem:[%s511 + $0x2c0] sm:$0xff]
                  %602 = vst [vmem:[%s512 + $0x160] sm:$0xff] %v601
                  %v603 = vld [vmem:[%s511 + $0x2d0] sm:$0xff]
                  %604 = vst [vmem:[%s512 + $0x168] sm:$0xff] %v603
                  %v605 = vld [vmem:[%s511 + $0x2e0] sm:$0xff]
                  %606 = vst [vmem:[%s512 + $0x170] sm:$0xff] %v605
                  %v607 = vld [vmem:[%s511 + $0x2f0] sm:$0xff]
                  %608 = vst [vmem:[%s512 + $0x178] sm:$0xff] %v607
                  %v609 = vld [vmem:[%s511 + $0x300] sm:$0xff]
                  %610 = vst [vmem:[%s512 + $0x180] sm:$0xff] %v609
                  %v611 = vld [vmem:[%s511 + $0x310] sm:$0xff]
                  %612 = vst [vmem:[%s512 + $0x188] sm:$0xff] %v611
                  %v613 = vld [vmem:[%s511 + $0x320] sm:$0xff]
                  %614 = vst [vmem:[%s512 + $0x190] sm:$0xff] %v613
                  %v615 = vld [vmem:[%s511 + $0x330] sm:$0xff]
                  %616 = vst [vmem:[%s512 + $0x198] sm:$0xff] %v615
                  %v617 = vld [vmem:[%s511 + $0x340] sm:$0xff]
                  %618 = vst [vmem:[%s512 + $0x1a0] sm:$0xff] %v617
                  %v619 = vld [vmem:[%s511 + $0x350] sm:$0xff]
                  %620 = vst [vmem:[%s512 + $0x1a8] sm:$0xff] %v619
                  %v621 = vld [vmem:[%s511 + $0x360] sm:$0xff]
                  %622 = vst [vmem:[%s512 + $0x1b0] sm:$0xff] %v621
                  %v623 = vld [vmem:[%s511 + $0x370] sm:$0xff]
                  %624 = vst [vmem:[%s512 + $0x1b8] sm:$0xff] %v623
                  %v625 = vld [vmem:[%s511 + $0x380] sm:$0xff]
                  %626 = vst [vmem:[%s512 + $0x1c0] sm:$0xff] %v625
                  %v627 = vld [vmem:[%s511 + $0x390] sm:$0xff]
                  %628 = vst [vmem:[%s512 + $0x1c8] sm:$0xff] %v627
                  %v629 = vld [vmem:[%s511 + $0x3a0] sm:$0xff]
                  %630 = vst [vmem:[%s512 + $0x1d0] sm:$0xff] %v629
                  %v631 = vld [vmem:[%s511 + $0x3b0] sm:$0xff]
                  %632 = vst [vmem:[%s512 + $0x1d8] sm:$0xff] %v631
                  %v633 = vld [vmem:[%s511 + $0x3c0] sm:$0xff]
                  %634 = vst [vmem:[%s512 + $0x1e0] sm:$0xff] %v633
                  %v635 = vld [vmem:[%s511 + $0x3d0] sm:$0xff]
                  %636 = vst [vmem:[%s512 + $0x1e8] sm:$0xff] %v635
                  %v637 = vld [vmem:[%s511 + $0x3e0] sm:$0xff]
                  %638 = vst [vmem:[%s512 + $0x1f0] sm:$0xff] %v637
                  %v639 = vld [vmem:[%s511 + $0x3f0] sm:$0xff]
                  %640 = vst [vmem:[%s512 + $0x1f8] sm:$0xff] %v639
                  %v641 = vld [vmem:[%s511 + $0x400] sm:$0xff]
                  %642 = vst [vmem:[%s512 + $0x200] sm:$0xff] %v641
                  %v643 = vld [vmem:[%s511 + $0x410] sm:$0xff]
                  %644 = vst [vmem:[%s512 + $0x208] sm:$0xff] %v643
                  %v645 = vld [vmem:[%s511 + $0x420] sm:$0xff]
                  %646 = vst [vmem:[%s512 + $0x210] sm:$0xff] %v645
                  %v647 = vld [vmem:[%s511 + $0x430] sm:$0xff]
                  %648 = vst [vmem:[%s512 + $0x218] sm:$0xff] %v647
                  %v649 = vld [vmem:[%s511 + $0x440] sm:$0xff]
                  %650 = vst [vmem:[%s512 + $0x220] sm:$0xff] %v649
                  %v651 = vld [vmem:[%s511 + $0x450] sm:$0xff]
                  %652 = vst [vmem:[%s512 + $0x228] sm:$0xff] %v651
                  %v653 = vld [vmem:[%s511 + $0x460] sm:$0xff]
                  %654 = vst [vmem:[%s512 + $0x230] sm:$0xff] %v653
                  %v655 = vld [vmem:[%s511 + $0x470] sm:$0xff]
                  %656 = vst [vmem:[%s512 + $0x238] sm:$0xff] %v655
                  %v657 = vld [vmem:[%s511 + $0x480] sm:$0xff]
                  %658 = vst [vmem:[%s512 + $0x240] sm:$0xff] %v657
                  %v659 = vld [vmem:[%s511 + $0x490] sm:$0xff]
                  %660 = vst [vmem:[%s512 + $0x248] sm:$0xff] %v659
                  %v661 = vld [vmem:[%s511 + $0x4a0] sm:$0xff]
                  %662 = vst [vmem:[%s512 + $0x250] sm:$0xff] %v661
                  %v663 = vld [vmem:[%s511 + $0x4b0] sm:$0xff]
                  %664 = vst [vmem:[%s512 + $0x258] sm:$0xff] %v663
                  %v665 = vld [vmem:[%s511 + $0x4c0] sm:$0xff]
                  %666 = vst [vmem:[%s512 + $0x260] sm:$0xff] %v665
                  %v667 = vld [vmem:[%s511 + $0x4d0] sm:$0xff]
                  %668 = vst [vmem:[%s512 + $0x268] sm:$0xff] %v667
                  %v669 = vld [vmem:[%s511 + $0x4e0] sm:$0xff]
                  %670 = vst [vmem:[%s512 + $0x270] sm:$0xff] %v669
                  %v671 = vld [vmem:[%s511 + $0x4f0] sm:$0xff]
                  %672 = vst [vmem:[%s512 + $0x278] sm:$0xff] %v671
                  %v673 = vld [vmem:[%s511 + $0x500] sm:$0xff]
                  %674 = vst [vmem:[%s512 + $0x280] sm:$0xff] %v673
                  %v675 = vld [vmem:[%s511 + $0x510] sm:$0xff]
                  %676 = vst [vmem:[%s512 + $0x288] sm:$0xff] %v675
                  %v677 = vld [vmem:[%s511 + $0x520] sm:$0xff]
                  %678 = vst [vmem:[%s512 + $0x290] sm:$0xff] %v677
                  %v679 = vld [vmem:[%s511 + $0x530] sm:$0xff]
                  %680 = vst [vmem:[%s512 + $0x298] sm:$0xff] %v679
                  %v681 = vld [vmem:[%s511 + $0x540] sm:$0xff]
                  %682 = vst [vmem:[%s512 + $0x2a0] sm:$0xff] %v681
                  %v683 = vld [vmem:[%s511 + $0x550] sm:$0xff]
                  %684 = vst [vmem:[%s512 + $0x2a8] sm:$0xff] %v683
                  %v685 = vld [vmem:[%s511 + $0x560] sm:$0xff]
                  %686 = vst [vmem:[%s512 + $0x2b0] sm:$0xff] %v685
                  %v687 = vld [vmem:[%s511 + $0x570] sm:$0xff]
                  %688 = vst [vmem:[%s512 + $0x2b8] sm:$0xff] %v687
                  %v689 = vld [vmem:[%s511 + $0x580] sm:$0xff]
                  %690 = vst [vmem:[%s512 + $0x2c0] sm:$0xff] %v689
                  %v691 = vld [vmem:[%s511 + $0x590] sm:$0xff]
                  %692 = vst [vmem:[%s512 + $0x2c8] sm:$0xff] %v691
                  %v693 = vld [vmem:[%s511 + $0x5a0] sm:$0xff]
                  %694 = vst [vmem:[%s512 + $0x2d0] sm:$0xff] %v693
                  %v695 = vld [vmem:[%s511 + $0x5b0] sm:$0xff]
                  %696 = vst [vmem:[%s512 + $0x2d8] sm:$0xff] %v695
                  %v697 = vld [vmem:[%s511 + $0x5c0] sm:$0xff]
                  %698 = vst [vmem:[%s512 + $0x2e0] sm:$0xff] %v697
                  %v699 = vld [vmem:[%s511 + $0x5d0] sm:$0xff]
                  %700 = vst [vmem:[%s512 + $0x2e8] sm:$0xff] %v699
                  %v701 = vld [vmem:[%s511 + $0x5e0] sm:$0xff]
                  %702 = vst [vmem:[%s512 + $0x2f0] sm:$0xff] %v701
                  %v703 = vld [vmem:[%s511 + $0x5f0] sm:$0xff]
                  %704 = vst [vmem:[%s512 + $0x2f8] sm:$0xff] %v703
                  %v705 = vld [vmem:[%s511 + $0x600] sm:$0xff]
                  %706 = vst [vmem:[%s512 + $0x300] sm:$0xff] %v705
                  %v707 = vld [vmem:[%s511 + $0x610] sm:$0xff]
                  %708 = vst [vmem:[%s512 + $0x308] sm:$0xff] %v707
                  %v709 = vld [vmem:[%s511 + $0x620] sm:$0xff]
                  %710 = vst [vmem:[%s512 + $0x310] sm:$0xff] %v709
                  %v711 = vld [vmem:[%s511 + $0x630] sm:$0xff]
                  %712 = vst [vmem:[%s512 + $0x318] sm:$0xff] %v711
                  %v713 = vld [vmem:[%s511 + $0x640] sm:$0xff]
                  %714 = vst [vmem:[%s512 + $0x320] sm:$0xff] %v713
                  %v715 = vld [vmem:[%s511 + $0x650] sm:$0xff]
                  %716 = vst [vmem:[%s512 + $0x328] sm:$0xff] %v715
                  %v717 = vld [vmem:[%s511 + $0x660] sm:$0xff]
                  %718 = vst [vmem:[%s512 + $0x330] sm:$0xff] %v717
                  %v719 = vld [vmem:[%s511 + $0x670] sm:$0xff]
                  %720 = vst [vmem:[%s512 + $0x338] sm:$0xff] %v719
                  %v721 = vld [vmem:[%s511 + $0x680] sm:$0xff]
                  %722 = vst [vmem:[%s512 + $0x340] sm:$0xff] %v721
                  %v723 = vld [vmem:[%s511 + $0x690] sm:$0xff]
                  %724 = vst [vmem:[%s512 + $0x348] sm:$0xff] %v723
                  %v725 = vld [vmem:[%s511 + $0x6a0] sm:$0xff]
                  %726 = vst [vmem:[%s512 + $0x350] sm:$0xff] %v725
                  %v727 = vld [vmem:[%s511 + $0x6b0] sm:$0xff]
                  %728 = vst [vmem:[%s512 + $0x358] sm:$0xff] %v727
                  %v729 = vld [vmem:[%s511 + $0x6c0] sm:$0xff]
                  %730 = vst [vmem:[%s512 + $0x360] sm:$0xff] %v729
                  %v731 = vld [vmem:[%s511 + $0x6d0] sm:$0xff]
                  %732 = vst [vmem:[%s512 + $0x368] sm:$0xff] %v731
                  %v733 = vld [vmem:[%s511 + $0x6e0] sm:$0xff]
                  %734 = vst [vmem:[%s512 + $0x370] sm:$0xff] %v733
                  %v735 = vld [vmem:[%s511 + $0x6f0] sm:$0xff]
                  %736 = vst [vmem:[%s512 + $0x378] sm:$0xff] %v735
                  %v737 = vld [vmem:[%s511 + $0x700] sm:$0xff]
                  %738 = vst [vmem:[%s512 + $0x380] sm:$0xff] %v737
                  %v739 = vld [vmem:[%s511 + $0x710] sm:$0xff]
                  %740 = vst [vmem:[%s512 + $0x388] sm:$0xff] %v739
                  %v741 = vld [vmem:[%s511 + $0x720] sm:$0xff]
                  %742 = vst [vmem:[%s512 + $0x390] sm:$0xff] %v741
                  %v743 = vld [vmem:[%s511 + $0x730] sm:$0xff]
                  %744 = vst [vmem:[%s512 + $0x398] sm:$0xff] %v743
                  %v745 = vld [vmem:[%s511 + $0x740] sm:$0xff]
                  %746 = vst [vmem:[%s512 + $0x3a0] sm:$0xff] %v745
                  %v747 = vld [vmem:[%s511 + $0x750] sm:$0xff]
                  %748 = vst [vmem:[%s512 + $0x3a8] sm:$0xff] %v747
                  %v749 = vld [vmem:[%s511 + $0x760] sm:$0xff]
                  %750 = vst [vmem:[%s512 + $0x3b0] sm:$0xff] %v749
                  %v751 = vld [vmem:[%s511 + $0x770] sm:$0xff]
                  %752 = vst [vmem:[%s512 + $0x3b8] sm:$0xff] %v751
                  %v753 = vld [vmem:[%s511 + $0x780] sm:$0xff]
                  %754 = vst [vmem:[%s512 + $0x3c0] sm:$0xff] %v753
                  %v755 = vld [vmem:[%s511 + $0x790] sm:$0xff]
                  %756 = vst [vmem:[%s512 + $0x3c8] sm:$0xff] %v755
                  %v757 = vld [vmem:[%s511 + $0x7a0] sm:$0xff]
                  %758 = vst [vmem:[%s512 + $0x3d0] sm:$0xff] %v757
                  %v759 = vld [vmem:[%s511 + $0x7b0] sm:$0xff]
                  %760 = vst [vmem:[%s512 + $0x3d8] sm:$0xff] %v759
                  %v761 = vld [vmem:[%s511 + $0x7c0] sm:$0xff]
                  %762 = vst [vmem:[%s512 + $0x3e0] sm:$0xff] %v761
                  %v763 = vld [vmem:[%s511 + $0x7d0] sm:$0xff]
                  %764 = vst [vmem:[%s512 + $0x3e8] sm:$0xff] %v763
                  %v765 = vld [vmem:[%s511 + $0x7e0] sm:$0xff]
                  %766 = vst [vmem:[%s512 + $0x3f0] sm:$0xff] %v765
                  %v767 = vld [vmem:[%s511 + $0x7f0] sm:$0xff]
                  %768 = vst [vmem:[%s512 + $0x3f8] sm:$0xff] %v767
                  %v769 = vld [vmem:[%s511 + $0x800] sm:$0xff]
                  %770 = vst [vmem:[%s512 + $0x400] sm:$0xff] %v769
                  %v771 = vld [vmem:[%s511 + $0x810] sm:$0xff]
                  %772 = vst [vmem:[%s512 + $0x408] sm:$0xff] %v771
                  %v773 = vld [vmem:[%s511 + $0x820] sm:$0xff]
                  %774 = vst [vmem:[%s512 + $0x410] sm:$0xff] %v773
                  %v775 = vld [vmem:[%s511 + $0x830] sm:$0xff]
                  %776 = vst [vmem:[%s512 + $0x418] sm:$0xff] %v775
                  %v777 = vld [vmem:[%s511 + $0x840] sm:$0xff]
                  %778 = vst [vmem:[%s512 + $0x420] sm:$0xff] %v777
                  %v779 = vld [vmem:[%s511 + $0x850] sm:$0xff]
                  %780 = vst [vmem:[%s512 + $0x428] sm:$0xff] %v779
                  %v781 = vld [vmem:[%s511 + $0x860] sm:$0xff]
                  %782 = vst [vmem:[%s512 + $0x430] sm:$0xff] %v781
                $region64: #{tpu_custom_call.1} parent=58 // loop_footer
                  %s510 = sadd.s32 1, %s506
                $region65: #{tpu_custom_call.1} parent=58 // loop_footer_branch
                  %505 = sbr.rel target = $region61
                $region66: #{tpu_custom_call.1} parent=58 // loop_exit
                  _
              $region59: #{tpu_custom_call.1} parent=43 // pred_fallthru
                _
              // Predicated region
              $region67: #{tpu_custom_call.1} parent=43 // pred_check
                _
              $region68: #{tpu_custom_call.1} parent=43 // pred_check_branch
                %784 = sbr.rel target = $region70
              $region69: #{tpu_custom_call.1} parent=43 // pred_region
                _
              $region70: #{tpu_custom_call.1} parent=43 // pred_fallthru
                _
            $region44: #{tpu_custom_call.1} parent=39 // pred_fallthru
              _
            // Predicated region
            $region45: #{tpu_custom_call.1} parent=39 // pred_check
              _
            $region46: #{tpu_custom_call.1} parent=39 // pred_check_branch
              %222 = sbr.rel target = $region48
            $region47: #{tpu_custom_call.1} parent=39 // pred_region
              %s224 = ssub.s32 256, 1
              loop: start=0, step=1, limit=1
              $region49: #{tpu_custom_call.1} parent=47 // loop_pre_header
                _
              $region50: #{tpu_custom_call.1} parent=47 // loop_header
                %s226 = sphi 0, %s230
                %p227 = scmp.ge.s32.totalorder %s226, 1
                %s231 = sphi %s216, %s216
                %s232 = sphi %s214, %s214
              $region51: #{tpu_custom_call.1} parent=47 // loop_header_branch
                %229 = sbr.rel (%p227) target = $region55
              $region52: #{tpu_custom_call.1} parent=47 // loop_body
                %v233 = vld [vmem:[%s231] sm:%s224]
                %234 = vst [vmem:[%s232] sm:%s224] %v233
                %v235 = vld [vmem:[%s231 + $0x10] sm:%s224]
                %236 = vst [vmem:[%s232 + $0x8] sm:%s224] %v235
                %v237 = vld [vmem:[%s231 + $0x20] sm:%s224]
                %238 = vst [vmem:[%s232 + $0x10] sm:%s224] %v237
                %v239 = vld [vmem:[%s231 + $0x30] sm:%s224]
                %240 = vst [vmem:[%s232 + $0x18] sm:%s224] %v239
                %v241 = vld [vmem:[%s231 + $0x40] sm:%s224]
                %242 = vst [vmem:[%s232 + $0x20] sm:%s224] %v241
                %v243 = vld [vmem:[%s231 + $0x50] sm:%s224]
                %244 = vst [vmem:[%s232 + $0x28] sm:%s224] %v243
                %v245 = vld [vmem:[%s231 + $0x60] sm:%s224]
                %246 = vst [vmem:[%s232 + $0x30] sm:%s224] %v245
                %v247 = vld [vmem:[%s231 + $0x70] sm:%s224]
                %248 = vst [vmem:[%s232 + $0x38] sm:%s224] %v247
                %v249 = vld [vmem:[%s231 + $0x80] sm:%s224]
                %250 = vst [vmem:[%s232 + $0x40] sm:%s224] %v249
                %v251 = vld [vmem:[%s231 + $0x90] sm:%s224]
                %252 = vst [vmem:[%s232 + $0x48] sm:%s224] %v251
                %v253 = vld [vmem:[%s231 + $0xa0] sm:%s224]
                %254 = vst [vmem:[%s232 + $0x50] sm:%s224] %v253
                %v255 = vld [vmem:[%s231 + $0xb0] sm:%s224]
                %256 = vst [vmem:[%s232 + $0x58] sm:%s224] %v255
                %v257 = vld [vmem:[%s231 + $0xc0] sm:%s224]
                %258 = vst [vmem:[%s232 + $0x60] sm:%s224] %v257
                %v259 = vld [vmem:[%s231 + $0xd0] sm:%s224]
                %260 = vst [vmem:[%s232 + $0x68] sm:%s224] %v259
                %v261 = vld [vmem:[%s231 + $0xe0] sm:%s224]
                %262 = vst [vmem:[%s232 + $0x70] sm:%s224] %v261
                %v263 = vld [vmem:[%s231 + $0xf0] sm:%s224]
                %264 = vst [vmem:[%s232 + $0x78] sm:%s224] %v263
                %v265 = vld [vmem:[%s231 + $0x100] sm:%s224]
                %266 = vst [vmem:[%s232 + $0x80] sm:%s224] %v265
                %v267 = vld [vmem:[%s231 + $0x110] sm:%s224]
                %268 = vst [vmem:[%s232 + $0x88] sm:%s224] %v267
                %v269 = vld [vmem:[%s231 + $0x120] sm:%s224]
                %270 = vst [vmem:[%s232 + $0x90] sm:%s224] %v269
                %v271 = vld [vmem:[%s231 + $0x130] sm:%s224]
                %272 = vst [vmem:[%s232 + $0x98] sm:%s224] %v271
                %v273 = vld [vmem:[%s231 + $0x140] sm:%s224]
                %274 = vst [vmem:[%s232 + $0xa0] sm:%s224] %v273
                %v275 = vld [vmem:[%s231 + $0x150] sm:%s224]
                %276 = vst [vmem:[%s232 + $0xa8] sm:%s224] %v275
                %v277 = vld [vmem:[%s231 + $0x160] sm:%s224]
                %278 = vst [vmem:[%s232 + $0xb0] sm:%s224] %v277
                %v279 = vld [vmem:[%s231 + $0x170] sm:%s224]
                %280 = vst [vmem:[%s232 + $0xb8] sm:%s224] %v279
                %v281 = vld [vmem:[%s231 + $0x180] sm:%s224]
                %282 = vst [vmem:[%s232 + $0xc0] sm:%s224] %v281
                %v283 = vld [vmem:[%s231 + $0x190] sm:%s224]
                %284 = vst [vmem:[%s232 + $0xc8] sm:%s224] %v283
                %v285 = vld [vmem:[%s231 + $0x1a0] sm:%s224]
                %286 = vst [vmem:[%s232 + $0xd0] sm:%s224] %v285
                %v287 = vld [vmem:[%s231 + $0x1b0] sm:%s224]
                %288 = vst [vmem:[%s232 + $0xd8] sm:%s224] %v287
                %v289 = vld [vmem:[%s231 + $0x1c0] sm:%s224]
                %290 = vst [vmem:[%s232 + $0xe0] sm:%s224] %v289
                %v291 = vld [vmem:[%s231 + $0x1d0] sm:%s224]
                %292 = vst [vmem:[%s232 + $0xe8] sm:%s224] %v291
                %v293 = vld [vmem:[%s231 + $0x1e0] sm:%s224]
                %294 = vst [vmem:[%s232 + $0xf0] sm:%s224] %v293
                %v295 = vld [vmem:[%s231 + $0x1f0] sm:%s224]
                %296 = vst [vmem:[%s232 + $0xf8] sm:%s224] %v295
                %v297 = vld [vmem:[%s231 + $0x200] sm:%s224]
                %298 = vst [vmem:[%s232 + $0x100] sm:%s224] %v297
                %v299 = vld [vmem:[%s231 + $0x210] sm:%s224]
                %300 = vst [vmem:[%s232 + $0x108] sm:%s224] %v299
                %v301 = vld [vmem:[%s231 + $0x220] sm:%s224]
                %302 = vst [vmem:[%s232 + $0x110] sm:%s224] %v301
                %v303 = vld [vmem:[%s231 + $0x230] sm:%s224]
                %304 = vst [vmem:[%s232 + $0x118] sm:%s224] %v303
                %v305 = vld [vmem:[%s231 + $0x240] sm:%s224]
                %306 = vst [vmem:[%s232 + $0x120] sm:%s224] %v305
                %v307 = vld [vmem:[%s231 + $0x250] sm:%s224]
                %308 = vst [vmem:[%s232 + $0x128] sm:%s224] %v307
                %v309 = vld [vmem:[%s231 + $0x260] sm:%s224]
                %310 = vst [vmem:[%s232 + $0x130] sm:%s224] %v309
                %v311 = vld [vmem:[%s231 + $0x270] sm:%s224]
                %312 = vst [vmem:[%s232 + $0x138] sm:%s224] %v311
                %v313 = vld [vmem:[%s231 + $0x280] sm:%s224]
                %314 = vst [vmem:[%s232 + $0x140] sm:%s224] %v313
                %v315 = vld [vmem:[%s231 + $0x290] sm:%s224]
                %316 = vst [vmem:[%s232 + $0x148] sm:%s224] %v315
                %v317 = vld [vmem:[%s231 + $0x2a0] sm:%s224]
                %318 = vst [vmem:[%s232 + $0x150] sm:%s224] %v317
                %v319 = vld [vmem:[%s231 + $0x2b0] sm:%s224]
                %320 = vst [vmem:[%s232 + $0x158] sm:%s224] %v319
                %v321 = vld [vmem:[%s231 + $0x2c0] sm:%s224]
                %322 = vst [vmem:[%s232 + $0x160] sm:%s224] %v321
                %v323 = vld [vmem:[%s231 + $0x2d0] sm:%s224]
                %324 = vst [vmem:[%s232 + $0x168] sm:%s224] %v323
                %v325 = vld [vmem:[%s231 + $0x2e0] sm:%s224]
                %326 = vst [vmem:[%s232 + $0x170] sm:%s224] %v325
                %v327 = vld [vmem:[%s231 + $0x2f0] sm:%s224]
                %328 = vst [vmem:[%s232 + $0x178] sm:%s224] %v327
                %v329 = vld [vmem:[%s231 + $0x300] sm:%s224]
                %330 = vst [vmem:[%s232 + $0x180] sm:%s224] %v329
                %v331 = vld [vmem:[%s231 + $0x310] sm:%s224]
                %332 = vst [vmem:[%s232 + $0x188] sm:%s224] %v331
                %v333 = vld [vmem:[%s231 + $0x320] sm:%s224]
                %334 = vst [vmem:[%s232 + $0x190] sm:%s224] %v333
                %v335 = vld [vmem:[%s231 + $0x330] sm:%s224]
                %336 = vst [vmem:[%s232 + $0x198] sm:%s224] %v335
                %v337 = vld [vmem:[%s231 + $0x340] sm:%s224]
                %338 = vst [vmem:[%s232 + $0x1a0] sm:%s224] %v337
                %v339 = vld [vmem:[%s231 + $0x350] sm:%s224]
                %340 = vst [vmem:[%s232 + $0x1a8] sm:%s224] %v339
                %v341 = vld [vmem:[%s231 + $0x360] sm:%s224]
                %342 = vst [vmem:[%s232 + $0x1b0] sm:%s224] %v341
                %v343 = vld [vmem:[%s231 + $0x370] sm:%s224]
                %344 = vst [vmem:[%s232 + $0x1b8] sm:%s224] %v343
                %v345 = vld [vmem:[%s231 + $0x380] sm:%s224]
                %346 = vst [vmem:[%s232 + $0x1c0] sm:%s224] %v345
                %v347 = vld [vmem:[%s231 + $0x390] sm:%s224]
                %348 = vst [vmem:[%s232 + $0x1c8] sm:%s224] %v347
                %v349 = vld [vmem:[%s231 + $0x3a0] sm:%s224]
                %350 = vst [vmem:[%s232 + $0x1d0] sm:%s224] %v349
                %v351 = vld [vmem:[%s231 + $0x3b0] sm:%s224]
                %352 = vst [vmem:[%s232 + $0x1d8] sm:%s224] %v351
                %v353 = vld [vmem:[%s231 + $0x3c0] sm:%s224]
                %354 = vst [vmem:[%s232 + $0x1e0] sm:%s224] %v353
                %v355 = vld [vmem:[%s231 + $0x3d0] sm:%s224]
                %356 = vst [vmem:[%s232 + $0x1e8] sm:%s224] %v355
                %v357 = vld [vmem:[%s231 + $0x3e0] sm:%s224]
                %358 = vst [vmem:[%s232 + $0x1f0] sm:%s224] %v357
                %v359 = vld [vmem:[%s231 + $0x3f0] sm:%s224]
                %360 = vst [vmem:[%s232 + $0x1f8] sm:%s224] %v359
                %v361 = vld [vmem:[%s231 + $0x400] sm:%s224]
                %362 = vst [vmem:[%s232 + $0x200] sm:%s224] %v361
                %v363 = vld [vmem:[%s231 + $0x410] sm:%s224]
                %364 = vst [vmem:[%s232 + $0x208] sm:%s224] %v363
                %v365 = vld [vmem:[%s231 + $0x420] sm:%s224]
                %366 = vst [vmem:[%s232 + $0x210] sm:%s224] %v365
                %v367 = vld [vmem:[%s231 + $0x430] sm:%s224]
                %368 = vst [vmem:[%s232 + $0x218] sm:%s224] %v367
                %v369 = vld [vmem:[%s231 + $0x440] sm:%s224]
                %370 = vst [vmem:[%s232 + $0x220] sm:%s224] %v369
                %v371 = vld [vmem:[%s231 + $0x450] sm:%s224]
                %372 = vst [vmem:[%s232 + $0x228] sm:%s224] %v371
                %v373 = vld [vmem:[%s231 + $0x460] sm:%s224]
                %374 = vst [vmem:[%s232 + $0x230] sm:%s224] %v373
                %v375 = vld [vmem:[%s231 + $0x470] sm:%s224]
                %376 = vst [vmem:[%s232 + $0x238] sm:%s224] %v375
                %v377 = vld [vmem:[%s231 + $0x480] sm:%s224]
                %378 = vst [vmem:[%s232 + $0x240] sm:%s224] %v377
                %v379 = vld [vmem:[%s231 + $0x490] sm:%s224]
                %380 = vst [vmem:[%s232 + $0x248] sm:%s224] %v379
                %v381 = vld [vmem:[%s231 + $0x4a0] sm:%s224]
                %382 = vst [vmem:[%s232 + $0x250] sm:%s224] %v381
                %v383 = vld [vmem:[%s231 + $0x4b0] sm:%s224]
                %384 = vst [vmem:[%s232 + $0x258] sm:%s224] %v383
                %v385 = vld [vmem:[%s231 + $0x4c0] sm:%s224]
                %386 = vst [vmem:[%s232 + $0x260] sm:%s224] %v385
                %v387 = vld [vmem:[%s231 + $0x4d0] sm:%s224]
                %388 = vst [vmem:[%s232 + $0x268] sm:%s224] %v387
                %v389 = vld [vmem:[%s231 + $0x4e0] sm:%s224]
                %390 = vst [vmem:[%s232 + $0x270] sm:%s224] %v389
                %v391 = vld [vmem:[%s231 + $0x4f0] sm:%s224]
                %392 = vst [vmem:[%s232 + $0x278] sm:%s224] %v391
                %v393 = vld [vmem:[%s231 + $0x500] sm:%s224]
                %394 = vst [vmem:[%s232 + $0x280] sm:%s224] %v393
                %v395 = vld [vmem:[%s231 + $0x510] sm:%s224]
                %396 = vst [vmem:[%s232 + $0x288] sm:%s224] %v395
                %v397 = vld [vmem:[%s231 + $0x520] sm:%s224]
                %398 = vst [vmem:[%s232 + $0x290] sm:%s224] %v397
                %v399 = vld [vmem:[%s231 + $0x530] sm:%s224]
                %400 = vst [vmem:[%s232 + $0x298] sm:%s224] %v399
                %v401 = vld [vmem:[%s231 + $0x540] sm:%s224]
                %402 = vst [vmem:[%s232 + $0x2a0] sm:%s224] %v401
                %v403 = vld [vmem:[%s231 + $0x550] sm:%s224]
                %404 = vst [vmem:[%s232 + $0x2a8] sm:%s224] %v403
                %v405 = vld [vmem:[%s231 + $0x560] sm:%s224]
                %406 = vst [vmem:[%s232 + $0x2b0] sm:%s224] %v405
                %v407 = vld [vmem:[%s231 + $0x570] sm:%s224]
                %408 = vst [vmem:[%s232 + $0x2b8] sm:%s224] %v407
                %v409 = vld [vmem:[%s231 + $0x580] sm:%s224]
                %410 = vst [vmem:[%s232 + $0x2c0] sm:%s224] %v409
                %v411 = vld [vmem:[%s231 + $0x590] sm:%s224]
                %412 = vst [vmem:[%s232 + $0x2c8] sm:%s224] %v411
                %v413 = vld [vmem:[%s231 + $0x5a0] sm:%s224]
                %414 = vst [vmem:[%s232 + $0x2d0] sm:%s224] %v413
                %v415 = vld [vmem:[%s231 + $0x5b0] sm:%s224]
                %416 = vst [vmem:[%s232 + $0x2d8] sm:%s224] %v415
                %v417 = vld [vmem:[%s231 + $0x5c0] sm:%s224]
                %418 = vst [vmem:[%s232 + $0x2e0] sm:%s224] %v417
                %v419 = vld [vmem:[%s231 + $0x5d0] sm:%s224]
                %420 = vst [vmem:[%s232 + $0x2e8] sm:%s224] %v419
                %v421 = vld [vmem:[%s231 + $0x5e0] sm:%s224]
                %422 = vst [vmem:[%s232 + $0x2f0] sm:%s224] %v421
                %v423 = vld [vmem:[%s231 + $0x5f0] sm:%s224]
                %424 = vst [vmem:[%s232 + $0x2f8] sm:%s224] %v423
                %v425 = vld [vmem:[%s231 + $0x600] sm:%s224]
                %426 = vst [vmem:[%s232 + $0x300] sm:%s224] %v425
                %v427 = vld [vmem:[%s231 + $0x610] sm:%s224]
                %428 = vst [vmem:[%s232 + $0x308] sm:%s224] %v427
                %v429 = vld [vmem:[%s231 + $0x620] sm:%s224]
                %430 = vst [vmem:[%s232 + $0x310] sm:%s224] %v429
                %v431 = vld [vmem:[%s231 + $0x630] sm:%s224]
                %432 = vst [vmem:[%s232 + $0x318] sm:%s224] %v431
                %v433 = vld [vmem:[%s231 + $0x640] sm:%s224]
                %434 = vst [vmem:[%s232 + $0x320] sm:%s224] %v433
                %v435 = vld [vmem:[%s231 + $0x650] sm:%s224]
                %436 = vst [vmem:[%s232 + $0x328] sm:%s224] %v435
                %v437 = vld [vmem:[%s231 + $0x660] sm:%s224]
                %438 = vst [vmem:[%s232 + $0x330] sm:%s224] %v437
                %v439 = vld [vmem:[%s231 + $0x670] sm:%s224]
                %440 = vst [vmem:[%s232 + $0x338] sm:%s224] %v439
                %v441 = vld [vmem:[%s231 + $0x680] sm:%s224]
                %442 = vst [vmem:[%s232 + $0x340] sm:%s224] %v441
                %v443 = vld [vmem:[%s231 + $0x690] sm:%s224]
                %444 = vst [vmem:[%s232 + $0x348] sm:%s224] %v443
                %v445 = vld [vmem:[%s231 + $0x6a0] sm:%s224]
                %446 = vst [vmem:[%s232 + $0x350] sm:%s224] %v445
                %v447 = vld [vmem:[%s231 + $0x6b0] sm:%s224]
                %448 = vst [vmem:[%s232 + $0x358] sm:%s224] %v447
                %v449 = vld [vmem:[%s231 + $0x6c0] sm:%s224]
                %450 = vst [vmem:[%s232 + $0x360] sm:%s224] %v449
                %v451 = vld [vmem:[%s231 + $0x6d0] sm:%s224]
                %452 = vst [vmem:[%s232 + $0x368] sm:%s224] %v451
                %v453 = vld [vmem:[%s231 + $0x6e0] sm:%s224]
                %454 = vst [vmem:[%s232 + $0x370] sm:%s224] %v453
                %v455 = vld [vmem:[%s231 + $0x6f0] sm:%s224]
                %456 = vst [vmem:[%s232 + $0x378] sm:%s224] %v455
                %v457 = vld [vmem:[%s231 + $0x700] sm:%s224]
                %458 = vst [vmem:[%s232 + $0x380] sm:%s224] %v457
                %v459 = vld [vmem:[%s231 + $0x710] sm:%s224]
                %460 = vst [vmem:[%s232 + $0x388] sm:%s224] %v459
                %v461 = vld [vmem:[%s231 + $0x720] sm:%s224]
                %462 = vst [vmem:[%s232 + $0x390] sm:%s224] %v461
                %v463 = vld [vmem:[%s231 + $0x730] sm:%s224]
                %464 = vst [vmem:[%s232 + $0x398] sm:%s224] %v463
                %v465 = vld [vmem:[%s231 + $0x740] sm:%s224]
                %466 = vst [vmem:[%s232 + $0x3a0] sm:%s224] %v465
                %v467 = vld [vmem:[%s231 + $0x750] sm:%s224]
                %468 = vst [vmem:[%s232 + $0x3a8] sm:%s224] %v467
                %v469 = vld [vmem:[%s231 + $0x760] sm:%s224]
                %470 = vst [vmem:[%s232 + $0x3b0] sm:%s224] %v469
                %v471 = vld [vmem:[%s231 + $0x770] sm:%s224]
                %472 = vst [vmem:[%s232 + $0x3b8] sm:%s224] %v471
                %v473 = vld [vmem:[%s231 + $0x780] sm:%s224]
                %474 = vst [vmem:[%s232 + $0x3c0] sm:%s224] %v473
                %v475 = vld [vmem:[%s231 + $0x790] sm:%s224]
                %476 = vst [vmem:[%s232 + $0x3c8] sm:%s224] %v475
                %v477 = vld [vmem:[%s231 + $0x7a0] sm:%s224]
                %478 = vst [vmem:[%s232 + $0x3d0] sm:%s224] %v477
                %v479 = vld [vmem:[%s231 + $0x7b0] sm:%s224]
                %480 = vst [vmem:[%s232 + $0x3d8] sm:%s224] %v479
                %v481 = vld [vmem:[%s231 + $0x7c0] sm:%s224]
                %482 = vst [vmem:[%s232 + $0x3e0] sm:%s224] %v481
                %v483 = vld [vmem:[%s231 + $0x7d0] sm:%s224]
                %484 = vst [vmem:[%s232 + $0x3e8] sm:%s224] %v483
                %v485 = vld [vmem:[%s231 + $0x7e0] sm:%s224]
                %486 = vst [vmem:[%s232 + $0x3f0] sm:%s224] %v485
                %v487 = vld [vmem:[%s231 + $0x7f0] sm:%s224]
                %488 = vst [vmem:[%s232 + $0x3f8] sm:%s224] %v487
                %v489 = vld [vmem:[%s231 + $0x800] sm:%s224]
                %490 = vst [vmem:[%s232 + $0x400] sm:%s224] %v489
                %v491 = vld [vmem:[%s231 + $0x810] sm:%s224]
                %492 = vst [vmem:[%s232 + $0x408] sm:%s224] %v491
                %v493 = vld [vmem:[%s231 + $0x820] sm:%s224]
                %494 = vst [vmem:[%s232 + $0x410] sm:%s224] %v493
                %v495 = vld [vmem:[%s231 + $0x830] sm:%s224]
                %496 = vst [vmem:[%s232 + $0x418] sm:%s224] %v495
                %v497 = vld [vmem:[%s231 + $0x840] sm:%s224]
                %498 = vst [vmem:[%s232 + $0x420] sm:%s224] %v497
                %v499 = vld [vmem:[%s231 + $0x850] sm:%s224]
                %500 = vst [vmem:[%s232 + $0x428] sm:%s224] %v499
                %v501 = vld [vmem:[%s231 + $0x860] sm:%s224]
                %502 = vst [vmem:[%s232 + $0x430] sm:%s224] %v501
              $region53: #{tpu_custom_call.1} parent=47 // loop_footer
                %s230 = sadd.s32 1, %s226
              $region54: #{tpu_custom_call.1} parent=47 // loop_footer_branch
                %225 = sbr.rel target = $region50
              $region55: #{tpu_custom_call.1} parent=47 // loop_exit
                _
            $region48: #{tpu_custom_call.1} parent=39 // pred_fallthru
              _
          $region40: #{tpu_custom_call.1} parent=35 // pred_fallthru
            _
          %785 = vnop
        $region36: #{tpu_custom_call.1} parent=31 // pred_fallthru
          _
        // Predicated region
        $region71: #{tpu_custom_call.1} parent=31 // pred_check
          %p786 = pneg %p145
        $region72: #{tpu_custom_call.1} parent=31 // pred_check_branch
          %788 = sbr.rel (%p786) target = $region74
        $region73: #{tpu_custom_call.1} parent=31 // pred_region
          %s789 = sand.u32 %s135, 1
          %s790 = sand.u32 %s135, 1
          %s791 = smul.addr %s790, 32
          %s792 = scalar_lea.vmem [#allocation4], %s791
          %s793 = smul.addr %s15, 8
          %s794 = scalar_lea.vmem %s5, %s793
          // Predicated region
          $region75: #{tpu_custom_call.1} parent=73 // pred_check
            _
          $region76: #{tpu_custom_call.1} parent=73 // pred_check_branch
            %796 = sbr.rel (0) target = $region78
          $region77: #{tpu_custom_call.1} parent=73 // pred_region
            // Predicated region
            $region79: #{tpu_custom_call.1} parent=77 // pred_check
              _
            $region80: #{tpu_custom_call.1} parent=77 // pred_check_branch
              %798 = sbr.rel (0) target = $region82
            $region81: #{tpu_custom_call.1} parent=77 // pred_region
              // Predicated region
              $region94: #{tpu_custom_call.1} parent=81 // pred_check
                _
              $region95: #{tpu_custom_call.1} parent=81 // pred_check_branch
                %820 = sbr.rel (0) target = $region97
              $region96: #{tpu_custom_call.1} parent=81 // pred_region
                loop: start=0, step=1, limit=1
                $region98: #{tpu_custom_call.1} parent=96 // loop_pre_header
                  _
                $region99: #{tpu_custom_call.1} parent=96 // loop_header
                  %s822 = sphi 0, %s826
                  %p823 = scmp.ge.s32.totalorder %s822, 1
                  %s827 = sphi %s794, %s794
                  %s828 = sphi %s792, %s792
                $region100: #{tpu_custom_call.1} parent=96 // loop_header_branch
                  %825 = sbr.rel (%p823) target = $region104
                $region101: #{tpu_custom_call.1} parent=96 // loop_body
                  %v829 = vld [vmem:[%s827] sm:$0xff]
                  %830 = vst [vmem:[%s828] sm:$0xff] %v829
                  %v831 = vld [vmem:[%s827 + $0x10] sm:$0xff]
                  %832 = vst [vmem:[%s828 + $0x8] sm:$0xff] %v831
                  %v833 = vld [vmem:[%s827 + $0x20] sm:$0xff]
                  %834 = vst [vmem:[%s828 + $0x10] sm:$0xff] %v833
                  %v835 = vld [vmem:[%s827 + $0x30] sm:$0xff]
                  %836 = vst [vmem:[%s828 + $0x18] sm:$0xff] %v835
                $region102: #{tpu_custom_call.1} parent=96 // loop_footer
                  %s826 = sadd.s32 1, %s822
                $region103: #{tpu_custom_call.1} parent=96 // loop_footer_branch
                  %821 = sbr.rel target = $region99
                $region104: #{tpu_custom_call.1} parent=96 // loop_exit
                  _
              $region97: #{tpu_custom_call.1} parent=81 // pred_fallthru
                _
              // Predicated region
              $region105: #{tpu_custom_call.1} parent=81 // pred_check
                _
              $region106: #{tpu_custom_call.1} parent=81 // pred_check_branch
                %838 = sbr.rel target = $region108
              $region107: #{tpu_custom_call.1} parent=81 // pred_region
                _
              $region108: #{tpu_custom_call.1} parent=81 // pred_fallthru
                _
            $region82: #{tpu_custom_call.1} parent=77 // pred_fallthru
              _
            // Predicated region
            $region83: #{tpu_custom_call.1} parent=77 // pred_check
              _
            $region84: #{tpu_custom_call.1} parent=77 // pred_check_branch
              %800 = sbr.rel target = $region86
            $region85: #{tpu_custom_call.1} parent=77 // pred_region
              %s802 = ssub.s32 256, 1
              loop: start=0, step=1, limit=1
              $region87: #{tpu_custom_call.1} parent=85 // loop_pre_header
                _
              $region88: #{tpu_custom_call.1} parent=85 // loop_header
                %s804 = sphi 0, %s808
                %p805 = scmp.ge.s32.totalorder %s804, 1
                %s809 = sphi %s794, %s794
                %s810 = sphi %s792, %s792
              $region89: #{tpu_custom_call.1} parent=85 // loop_header_branch
                %807 = sbr.rel (%p805) target = $region93
              $region90: #{tpu_custom_call.1} parent=85 // loop_body
                %v811 = vld [vmem:[%s809] sm:%s802]
                %812 = vst [vmem:[%s810] sm:%s802] %v811
                %v813 = vld [vmem:[%s809 + $0x10] sm:%s802]
                %814 = vst [vmem:[%s810 + $0x8] sm:%s802] %v813
                %v815 = vld [vmem:[%s809 + $0x20] sm:%s802]
                %816 = vst [vmem:[%s810 + $0x10] sm:%s802] %v815
                %v817 = vld [vmem:[%s809 + $0x30] sm:%s802]
                %818 = vst [vmem:[%s810 + $0x18] sm:%s802] %v817
              $region91: #{tpu_custom_call.1} parent=85 // loop_footer
                %s808 = sadd.s32 1, %s804
              $region92: #{tpu_custom_call.1} parent=85 // loop_footer_branch
                %803 = sbr.rel target = $region88
              $region93: #{tpu_custom_call.1} parent=85 // loop_exit
                _
            $region86: #{tpu_custom_call.1} parent=77 // pred_fallthru
              _
          $region78: #{tpu_custom_call.1} parent=73 // pred_fallthru
            _
          %839 = vnop
        $region74: #{tpu_custom_call.1} parent=31 // pred_fallthru
          _
      $region32: #{tpu_custom_call.1} parent=5 // pred_fallthru
        _
      %p840 = scmp.le.s32.totalorder 1, %s15
      %p841 = scmp.lt.s32.totalorder %s15, 3
      %p842 = pnand %p840, %p841
      %p843 = pneg %p842
      // Predicated region
      $region109: #{tpu_custom_call.1} parent=5 // pred_check
        _
      $region110: #{tpu_custom_call.1} parent=5 // pred_check_branch
        %845 = sbr.rel (%p842) target = $region112
      $region111: #{tpu_custom_call.1} parent=5 // pred_region
        %s846 = ssub.s32 %s15, 1
        %s847 = sand.u32 %s28, 1
        %s848 = sand.u32 %s28, 1
        %s849 = smul.addr %s848, 1080
        %s850 = scalar_lea.vmem [#allocation3], %s849
        // Predicated region
        $region113: #{tpu_custom_call.1} parent=111 // pred_check
          %p851 = pneg %p41
        $region114: #{tpu_custom_call.1} parent=111 // pred_check_branch
          %853 = sbr.rel (%p851) target = $region116
        $region115: #{tpu_custom_call.1} parent=111 // pred_region
          _
        $region116: #{tpu_custom_call.1} parent=111 // pred_fallthru
          _
        %s854 = sand.u32 %s138, 1
        %s855 = sand.u32 %s138, 1
        %s856 = smul.addr %s855, 32
        %s857 = scalar_lea.vmem [#allocation4], %s856
        // Predicated region
        $region117: #{tpu_custom_call.1} parent=111 // pred_check
          %p858 = pneg %p151
        $region118: #{tpu_custom_call.1} parent=111 // pred_check_branch
          %860 = sbr.rel (%p858) target = $region120
        $region119: #{tpu_custom_call.1} parent=111 // pred_region
          _
        $region120: #{tpu_custom_call.1} parent=111 // pred_fallthru
          _
        %s861 = sand.u32 %s28, 1
        %s862 = sand.u32 %s28, 1
        %s863 = smul.addr %s862, 1080
        %s864 = scalar_lea.vmem [#allocation3], %s863
        %p865 = pneg %p41
        %p866 = pneg %p38
        %p867 = pneg %p62
        %p868 = pneg %p59
        %p869 = pneg %p83
        %p870 = pneg %p80
        %p871 = pneg %p104
        %p872 = pneg %p101
        %p873 = pneg %p125
        %p874 = pneg %p122
        %s875 = sand.u32 %s138, 1
        %s876 = sand.u32 %s138, 1
        %s877 = smul.addr %s876, 32
        %s878 = scalar_lea.vmem [#allocation4], %s877
        %p879 = pneg %p151
        %p880 = pneg %p148
        %p881 = pneg %p177
        %p882 = pneg %p174
        %s883 = sand.u32 %s164, 1
        %s884 = scalar_lea.sflag [#allocation6], %s883
        %s885 = sand.u32 %s164, 1
        %s886 = smul.addr %s885, 32
        %s887 = scalar_lea.vmem [#allocation5], %s886
        %888 = vst [vmem:[#allocation2] sm:$0xff] 0.0
        %889 = vst [vmem:[#allocation2 + $0x8] sm:$0xff] 0.0
        %890 = vst [vmem:[#allocation2 + $0x10] sm:$0xff] 0.0
        %891 = vst [vmem:[#allocation2 + $0x18] sm:$0xff] 0.0
        %v892 = vld [vmem:[%s1] sm:$0xff]
        %v893 = vld [vmem:[%s1 + $0x8] sm:$0xff]
        %v894 = vld [vmem:[%s1 + $0x10] sm:$0xff]
        %v895 = vld [vmem:[%s1 + $0x18] sm:$0xff]
        %v896 = vld [vmem:[%s1 + $0x20] sm:$0xff]
        %v897 = vld [vmem:[%s1 + $0x28] sm:$0xff]
        %v898 = vld [vmem:[%s1 + $0x30] sm:$0xff]
        %v899 = vld [vmem:[%s1 + $0x38] sm:$0xff]
        %v900 = vld [vmem:[%s1 + $0x40] sm:$0xff]
        %v901 = vld [vmem:[%s1 + $0x48] sm:$0xff]
        %v902 = vld [vmem:[%s1 + $0x50] sm:$0xff]
        %v903 = vld [vmem:[%s1 + $0x58] sm:$0xff]
        %v904 = vld [vmem:[%s1 + $0x60] sm:$0xff]
        %v905 = vld [vmem:[%s1 + $0x68] sm:$0xff]
        %v906 = vld [vmem:[%s1 + $0x70] sm:$0xff]
        %v907 = vld [vmem:[%s1 + $0x78] sm:$0xff]
        %v908 = vld [vmem:[%s850] sm:$0xff]
        %v909 = vld [vmem:[%s850 + $0x8] sm:$0xff]
        %v910 = vld [vmem:[%s850 + $0x10] sm:$0xff]
        %v911 = vld [vmem:[%s850 + $0x18] sm:$0xff]
        %v912 = vld [vmem:[%s850 + $0x20] sm:$0x1]
        %vm913 = vcmask 269312
        %v915 = vsel %vm913, %v892, 0
        %v918 = vsel %vm913, %v893, 0
        %v921 = vsel %vm913, %v894, 0
        %v924 = vsel %vm913, %v895, 0
        %v927 = vsel %vm913, %v896, 0
        %v930 = vsel %vm913, %v897, 0
        %v933 = vsel %vm913, %v898, 0
        %v936 = vsel %vm913, %v899, 0
        %v939 = vsel %vm913, %v900, 0
        %v942 = vsel %vm913, %v901, 0
        %v945 = vsel %vm913, %v902, 0
        %v948 = vsel %vm913, %v903, 0
        %v951 = vsel %vm913, %v904, 0
        %v954 = vsel %vm913, %v905, 0
        %v957 = vsel %vm913, %v906, 0
        %v960 = vsel %vm913, %v907, 0
        %vm962 = vcmask 1040384
        %v964 = vsel %vm962, %v912, 0
        %966 = vmatprep.subr.mxu0 0.0
        %967 = vmatpush1.msra.mxu0 0.0
        %968 = vmatprep.subr.mxu0 0.0
        %969 = vmatpush1.msra.mxu0 0.0
        %970 = vmatprep.subr.mxu0 0.0
        %971 = vmatpush1.msra.mxu0 0.0
        %972 = vmatprep.subr.mxu0 0.0
        %973 = vmatpush1.msra.mxu0 0.0
        %974 = vmatprep.subr.mxu0 0.0
        %975 = vmatpush1.msra.mxu0 0.0
        %976 = vmatprep.subr.mxu0 0.0
        %977 = vmatpush1.msra.mxu0 0.0
        %978 = vmatprep.subr.mxu0 0.0
        %979 = vmatpush1.msra.mxu0 0.0
        %980 = vmatprep.subr.mxu0 0.0
        %981 = vmatpush1.msra.mxu0 0.0
        %982 = vmatprep.subr.mxu0 0.0
        %983 = vmatpush1.msra.mxu0 0.0
        %984 = vmatprep.subr.mxu0 0.0
        %985 = vmatpush1.msra.mxu0 0.0
        %986 = vmatprep.subr.mxu0 0.0
        %987 = vmatpush1.msra.mxu0 0.0
        %988 = vmatprep.subr.mxu0 0.0
        %989 = vmatpush1.msra.mxu0 %v964
        %990 = vmatprep.subr.mxu0 0.0
        %991 = vmatpush1.msra.mxu0 %v911
        %992 = vmatprep.subr.mxu0 0.0
        %993 = vmatpush1.msra.mxu0 %v910
        %994 = vmatprep.subr.mxu0 0.0
        %995 = vmatpush1.msra.mxu0 %v909
        %996 = vmatprep.subr.mxu0 0.0
        %997 = vmatpush1.msra.mxu0 %v908
        %998 = vmatprep.subr.mxu0 0.0
        %999 = vmatpush2.msra.mxu0 0.0
        %1000 = vmatprep.subr.mxu0 0.0
        %1001 = vmatpush2.msra.mxu0 0.0
        %1002 = vmatprep.subr.mxu0 0.0
        %1003 = vmatpush2.msra.mxu0 0.0
        %1004 = vmatprep.subr.mxu0 0.0
        %1005 = vmatpush2.msra.mxu0 0.0
        %1006 = vmatprep.subr.mxu0 0.0
        %1007 = vmatpush2.msra.mxu0 0.0
        %1008 = vmatprep.subr.mxu0 0.0
        %1009 = vmatpush2.msra.mxu0 0.0
        %1010 = vmatprep.subr.mxu0 0.0
        %1011 = vmatpush2.msra.mxu0 0.0
        %1012 = vmatprep.subr.mxu0 0.0
        %1013 = vmatpush2.msra.mxu0 0.0
        %1014 = vmatprep.subr.mxu0 0.0
        %1015 = vmatpush2.msra.mxu0 0.0
        %1016 = vmatprep.subr.mxu0 0.0
        %1017 = vmatpush2.msra.mxu0 0.0
        %1018 = vmatprep.subr.mxu0 0.0
        %1019 = vmatpush2.msra.mxu0 0.0
        %1020 = vmatprep.subr.mxu0 0.0
        %1021 = vmatpush2.msra.mxu0 0.0
        %1022 = vmatprep.subr.mxu0 0.0
        %1023 = vmatpush2.msra.mxu0 0.0
        %1024 = vmatprep.subr.mxu0 0.0
        %1025 = vmatpush2.msra.mxu0 0.0
        %1026 = vmatprep.subr.mxu0 0.0
        %1027 = vmatpush2.msra.mxu0 0.0
        %1028 = vmatprep.subr.mxu0 0.0
        %1029 = vmatpush2.msra.mxu0 0.0
        %1030 = vmatprep.mubr.f32.mxu0 0.0
        %1031 = vmatmul.mubr.f32.gmra.mxu0 %v915
        %v1032 = vpop.f32.mrf.mxu0
        %v1033 = vadd.f32 0.0, %v1032
        %v1034 = vpop.f32.mrf.mxu0
        %1035 = vmatprep.mubr.f32.mxu0 0.0
        %1036 = vmatmul.mubr.f32.gmra.mxu0 %v918
        %v1037 = vpop.f32.mrf.mxu0
        %v1038 = vadd.f32 0.0, %v1037
        %v1039 = vpop.f32.mrf.mxu0
        %1040 = vmatprep.mubr.f32.mxu0 0.0
        %1041 = vmatmul.mubr.f32.gmra.mxu0 %v921
        %v1042 = vpop.f32.mrf.mxu0
        %v1043 = vadd.f32 0.0, %v1042
        %v1044 = vpop.f32.mrf.mxu0
        %1045 = vmatprep.mubr.f32.mxu0 0.0
        %1046 = vmatmul.mubr.f32.gmra.mxu0 %v924
        %v1047 = vpop.f32.mrf.mxu0
        %v1048 = vadd.f32 0.0, %v1047
        %v1049 = vpop.f32.mrf.mxu0
        %1050 = vmatprep.mubr.f32.mxu0 0.0
        %1051 = vmatmul.mubr.f32.gmra.mxu0 %v927
        %v1052 = vpop.f32.mrf.mxu0
        %v1053 = vadd.f32 0.0, %v1052
        %v1054 = vpop.f32.mrf.mxu0
        %1055 = vmatprep.mubr.f32.mxu0 0.0
        %1056 = vmatmul.mubr.f32.gmra.mxu0 %v930
        %v1057 = vpop.f32.mrf.mxu0
        %v1058 = vadd.f32 0.0, %v1057
        %v1059 = vpop.f32.mrf.mxu0
        %1060 = vmatprep.mubr.f32.mxu0 0.0
        %1061 = vmatmul.mubr.f32.gmra.mxu0 %v933
        %v1062 = vpop.f32.mrf.mxu0
        %v1063 = vadd.f32 0.0, %v1062
        %v1064 = vpop.f32.mrf.mxu0
        %1065 = vmatprep.mubr.f32.mxu0 0.0
        %1066 = vmatmul.mubr.f32.gmra.mxu0 %v936
        %v1067 = vpop.f32.mrf.mxu0
        %v1068 = vadd.f32 0.0, %v1067
        %v1069 = vpop.f32.mrf.mxu0
        %1070 = vmatprep.mubr.f32.mxu0 0.0
        %1071 = vmatmul.mubr.f32.gmra.mxu0 %v939
        %v1072 = vpop.f32.mrf.mxu0
        %v1073 = vadd.f32 0.0, %v1072
        %v1074 = vpop.f32.mrf.mxu0
        %1075 = vmatprep.mubr.f32.mxu0 0.0
        %1076 = vmatmul.mubr.f32.gmra.mxu0 %v942
        %v1077 = vpop.f32.mrf.mxu0
        %v1078 = vadd.f32 0.0, %v1077
        %v1079 = vpop.f32.mrf.mxu0
        %1080 = vmatprep.mubr.f32.mxu0 0.0
        %1081 = vmatmul.mubr.f32.gmra.mxu0 %v945
        %v1082 = vpop.f32.mrf.mxu0
        %v1083 = vadd.f32 0.0, %v1082
        %v1084 = vpop.f32.mrf.mxu0
        %1085 = vmatprep.mubr.f32.mxu0 0.0
        %1086 = vmatmul.mubr.f32.gmra.mxu0 %v948
        %v1087 = vpop.f32.mrf.mxu0
        %v1088 = vadd.f32 0.0, %v1087
        %v1089 = vpop.f32.mrf.mxu0
        %1090 = vmatprep.mubr.f32.mxu0 0.0
        %1091 = vmatmul.mubr.f32.gmra.mxu0 %v951
        %v1092 = vpop.f32.mrf.mxu0
        %v1093 = vadd.f32 0.0, %v1092
        %v1094 = vpop.f32.mrf.mxu0
        %1095 = vmatprep.mubr.f32.mxu0 0.0
        %1096 = vmatmul.mubr.f32.gmra.mxu0 %v954
        %v1097 = vpop.f32.mrf.mxu0
        %v1098 = vadd.f32 0.0, %v1097
        %v1099 = vpop.f32.mrf.mxu0
        %1100 = vmatprep.mubr.f32.mxu0 0.0
        %1101 = vmatmul.mubr.f32.gmra.mxu0 %v957
        %v1102 = vpop.f32.mrf.mxu0
        %v1103 = vadd.f32 0.0, %v1102
        %v1104 = vpop.f32.mrf.mxu0
        %1105 = vmatprep.mubr.f32.mxu0 0.0
        %1106 = vmatmul.mubr.f32.gmra.mxu0 %v960
        %v1107 = vpop.f32.mrf.mxu0
        %v1108 = vadd.f32 0.0, %v1107
        %v1109 = vpop.f32.mrf.mxu0
        %1110 = vdwg.mxu0
        %v1111 = vmax.f32 %v1033, 0.0
        %v1112 = vmax.f32 %v1038, 0.0
        %v1113 = vmax.f32 %v1043, 0.0
        %v1114 = vmax.f32 %v1048, 0.0
        %v1115 = vmax.f32 %v1053, 0.0
        %v1116 = vmax.f32 %v1058, 0.0
        %v1117 = vmax.f32 %v1063, 0.0
        %v1118 = vmax.f32 %v1068, 0.0
        %v1119 = vmax.f32 %v1073, 0.0
        %v1120 = vmax.f32 %v1078, 0.0
        %v1121 = vmax.f32 %v1083, 0.0
        %v1122 = vmax.f32 %v1088, 0.0
        %v1123 = vmax.f32 %v1093, 0.0
        %v1124 = vmax.f32 %v1098, 0.0
        %v1125 = vmax.f32 %v1103, 0.0
        %v1126 = vmax.f32 %v1108, 0.0
        %v1127 = vld [vmem:[%s2] sm:$0xff]
        %v1128 = vld [vmem:[%s2 + $0x8] sm:$0xff]
        %v1129 = vld [vmem:[%s2 + $0x10] sm:$0xff]
        %v1130 = vld [vmem:[%s2 + $0x18] sm:$0xff]
        %v1131 = vld [vmem:[%s2 + $0x20] sm:$0xff]
        %v1132 = vld [vmem:[%s2 + $0x28] sm:$0xff]
        %v1133 = vld [vmem:[%s2 + $0x30] sm:$0xff]
        %v1134 = vld [vmem:[%s2 + $0x38] sm:$0xff]
        %v1135 = vld [vmem:[%s2 + $0x40] sm:$0xff]
        %v1136 = vld [vmem:[%s2 + $0x48] sm:$0xff]
        %v1137 = vld [vmem:[%s2 + $0x50] sm:$0xff]
        %v1138 = vld [vmem:[%s2 + $0x58] sm:$0xff]
        %v1139 = vld [vmem:[%s2 + $0x60] sm:$0xff]
        %v1140 = vld [vmem:[%s2 + $0x68] sm:$0xff]
        %v1141 = vld [vmem:[%s2 + $0x70] sm:$0xff]
        %v1142 = vld [vmem:[%s2 + $0x78] sm:$0xff]
        %1144 = vset.pattern.permute.xlu0 0
        %1145 = vperm.xlu0 %1144, %v1127
        %v1146 = vpop.permute.xlu0 %1145
        %1149 = vset.pattern.permute.xlu0 0
        %1150 = vperm.xlu0 %1149, %v1128
        %v1151 = vpop.permute.xlu0 %1150
        %1154 = vset.pattern.permute.xlu0 0
        %1155 = vperm.xlu0 %1154, %v1129
        %v1156 = vpop.permute.xlu0 %1155
        %1159 = vset.pattern.permute.xlu0 0
        %1160 = vperm.xlu0 %1159, %v1130
        %v1161 = vpop.permute.xlu0 %1160
        %1164 = vset.pattern.permute.xlu0 0
        %1165 = vperm.xlu0 %1164, %v1131
        %v1166 = vpop.permute.xlu0 %1165
        %1169 = vset.pattern.permute.xlu0 0
        %1170 = vperm.xlu0 %1169, %v1132
        %v1171 = vpop.permute.xlu0 %1170
        %1174 = vset.pattern.permute.xlu0 0
        %1175 = vperm.xlu0 %1174, %v1133
        %v1176 = vpop.permute.xlu0 %1175
        %1179 = vset.pattern.permute.xlu0 0
        %1180 = vperm.xlu0 %1179, %v1134
        %v1181 = vpop.permute.xlu0 %1180
        %1184 = vset.pattern.permute.xlu0 0
        %1185 = vperm.xlu0 %1184, %v1135
        %v1186 = vpop.permute.xlu0 %1185
        %1189 = vset.pattern.permute.xlu0 0
        %1190 = vperm.xlu0 %1189, %v1136
        %v1191 = vpop.permute.xlu0 %1190
        %1194 = vset.pattern.permute.xlu0 0
        %1195 = vperm.xlu0 %1194, %v1137
        %v1196 = vpop.permute.xlu0 %1195
        %1199 = vset.pattern.permute.xlu0 0
        %1200 = vperm.xlu0 %1199, %v1138
        %v1201 = vpop.permute.xlu0 %1200
        %1204 = vset.pattern.permute.xlu0 0
        %1205 = vperm.xlu0 %1204, %v1139
        %v1206 = vpop.permute.xlu0 %1205
        %1209 = vset.pattern.permute.xlu0 0
        %1210 = vperm.xlu0 %1209, %v1140
        %v1211 = vpop.permute.xlu0 %1210
        %1214 = vset.pattern.permute.xlu0 0
        %1215 = vperm.xlu0 %1214, %v1141
        %v1216 = vpop.permute.xlu0 %1215
        %1219 = vset.pattern.permute.xlu0 0
        %1220 = vperm.xlu0 %1219, %v1142
        %v1221 = vpop.permute.xlu0 %1220
        %v1223 = vmul.f32 %v1111, %v1146
        %v1224 = vmul.f32 %v1112, %v1151
        %v1225 = vmul.f32 %v1113, %v1156
        %v1226 = vmul.f32 %v1114, %v1161
        %v1227 = vmul.f32 %v1115, %v1166
        %v1228 = vmul.f32 %v1116, %v1171
        %v1229 = vmul.f32 %v1117, %v1176
        %v1230 = vmul.f32 %v1118, %v1181
        %v1231 = vmul.f32 %v1119, %v1186
        %v1232 = vmul.f32 %v1120, %v1191
        %v1233 = vmul.f32 %v1121, %v1196
        %v1234 = vmul.f32 %v1122, %v1201
        %v1235 = vmul.f32 %v1123, %v1206
        %v1236 = vmul.f32 %v1124, %v1211
        %v1237 = vmul.f32 %v1125, %v1216
        %v1238 = vmul.f32 %v1126, %v1221
        %v1239 = vadd.f32 %v1223, %v1227
        %v1240 = vadd.f32 %v1224, %v1228
        %v1241 = vadd.f32 %v1225, %v1229
        %v1242 = vadd.f32 %v1226, %v1230
        %v1243 = vadd.f32 %v1239, %v1231
        %v1244 = vadd.f32 %v1240, %v1232
        %v1245 = vadd.f32 %v1241, %v1233
        %v1246 = vadd.f32 %v1242, %v1234
        %v1247 = vadd.f32 %v1243, %v1235
        %v1248 = vadd.f32 %v1244, %v1236
        %v1249 = vadd.f32 %v1245, %v1237
        %v1250 = vadd.f32 %v1246, %v1238
        %v1251 = vld [vmem:[#allocation2] sm:$0xff]
        %v1252 = vld [vmem:[#allocation2 + $0x8] sm:$0xff]
        %v1253 = vld [vmem:[#allocation2 + $0x10] sm:$0xff]
        %v1254 = vld [vmem:[#allocation2 + $0x18] sm:$0xff]
        %v1255 = vadd.f32 %v1251, %v1247
        %v1256 = vadd.f32 %v1252, %v1248
        %v1257 = vadd.f32 %v1253, %v1249
        %v1258 = vadd.f32 %v1254, %v1250
        %1259 = vst [vmem:[#allocation2] sm:$0xff] %v1255
        %1260 = vst [vmem:[#allocation2 + $0x8] sm:$0xff] %v1256
        %1261 = vst [vmem:[#allocation2 + $0x10] sm:$0xff] %v1257
        %1262 = vst [vmem:[#allocation2 + $0x18] sm:$0xff] %v1258
        %s1263 = scalar_lea.vmem %s850, 40 [#allocation3]
        %v1264 = vld [vmem:[%s1263] sm:$0xff]
        %v1265 = vld [vmem:[%s1263 + $0x8] sm:$0xff]
        %v1266 = vld [vmem:[%s1263 + $0x10] sm:$0xff]
        %v1267 = vld [vmem:[%s1263 + $0x18] sm:$0xff]
        %v1268 = vld [vmem:[%s1263 + $0x20] sm:$0x1]
        %v1270 = vsel %vm962, %v1268, 0
        %1272 = vmatprep.subr.mxu0 0.0
        %1273 = vmatpush1.msra.mxu0 0.0
        %1274 = vmatprep.subr.mxu0 0.0
        %1275 = vmatpush1.msra.mxu0 0.0
        %1276 = vmatprep.subr.mxu0 0.0
        %1277 = vmatpush1.msra.mxu0 0.0
        %1278 = vmatprep.subr.mxu0 0.0
        %1279 = vmatpush1.msra.mxu0 0.0
        %1280 = vmatprep.subr.mxu0 0.0
        %1281 = vmatpush1.msra.mxu0 0.0
        %1282 = vmatprep.subr.mxu0 0.0
        %1283 = vmatpush1.msra.mxu0 0.0
        %1284 = vmatprep.subr.mxu0 0.0
        %1285 = vmatpush1.msra.mxu0 0.0
        %1286 = vmatprep.subr.mxu0 0.0
        %1287 = vmatpush1.msra.mxu0 0.0
        %1288 = vmatprep.subr.mxu0 0.0
        %1289 = vmatpush1.msra.mxu0 0.0
        %1290 = vmatprep.subr.mxu0 0.0
        %1291 = vmatpush1.msra.mxu0 0.0
        %1292 = vmatprep.subr.mxu0 0.0
        %1293 = vmatpush1.msra.mxu0 0.0
        %1294 = vmatprep.subr.mxu0 0.0
        %1295 = vmatpush1.msra.mxu0 %v1270
        %1296 = vmatprep.subr.mxu0 0.0
        %1297 = vmatpush1.msra.mxu0 %v1267
        %1298 = vmatprep.subr.mxu0 0.0
        %1299 = vmatpush1.msra.mxu0 %v1266
        %1300 = vmatprep.subr.mxu0 0.0
        %1301 = vmatpush1.msra.mxu0 %v1265
        %1302 = vmatprep.subr.mxu0 0.0
        %1303 = vmatpush1.msra.mxu0 %v1264
        %1304 = vmatprep.subr.mxu0 0.0
        %1305 = vmatpush2.msra.mxu0 0.0
        %1306 = vmatprep.subr.mxu0 0.0
        %1307 = vmatpush2.msra.mxu0 0.0
        %1308 = vmatprep.subr.mxu0 0.0
        %1309 = vmatpush2.msra.mxu0 0.0
        %1310 = vmatprep.subr.mxu0 0.0
        %1311 = vmatpush2.msra.mxu0 0.0
        %1312 = vmatprep.subr.mxu0 0.0
        %1313 = vmatpush2.msra.mxu0 0.0
        %1314 = vmatprep.subr.mxu0 0.0
        %1315 = vmatpush2.msra.mxu0 0.0
        %1316 = vmatprep.subr.mxu0 0.0
        %1317 = vmatpush2.msra.mxu0 0.0
        %1318 = vmatprep.subr.mxu0 0.0
        %1319 = vmatpush2.msra.mxu0 0.0
        %1320 = vmatprep.subr.mxu0 0.0
        %1321 = vmatpush2.msra.mxu0 0.0
        %1322 = vmatprep.subr.mxu0 0.0
        %1323 = vmatpush2.msra.mxu0 0.0
        %1324 = vmatprep.subr.mxu0 0.0
        %1325 = vmatpush2.msra.mxu0 0.0
        %1326 = vmatprep.subr.mxu0 0.0
        %1327 = vmatpush2.msra.mxu0 0.0
        %1328 = vmatprep.subr.mxu0 0.0
        %1329 = vmatpush2.msra.mxu0 0.0
        %1330 = vmatprep.subr.mxu0 0.0
        %1331 = vmatpush2.msra.mxu0 0.0
        %1332 = vmatprep.subr.mxu0 0.0
        %1333 = vmatpush2.msra.mxu0 0.0
        %1334 = vmatprep.subr.mxu0 0.0
        %1335 = vmatpush2.msra.mxu0 0.0
        %1336 = vmatprep.mubr.f32.mxu0 0.0
        %1337 = vmatmul.mubr.f32.gmra.mxu0 %v915
        %v1338 = vpop.f32.mrf.mxu0
        %v1339 = vadd.f32 0.0, %v1338
        %v1340 = vpop.f32.mrf.mxu0
        %1341 = vmatprep.mubr.f32.mxu0 0.0
        %1342 = vmatmul.mubr.f32.gmra.mxu0 %v918
        %v1343 = vpop.f32.mrf.mxu0
        %v1344 = vadd.f32 0.0, %v1343
        %v1345 = vpop.f32.mrf.mxu0
        %1346 = vmatprep.mubr.f32.mxu0 0.0
        %1347 = vmatmul.mubr.f32.gmra.mxu0 %v921
        %v1348 = vpop.f32.mrf.mxu0
        %v1349 = vadd.f32 0.0, %v1348
        %v1350 = vpop.f32.mrf.mxu0
        %1351 = vmatprep.mubr.f32.mxu0 0.0
        %1352 = vmatmul.mubr.f32.gmra.mxu0 %v924
        %v1353 = vpop.f32.mrf.mxu0
        %v1354 = vadd.f32 0.0, %v1353
        %v1355 = vpop.f32.mrf.mxu0
        %1356 = vmatprep.mubr.f32.mxu0 0.0
        %1357 = vmatmul.mubr.f32.gmra.mxu0 %v927
        %v1358 = vpop.f32.mrf.mxu0
        %v1359 = vadd.f32 0.0, %v1358
        %v1360 = vpop.f32.mrf.mxu0
        %1361 = vmatprep.mubr.f32.mxu0 0.0
        %1362 = vmatmul.mubr.f32.gmra.mxu0 %v930
        %v1363 = vpop.f32.mrf.mxu0
        %v1364 = vadd.f32 0.0, %v1363
        %v1365 = vpop.f32.mrf.mxu0
        %1366 = vmatprep.mubr.f32.mxu0 0.0
        %1367 = vmatmul.mubr.f32.gmra.mxu0 %v933
        %v1368 = vpop.f32.mrf.mxu0
        %v1369 = vadd.f32 0.0, %v1368
        %v1370 = vpop.f32.mrf.mxu0
        %1371 = vmatprep.mubr.f32.mxu0 0.0
        %1372 = vmatmul.mubr.f32.gmra.mxu0 %v936
        %v1373 = vpop.f32.mrf.mxu0
        %v1374 = vadd.f32 0.0, %v1373
        %v1375 = vpop.f32.mrf.mxu0
        %1376 = vmatprep.mubr.f32.mxu0 0.0
        %1377 = vmatmul.mubr.f32.gmra.mxu0 %v939
        %v1378 = vpop.f32.mrf.mxu0
        %v1379 = vadd.f32 0.0, %v1378
        %v1380 = vpop.f32.mrf.mxu0
        %1381 = vmatprep.mubr.f32.mxu0 0.0
        %1382 = vmatmul.mubr.f32.gmra.mxu0 %v942
        %v1383 = vpop.f32.mrf.mxu0
        %v1384 = vadd.f32 0.0, %v1383
        %v1385 = vpop.f32.mrf.mxu0
        %1386 = vmatprep.mubr.f32.mxu0 0.0
        %1387 = vmatmul.mubr.f32.gmra.mxu0 %v945
        %v1388 = vpop.f32.mrf.mxu0
        %v1389 = vadd.f32 0.0, %v1388
        %v1390 = vpop.f32.mrf.mxu0
        %1391 = vmatprep.mubr.f32.mxu0 0.0
        %1392 = vmatmul.mubr.f32.gmra.mxu0 %v948
        %v1393 = vpop.f32.mrf.mxu0
        %v1394 = vadd.f32 0.0, %v1393
        %v1395 = vpop.f32.mrf.mxu0
        %1396 = vmatprep.mubr.f32.mxu0 0.0
        %1397 = vmatmul.mubr.f32.gmra.mxu0 %v951
        %v1398 = vpop.f32.mrf.mxu0
        %v1399 = vadd.f32 0.0, %v1398
        %v1400 = vpop.f32.mrf.mxu0
        %1401 = vmatprep.mubr.f32.mxu0 0.0
        %1402 = vmatmul.mubr.f32.gmra.mxu0 %v954
        %v1403 = vpop.f32.mrf.mxu0
        %v1404 = vadd.f32 0.0, %v1403
        %v1405 = vpop.f32.mrf.mxu0
        %1406 = vmatprep.mubr.f32.mxu0 0.0
        %1407 = vmatmul.mubr.f32.gmra.mxu0 %v957
        %v1408 = vpop.f32.mrf.mxu0
        %v1409 = vadd.f32 0.0, %v1408
        %v1410 = vpop.f32.mrf.mxu0
        %1411 = vmatprep.mubr.f32.mxu0 0.0
        %1412 = vmatmul.mubr.f32.gmra.mxu0 %v960
        %v1413 = vpop.f32.mrf.mxu0
        %v1414 = vadd.f32 0.0, %v1413
        %v1415 = vpop.f32.mrf.mxu0
        %1416 = vdwg.mxu0
        %v1417 = vmax.f32 %v1339, 0.0
        %v1418 = vmax.f32 %v1344, 0.0
        %v1419 = vmax.f32 %v1349, 0.0
        %v1420 = vmax.f32 %v1354, 0.0
        %v1421 = vmax.f32 %v1359, 0.0
        %v1422 = vmax.f32 %v1364, 0.0
        %v1423 = vmax.f32 %v1369, 0.0
        %v1424 = vmax.f32 %v1374, 0.0
        %v1425 = vmax.f32 %v1379, 0.0
        %v1426 = vmax.f32 %v1384, 0.0
        %v1427 = vmax.f32 %v1389, 0.0
        %v1428 = vmax.f32 %v1394, 0.0
        %v1429 = vmax.f32 %v1399, 0.0
        %v1430 = vmax.f32 %v1404, 0.0
        %v1431 = vmax.f32 %v1409, 0.0
        %v1432 = vmax.f32 %v1414, 0.0
        %s1433 = scalar_lea.vmem %s2, 128
        %v1434 = vld [vmem:[%s1433] sm:$0xff]
        %v1435 = vld [vmem:[%s1433 + $0x8] sm:$0xff]
        %v1436 = vld [vmem:[%s1433 + $0x10] sm:$0xff]
        %v1437 = vld [vmem:[%s1433 + $0x18] sm:$0xff]
        %v1438 = vld [vmem:[%s1433 + $0x20] sm:$0xff]
        %v1439 = vld [vmem:[%s1433 + $0x28] sm:$0xff]
        %v1440 = vld [vmem:[%s1433 + $0x30] sm:$0xff]
        %v1441 = vld [vmem:[%s1433 + $0x38] sm:$0xff]
        %v1442 = vld [vmem:[%s1433 + $0x40] sm:$0xff]
        %v1443 = vld [vmem:[%s1433 + $0x48] sm:$0xff]
        %v1444 = vld [vmem:[%s1433 + $0x50] sm:$0xff]
        %v1445 = vld [vmem:[%s1433 + $0x58] sm:$0xff]
        %v1446 = vld [vmem:[%s1433 + $0x60] sm:$0xff]
        %v1447 = vld [vmem:[%s1433 + $0x68] sm:$0xff]
        %v1448 = vld [vmem:[%s1433 + $0x70] sm:$0xff]
        %v1449 = vld [vmem:[%s1433 + $0x78] sm:$0xff]
        %1451 = vset.pattern.permute.xlu0 0
        %1452 = vperm.xlu0 %1451, %v1434
        %v1453 = vpop.permute.xlu0 %1452
        %1456 = vset.pattern.permute.xlu0 0
        %1457 = vperm.xlu0 %1456, %v1435
        %v1458 = vpop.permute.xlu0 %1457
        %1461 = vset.pattern.permute.xlu0 0
        %1462 = vperm.xlu0 %1461, %v1436
        %v1463 = vpop.permute.xlu0 %1462
        %1466 = vset.pattern.permute.xlu0 0
        %1467 = vperm.xlu0 %1466, %v1437
        %v1468 = vpop.permute.xlu0 %1467
        %1471 = vset.pattern.permute.xlu0 0
        %1472 = vperm.xlu0 %1471, %v1438
        %v1473 = vpop.permute.xlu0 %1472
        %1476 = vset.pattern.permute.xlu0 0
        %1477 = vperm.xlu0 %1476, %v1439
        %v1478 = vpop.permute.xlu0 %1477
        %1481 = vset.pattern.permute.xlu0 0
        %1482 = vperm.xlu0 %1481, %v1440
        %v1483 = vpop.permute.xlu0 %1482
        %1486 = vset.pattern.permute.xlu0 0
        %1487 = vperm.xlu0 %1486, %v1441
        %v1488 = vpop.permute.xlu0 %1487
        %1491 = vset.pattern.permute.xlu0 0
        %1492 = vperm.xlu0 %1491, %v1442
        %v1493 = vpop.permute.xlu0 %1492
        %1496 = vset.pattern.permute.xlu0 0
        %1497 = vperm.xlu0 %1496, %v1443
        %v1498 = vpop.permute.xlu0 %1497
        %1501 = vset.pattern.permute.xlu0 0
        %1502 = vperm.xlu0 %1501, %v1444
        %v1503 = vpop.permute.xlu0 %1502
        %1506 = vset.pattern.permute.xlu0 0
        %1507 = vperm.xlu0 %1506, %v1445
        %v1508 = vpop.permute.xlu0 %1507
        %1511 = vset.pattern.permute.xlu0 0
        %1512 = vperm.xlu0 %1511, %v1446
        %v1513 = vpop.permute.xlu0 %1512
        %1516 = vset.pattern.permute.xlu0 0
        %1517 = vperm.xlu0 %1516, %v1447
        %v1518 = vpop.permute.xlu0 %1517
        %1521 = vset.pattern.permute.xlu0 0
        %1522 = vperm.xlu0 %1521, %v1448
        %v1523 = vpop.permute.xlu0 %1522
        %1526 = vset.pattern.permute.xlu0 0
        %1527 = vperm.xlu0 %1526, %v1449
        %v1528 = vpop.permute.xlu0 %1527
        %v1530 = vmul.f32 %v1417, %v1453
        %v1531 = vmul.f32 %v1418, %v1458
        %v1532 = vmul.f32 %v1419, %v1463
        %v1533 = vmul.f32 %v1420, %v1468
        %v1534 = vmul.f32 %v1421, %v1473
        %v1535 = vmul.f32 %v1422, %v1478
        %v1536 = vmul.f32 %v1423, %v1483
        %v1537 = vmul.f32 %v1424, %v1488
        %v1538 = vmul.f32 %v1425, %v1493
        %v1539 = vmul.f32 %v1426, %v1498
        %v1540 = vmul.f32 %v1427, %v1503
        %v1541 = vmul.f32 %v1428, %v1508
        %v1542 = vmul.f32 %v1429, %v1513
        %v1543 = vmul.f32 %v1430, %v1518
        %v1544 = vmul.f32 %v1431, %v1523
        %v1545 = vmul.f32 %v1432, %v1528
        %v1546 = vadd.f32 %v1530, %v1534
        %v1547 = vadd.f32 %v1531, %v1535
        %v1548 = vadd.f32 %v1532, %v1536
        %v1549 = vadd.f32 %v1533, %v1537
        %v1550 = vadd.f32 %v1546, %v1538
        %v1551 = vadd.f32 %v1547, %v1539
        %v1552 = vadd.f32 %v1548, %v1540
        %v1553 = vadd.f32 %v1549, %v1541
        %v1554 = vadd.f32 %v1550, %v1542
        %v1555 = vadd.f32 %v1551, %v1543
        %v1556 = vadd.f32 %v1552, %v1544
        %v1557 = vadd.f32 %v1553, %v1545
        %v1558 = vld [vmem:[#allocation2] sm:$0xff]
        %v1559 = vld [vmem:[#allocation2 + $0x8] sm:$0xff]
        %v1560 = vld [vmem:[#allocation2 + $0x10] sm:$0xff]
        %v1561 = vld [vmem:[#allocation2 + $0x18] sm:$0xff]
        %v1562 = vadd.f32 %v1558, %v1554
        %v1563 = vadd.f32 %v1559, %v1555
        %v1564 = vadd.f32 %v1560, %v1556
        %v1565 = vadd.f32 %v1561, %v1557
        %1566 = vst [vmem:[#allocation2] sm:$0xff] %v1562
        %1567 = vst [vmem:[#allocation2 + $0x8] sm:$0xff] %v1563
        %1568 = vst [vmem:[#allocation2 + $0x10] sm:$0xff] %v1564
        %1569 = vst [vmem:[#allocation2 + $0x18] sm:$0xff] %v1565
        %s1570 = scalar_lea.vmem %s850, 80 [#allocation3]
        %v1571 = vld [vmem:[%s1570] sm:$0xff]
        %v1572 = vld [vmem:[%s1570 + $0x8] sm:$0xff]
        %v1573 = vld [vmem:[%s1570 + $0x10] sm:$0xff]
        %v1574 = vld [vmem:[%s1570 + $0x18] sm:$0xff]
        %v1575 = vld [vmem:[%s1570 + $0x20] sm:$0x1]
        %v1577 = vsel %vm962, %v1575, 0
        %1579 = vmatprep.subr.mxu0 0.0
        %1580 = vmatpush1.msra.mxu0 0.0
        %1581 = vmatprep.subr.mxu0 0.0
        %1582 = vmatpush1.msra.mxu0 0.0
        %1583 = vmatprep.subr.mxu0 0.0
        %1584 = vmatpush1.msra.mxu0 0.0
        %1585 = vmatprep.subr.mxu0 0.0
        %1586 = vmatpush1.msra.mxu0 0.0
        %1587 = vmatprep.subr.mxu0 0.0
        %1588 = vmatpush1.msra.mxu0 0.0
        %1589 = vmatprep.subr.mxu0 0.0
        %1590 = vmatpush1.msra.mxu0 0.0
        %1591 = vmatprep.subr.mxu0 0.0
        %1592 = vmatpush1.msra.mxu0 0.0
        %1593 = vmatprep.subr.mxu0 0.0
        %1594 = vmatpush1.msra.mxu0 0.0
        %1595 = vmatprep.subr.mxu0 0.0
        %1596 = vmatpush1.msra.mxu0 0.0
        %1597 = vmatprep.subr.mxu0 0.0
        %1598 = vmatpush1.msra.mxu0 0.0
        %1599 = vmatprep.subr.mxu0 0.0
        %1600 = vmatpush1.msra.mxu0 0.0
        %1601 = vmatprep.subr.mxu0 0.0
        %1602 = vmatpush1.msra.mxu0 %v1577
        %1603 = vmatprep.subr.mxu0 0.0
        %1604 = vmatpush1.msra.mxu0 %v1574
        %1605 = vmatprep.subr.mxu0 0.0
        %1606 = vmatpush1.msra.mxu0 %v1573
        %1607 = vmatprep.subr.mxu0 0.0
        %1608 = vmatpush1.msra.mxu0 %v1572
        %1609 = vmatprep.subr.mxu0 0.0
        %1610 = vmatpush1.msra.mxu0 %v1571
        %1611 = vmatprep.subr.mxu0 0.0
        %1612 = vmatpush2.msra.mxu0 0.0
        %1613 = vmatprep.subr.mxu0 0.0
        %1614 = vmatpush2.msra.mxu0 0.0
        %1615 = vmatprep.subr.mxu0 0.0
        %1616 = vmatpush2.msra.mxu0 0.0
        %1617 = vmatprep.subr.mxu0 0.0
        %1618 = vmatpush2.msra.mxu0 0.0
        %1619 = vmatprep.subr.mxu0 0.0
        %1620 = vmatpush2.msra.mxu0 0.0
        %1621 = vmatprep.subr.mxu0 0.0
        %1622 = vmatpush2.msra.mxu0 0.0
        %1623 = vmatprep.subr.mxu0 0.0
        %1624 = vmatpush2.msra.mxu0 0.0
        %1625 = vmatprep.subr.mxu0 0.0
        %1626 = vmatpush2.msra.mxu0 0.0
        %1627 = vmatprep.subr.mxu0 0.0
        %1628 = vmatpush2.msra.mxu0 0.0
        %1629 = vmatprep.subr.mxu0 0.0
        %1630 = vmatpush2.msra.mxu0 0.0
        %1631 = vmatprep.subr.mxu0 0.0
        %1632 = vmatpush2.msra.mxu0 0.0
        %1633 = vmatprep.subr.mxu0 0.0
        %1634 = vmatpush2.msra.mxu0 0.0
        %1635 = vmatprep.subr.mxu0 0.0
        %1636 = vmatpush2.msra.mxu0 0.0
        %1637 = vmatprep.subr.mxu0 0.0
        %1638 = vmatpush2.msra.mxu0 0.0
        %1639 = vmatprep.subr.mxu0 0.0
        %1640 = vmatpush2.msra.mxu0 0.0
        %1641 = vmatprep.subr.mxu0 0.0
        %1642 = vmatpush2.msra.mxu0 0.0
        %1643 = vmatprep.mubr.f32.mxu0 0.0
        %1644 = vmatmul.mubr.f32.gmra.mxu0 %v915
        %v1645 = vpop.f32.mrf.mxu0
        %v1646 = vadd.f32 0.0, %v1645
        %v1647 = vpop.f32.mrf.mxu0
        %1648 = vmatprep.mubr.f32.mxu0 0.0
        %1649 = vmatmul.mubr.f32.gmra.mxu0 %v918
        %v1650 = vpop.f32.mrf.mxu0
        %v1651 = vadd.f32 0.0, %v1650
        %v1652 = vpop.f32.mrf.mxu0
        %1653 = vmatprep.mubr.f32.mxu0 0.0
        %1654 = vmatmul.mubr.f32.gmra.mxu0 %v921
        %v1655 = vpop.f32.mrf.mxu0
        %v1656 = vadd.f32 0.0, %v1655
        %v1657 = vpop.f32.mrf.mxu0
        %1658 = vmatprep.mubr.f32.mxu0 0.0
        %1659 = vmatmul.mubr.f32.gmra.mxu0 %v924
        %v1660 = vpop.f32.mrf.mxu0
        %v1661 = vadd.f32 0.0, %v1660
        %v1662 = vpop.f32.mrf.mxu0
        %1663 = vmatprep.mubr.f32.mxu0 0.0
        %1664 = vmatmul.mubr.f32.gmra.mxu0 %v927
        %v1665 = vpop.f32.mrf.mxu0
        %v1666 = vadd.f32 0.0, %v1665
        %v1667 = vpop.f32.mrf.mxu0
        %1668 = vmatprep.mubr.f32.mxu0 0.0
        %1669 = vmatmul.mubr.f32.gmra.mxu0 %v930
        %v1670 = vpop.f32.mrf.mxu0
        %v1671 = vadd.f32 0.0, %v1670
        %v1672 = vpop.f32.mrf.mxu0
        %1673 = vmatprep.mubr.f32.mxu0 0.0
        %1674 = vmatmul.mubr.f32.gmra.mxu0 %v933
        %v1675 = vpop.f32.mrf.mxu0
        %v1676 = vadd.f32 0.0, %v1675
        %v1677 = vpop.f32.mrf.mxu0
        %1678 = vmatprep.mubr.f32.mxu0 0.0
        %1679 = vmatmul.mubr.f32.gmra.mxu0 %v936
        %v1680 = vpop.f32.mrf.mxu0
        %v1681 = vadd.f32 0.0, %v1680
        %v1682 = vpop.f32.mrf.mxu0
        %1683 = vmatprep.mubr.f32.mxu0 0.0
        %1684 = vmatmul.mubr.f32.gmra.mxu0 %v939
        %v1685 = vpop.f32.mrf.mxu0
        %v1686 = vadd.f32 0.0, %v1685
        %v1687 = vpop.f32.mrf.mxu0
        %1688 = vmatprep.mubr.f32.mxu0 0.0
        %1689 = vmatmul.mubr.f32.gmra.mxu0 %v942
        %v1690 = vpop.f32.mrf.mxu0
        %v1691 = vadd.f32 0.0, %v1690
        %v1692 = vpop.f32.mrf.mxu0
        %1693 = vmatprep.mubr.f32.mxu0 0.0
        %1694 = vmatmul.mubr.f32.gmra.mxu0 %v945
        %v1695 = vpop.f32.mrf.mxu0
        %v1696 = vadd.f32 0.0, %v1695
        %v1697 = vpop.f32.mrf.mxu0
        %1698 = vmatprep.mubr.f32.mxu0 0.0
        %1699 = vmatmul.mubr.f32.gmra.mxu0 %v948
        %v1700 = vpop.f32.mrf.mxu0
        %v1701 = vadd.f32 0.0, %v1700
        %v1702 = vpop.f32.mrf.mxu0
        %1703 = vmatprep.mubr.f32.mxu0 0.0
        %1704 = vmatmul.mubr.f32.gmra.mxu0 %v951
        %v1705 = vpop.f32.mrf.mxu0
        %v1706 = vadd.f32 0.0, %v1705
        %v1707 = vpop.f32.mrf.mxu0
        %1708 = vmatprep.mubr.f32.mxu0 0.0
        %1709 = vmatmul.mubr.f32.gmra.mxu0 %v954
        %v1710 = vpop.f32.mrf.mxu0
        %v1711 = vadd.f32 0.0, %v1710
        %v1712 = vpop.f32.mrf.mxu0
        %1713 = vmatprep.mubr.f32.mxu0 0.0
        %1714 = vmatmul.mubr.f32.gmra.mxu0 %v957
        %v1715 = vpop.f32.mrf.mxu0
        %v1716 = vadd.f32 0.0, %v1715
        %v1717 = vpop.f32.mrf.mxu0
        %1718 = vmatprep.mubr.f32.mxu0 0.0
        %1719 = vmatmul.mubr.f32.gmra.mxu0 %v960
        %v1720 = vpop.f32.mrf.mxu0
        %v1721 = vadd.f32 0.0, %v1720
        %v1722 = vpop.f32.mrf.mxu0
        %1723 = vdwg.mxu0
        %v1724 = vmax.f32 %v1646, 0.0
        %v1725 = vmax.f32 %v1651, 0.0
        %v1726 = vmax.f32 %v1656, 0.0
        %v1727 = vmax.f32 %v1661, 0.0
        %v1728 = vmax.f32 %v1666, 0.0
        %v1729 = vmax.f32 %v1671, 0.0
        %v1730 = vmax.f32 %v1676, 0.0
        %v1731 = vmax.f32 %v1681, 0.0
        %v1732 = vmax.f32 %v1686, 0.0
        %v1733 = vmax.f32 %v1691, 0.0
        %v1734 = vmax.f32 %v1696, 0.0
        %v1735 = vmax.f32 %v1701, 0.0
        %v1736 = vmax.f32 %v1706, 0.0
        %v1737 = vmax.f32 %v1711, 0.0
        %v1738 = vmax.f32 %v1716, 0.0
        %v1739 = vmax.f32 %v1721, 0.0
        %s1740 = scalar_lea.vmem %s2, 256
        %v1741 = vld [vmem:[%s1740] sm:$0xff]
        %v1742 = vld [vmem:[%s1740 + $0x8] sm:$0xff]
        %v1743 = vld [vmem:[%s1740 + $0x10] sm:$0xff]
        %v1744 = vld [vmem:[%s1740 + $0x18] sm:$0xff]
        %v1745 = vld [vmem:[%s1740 + $0x20] sm:$0xff]
        %v1746 = vld [vmem:[%s1740 + $0x28] sm:$0xff]
        %v1747 = vld [vmem:[%s1740 + $0x30] sm:$0xff]
        %v1748 = vld [vmem:[%s1740 + $0x38] sm:$0xff]
        %v1749 = vld [vmem:[%s1740 + $0x40] sm:$0xff]
        %v1750 = vld [vmem:[%s1740 + $0x48] sm:$0xff]
        %v1751 = vld [vmem:[%s1740 + $0x50] sm:$0xff]
        %v1752 = vld [vmem:[%s1740 + $0x58] sm:$0xff]
        %v1753 = vld [vmem:[%s1740 + $0x60] sm:$0xff]
        %v1754 = vld [vmem:[%s1740 + $0x68] sm:$0xff]
        %v1755 = vld [vmem:[%s1740 + $0x70] sm:$0xff]
        %v1756 = vld [vmem:[%s1740 + $0x78] sm:$0xff]
        %1758 = vset.pattern.permute.xlu0 0
        %1759 = vperm.xlu0 %1758, %v1741
        %v1760 = vpop.permute.xlu0 %1759
        %1763 = vset.pattern.permute.xlu0 0
        %1764 = vperm.xlu0 %1763, %v1742
        %v1765 = vpop.permute.xlu0 %1764
        %1768 = vset.pattern.permute.xlu0 0
        %1769 = vperm.xlu0 %1768, %v1743
        %v1770 = vpop.permute.xlu0 %1769
        %1773 = vset.pattern.permute.xlu0 0
        %1774 = vperm.xlu0 %1773, %v1744
        %v1775 = vpop.permute.xlu0 %1774
        %1778 = vset.pattern.permute.xlu0 0
        %1779 = vperm.xlu0 %1778, %v1745
        %v1780 = vpop.permute.xlu0 %1779
        %1783 = vset.pattern.permute.xlu0 0
        %1784 = vperm.xlu0 %1783, %v1746
        %v1785 = vpop.permute.xlu0 %1784
        %1788 = vset.pattern.permute.xlu0 0
        %1789 = vperm.xlu0 %1788, %v1747
        %v1790 = vpop.permute.xlu0 %1789
        %1793 = vset.pattern.permute.xlu0 0
        %1794 = vperm.xlu0 %1793, %v1748
        %v1795 = vpop.permute.xlu0 %1794
        %1798 = vset.pattern.permute.xlu0 0
        %1799 = vperm.xlu0 %1798, %v1749
        %v1800 = vpop.permute.xlu0 %1799
        %1803 = vset.pattern.permute.xlu0 0
        %1804 = vperm.xlu0 %1803, %v1750
        %v1805 = vpop.permute.xlu0 %1804
        %1808 = vset.pattern.permute.xlu0 0
        %1809 = vperm.xlu0 %1808, %v1751
        %v1810 = vpop.permute.xlu0 %1809
        %1813 = vset.pattern.permute.xlu0 0
        %1814 = vperm.xlu0 %1813, %v1752
        %v1815 = vpop.permute.xlu0 %1814
        %1818 = vset.pattern.permute.xlu0 0
        %1819 = vperm.xlu0 %1818, %v1753
        %v1820 = vpop.permute.xlu0 %1819
        %1823 = vset.pattern.permute.xlu0 0
        %1824 = vperm.xlu0 %1823, %v1754
        %v1825 = vpop.permute.xlu0 %1824
        %1828 = vset.pattern.permute.xlu0 0
        %1829 = vperm.xlu0 %1828, %v1755
        %v1830 = vpop.permute.xlu0 %1829
        %1833 = vset.pattern.permute.xlu0 0
        %1834 = vperm.xlu0 %1833, %v1756
        %v1835 = vpop.permute.xlu0 %1834
        %v1837 = vmul.f32 %v1724, %v1760
        %v1838 = vmul.f32 %v1725, %v1765
        %v1839 = vmul.f32 %v1726, %v1770
        %v1840 = vmul.f32 %v1727, %v1775
        %v1841 = vmul.f32 %v1728, %v1780
        %v1842 = vmul.f32 %v1729, %v1785
        %v1843 = vmul.f32 %v1730, %v1790
        %v1844 = vmul.f32 %v1731, %v1795
        %v1845 = vmul.f32 %v1732, %v1800
        %v1846 = vmul.f32 %v1733, %v1805
        %v1847 = vmul.f32 %v1734, %v1810
        %v1848 = vmul.f32 %v1735, %v1815
        %v1849 = vmul.f32 %v1736, %v1820
        %v1850 = vmul.f32 %v1737, %v1825
        %v1851 = vmul.f32 %v1738, %v1830
        %v1852 = vmul.f32 %v1739, %v1835
        %v1853 = vadd.f32 %v1837, %v1841
        %v1854 = vadd.f32 %v1838, %v1842
        %v1855 = vadd.f32 %v1839, %v1843
        %v1856 = vadd.f32 %v1840, %v1844
        %v1857 = vadd.f32 %v1853, %v1845
        %v1858 = vadd.f32 %v1854, %v1846
        %v1859 = vadd.f32 %v1855, %v1847
        %v1860 = vadd.f32 %v1856, %v1848
        %v1861 = vadd.f32 %v1857, %v1849
        %v1862 = vadd.f32 %v1858, %v1850
        %v1863 = vadd.f32 %v1859, %v1851
        %v1864 = vadd.f32 %v1860, %v1852
        %v1865 = vld [vmem:[#allocation2] sm:$0xff]
        %v1866 = vld [vmem:[#allocation2 + $0x8] sm:$0xff]
        %v1867 = vld [vmem:[#allocation2 + $0x10] sm:$0xff]
        %v1868 = vld [vmem:[#allocation2 + $0x18] sm:$0xff]
        %v1869 = vadd.f32 %v1865, %v1861
        %v1870 = vadd.f32 %v1866, %v1862
        %v1871 = vadd.f32 %v1867, %v1863
        %v1872 = vadd.f32 %v1868, %v1864
        %1873 = vst [vmem:[#allocation2] sm:$0xff] %v1869
        %1874 = vst [vmem:[#allocation2 + $0x8] sm:$0xff] %v1870
        %1875 = vst [vmem:[#allocation2 + $0x10] sm:$0xff] %v1871
        %1876 = vst [vmem:[#allocation2 + $0x18] sm:$0xff] %v1872
        %s1877 = scalar_lea.vmem %s850, 120 [#allocation3]
        %v1878 = vld [vmem:[%s1877] sm:$0xff]
        %v1879 = vld [vmem:[%s1877 + $0x8] sm:$0xff]
        %v1880 = vld [vmem:[%s1877 + $0x10] sm:$0xff]
        %v1881 = vld [vmem:[%s1877 + $0x18] sm:$0xff]
        %v1882 = vld [vmem:[%s1877 + $0x20] sm:$0x1]
        %v1884 = vsel %vm962, %v1882, 0
        %1886 = vmatprep.subr.mxu0 0.0
        %1887 = vmatpush1.msra.mxu0 0.0
        %1888 = vmatprep.subr.mxu0 0.0
        %1889 = vmatpush1.msra.mxu0 0.0
        %1890 = vmatprep.subr.mxu0 0.0
        %1891 = vmatpush1.msra.mxu0 0.0
        %1892 = vmatprep.subr.mxu0 0.0
        %1893 = vmatpush1.msra.mxu0 0.0
        %1894 = vmatprep.subr.mxu0 0.0
        %1895 = vmatpush1.msra.mxu0 0.0
        %1896 = vmatprep.subr.mxu0 0.0
        %1897 = vmatpush1.msra.mxu0 0.0
        %1898 = vmatprep.subr.mxu0 0.0
        %1899 = vmatpush1.msra.mxu0 0.0
        %1900 = vmatprep.subr.mxu0 0.0
        %1901 = vmatpush1.msra.mxu0 0.0
        %1902 = vmatprep.subr.mxu0 0.0
        %1903 = vmatpush1.msra.mxu0 0.0
        %1904 = vmatprep.subr.mxu0 0.0
        %1905 = vmatpush1.msra.mxu0 0.0
        %1906 = vmatprep.subr.mxu0 0.0
        %1907 = vmatpush1.msra.mxu0 0.0
        %1908 = vmatprep.subr.mxu0 0.0
        %1909 = vmatpush1.msra.mxu0 %v1884
        %1910 = vmatprep.subr.mxu0 0.0
        %1911 = vmatpush1.msra.mxu0 %v1881
        %1912 = vmatprep.subr.mxu0 0.0
        %1913 = vmatpush1.msra.mxu0 %v1880
        %1914 = vmatprep.subr.mxu0 0.0
        %1915 = vmatpush1.msra.mxu0 %v1879
        %1916 = vmatprep.subr.mxu0 0.0
        %1917 = vmatpush1.msra.mxu0 %v1878
        %1918 = vmatprep.subr.mxu0 0.0
        %1919 = vmatpush2.msra.mxu0 0.0
        %1920 = vmatprep.subr.mxu0 0.0
        %1921 = vmatpush2.msra.mxu0 0.0
        %1922 = vmatprep.subr.mxu0 0.0
        %1923 = vmatpush2.msra.mxu0 0.0
        %1924 = vmatprep.subr.mxu0 0.0
        %1925 = vmatpush2.msra.mxu0 0.0
        %1926 = vmatprep.subr.mxu0 0.0
        %1927 = vmatpush2.msra.mxu0 0.0
        %1928 = vmatprep.subr.mxu0 0.0
        %1929 = vmatpush2.msra.mxu0 0.0
        %1930 = vmatprep.subr.mxu0 0.0
        %1931 = vmatpush2.msra.mxu0 0.0
        %1932 = vmatprep.subr.mxu0 0.0
        %1933 = vmatpush2.msra.mxu0 0.0
        %1934 = vmatprep.subr.mxu0 0.0
        %1935 = vmatpush2.msra.mxu0 0.0
        %1936 = vmatprep.subr.mxu0 0.0
        %1937 = vmatpush2.msra.mxu0 0.0
        %1938 = vmatprep.subr.mxu0 0.0
        %1939 = vmatpush2.msra.mxu0 0.0
        %1940 = vmatprep.subr.mxu0 0.0
        %1941 = vmatpush2.msra.mxu0 0.0
        %1942 = vmatprep.subr.mxu0 0.0
        %1943 = vmatpush2.msra.mxu0 0.0
        %1944 = vmatprep.subr.mxu0 0.0
        %1945 = vmatpush2.msra.mxu0 0.0
        %1946 = vmatprep.subr.mxu0 0.0
        %1947 = vmatpush2.msra.mxu0 0.0
        %1948 = vmatprep.subr.mxu0 0.0
        %1949 = vmatpush2.msra.mxu0 0.0
        %1950 = vmatprep.mubr.f32.mxu0 0.0
        %1951 = vmatmul.mubr.f32.gmra.mxu0 %v915
        %v1952 = vpop.f32.mrf.mxu0
        %v1953 = vadd.f32 0.0, %v1952
        %v1954 = vpop.f32.mrf.mxu0
        %1955 = vmatprep.mubr.f32.mxu0 0.0
        %1956 = vmatmul.mubr.f32.gmra.mxu0 %v918
        %v1957 = vpop.f32.mrf.mxu0
        %v1958 = vadd.f32 0.0, %v1957
        %v1959 = vpop.f32.mrf.mxu0
        %1960 = vmatprep.mubr.f32.mxu0 0.0
        %1961 = vmatmul.mubr.f32.gmra.mxu0 %v921
        %v1962 = vpop.f32.mrf.mxu0
        %v1963 = vadd.f32 0.0, %v1962
        %v1964 = vpop.f32.mrf.mxu0
        %1965 = vmatprep.mubr.f32.mxu0 0.0
        %1966 = vmatmul.mubr.f32.gmra.mxu0 %v924
        %v1967 = vpop.f32.mrf.mxu0
        %v1968 = vadd.f32 0.0, %v1967
        %v1969 = vpop.f32.mrf.mxu0
        %1970 = vmatprep.mubr.f32.mxu0 0.0
        %1971 = vmatmul.mubr.f32.gmra.mxu0 %v927
        %v1972 = vpop.f32.mrf.mxu0
        %v1973 = vadd.f32 0.0, %v1972
        %v1974 = vpop.f32.mrf.mxu0
        %1975 = vmatprep.mubr.f32.mxu0 0.0
        %1976 = vmatmul.mubr.f32.gmra.mxu0 %v930
        %v1977 = vpop.f32.mrf.mxu0
        %v1978 = vadd.f32 0.0, %v1977
        %v1979 = vpop.f32.mrf.mxu0
        %1980 = vmatprep.mubr.f32.mxu0 0.0
        %1981 = vmatmul.mubr.f32.gmra.mxu0 %v933
        %v1982 = vpop.f32.mrf.mxu0
        %v1983 = vadd.f32 0.0, %v1982
        %v1984 = vpop.f32.mrf.mxu0
        %1985 = vmatprep.mubr.f32.mxu0 0.0
        %1986 = vmatmul.mubr.f32.gmra.mxu0 %v936
        %v1987 = vpop.f32.mrf.mxu0
        %v1988 = vadd.f32 0.0, %v1987
        %v1989 = vpop.f32.mrf.mxu0
        %1990 = vmatprep.mubr.f32.mxu0 0.0
        %1991 = vmatmul.mubr.f32.gmra.mxu0 %v939
        %v1992 = vpop.f32.mrf.mxu0
        %v1993 = vadd.f32 0.0, %v1992
        %v1994 = vpop.f32.mrf.mxu0
        %1995 = vmatprep.mubr.f32.mxu0 0.0
        %1996 = vmatmul.mubr.f32.gmra.mxu0 %v942
        %v1997 = vpop.f32.mrf.mxu0
        %v1998 = vadd.f32 0.0, %v1997
        %v1999 = vpop.f32.mrf.mxu0
        %2000 = vmatprep.mubr.f32.mxu0 0.0
        %2001 = vmatmul.mubr.f32.gmra.mxu0 %v945
        %v2002 = vpop.f32.mrf.mxu0
        %v2003 = vadd.f32 0.0, %v2002
        %v2004 = vpop.f32.mrf.mxu0
        %2005 = vmatprep.mubr.f32.mxu0 0.0
        %2006 = vmatmul.mubr.f32.gmra.mxu0 %v948
        %v2007 = vpop.f32.mrf.mxu0
        %v2008 = vadd.f32 0.0, %v2007
        %v2009 = vpop.f32.mrf.mxu0
        %2010 = vmatprep.mubr.f32.mxu0 0.0
        %2011 = vmatmul.mubr.f32.gmra.mxu0 %v951
        %v2012 = vpop.f32.mrf.mxu0
        %v2013 = vadd.f32 0.0, %v2012
        %v2014 = vpop.f32.mrf.mxu0
        %2015 = vmatprep.mubr.f32.mxu0 0.0
        %2016 = vmatmul.mubr.f32.gmra.mxu0 %v954
        %v2017 = vpop.f32.mrf.mxu0
        %v2018 = vadd.f32 0.0, %v2017
        %v2019 = vpop.f32.mrf.mxu0
        %2020 = vmatprep.mubr.f32.mxu0 0.0
        %2021 = vmatmul.mubr.f32.gmra.mxu0 %v957
        %v2022 = vpop.f32.mrf.mxu0
        %v2023 = vadd.f32 0.0, %v2022
        %v2024 = vpop.f32.mrf.mxu0
        %2025 = vmatprep.mubr.f32.mxu0 0.0
        %2026 = vmatmul.mubr.f32.gmra.mxu0 %v960
        %v2027 = vpop.f32.mrf.mxu0
        %v2028 = vadd.f32 0.0, %v2027
        %v2029 = vpop.f32.mrf.mxu0
        %2030 = vdwg.mxu0
        %v2031 = vmax.f32 %v1953, 0.0
        %v2032 = vmax.f32 %v1958, 0.0
        %v2033 = vmax.f32 %v1963, 0.0
        %v2034 = vmax.f32 %v1968, 0.0
        %v2035 = vmax.f32 %v1973, 0.0
        %v2036 = vmax.f32 %v1978, 0.0
        %v2037 = vmax.f32 %v1983, 0.0
        %v2038 = vmax.f32 %v1988, 0.0
        %v2039 = vmax.f32 %v1993, 0.0
        %v2040 = vmax.f32 %v1998, 0.0
        %v2041 = vmax.f32 %v2003, 0.0
        %v2042 = vmax.f32 %v2008, 0.0
        %v2043 = vmax.f32 %v2013, 0.0
        %v2044 = vmax.f32 %v2018, 0.0
        %v2045 = vmax.f32 %v2023, 0.0
        %v2046 = vmax.f32 %v2028, 0.0
        %s2047 = scalar_lea.vmem %s2, 384
        %v2048 = vld [vmem:[%s2047] sm:$0xff]
        %v2049 = vld [vmem:[%s2047 + $0x8] sm:$0xff]
        %v2050 = vld [vmem:[%s2047 + $0x10] sm:$0xff]
        %v2051 = vld [vmem:[%s2047 + $0x18] sm:$0xff]
        %v2052 = vld [vmem:[%s2047 + $0x20] sm:$0xff]
        %v2053 = vld [vmem:[%s2047 + $0x28] sm:$0xff]
        %v2054 = vld [vmem:[%s2047 + $0x30] sm:$0xff]
        %v2055 = vld [vmem:[%s2047 + $0x38] sm:$0xff]
        %v2056 = vld [vmem:[%s2047 + $0x40] sm:$0xff]
        %v2057 = vld [vmem:[%s2047 + $0x48] sm:$0xff]
        %v2058 = vld [vmem:[%s2047 + $0x50] sm:$0xff]
        %v2059 = vld [vmem:[%s2047 + $0x58] sm:$0xff]
        %v2060 = vld [vmem:[%s2047 + $0x60] sm:$0xff]
        %v2061 = vld [vmem:[%s2047 + $0x68] sm:$0xff]
        %v2062 = vld [vmem:[%s2047 + $0x70] sm:$0xff]
        %v2063 = vld [vmem:[%s2047 + $0x78] sm:$0xff]
        %2065 = vset.pattern.permute.xlu0 0
        %2066 = vperm.xlu0 %2065, %v2048
        %v2067 = vpop.permute.xlu0 %2066
        %2070 = vset.pattern.permute.xlu0 0
        %2071 = vperm.xlu0 %2070, %v2049
        %v2072 = vpop.permute.xlu0 %2071
        %2075 = vset.pattern.permute.xlu0 0
        %2076 = vperm.xlu0 %2075, %v2050
        %v2077 = vpop.permute.xlu0 %2076
        %2080 = vset.pattern.permute.xlu0 0
        %2081 = vperm.xlu0 %2080, %v2051
        %v2082 = vpop.permute.xlu0 %2081
        %2085 = vset.pattern.permute.xlu0 0
        %2086 = vperm.xlu0 %2085, %v2052
        %v2087 = vpop.permute.xlu0 %2086
        %2090 = vset.pattern.permute.xlu0 0
        %2091 = vperm.xlu0 %2090, %v2053
        %v2092 = vpop.permute.xlu0 %2091
        %2095 = vset.pattern.permute.xlu0 0
        %2096 = vperm.xlu0 %2095, %v2054
        %v2097 = vpop.permute.xlu0 %2096
        %2100 = vset.pattern.permute.xlu0 0
        %2101 = vperm.xlu0 %2100, %v2055
        %v2102 = vpop.permute.xlu0 %2101
        %2105 = vset.pattern.permute.xlu0 0
        %2106 = vperm.xlu0 %2105, %v2056
        %v2107 = vpop.permute.xlu0 %2106
        %2110 = vset.pattern.permute.xlu0 0
        %2111 = vperm.xlu0 %2110, %v2057
        %v2112 = vpop.permute.xlu0 %2111
        %2115 = vset.pattern.permute.xlu0 0
        %2116 = vperm.xlu0 %2115, %v2058
        %v2117 = vpop.permute.xlu0 %2116
        %2120 = vset.pattern.permute.xlu0 0
        %2121 = vperm.xlu0 %2120, %v2059
        %v2122 = vpop.permute.xlu0 %2121
        %2125 = vset.pattern.permute.xlu0 0
        %2126 = vperm.xlu0 %2125, %v2060
        %v2127 = vpop.permute.xlu0 %2126
        %2130 = vset.pattern.permute.xlu0 0
        %2131 = vperm.xlu0 %2130, %v2061
        %v2132 = vpop.permute.xlu0 %2131
        %2135 = vset.pattern.permute.xlu0 0
        %2136 = vperm.xlu0 %2135, %v2062
        %v2137 = vpop.permute.xlu0 %2136
        %2140 = vset.pattern.permute.xlu0 0
        %2141 = vperm.xlu0 %2140, %v2063
        %v2142 = vpop.permute.xlu0 %2141
        %v2144 = vmul.f32 %v2031, %v2067
        %v2145 = vmul.f32 %v2032, %v2072
        %v2146 = vmul.f32 %v2033, %v2077
        %v2147 = vmul.f32 %v2034, %v2082
        %v2148 = vmul.f32 %v2035, %v2087
        %v2149 = vmul.f32 %v2036, %v2092
        %v2150 = vmul.f32 %v2037, %v2097
        %v2151 = vmul.f32 %v2038, %v2102
        %v2152 = vmul.f32 %v2039, %v2107
        %v2153 = vmul.f32 %v2040, %v2112
        %v2154 = vmul.f32 %v2041, %v2117
        %v2155 = vmul.f32 %v2042, %v2122
        %v2156 = vmul.f32 %v2043, %v2127
        %v2157 = vmul.f32 %v2044, %v2132
        %v2158 = vmul.f32 %v2045, %v2137
        %v2159 = vmul.f32 %v2046, %v2142
        %v2160 = vadd.f32 %v2144, %v2148
        %v2161 = vadd.f32 %v2145, %v2149
        %v2162 = vadd.f32 %v2146, %v2150
        %v2163 = vadd.f32 %v2147, %v2151
        %v2164 = vadd.f32 %v2160, %v2152
        %v2165 = vadd.f32 %v2161, %v2153
        %v2166 = vadd.f32 %v2162, %v2154
        %v2167 = vadd.f32 %v2163, %v2155
        %v2168 = vadd.f32 %v2164, %v2156
        %v2169 = vadd.f32 %v2165, %v2157
        %v2170 = vadd.f32 %v2166, %v2158
        %v2171 = vadd.f32 %v2167, %v2159
        %v2172 = vld [vmem:[#allocation2] sm:$0xff]
        %v2173 = vld [vmem:[#allocation2 + $0x8] sm:$0xff]
        %v2174 = vld [vmem:[#allocation2 + $0x10] sm:$0xff]
        %v2175 = vld [vmem:[#allocation2 + $0x18] sm:$0xff]
        %v2176 = vadd.f32 %v2172, %v2168
        %v2177 = vadd.f32 %v2173, %v2169
        %v2178 = vadd.f32 %v2174, %v2170
        %v2179 = vadd.f32 %v2175, %v2171
        %2180 = vst [vmem:[#allocation2] sm:$0xff] %v2176
        %2181 = vst [vmem:[#allocation2 + $0x8] sm:$0xff] %v2177
        %2182 = vst [vmem:[#allocation2 + $0x10] sm:$0xff] %v2178
        %2183 = vst [vmem:[#allocation2 + $0x18] sm:$0xff] %v2179
        %s2184 = scalar_lea.vmem %s850, 160 [#allocation3]
        %v2185 = vld [vmem:[%s2184] sm:$0xff]
        %v2186 = vld [vmem:[%s2184 + $0x8] sm:$0xff]
        %v2187 = vld [vmem:[%s2184 + $0x10] sm:$0xff]
        %v2188 = vld [vmem:[%s2184 + $0x18] sm:$0xff]
        %v2189 = vld [vmem:[%s2184 + $0x20] sm:$0x1]
        %v2191 = vsel %vm962, %v2189, 0
        %2193 = vmatprep.subr.mxu0 0.0
        %2194 = vmatpush1.msra.mxu0 0.0
        %2195 = vmatprep.subr.mxu0 0.0
        %2196 = vmatpush1.msra.mxu0 0.0
        %2197 = vmatprep.subr.mxu0 0.0
        %2198 = vmatpush1.msra.mxu0 0.0
        %2199 = vmatprep.subr.mxu0 0.0
        %2200 = vmatpush1.msra.mxu0 0.0
        %2201 = vmatprep.subr.mxu0 0.0
        %2202 = vmatpush1.msra.mxu0 0.0
        %2203 = vmatprep.subr.mxu0 0.0
        %2204 = vmatpush1.msra.mxu0 0.0
        %2205 = vmatprep.subr.mxu0 0.0
        %2206 = vmatpush1.msra.mxu0 0.0
        %2207 = vmatprep.subr.mxu0 0.0
        %2208 = vmatpush1.msra.mxu0 0.0
        %2209 = vmatprep.subr.mxu0 0.0
        %2210 = vmatpush1.msra.mxu0 0.0
        %2211 = vmatprep.subr.mxu0 0.0
        %2212 = vmatpush1.msra.mxu0 0.0
        %2213 = vmatprep.subr.mxu0 0.0
        %2214 = vmatpush1.msra.mxu0 0.0
        %2215 = vmatprep.subr.mxu0 0.0
        %2216 = vmatpush1.msra.mxu0 %v2191
        %2217 = vmatprep.subr.mxu0 0.0
        %2218 = vmatpush1.msra.mxu0 %v2188
        %2219 = vmatprep.subr.mxu0 0.0
        %2220 = vmatpush1.msra.mxu0 %v2187
        %2221 = vmatprep.subr.mxu0 0.0
        %2222 = vmatpush1.msra.mxu0 %v2186
        %2223 = vmatprep.subr.mxu0 0.0
        %2224 = vmatpush1.msra.mxu0 %v2185
        %2225 = vmatprep.subr.mxu0 0.0
        %2226 = vmatpush2.msra.mxu0 0.0
        %2227 = vmatprep.subr.mxu0 0.0
        %2228 = vmatpush2.msra.mxu0 0.0
        %2229 = vmatprep.subr.mxu0 0.0
        %2230 = vmatpush2.msra.mxu0 0.0
        %2231 = vmatprep.subr.mxu0 0.0
        %2232 = vmatpush2.msra.mxu0 0.0
        %2233 = vmatprep.subr.mxu0 0.0
        %2234 = vmatpush2.msra.mxu0 0.0
        %2235 = vmatprep.subr.mxu0 0.0
        %2236 = vmatpush2.msra.mxu0 0.0
        %2237 = vmatprep.subr.mxu0 0.0
        %2238 = vmatpush2.msra.mxu0 0.0
        %2239 = vmatprep.subr.mxu0 0.0
        %2240 = vmatpush2.msra.mxu0 0.0
        %2241 = vmatprep.subr.mxu0 0.0
        %2242 = vmatpush2.msra.mxu0 0.0
        %2243 = vmatprep.subr.mxu0 0.0
        %2244 = vmatpush2.msra.mxu0 0.0
        %2245 = vmatprep.subr.mxu0 0.0
        %2246 = vmatpush2.msra.mxu0 0.0
        %2247 = vmatprep.subr.mxu0 0.0
        %2248 = vmatpush2.msra.mxu0 0.0
        %2249 = vmatprep.subr.mxu0 0.0
        %2250 = vmatpush2.msra.mxu0 0.0
        %2251 = vmatprep.subr.mxu0 0.0
        %2252 = vmatpush2.msra.mxu0 0.0
        %2253 = vmatprep.subr.mxu0 0.0
        %2254 = vmatpush2.msra.mxu0 0.0
        %2255 = vmatprep.subr.mxu0 0.0
        %2256 = vmatpush2.msra.mxu0 0.0
        %2257 = vmatprep.mubr.f32.mxu0 0.0
        %2258 = vmatmul.mubr.f32.gmra.mxu0 %v915
        %v2259 = vpop.f32.mrf.mxu0
        %v2260 = vadd.f32 0.0, %v2259
        %v2261 = vpop.f32.mrf.mxu0
        %2262 = vmatprep.mubr.f32.mxu0 0.0
        %2263 = vmatmul.mubr.f32.gmra.mxu0 %v918
        %v2264 = vpop.f32.mrf.mxu0
        %v2265 = vadd.f32 0.0, %v2264
        %v2266 = vpop.f32.mrf.mxu0
        %2267 = vmatprep.mubr.f32.mxu0 0.0
        %2268 = vmatmul.mubr.f32.gmra.mxu0 %v921
        %v2269 = vpop.f32.mrf.mxu0
        %v2270 = vadd.f32 0.0, %v2269
        %v2271 = vpop.f32.mrf.mxu0
        %2272 = vmatprep.mubr.f32.mxu0 0.0
        %2273 = vmatmul.mubr.f32.gmra.mxu0 %v924
        %v2274 = vpop.f32.mrf.mxu0
        %v2275 = vadd.f32 0.0, %v2274
        %v2276 = vpop.f32.mrf.mxu0
        %2277 = vmatprep.mubr.f32.mxu0 0.0
        %2278 = vmatmul.mubr.f32.gmra.mxu0 %v927
        %v2279 = vpop.f32.mrf.mxu0
        %v2280 = vadd.f32 0.0, %v2279
        %v2281 = vpop.f32.mrf.mxu0
        %2282 = vmatprep.mubr.f32.mxu0 0.0
        %2283 = vmatmul.mubr.f32.gmra.mxu0 %v930
        %v2284 = vpop.f32.mrf.mxu0
        %v2285 = vadd.f32 0.0, %v2284
        %v2286 = vpop.f32.mrf.mxu0
        %2287 = vmatprep.mubr.f32.mxu0 0.0
        %2288 = vmatmul.mubr.f32.gmra.mxu0 %v933
        %v2289 = vpop.f32.mrf.mxu0
        %v2290 = vadd.f32 0.0, %v2289
        %v2291 = vpop.f32.mrf.mxu0
        %2292 = vmatprep.mubr.f32.mxu0 0.0
        %2293 = vmatmul.mubr.f32.gmra.mxu0 %v936
        %v2294 = vpop.f32.mrf.mxu0
        %v2295 = vadd.f32 0.0, %v2294
        %v2296 = vpop.f32.mrf.mxu0
        %2297 = vmatprep.mubr.f32.mxu0 0.0
        %2298 = vmatmul.mubr.f32.gmra.mxu0 %v939
        %v2299 = vpop.f32.mrf.mxu0
        %v2300 = vadd.f32 0.0, %v2299
        %v2301 = vpop.f32.mrf.mxu0
        %2302 = vmatprep.mubr.f32.mxu0 0.0
        %2303 = vmatmul.mubr.f32.gmra.mxu0 %v942
        %v2304 = vpop.f32.mrf.mxu0
        %v2305 = vadd.f32 0.0, %v2304
        %v2306 = vpop.f32.mrf.mxu0
        %2307 = vmatprep.mubr.f32.mxu0 0.0
        %2308 = vmatmul.mubr.f32.gmra.mxu0 %v945
        %v2309 = vpop.f32.mrf.mxu0
        %v2310 = vadd.f32 0.0, %v2309
        %v2311 = vpop.f32.mrf.mxu0
        %2312 = vmatprep.mubr.f32.mxu0 0.0
        %2313 = vmatmul.mubr.f32.gmra.mxu0 %v948
        %v2314 = vpop.f32.mrf.mxu0
        %v2315 = vadd.f32 0.0, %v2314
        %v2316 = vpop.f32.mrf.mxu0
        %2317 = vmatprep.mubr.f32.mxu0 0.0
        %2318 = vmatmul.mubr.f32.gmra.mxu0 %v951
        %v2319 = vpop.f32.mrf.mxu0
        %v2320 = vadd.f32 0.0, %v2319
        %v2321 = vpop.f32.mrf.mxu0
        %2322 = vmatprep.mubr.f32.mxu0 0.0
        %2323 = vmatmul.mubr.f32.gmra.mxu0 %v954
        %v2324 = vpop.f32.mrf.mxu0
        %v2325 = vadd.f32 0.0, %v2324
        %v2326 = vpop.f32.mrf.mxu0
        %2327 = vmatprep.mubr.f32.mxu0 0.0
        %2328 = vmatmul.mubr.f32.gmra.mxu0 %v957
        %v2329 = vpop.f32.mrf.mxu0
        %v2330 = vadd.f32 0.0, %v2329
        %v2331 = vpop.f32.mrf.mxu0
        %2332 = vmatprep.mubr.f32.mxu0 0.0
        %2333 = vmatmul.mubr.f32.gmra.mxu0 %v960
        %v2334 = vpop.f32.mrf.mxu0
        %v2335 = vadd.f32 0.0, %v2334
        %v2336 = vpop.f32.mrf.mxu0
        %2337 = vdwg.mxu0
        %v2338 = vmax.f32 %v2260, 0.0
        %v2339 = vmax.f32 %v2265, 0.0
        %v2340 = vmax.f32 %v2270, 0.0
        %v2341 = vmax.f32 %v2275, 0.0
        %v2342 = vmax.f32 %v2280, 0.0
        %v2343 = vmax.f32 %v2285, 0.0
        %v2344 = vmax.f32 %v2290, 0.0
        %v2345 = vmax.f32 %v2295, 0.0
        %v2346 = vmax.f32 %v2300, 0.0
        %v2347 = vmax.f32 %v2305, 0.0
        %v2348 = vmax.f32 %v2310, 0.0
        %v2349 = vmax.f32 %v2315, 0.0
        %v2350 = vmax.f32 %v2320, 0.0
        %v2351 = vmax.f32 %v2325, 0.0
        %v2352 = vmax.f32 %v2330, 0.0
        %v2353 = vmax.f32 %v2335, 0.0
        %s2354 = scalar_lea.vmem %s2, 512
        %v2355 = vld [vmem:[%s2354] sm:$0xff]
        %v2356 = vld [vmem:[%s2354 + $0x8] sm:$0xff]
        %v2357 = vld [vmem:[%s2354 + $0x10] sm:$0xff]
        %v2358 = vld [vmem:[%s2354 + $0x18] sm:$0xff]
        %v2359 = vld [vmem:[%s2354 + $0x20] sm:$0xff]
        %v2360 = vld [vmem:[%s2354 + $0x28] sm:$0xff]
        %v2361 = vld [vmem:[%s2354 + $0x30] sm:$0xff]
        %v2362 = vld [vmem:[%s2354 + $0x38] sm:$0xff]
        %v2363 = vld [vmem:[%s2354 + $0x40] sm:$0xff]
        %v2364 = vld [vmem:[%s2354 + $0x48] sm:$0xff]
        %v2365 = vld [vmem:[%s2354 + $0x50] sm:$0xff]
        %v2366 = vld [vmem:[%s2354 + $0x58] sm:$0xff]
        %v2367 = vld [vmem:[%s2354 + $0x60] sm:$0xff]
        %v2368 = vld [vmem:[%s2354 + $0x68] sm:$0xff]
        %v2369 = vld [vmem:[%s2354 + $0x70] sm:$0xff]
        %v2370 = vld [vmem:[%s2354 + $0x78] sm:$0xff]
        %2372 = vset.pattern.permute.xlu0 0
        %2373 = vperm.xlu0 %2372, %v2355
        %v2374 = vpop.permute.xlu0 %2373
        %2377 = vset.pattern.permute.xlu0 0
        %2378 = vperm.xlu0 %2377, %v2356
        %v2379 = vpop.permute.xlu0 %2378
        %2382 = vset.pattern.permute.xlu0 0
        %2383 = vperm.xlu0 %2382, %v2357
        %v2384 = vpop.permute.xlu0 %2383
        %2387 = vset.pattern.permute.xlu0 0
        %2388 = vperm.xlu0 %2387, %v2358
        %v2389 = vpop.permute.xlu0 %2388
        %2392 = vset.pattern.permute.xlu0 0
        %2393 = vperm.xlu0 %2392, %v2359
        %v2394 = vpop.permute.xlu0 %2393
        %2397 = vset.pattern.permute.xlu0 0
        %2398 = vperm.xlu0 %2397, %v2360
        %v2399 = vpop.permute.xlu0 %2398
        %2402 = vset.pattern.permute.xlu0 0
        %2403 = vperm.xlu0 %2402, %v2361
        %v2404 = vpop.permute.xlu0 %2403
        %2407 = vset.pattern.permute.xlu0 0
        %2408 = vperm.xlu0 %2407, %v2362
        %v2409 = vpop.permute.xlu0 %2408
        %2412 = vset.pattern.permute.xlu0 0
        %2413 = vperm.xlu0 %2412, %v2363
        %v2414 = vpop.permute.xlu0 %2413
        %2417 = vset.pattern.permute.xlu0 0
        %2418 = vperm.xlu0 %2417, %v2364
        %v2419 = vpop.permute.xlu0 %2418
        %2422 = vset.pattern.permute.xlu0 0
        %2423 = vperm.xlu0 %2422, %v2365
        %v2424 = vpop.permute.xlu0 %2423
        %2427 = vset.pattern.permute.xlu0 0
        %2428 = vperm.xlu0 %2427, %v2366
        %v2429 = vpop.permute.xlu0 %2428
        %2432 = vset.pattern.permute.xlu0 0
        %2433 = vperm.xlu0 %2432, %v2367
        %v2434 = vpop.permute.xlu0 %2433
        %2437 = vset.pattern.permute.xlu0 0
        %2438 = vperm.xlu0 %2437, %v2368
        %v2439 = vpop.permute.xlu0 %2438
        %2442 = vset.pattern.permute.xlu0 0
        %2443 = vperm.xlu0 %2442, %v2369
        %v2444 = vpop.permute.xlu0 %2443
        %2447 = vset.pattern.permute.xlu0 0
        %2448 = vperm.xlu0 %2447, %v2370
        %v2449 = vpop.permute.xlu0 %2448
        %v2451 = vmul.f32 %v2338, %v2374
        %v2452 = vmul.f32 %v2339, %v2379
        %v2453 = vmul.f32 %v2340, %v2384
        %v2454 = vmul.f32 %v2341, %v2389
        %v2455 = vmul.f32 %v2342, %v2394
        %v2456 = vmul.f32 %v2343, %v2399
        %v2457 = vmul.f32 %v2344, %v2404
        %v2458 = vmul.f32 %v2345, %v2409
        %v2459 = vmul.f32 %v2346, %v2414
        %v2460 = vmul.f32 %v2347, %v2419
        %v2461 = vmul.f32 %v2348, %v2424
        %v2462 = vmul.f32 %v2349, %v2429
        %v2463 = vmul.f32 %v2350, %v2434
        %v2464 = vmul.f32 %v2351, %v2439
        %v2465 = vmul.f32 %v2352, %v2444
        %v2466 = vmul.f32 %v2353, %v2449
        %v2467 = vadd.f32 %v2451, %v2455
        %v2468 = vadd.f32 %v2452, %v2456
        %v2469 = vadd.f32 %v2453, %v2457
        %v2470 = vadd.f32 %v2454, %v2458
        %v2471 = vadd.f32 %v2467, %v2459
        %v2472 = vadd.f32 %v2468, %v2460
        %v2473 = vadd.f32 %v2469, %v2461
        %v2474 = vadd.f32 %v2470, %v2462
        %v2475 = vadd.f32 %v2471, %v2463
        %v2476 = vadd.f32 %v2472, %v2464
        %v2477 = vadd.f32 %v2473, %v2465
        %v2478 = vadd.f32 %v2474, %v2466
        %v2479 = vld [vmem:[#allocation2] sm:$0xff]
        %v2480 = vld [vmem:[#allocation2 + $0x8] sm:$0xff]
        %v2481 = vld [vmem:[#allocation2 + $0x10] sm:$0xff]
        %v2482 = vld [vmem:[#allocation2 + $0x18] sm:$0xff]
        %v2483 = vadd.f32 %v2479, %v2475
        %v2484 = vadd.f32 %v2480, %v2476
        %v2485 = vadd.f32 %v2481, %v2477
        %v2486 = vadd.f32 %v2482, %v2478
        %2487 = vst [vmem:[#allocation2] sm:$0xff] %v2483
        %2488 = vst [vmem:[#allocation2 + $0x8] sm:$0xff] %v2484
        %2489 = vst [vmem:[#allocation2 + $0x10] sm:$0xff] %v2485
        %2490 = vst [vmem:[#allocation2 + $0x18] sm:$0xff] %v2486
        %s2491 = scalar_lea.vmem %s850, 200 [#allocation3]
        %v2492 = vld [vmem:[%s2491] sm:$0xff]
        %v2493 = vld [vmem:[%s2491 + $0x8] sm:$0xff]
        %v2494 = vld [vmem:[%s2491 + $0x10] sm:$0xff]
        %v2495 = vld [vmem:[%s2491 + $0x18] sm:$0xff]
        %v2496 = vld [vmem:[%s2491 + $0x20] sm:$0x1]
        %v2498 = vsel %vm962, %v2496, 0
        %2500 = vmatprep.subr.mxu0 0.0
        %2501 = vmatpush1.msra.mxu0 0.0
        %2502 = vmatprep.subr.mxu0 0.0
        %2503 = vmatpush1.msra.mxu0 0.0
        %2504 = vmatprep.subr.mxu0 0.0
        %2505 = vmatpush1.msra.mxu0 0.0
        %2506 = vmatprep.subr.mxu0 0.0
        %2507 = vmatpush1.msra.mxu0 0.0
        %2508 = vmatprep.subr.mxu0 0.0
        %2509 = vmatpush1.msra.mxu0 0.0
        %2510 = vmatprep.subr.mxu0 0.0
        %2511 = vmatpush1.msra.mxu0 0.0
        %2512 = vmatprep.subr.mxu0 0.0
        %2513 = vmatpush1.msra.mxu0 0.0
        %2514 = vmatprep.subr.mxu0 0.0
        %2515 = vmatpush1.msra.mxu0 0.0
        %2516 = vmatprep.subr.mxu0 0.0
        %2517 = vmatpush1.msra.mxu0 0.0
        %2518 = vmatprep.subr.mxu0 0.0
        %2519 = vmatpush1.msra.mxu0 0.0
        %2520 = vmatprep.subr.mxu0 0.0
        %2521 = vmatpush1.msra.mxu0 0.0
        %2522 = vmatprep.subr.mxu0 0.0
        %2523 = vmatpush1.msra.mxu0 %v2498
        %2524 = vmatprep.subr.mxu0 0.0
        %2525 = vmatpush1.msra.mxu0 %v2495
        %2526 = vmatprep.subr.mxu0 0.0
        %2527 = vmatpush1.msra.mxu0 %v2494
        %2528 = vmatprep.subr.mxu0 0.0
        %2529 = vmatpush1.msra.mxu0 %v2493
        %2530 = vmatprep.subr.mxu0 0.0
        %2531 = vmatpush1.msra.mxu0 %v2492
        %2532 = vmatprep.subr.mxu0 0.0
        %2533 = vmatpush2.msra.mxu0 0.0
        %2534 = vmatprep.subr.mxu0 0.0
        %2535 = vmatpush2.msra.mxu0 0.0
        %2536 = vmatprep.subr.mxu0 0.0
        %2537 = vmatpush2.msra.mxu0 0.0
        %2538 = vmatprep.subr.mxu0 0.0
        %2539 = vmatpush2.msra.mxu0 0.0
        %2540 = vmatprep.subr.mxu0 0.0
        %2541 = vmatpush2.msra.mxu0 0.0
        %2542 = vmatprep.subr.mxu0 0.0
        %2543 = vmatpush2.msra.mxu0 0.0
        %2544 = vmatprep.subr.mxu0 0.0
        %2545 = vmatpush2.msra.mxu0 0.0
        %2546 = vmatprep.subr.mxu0 0.0
        %2547 = vmatpush2.msra.mxu0 0.0
        %2548 = vmatprep.subr.mxu0 0.0
        %2549 = vmatpush2.msra.mxu0 0.0
        %2550 = vmatprep.subr.mxu0 0.0
        %2551 = vmatpush2.msra.mxu0 0.0
        %2552 = vmatprep.subr.mxu0 0.0
        %2553 = vmatpush2.msra.mxu0 0.0
        %2554 = vmatprep.subr.mxu0 0.0
        %2555 = vmatpush2.msra.mxu0 0.0
        %2556 = vmatprep.subr.mxu0 0.0
        %2557 = vmatpush2.msra.mxu0 0.0
        %2558 = vmatprep.subr.mxu0 0.0
        %2559 = vmatpush2.msra.mxu0 0.0
        %2560 = vmatprep.subr.mxu0 0.0
        %2561 = vmatpush2.msra.mxu0 0.0
        %2562 = vmatprep.subr.mxu0 0.0
        %2563 = vmatpush2.msra.mxu0 0.0
        %2564 = vmatprep.mubr.f32.mxu0 0.0
        %2565 = vmatmul.mubr.f32.gmra.mxu0 %v915
        %v2566 = vpop.f32.mrf.mxu0
        %v2567 = vadd.f32 0.0, %v2566
        %v2568 = vpop.f32.mrf.mxu0
        %2569 = vmatprep.mubr.f32.mxu0 0.0
        %2570 = vmatmul.mubr.f32.gmra.mxu0 %v918
        %v2571 = vpop.f32.mrf.mxu0
        %v2572 = vadd.f32 0.0, %v2571
        %v2573 = vpop.f32.mrf.mxu0
        %2574 = vmatprep.mubr.f32.mxu0 0.0
        %2575 = vmatmul.mubr.f32.gmra.mxu0 %v921
        %v2576 = vpop.f32.mrf.mxu0
        %v2577 = vadd.f32 0.0, %v2576
        %v2578 = vpop.f32.mrf.mxu0
        %2579 = vmatprep.mubr.f32.mxu0 0.0
        %2580 = vmatmul.mubr.f32.gmra.mxu0 %v924
        %v2581 = vpop.f32.mrf.mxu0
        %v2582 = vadd.f32 0.0, %v2581
        %v2583 = vpop.f32.mrf.mxu0
        %2584 = vmatprep.mubr.f32.mxu0 0.0
        %2585 = vmatmul.mubr.f32.gmra.mxu0 %v927
        %v2586 = vpop.f32.mrf.mxu0
        %v2587 = vadd.f32 0.0, %v2586
        %v2588 = vpop.f32.mrf.mxu0
        %2589 = vmatprep.mubr.f32.mxu0 0.0
        %2590 = vmatmul.mubr.f32.gmra.mxu0 %v930
        %v2591 = vpop.f32.mrf.mxu0
        %v2592 = vadd.f32 0.0, %v2591
        %v2593 = vpop.f32.mrf.mxu0
        %2594 = vmatprep.mubr.f32.mxu0 0.0
        %2595 = vmatmul.mubr.f32.gmra.mxu0 %v933
        %v2596 = vpop.f32.mrf.mxu0
        %v2597 = vadd.f32 0.0, %v2596
        %v2598 = vpop.f32.mrf.mxu0
        %2599 = vmatprep.mubr.f32.mxu0 0.0
        %2600 = vmatmul.mubr.f32.gmra.mxu0 %v936
        %v2601 = vpop.f32.mrf.mxu0
        %v2602 = vadd.f32 0.0, %v2601
        %v2603 = vpop.f32.mrf.mxu0
        %2604 = vmatprep.mubr.f32.mxu0 0.0
        %2605 = vmatmul.mubr.f32.gmra.mxu0 %v939
        %v2606 = vpop.f32.mrf.mxu0
        %v2607 = vadd.f32 0.0, %v2606
        %v2608 = vpop.f32.mrf.mxu0
        %2609 = vmatprep.mubr.f32.mxu0 0.0
        %2610 = vmatmul.mubr.f32.gmra.mxu0 %v942
        %v2611 = vpop.f32.mrf.mxu0
        %v2612 = vadd.f32 0.0, %v2611
        %v2613 = vpop.f32.mrf.mxu0
        %2614 = vmatprep.mubr.f32.mxu0 0.0
        %2615 = vmatmul.mubr.f32.gmra.mxu0 %v945
        %v2616 = vpop.f32.mrf.mxu0
        %v2617 = vadd.f32 0.0, %v2616
        %v2618 = vpop.f32.mrf.mxu0
        %2619 = vmatprep.mubr.f32.mxu0 0.0
        %2620 = vmatmul.mubr.f32.gmra.mxu0 %v948
        %v2621 = vpop.f32.mrf.mxu0
        %v2622 = vadd.f32 0.0, %v2621
        %v2623 = vpop.f32.mrf.mxu0
        %2624 = vmatprep.mubr.f32.mxu0 0.0
        %2625 = vmatmul.mubr.f32.gmra.mxu0 %v951
        %v2626 = vpop.f32.mrf.mxu0
        %v2627 = vadd.f32 0.0, %v2626
        %v2628 = vpop.f32.mrf.mxu0
        %2629 = vmatprep.mubr.f32.mxu0 0.0
        %2630 = vmatmul.mubr.f32.gmra.mxu0 %v954
        %v2631 = vpop.f32.mrf.mxu0
        %v2632 = vadd.f32 0.0, %v2631
        %v2633 = vpop.f32.mrf.mxu0
        %2634 = vmatprep.mubr.f32.mxu0 0.0
        %2635 = vmatmul.mubr.f32.gmra.mxu0 %v957
        %v2636 = vpop.f32.mrf.mxu0
        %v2637 = vadd.f32 0.0, %v2636
        %v2638 = vpop.f32.mrf.mxu0
        %2639 = vmatprep.mubr.f32.mxu0 0.0
        %2640 = vmatmul.mubr.f32.gmra.mxu0 %v960
        %v2641 = vpop.f32.mrf.mxu0
        %v2642 = vadd.f32 0.0, %v2641
        %v2643 = vpop.f32.mrf.mxu0
        %2644 = vdwg.mxu0
        %v2645 = vmax.f32 %v2567, 0.0
        %v2646 = vmax.f32 %v2572, 0.0
        %v2647 = vmax.f32 %v2577, 0.0
        %v2648 = vmax.f32 %v2582, 0.0
        %v2649 = vmax.f32 %v2587, 0.0
        %v2650 = vmax.f32 %v2592, 0.0
        %v2651 = vmax.f32 %v2597, 0.0
        %v2652 = vmax.f32 %v2602, 0.0
        %v2653 = vmax.f32 %v2607, 0.0
        %v2654 = vmax.f32 %v2612, 0.0
        %v2655 = vmax.f32 %v2617, 0.0
        %v2656 = vmax.f32 %v2622, 0.0
        %v2657 = vmax.f32 %v2627, 0.0
        %v2658 = vmax.f32 %v2632, 0.0
        %v2659 = vmax.f32 %v2637, 0.0
        %v2660 = vmax.f32 %v2642, 0.0
        %s2661 = scalar_lea.vmem %s2, 640
        %v2662 = vld [vmem:[%s2661] sm:$0xff]
        %v2663 = vld [vmem:[%s2661 + $0x8] sm:$0xff]
        %v2664 = vld [vmem:[%s2661 + $0x10] sm:$0xff]
        %v2665 = vld [vmem:[%s2661 + $0x18] sm:$0xff]
        %v2666 = vld [vmem:[%s2661 + $0x20] sm:$0xff]
        %v2667 = vld [vmem:[%s2661 + $0x28] sm:$0xff]
        %v2668 = vld [vmem:[%s2661 + $0x30] sm:$0xff]
        %v2669 = vld [vmem:[%s2661 + $0x38] sm:$0xff]
        %v2670 = vld [vmem:[%s2661 + $0x40] sm:$0xff]
        %v2671 = vld [vmem:[%s2661 + $0x48] sm:$0xff]
        %v2672 = vld [vmem:[%s2661 + $0x50] sm:$0xff]
        %v2673 = vld [vmem:[%s2661 + $0x58] sm:$0xff]
        %v2674 = vld [vmem:[%s2661 + $0x60] sm:$0xff]
        %v2675 = vld [vmem:[%s2661 + $0x68] sm:$0xff]
        %v2676 = vld [vmem:[%s2661 + $0x70] sm:$0xff]
        %v2677 = vld [vmem:[%s2661 + $0x78] sm:$0xff]
        %2679 = vset.pattern.permute.xlu0 0
        %2680 = vperm.xlu0 %2679, %v2662
        %v2681 = vpop.permute.xlu0 %2680
        %2684 = vset.pattern.permute.xlu0 0
        %2685 = vperm.xlu0 %2684, %v2663
        %v2686 = vpop.permute.xlu0 %2685
        %2689 = vset.pattern.permute.xlu0 0
        %2690 = vperm.xlu0 %2689, %v2664
        %v2691 = vpop.permute.xlu0 %2690
        %2694 = vset.pattern.permute.xlu0 0
        %2695 = vperm.xlu0 %2694, %v2665
        %v2696 = vpop.permute.xlu0 %2695
        %2699 = vset.pattern.permute.xlu0 0
        %2700 = vperm.xlu0 %2699, %v2666
        %v2701 = vpop.permute.xlu0 %2700
        %2704 = vset.pattern.permute.xlu0 0
        %2705 = vperm.xlu0 %2704, %v2667
        %v2706 = vpop.permute.xlu0 %2705
        %2709 = vset.pattern.permute.xlu0 0
        %2710 = vperm.xlu0 %2709, %v2668
        %v2711 = vpop.permute.xlu0 %2710
        %2714 = vset.pattern.permute.xlu0 0
        %2715 = vperm.xlu0 %2714, %v2669
        %v2716 = vpop.permute.xlu0 %2715
        %2719 = vset.pattern.permute.xlu0 0
        %2720 = vperm.xlu0 %2719, %v2670
        %v2721 = vpop.permute.xlu0 %2720
        %2724 = vset.pattern.permute.xlu0 0
        %2725 = vperm.xlu0 %2724, %v2671
        %v2726 = vpop.permute.xlu0 %2725
        %2729 = vset.pattern.permute.xlu0 0
        %2730 = vperm.xlu0 %2729, %v2672
        %v2731 = vpop.permute.xlu0 %2730
        %2734 = vset.pattern.permute.xlu0 0
        %2735 = vperm.xlu0 %2734, %v2673
        %v2736 = vpop.permute.xlu0 %2735
        %2739 = vset.pattern.permute.xlu0 0
        %2740 = vperm.xlu0 %2739, %v2674
        %v2741 = vpop.permute.xlu0 %2740
        %2744 = vset.pattern.permute.xlu0 0
        %2745 = vperm.xlu0 %2744, %v2675
        %v2746 = vpop.permute.xlu0 %2745
        %2749 = vset.pattern.permute.xlu0 0
        %2750 = vperm.xlu0 %2749, %v2676
        %v2751 = vpop.permute.xlu0 %2750
        %2754 = vset.pattern.permute.xlu0 0
        %2755 = vperm.xlu0 %2754, %v2677
        %v2756 = vpop.permute.xlu0 %2755
        %v2758 = vmul.f32 %v2645, %v2681
        %v2759 = vmul.f32 %v2646, %v2686
        %v2760 = vmul.f32 %v2647, %v2691
        %v2761 = vmul.f32 %v2648, %v2696
        %v2762 = vmul.f32 %v2649, %v2701
        %v2763 = vmul.f32 %v2650, %v2706
        %v2764 = vmul.f32 %v2651, %v2711
        %v2765 = vmul.f32 %v2652, %v2716
        %v2766 = vmul.f32 %v2653, %v2721
        %v2767 = vmul.f32 %v2654, %v2726
        %v2768 = vmul.f32 %v2655, %v2731
        %v2769 = vmul.f32 %v2656, %v2736
        %v2770 = vmul.f32 %v2657, %v2741
        %v2771 = vmul.f32 %v2658, %v2746
        %v2772 = vmul.f32 %v2659, %v2751
        %v2773 = vmul.f32 %v2660, %v2756
        %v2774 = vadd.f32 %v2758, %v2762
        %v2775 = vadd.f32 %v2759, %v2763
        %v2776 = vadd.f32 %v2760, %v2764
        %v2777 = vadd.f32 %v2761, %v2765
        %v2778 = vadd.f32 %v2774, %v2766
        %v2779 = vadd.f32 %v2775, %v2767
        %v2780 = vadd.f32 %v2776, %v2768
        %v2781 = vadd.f32 %v2777, %v2769
        %v2782 = vadd.f32 %v2778, %v2770
        %v2783 = vadd.f32 %v2779, %v2771
        %v2784 = vadd.f32 %v2780, %v2772
        %v2785 = vadd.f32 %v2781, %v2773
        %v2786 = vld [vmem:[#allocation2] sm:$0xff]
        %v2787 = vld [vmem:[#allocation2 + $0x8] sm:$0xff]
        %v2788 = vld [vmem:[#allocation2 + $0x10] sm:$0xff]
        %v2789 = vld [vmem:[#allocation2 + $0x18] sm:$0xff]
        %v2790 = vadd.f32 %v2786, %v2782
        %v2791 = vadd.f32 %v2787, %v2783
        %v2792 = vadd.f32 %v2788, %v2784
        %v2793 = vadd.f32 %v2789, %v2785
        %2794 = vst [vmem:[#allocation2] sm:$0xff] %v2790
        %2795 = vst [vmem:[#allocation2 + $0x8] sm:$0xff] %v2791
        %2796 = vst [vmem:[#allocation2 + $0x10] sm:$0xff] %v2792
        %2797 = vst [vmem:[#allocation2 + $0x18] sm:$0xff] %v2793
        %s2798 = scalar_lea.vmem %s850, 240 [#allocation3]
        %v2799 = vld [vmem:[%s2798] sm:$0xff]
        %v2800 = vld [vmem:[%s2798 + $0x8] sm:$0xff]
        %v2801 = vld [vmem:[%s2798 + $0x10] sm:$0xff]
        %v2802 = vld [vmem:[%s2798 + $0x18] sm:$0xff]
        %v2803 = vld [vmem:[%s2798 + $0x20] sm:$0x1]
        %v2805 = vsel %vm962, %v2803, 0
        %2807 = vmatprep.subr.mxu0 0.0
        %2808 = vmatpush1.msra.mxu0 0.0
        %2809 = vmatprep.subr.mxu0 0.0
        %2810 = vmatpush1.msra.mxu0 0.0
        %2811 = vmatprep.subr.mxu0 0.0
        %2812 = vmatpush1.msra.mxu0 0.0
        %2813 = vmatprep.subr.mxu0 0.0
        %2814 = vmatpush1.msra.mxu0 0.0
        %2815 = vmatprep.subr.mxu0 0.0
        %2816 = vmatpush1.msra.mxu0 0.0
        %2817 = vmatprep.subr.mxu0 0.0
        %2818 = vmatpush1.msra.mxu0 0.0
        %2819 = vmatprep.subr.mxu0 0.0
        %2820 = vmatpush1.msra.mxu0 0.0
        %2821 = vmatprep.subr.mxu0 0.0
        %2822 = vmatpush1.msra.mxu0 0.0
        %2823 = vmatprep.subr.mxu0 0.0
        %2824 = vmatpush1.msra.mxu0 0.0
        %2825 = vmatprep.subr.mxu0 0.0
        %2826 = vmatpush1.msra.mxu0 0.0
        %2827 = vmatprep.subr.mxu0 0.0
        %2828 = vmatpush1.msra.mxu0 0.0
        %2829 = vmatprep.subr.mxu0 0.0
        %2830 = vmatpush1.msra.mxu0 %v2805
        %2831 = vmatprep.subr.mxu0 0.0
        %2832 = vmatpush1.msra.mxu0 %v2802
        %2833 = vmatprep.subr.mxu0 0.0
        %2834 = vmatpush1.msra.mxu0 %v2801
        %2835 = vmatprep.subr.mxu0 0.0
        %2836 = vmatpush1.msra.mxu0 %v2800
        %2837 = vmatprep.subr.mxu0 0.0
        %2838 = vmatpush1.msra.mxu0 %v2799
        %2839 = vmatprep.subr.mxu0 0.0
        %2840 = vmatpush2.msra.mxu0 0.0
        %2841 = vmatprep.subr.mxu0 0.0
        %2842 = vmatpush2.msra.mxu0 0.0
        %2843 = vmatprep.subr.mxu0 0.0
        %2844 = vmatpush2.msra.mxu0 0.0
        %2845 = vmatprep.subr.mxu0 0.0
        %2846 = vmatpush2.msra.mxu0 0.0
        %2847 = vmatprep.subr.mxu0 0.0
        %2848 = vmatpush2.msra.mxu0 0.0
        %2849 = vmatprep.subr.mxu0 0.0
        %2850 = vmatpush2.msra.mxu0 0.0
        %2851 = vmatprep.subr.mxu0 0.0
        %2852 = vmatpush2.msra.mxu0 0.0
        %2853 = vmatprep.subr.mxu0 0.0
        %2854 = vmatpush2.msra.mxu0 0.0
        %2855 = vmatprep.subr.mxu0 0.0
        %2856 = vmatpush2.msra.mxu0 0.0
        %2857 = vmatprep.subr.mxu0 0.0
        %2858 = vmatpush2.msra.mxu0 0.0
        %2859 = vmatprep.subr.mxu0 0.0
        %2860 = vmatpush2.msra.mxu0 0.0
        %2861 = vmatprep.subr.mxu0 0.0
        %2862 = vmatpush2.msra.mxu0 0.0
        %2863 = vmatprep.subr.mxu0 0.0
        %2864 = vmatpush2.msra.mxu0 0.0
        %2865 = vmatprep.subr.mxu0 0.0
        %2866 = vmatpush2.msra.mxu0 0.0
        %2867 = vmatprep.subr.mxu0 0.0
        %2868 = vmatpush2.msra.mxu0 0.0
        %2869 = vmatprep.subr.mxu0 0.0
        %2870 = vmatpush2.msra.mxu0 0.0
        %2871 = vmatprep.mubr.f32.mxu0 0.0
        %2872 = vmatmul.mubr.f32.gmra.mxu0 %v915
        %v2873 = vpop.f32.mrf.mxu0
        %v2874 = vadd.f32 0.0, %v2873
        %v2875 = vpop.f32.mrf.mxu0
        %2876 = vmatprep.mubr.f32.mxu0 0.0
        %2877 = vmatmul.mubr.f32.gmra.mxu0 %v918
        %v2878 = vpop.f32.mrf.mxu0
        %v2879 = vadd.f32 0.0, %v2878
        %v2880 = vpop.f32.mrf.mxu0
        %2881 = vmatprep.mubr.f32.mxu0 0.0
        %2882 = vmatmul.mubr.f32.gmra.mxu0 %v921
        %v2883 = vpop.f32.mrf.mxu0
        %v2884 = vadd.f32 0.0, %v2883
        %v2885 = vpop.f32.mrf.mxu0
        %2886 = vmatprep.mubr.f32.mxu0 0.0
        %2887 = vmatmul.mubr.f32.gmra.mxu0 %v924
        %v2888 = vpop.f32.mrf.mxu0
        %v2889 = vadd.f32 0.0, %v2888
        %v2890 = vpop.f32.mrf.mxu0
        %2891 = vmatprep.mubr.f32.mxu0 0.0
        %2892 = vmatmul.mubr.f32.gmra.mxu0 %v927
        %v2893 = vpop.f32.mrf.mxu0
        %v2894 = vadd.f32 0.0, %v2893
        %v2895 = vpop.f32.mrf.mxu0
        %2896 = vmatprep.mubr.f32.mxu0 0.0
        %2897 = vmatmul.mubr.f32.gmra.mxu0 %v930
        %v2898 = vpop.f32.mrf.mxu0
        %v2899 = vadd.f32 0.0, %v2898
        %v2900 = vpop.f32.mrf.mxu0
        %2901 = vmatprep.mubr.f32.mxu0 0.0
        %2902 = vmatmul.mubr.f32.gmra.mxu0 %v933
        %v2903 = vpop.f32.mrf.mxu0
        %v2904 = vadd.f32 0.0, %v2903
        %v2905 = vpop.f32.mrf.mxu0
        %2906 = vmatprep.mubr.f32.mxu0 0.0
        %2907 = vmatmul.mubr.f32.gmra.mxu0 %v936
        %v2908 = vpop.f32.mrf.mxu0
        %v2909 = vadd.f32 0.0, %v2908
        %v2910 = vpop.f32.mrf.mxu0
        %2911 = vmatprep.mubr.f32.mxu0 0.0
        %2912 = vmatmul.mubr.f32.gmra.mxu0 %v939
        %v2913 = vpop.f32.mrf.mxu0
        %v2914 = vadd.f32 0.0, %v2913
        %v2915 = vpop.f32.mrf.mxu0
        %2916 = vmatprep.mubr.f32.mxu0 0.0
        %2917 = vmatmul.mubr.f32.gmra.mxu0 %v942
        %v2918 = vpop.f32.mrf.mxu0
        %v2919 = vadd.f32 0.0, %v2918
        %v2920 = vpop.f32.mrf.mxu0
        %2921 = vmatprep.mubr.f32.mxu0 0.0
        %2922 = vmatmul.mubr.f32.gmra.mxu0 %v945
        %v2923 = vpop.f32.mrf.mxu0
        %v2924 = vadd.f32 0.0, %v2923
        %v2925 = vpop.f32.mrf.mxu0
        %2926 = vmatprep.mubr.f32.mxu0 0.0
        %2927 = vmatmul.mubr.f32.gmra.mxu0 %v948
        %v2928 = vpop.f32.mrf.mxu0
        %v2929 = vadd.f32 0.0, %v2928
        %v2930 = vpop.f32.mrf.mxu0
        %2931 = vmatprep.mubr.f32.mxu0 0.0
        %2932 = vmatmul.mubr.f32.gmra.mxu0 %v951
        %v2933 = vpop.f32.mrf.mxu0
        %v2934 = vadd.f32 0.0, %v2933
        %v2935 = vpop.f32.mrf.mxu0
        %2936 = vmatprep.mubr.f32.mxu0 0.0
        %2937 = vmatmul.mubr.f32.gmra.mxu0 %v954
        %v2938 = vpop.f32.mrf.mxu0
        %v2939 = vadd.f32 0.0, %v2938
        %v2940 = vpop.f32.mrf.mxu0
        %2941 = vmatprep.mubr.f32.mxu0 0.0
        %2942 = vmatmul.mubr.f32.gmra.mxu0 %v957
        %v2943 = vpop.f32.mrf.mxu0
        %v2944 = vadd.f32 0.0, %v2943
        %v2945 = vpop.f32.mrf.mxu0
        %2946 = vmatprep.mubr.f32.mxu0 0.0
        %2947 = vmatmul.mubr.f32.gmra.mxu0 %v960
        %v2948 = vpop.f32.mrf.mxu0
        %v2949 = vadd.f32 0.0, %v2948
        %v2950 = vpop.f32.mrf.mxu0
        %2951 = vdwg.mxu0
        %v2952 = vmax.f32 %v2874, 0.0
        %v2953 = vmax.f32 %v2879, 0.0
        %v2954 = vmax.f32 %v2884, 0.0
        %v2955 = vmax.f32 %v2889, 0.0
        %v2956 = vmax.f32 %v2894, 0.0
        %v2957 = vmax.f32 %v2899, 0.0
        %v2958 = vmax.f32 %v2904, 0.0
        %v2959 = vmax.f32 %v2909, 0.0
        %v2960 = vmax.f32 %v2914, 0.0
        %v2961 = vmax.f32 %v2919, 0.0
        %v2962 = vmax.f32 %v2924, 0.0
        %v2963 = vmax.f32 %v2929, 0.0
        %v2964 = vmax.f32 %v2934, 0.0
        %v2965 = vmax.f32 %v2939, 0.0
        %v2966 = vmax.f32 %v2944, 0.0
        %v2967 = vmax.f32 %v2949, 0.0
        %s2968 = scalar_lea.vmem %s2, 768
        %v2969 = vld [vmem:[%s2968] sm:$0xff]
        %v2970 = vld [vmem:[%s2968 + $0x8] sm:$0xff]
        %v2971 = vld [vmem:[%s2968 + $0x10] sm:$0xff]
        %v2972 = vld [vmem:[%s2968 + $0x18] sm:$0xff]
        %v2973 = vld [vmem:[%s2968 + $0x20] sm:$0xff]
        %v2974 = vld [vmem:[%s2968 + $0x28] sm:$0xff]
        %v2975 = vld [vmem:[%s2968 + $0x30] sm:$0xff]
        %v2976 = vld [vmem:[%s2968 + $0x38] sm:$0xff]
        %v2977 = vld [vmem:[%s2968 + $0x40] sm:$0xff]
        %v2978 = vld [vmem:[%s2968 + $0x48] sm:$0xff]
        %v2979 = vld [vmem:[%s2968 + $0x50] sm:$0xff]
        %v2980 = vld [vmem:[%s2968 + $0x58] sm:$0xff]
        %v2981 = vld [vmem:[%s2968 + $0x60] sm:$0xff]
        %v2982 = vld [vmem:[%s2968 + $0x68] sm:$0xff]
        %v2983 = vld [vmem:[%s2968 + $0x70] sm:$0xff]
        %v2984 = vld [vmem:[%s2968 + $0x78] sm:$0xff]
        %2986 = vset.pattern.permute.xlu0 0
        %2987 = vperm.xlu0 %2986, %v2969
        %v2988 = vpop.permute.xlu0 %2987
        %2991 = vset.pattern.permute.xlu0 0
        %2992 = vperm.xlu0 %2991, %v2970
        %v2993 = vpop.permute.xlu0 %2992
        %2996 = vset.pattern.permute.xlu0 0
        %2997 = vperm.xlu0 %2996, %v2971
        %v2998 = vpop.permute.xlu0 %2997
        %3001 = vset.pattern.permute.xlu0 0
        %3002 = vperm.xlu0 %3001, %v2972
        %v3003 = vpop.permute.xlu0 %3002
        %3006 = vset.pattern.permute.xlu0 0
        %3007 = vperm.xlu0 %3006, %v2973
        %v3008 = vpop.permute.xlu0 %3007
        %3011 = vset.pattern.permute.xlu0 0
        %3012 = vperm.xlu0 %3011, %v2974
        %v3013 = vpop.permute.xlu0 %3012
        %3016 = vset.pattern.permute.xlu0 0
        %3017 = vperm.xlu0 %3016, %v2975
        %v3018 = vpop.permute.xlu0 %3017
        %3021 = vset.pattern.permute.xlu0 0
        %3022 = vperm.xlu0 %3021, %v2976
        %v3023 = vpop.permute.xlu0 %3022
        %3026 = vset.pattern.permute.xlu0 0
        %3027 = vperm.xlu0 %3026, %v2977
        %v3028 = vpop.permute.xlu0 %3027
        %3031 = vset.pattern.permute.xlu0 0
        %3032 = vperm.xlu0 %3031, %v2978
        %v3033 = vpop.permute.xlu0 %3032
        %3036 = vset.pattern.permute.xlu0 0
        %3037 = vperm.xlu0 %3036, %v2979
        %v3038 = vpop.permute.xlu0 %3037
        %3041 = vset.pattern.permute.xlu0 0
        %3042 = vperm.xlu0 %3041, %v2980
        %v3043 = vpop.permute.xlu0 %3042
        %3046 = vset.pattern.permute.xlu0 0
        %3047 = vperm.xlu0 %3046, %v2981
        %v3048 = vpop.permute.xlu0 %3047
        %3051 = vset.pattern.permute.xlu0 0
        %3052 = vperm.xlu0 %3051, %v2982
        %v3053 = vpop.permute.xlu0 %3052
        %3056 = vset.pattern.permute.xlu0 0
        %3057 = vperm.xlu0 %3056, %v2983
        %v3058 = vpop.permute.xlu0 %3057
        %3061 = vset.pattern.permute.xlu0 0
        %3062 = vperm.xlu0 %3061, %v2984
        %v3063 = vpop.permute.xlu0 %3062
        %v3065 = vmul.f32 %v2952, %v2988
        %v3066 = vmul.f32 %v2953, %v2993
        %v3067 = vmul.f32 %v2954, %v2998
        %v3068 = vmul.f32 %v2955, %v3003
        %v3069 = vmul.f32 %v2956, %v3008
        %v3070 = vmul.f32 %v2957, %v3013
        %v3071 = vmul.f32 %v2958, %v3018
        %v3072 = vmul.f32 %v2959, %v3023
        %v3073 = vmul.f32 %v2960, %v3028
        %v3074 = vmul.f32 %v2961, %v3033
        %v3075 = vmul.f32 %v2962, %v3038
        %v3076 = vmul.f32 %v2963, %v3043
        %v3077 = vmul.f32 %v2964, %v3048
        %v3078 = vmul.f32 %v2965, %v3053
        %v3079 = vmul.f32 %v2966, %v3058
        %v3080 = vmul.f32 %v2967, %v3063
        %v3081 = vadd.f32 %v3065, %v3069
        %v3082 = vadd.f32 %v3066, %v3070
        %v3083 = vadd.f32 %v3067, %v3071
        %v3084 = vadd.f32 %v3068, %v3072
        %v3085 = vadd.f32 %v3081, %v3073
        %v3086 = vadd.f32 %v3082, %v3074
        %v3087 = vadd.f32 %v3083, %v3075
        %v3088 = vadd.f32 %v3084, %v3076
        %v3089 = vadd.f32 %v3085, %v3077
        %v3090 = vadd.f32 %v3086, %v3078
        %v3091 = vadd.f32 %v3087, %v3079
        %v3092 = vadd.f32 %v3088, %v3080
        %v3093 = vld [vmem:[#allocation2] sm:$0xff]
        %v3094 = vld [vmem:[#allocation2 + $0x8] sm:$0xff]
        %v3095 = vld [vmem:[#allocation2 + $0x10] sm:$0xff]
        %v3096 = vld [vmem:[#allocation2 + $0x18] sm:$0xff]
        %v3097 = vadd.f32 %v3093, %v3089
        %v3098 = vadd.f32 %v3094, %v3090
        %v3099 = vadd.f32 %v3095, %v3091
        %v3100 = vadd.f32 %v3096, %v3092
        %3101 = vst [vmem:[#allocation2] sm:$0xff] %v3097
        %3102 = vst [vmem:[#allocation2 + $0x8] sm:$0xff] %v3098
        %3103 = vst [vmem:[#allocation2 + $0x10] sm:$0xff] %v3099
        %3104 = vst [vmem:[#allocation2 + $0x18] sm:$0xff] %v3100
        %s3105 = scalar_lea.vmem %s850, 280 [#allocation3]
        %v3106 = vld [vmem:[%s3105] sm:$0xff]
        %v3107 = vld [vmem:[%s3105 + $0x8] sm:$0xff]
        %v3108 = vld [vmem:[%s3105 + $0x10] sm:$0xff]
        %v3109 = vld [vmem:[%s3105 + $0x18] sm:$0xff]
        %v3110 = vld [vmem:[%s3105 + $0x20] sm:$0x1]
        %v3112 = vsel %vm962, %v3110, 0
        %3114 = vmatprep.subr.mxu0 0.0
        %3115 = vmatpush1.msra.mxu0 0.0
        %3116 = vmatprep.subr.mxu0 0.0
        %3117 = vmatpush1.msra.mxu0 0.0
        %3118 = vmatprep.subr.mxu0 0.0
        %3119 = vmatpush1.msra.mxu0 0.0
        %3120 = vmatprep.subr.mxu0 0.0
        %3121 = vmatpush1.msra.mxu0 0.0
        %3122 = vmatprep.subr.mxu0 0.0
        %3123 = vmatpush1.msra.mxu0 0.0
        %3124 = vmatprep.subr.mxu0 0.0
        %3125 = vmatpush1.msra.mxu0 0.0
        %3126 = vmatprep.subr.mxu0 0.0
        %3127 = vmatpush1.msra.mxu0 0.0
        %3128 = vmatprep.subr.mxu0 0.0
        %3129 = vmatpush1.msra.mxu0 0.0
        %3130 = vmatprep.subr.mxu0 0.0
        %3131 = vmatpush1.msra.mxu0 0.0
        %3132 = vmatprep.subr.mxu0 0.0
        %3133 = vmatpush1.msra.mxu0 0.0
        %3134 = vmatprep.subr.mxu0 0.0
        %3135 = vmatpush1.msra.mxu0 0.0
        %3136 = vmatprep.subr.mxu0 0.0
        %3137 = vmatpush1.msra.mxu0 %v3112
        %3138 = vmatprep.subr.mxu0 0.0
        %3139 = vmatpush1.msra.mxu0 %v3109
        %3140 = vmatprep.subr.mxu0 0.0
        %3141 = vmatpush1.msra.mxu0 %v3108
        %3142 = vmatprep.subr.mxu0 0.0
        %3143 = vmatpush1.msra.mxu0 %v3107
        %3144 = vmatprep.subr.mxu0 0.0
        %3145 = vmatpush1.msra.mxu0 %v3106
        %3146 = vmatprep.subr.mxu0 0.0
        %3147 = vmatpush2.msra.mxu0 0.0
        %3148 = vmatprep.subr.mxu0 0.0
        %3149 = vmatpush2.msra.mxu0 0.0
        %3150 = vmatprep.subr.mxu0 0.0
        %3151 = vmatpush2.msra.mxu0 0.0
        %3152 = vmatprep.subr.mxu0 0.0
        %3153 = vmatpush2.msra.mxu0 0.0
        %3154 = vmatprep.subr.mxu0 0.0
        %3155 = vmatpush2.msra.mxu0 0.0
        %3156 = vmatprep.subr.mxu0 0.0
        %3157 = vmatpush2.msra.mxu0 0.0
        %3158 = vmatprep.subr.mxu0 0.0
        %3159 = vmatpush2.msra.mxu0 0.0
        %3160 = vmatprep.subr.mxu0 0.0
        %3161 = vmatpush2.msra.mxu0 0.0
        %3162 = vmatprep.subr.mxu0 0.0
        %3163 = vmatpush2.msra.mxu0 0.0
        %3164 = vmatprep.subr.mxu0 0.0
        %3165 = vmatpush2.msra.mxu0 0.0
        %3166 = vmatprep.subr.mxu0 0.0
        %3167 = vmatpush2.msra.mxu0 0.0
        %3168 = vmatprep.subr.mxu0 0.0
        %3169 = vmatpush2.msra.mxu0 0.0
        %3170 = vmatprep.subr.mxu0 0.0
        %3171 = vmatpush2.msra.mxu0 0.0
        %3172 = vmatprep.subr.mxu0 0.0
        %3173 = vmatpush2.msra.mxu0 0.0
        %3174 = vmatprep.subr.mxu0 0.0
        %3175 = vmatpush2.msra.mxu0 0.0
        %3176 = vmatprep.subr.mxu0 0.0
        %3177 = vmatpush2.msra.mxu0 0.0
        %3178 = vmatprep.mubr.f32.mxu0 0.0
        %3179 = vmatmul.mubr.f32.gmra.mxu0 %v915
        %v3180 = vpop.f32.mrf.mxu0
        %v3181 = vadd.f32 0.0, %v3180
        %v3182 = vpop.f32.mrf.mxu0
        %3183 = vmatprep.mubr.f32.mxu0 0.0
        %3184 = vmatmul.mubr.f32.gmra.mxu0 %v918
        %v3185 = vpop.f32.mrf.mxu0
        %v3186 = vadd.f32 0.0, %v3185
        %v3187 = vpop.f32.mrf.mxu0
        %3188 = vmatprep.mubr.f32.mxu0 0.0
        %3189 = vmatmul.mubr.f32.gmra.mxu0 %v921
        %v3190 = vpop.f32.mrf.mxu0
        %v3191 = vadd.f32 0.0, %v3190
        %v3192 = vpop.f32.mrf.mxu0
        %3193 = vmatprep.mubr.f32.mxu0 0.0
        %3194 = vmatmul.mubr.f32.gmra.mxu0 %v924
        %v3195 = vpop.f32.mrf.mxu0
        %v3196 = vadd.f32 0.0, %v3195
        %v3197 = vpop.f32.mrf.mxu0
        %3198 = vmatprep.mubr.f32.mxu0 0.0
        %3199 = vmatmul.mubr.f32.gmra.mxu0 %v927
        %v3200 = vpop.f32.mrf.mxu0
        %v3201 = vadd.f32 0.0, %v3200
        %v3202 = vpop.f32.mrf.mxu0
        %3203 = vmatprep.mubr.f32.mxu0 0.0
        %3204 = vmatmul.mubr.f32.gmra.mxu0 %v930
        %v3205 = vpop.f32.mrf.mxu0
        %v3206 = vadd.f32 0.0, %v3205
        %v3207 = vpop.f32.mrf.mxu0
        %3208 = vmatprep.mubr.f32.mxu0 0.0
        %3209 = vmatmul.mubr.f32.gmra.mxu0 %v933
        %v3210 = vpop.f32.mrf.mxu0
        %v3211 = vadd.f32 0.0, %v3210
        %v3212 = vpop.f32.mrf.mxu0
        %3213 = vmatprep.mubr.f32.mxu0 0.0
        %3214 = vmatmul.mubr.f32.gmra.mxu0 %v936
        %v3215 = vpop.f32.mrf.mxu0
        %v3216 = vadd.f32 0.0, %v3215
        %v3217 = vpop.f32.mrf.mxu0
        %3218 = vmatprep.mubr.f32.mxu0 0.0
        %3219 = vmatmul.mubr.f32.gmra.mxu0 %v939
        %v3220 = vpop.f32.mrf.mxu0
        %v3221 = vadd.f32 0.0, %v3220
        %v3222 = vpop.f32.mrf.mxu0
        %3223 = vmatprep.mubr.f32.mxu0 0.0
        %3224 = vmatmul.mubr.f32.gmra.mxu0 %v942
        %v3225 = vpop.f32.mrf.mxu0
        %v3226 = vadd.f32 0.0, %v3225
        %v3227 = vpop.f32.mrf.mxu0
        %3228 = vmatprep.mubr.f32.mxu0 0.0
        %3229 = vmatmul.mubr.f32.gmra.mxu0 %v945
        %v3230 = vpop.f32.mrf.mxu0
        %v3231 = vadd.f32 0.0, %v3230
        %v3232 = vpop.f32.mrf.mxu0
        %3233 = vmatprep.mubr.f32.mxu0 0.0
        %3234 = vmatmul.mubr.f32.gmra.mxu0 %v948
        %v3235 = vpop.f32.mrf.mxu0
        %v3236 = vadd.f32 0.0, %v3235
        %v3237 = vpop.f32.mrf.mxu0
        %3238 = vmatprep.mubr.f32.mxu0 0.0
        %3239 = vmatmul.mubr.f32.gmra.mxu0 %v951
        %v3240 = vpop.f32.mrf.mxu0
        %v3241 = vadd.f32 0.0, %v3240
        %v3242 = vpop.f32.mrf.mxu0
        %3243 = vmatprep.mubr.f32.mxu0 0.0
        %3244 = vmatmul.mubr.f32.gmra.mxu0 %v954
        %v3245 = vpop.f32.mrf.mxu0
        %v3246 = vadd.f32 0.0, %v3245
        %v3247 = vpop.f32.mrf.mxu0
        %3248 = vmatprep.mubr.f32.mxu0 0.0
        %3249 = vmatmul.mubr.f32.gmra.mxu0 %v957
        %v3250 = vpop.f32.mrf.mxu0
        %v3251 = vadd.f32 0.0, %v3250
        %v3252 = vpop.f32.mrf.mxu0
        %3253 = vmatprep.mubr.f32.mxu0 0.0
        %3254 = vmatmul.mubr.f32.gmra.mxu0 %v960
        %v3255 = vpop.f32.mrf.mxu0
        %v3256 = vadd.f32 0.0, %v3255
        %v3257 = vpop.f32.mrf.mxu0
        %3258 = vdwg.mxu0
        %v3259 = vmax.f32 %v3181, 0.0
        %v3260 = vmax.f32 %v3186, 0.0
        %v3261 = vmax.f32 %v3191, 0.0
        %v3262 = vmax.f32 %v3196, 0.0
        %v3263 = vmax.f32 %v3201, 0.0
        %v3264 = vmax.f32 %v3206, 0.0
        %v3265 = vmax.f32 %v3211, 0.0
        %v3266 = vmax.f32 %v3216, 0.0
        %v3267 = vmax.f32 %v3221, 0.0
        %v3268 = vmax.f32 %v3226, 0.0
        %v3269 = vmax.f32 %v3231, 0.0
        %v3270 = vmax.f32 %v3236, 0.0
        %v3271 = vmax.f32 %v3241, 0.0
        %v3272 = vmax.f32 %v3246, 0.0
        %v3273 = vmax.f32 %v3251, 0.0
        %v3274 = vmax.f32 %v3256, 0.0
        %s3275 = scalar_lea.vmem %s2, 896
        %v3276 = vld [vmem:[%s3275] sm:$0xff]
        %v3277 = vld [vmem:[%s3275 + $0x8] sm:$0xff]
        %v3278 = vld [vmem:[%s3275 + $0x10] sm:$0xff]
        %v3279 = vld [vmem:[%s3275 + $0x18] sm:$0xff]
        %v3280 = vld [vmem:[%s3275 + $0x20] sm:$0xff]
        %v3281 = vld [vmem:[%s3275 + $0x28] sm:$0xff]
        %v3282 = vld [vmem:[%s3275 + $0x30] sm:$0xff]
        %v3283 = vld [vmem:[%s3275 + $0x38] sm:$0xff]
        %v3284 = vld [vmem:[%s3275 + $0x40] sm:$0xff]
        %v3285 = vld [vmem:[%s3275 + $0x48] sm:$0xff]
        %v3286 = vld [vmem:[%s3275 + $0x50] sm:$0xff]
        %v3287 = vld [vmem:[%s3275 + $0x58] sm:$0xff]
        %v3288 = vld [vmem:[%s3275 + $0x60] sm:$0xff]
        %v3289 = vld [vmem:[%s3275 + $0x68] sm:$0xff]
        %v3290 = vld [vmem:[%s3275 + $0x70] sm:$0xff]
        %v3291 = vld [vmem:[%s3275 + $0x78] sm:$0xff]
        %3293 = vset.pattern.permute.xlu0 0
        %3294 = vperm.xlu0 %3293, %v3276
        %v3295 = vpop.permute.xlu0 %3294
        %3298 = vset.pattern.permute.xlu0 0
        %3299 = vperm.xlu0 %3298, %v3277
        %v3300 = vpop.permute.xlu0 %3299
        %3303 = vset.pattern.permute.xlu0 0
        %3304 = vperm.xlu0 %3303, %v3278
        %v3305 = vpop.permute.xlu0 %3304
        %3308 = vset.pattern.permute.xlu0 0
        %3309 = vperm.xlu0 %3308, %v3279
        %v3310 = vpop.permute.xlu0 %3309
        %3313 = vset.pattern.permute.xlu0 0
        %3314 = vperm.xlu0 %3313, %v3280
        %v3315 = vpop.permute.xlu0 %3314
        %3318 = vset.pattern.permute.xlu0 0
        %3319 = vperm.xlu0 %3318, %v3281
        %v3320 = vpop.permute.xlu0 %3319
        %3323 = vset.pattern.permute.xlu0 0
        %3324 = vperm.xlu0 %3323, %v3282
        %v3325 = vpop.permute.xlu0 %3324
        %3328 = vset.pattern.permute.xlu0 0
        %3329 = vperm.xlu0 %3328, %v3283
        %v3330 = vpop.permute.xlu0 %3329
        %3333 = vset.pattern.permute.xlu0 0
        %3334 = vperm.xlu0 %3333, %v3284
        %v3335 = vpop.permute.xlu0 %3334
        %3338 = vset.pattern.permute.xlu0 0
        %3339 = vperm.xlu0 %3338, %v3285
        %v3340 = vpop.permute.xlu0 %3339
        %3343 = vset.pattern.permute.xlu0 0
        %3344 = vperm.xlu0 %3343, %v3286
        %v3345 = vpop.permute.xlu0 %3344
        %3348 = vset.pattern.permute.xlu0 0
        %3349 = vperm.xlu0 %3348, %v3287
        %v3350 = vpop.permute.xlu0 %3349
        %3353 = vset.pattern.permute.xlu0 0
        %3354 = vperm.xlu0 %3353, %v3288
        %v3355 = vpop.permute.xlu0 %3354
        %3358 = vset.pattern.permute.xlu0 0
        %3359 = vperm.xlu0 %3358, %v3289
        %v3360 = vpop.permute.xlu0 %3359
        %3363 = vset.pattern.permute.xlu0 0
        %3364 = vperm.xlu0 %3363, %v3290
        %v3365 = vpop.permute.xlu0 %3364
        %3368 = vset.pattern.permute.xlu0 0
        %3369 = vperm.xlu0 %3368, %v3291
        %v3370 = vpop.permute.xlu0 %3369
        %v3372 = vmul.f32 %v3259, %v3295
        %v3373 = vmul.f32 %v3260, %v3300
        %v3374 = vmul.f32 %v3261, %v3305
        %v3375 = vmul.f32 %v3262, %v3310
        %v3376 = vmul.f32 %v3263, %v3315
        %v3377 = vmul.f32 %v3264, %v3320
        %v3378 = vmul.f32 %v3265, %v3325
        %v3379 = vmul.f32 %v3266, %v3330
        %v3380 = vmul.f32 %v3267, %v3335
        %v3381 = vmul.f32 %v3268, %v3340
        %v3382 = vmul.f32 %v3269, %v3345
        %v3383 = vmul.f32 %v3270, %v3350
        %v3384 = vmul.f32 %v3271, %v3355
        %v3385 = vmul.f32 %v3272, %v3360
        %v3386 = vmul.f32 %v3273, %v3365
        %v3387 = vmul.f32 %v3274, %v3370
        %v3388 = vadd.f32 %v3372, %v3376
        %v3389 = vadd.f32 %v3373, %v3377
        %v3390 = vadd.f32 %v3374, %v3378
        %v3391 = vadd.f32 %v3375, %v3379
        %v3392 = vadd.f32 %v3388, %v3380
        %v3393 = vadd.f32 %v3389, %v3381
        %v3394 = vadd.f32 %v3390, %v3382
        %v3395 = vadd.f32 %v3391, %v3383
        %v3396 = vadd.f32 %v3392, %v3384
        %v3397 = vadd.f32 %v3393, %v3385
        %v3398 = vadd.f32 %v3394, %v3386
        %v3399 = vadd.f32 %v3395, %v3387
        %v3400 = vld [vmem:[#allocation2] sm:$0xff]
        %v3401 = vld [vmem:[#allocation2 + $0x8] sm:$0xff]
        %v3402 = vld [vmem:[#allocation2 + $0x10] sm:$0xff]
        %v3403 = vld [vmem:[#allocation2 + $0x18] sm:$0xff]
        %v3404 = vadd.f32 %v3400, %v3396
        %v3405 = vadd.f32 %v3401, %v3397
        %v3406 = vadd.f32 %v3402, %v3398
        %v3407 = vadd.f32 %v3403, %v3399
        %3408 = vst [vmem:[#allocation2] sm:$0xff] %v3404
        %3409 = vst [vmem:[#allocation2 + $0x8] sm:$0xff] %v3405
        %3410 = vst [vmem:[#allocation2 + $0x10] sm:$0xff] %v3406
        %3411 = vst [vmem:[#allocation2 + $0x18] sm:$0xff] %v3407
        %s3412 = scalar_lea.vmem %s850, 320 [#allocation3]
        %v3413 = vld [vmem:[%s3412] sm:$0xff]
        %v3414 = vld [vmem:[%s3412 + $0x8] sm:$0xff]
        %v3415 = vld [vmem:[%s3412 + $0x10] sm:$0xff]
        %v3416 = vld [vmem:[%s3412 + $0x18] sm:$0xff]
        %v3417 = vld [vmem:[%s3412 + $0x20] sm:$0x1]
        %v3419 = vsel %vm962, %v3417, 0
        %3421 = vmatprep.subr.mxu0 0.0
        %3422 = vmatpush1.msra.mxu0 0.0
        %3423 = vmatprep.subr.mxu0 0.0
        %3424 = vmatpush1.msra.mxu0 0.0
        %3425 = vmatprep.subr.mxu0 0.0
        %3426 = vmatpush1.msra.mxu0 0.0
        %3427 = vmatprep.subr.mxu0 0.0
        %3428 = vmatpush1.msra.mxu0 0.0
        %3429 = vmatprep.subr.mxu0 0.0
        %3430 = vmatpush1.msra.mxu0 0.0
        %3431 = vmatprep.subr.mxu0 0.0
        %3432 = vmatpush1.msra.mxu0 0.0
        %3433 = vmatprep.subr.mxu0 0.0
        %3434 = vmatpush1.msra.mxu0 0.0
        %3435 = vmatprep.subr.mxu0 0.0
        %3436 = vmatpush1.msra.mxu0 0.0
        %3437 = vmatprep.subr.mxu0 0.0
        %3438 = vmatpush1.msra.mxu0 0.0
        %3439 = vmatprep.subr.mxu0 0.0
        %3440 = vmatpush1.msra.mxu0 0.0
        %3441 = vmatprep.subr.mxu0 0.0
        %3442 = vmatpush1.msra.mxu0 0.0
        %3443 = vmatprep.subr.mxu0 0.0
        %3444 = vmatpush1.msra.mxu0 %v3419
        %3445 = vmatprep.subr.mxu0 0.0
        %3446 = vmatpush1.msra.mxu0 %v3416
        %3447 = vmatprep.subr.mxu0 0.0
        %3448 = vmatpush1.msra.mxu0 %v3415
        %3449 = vmatprep.subr.mxu0 0.0
        %3450 = vmatpush1.msra.mxu0 %v3414
        %3451 = vmatprep.subr.mxu0 0.0
        %3452 = vmatpush1.msra.mxu0 %v3413
        %3453 = vmatprep.subr.mxu0 0.0
        %3454 = vmatpush2.msra.mxu0 0.0
        %3455 = vmatprep.subr.mxu0 0.0
        %3456 = vmatpush2.msra.mxu0 0.0
        %3457 = vmatprep.subr.mxu0 0.0
        %3458 = vmatpush2.msra.mxu0 0.0
        %3459 = vmatprep.subr.mxu0 0.0
        %3460 = vmatpush2.msra.mxu0 0.0
        %3461 = vmatprep.subr.mxu0 0.0
        %3462 = vmatpush2.msra.mxu0 0.0
        %3463 = vmatprep.subr.mxu0 0.0
        %3464 = vmatpush2.msra.mxu0 0.0
        %3465 = vmatprep.subr.mxu0 0.0
        %3466 = vmatpush2.msra.mxu0 0.0
        %3467 = vmatprep.subr.mxu0 0.0
        %3468 = vmatpush2.msra.mxu0 0.0
        %3469 = vmatprep.subr.mxu0 0.0
        %3470 = vmatpush2.msra.mxu0 0.0
        %3471 = vmatprep.subr.mxu0 0.0
        %3472 = vmatpush2.msra.mxu0 0.0
        %3473 = vmatprep.subr.mxu0 0.0
        %3474 = vmatpush2.msra.mxu0 0.0
        %3475 = vmatprep.subr.mxu0 0.0
        %3476 = vmatpush2.msra.mxu0 0.0
        %3477 = vmatprep.subr.mxu0 0.0
        %3478 = vmatpush2.msra.mxu0 0.0
        %3479 = vmatprep.subr.mxu0 0.0
        %3480 = vmatpush2.msra.mxu0 0.0
        %3481 = vmatprep.subr.mxu0 0.0
        %3482 = vmatpush2.msra.mxu0 0.0
        %3483 = vmatprep.subr.mxu0 0.0
        %3484 = vmatpush2.msra.mxu0 0.0
        %3485 = vmatprep.mubr.f32.mxu0 0.0
        %3486 = vmatmul.mubr.f32.gmra.mxu0 %v915
        %v3487 = vpop.f32.mrf.mxu0
        %v3488 = vadd.f32 0.0, %v3487
        %v3489 = vpop.f32.mrf.mxu0
        %3490 = vmatprep.mubr.f32.mxu0 0.0
        %3491 = vmatmul.mubr.f32.gmra.mxu0 %v918
        %v3492 = vpop.f32.mrf.mxu0
        %v3493 = vadd.f32 0.0, %v3492
        %v3494 = vpop.f32.mrf.mxu0
        %3495 = vmatprep.mubr.f32.mxu0 0.0
        %3496 = vmatmul.mubr.f32.gmra.mxu0 %v921
        %v3497 = vpop.f32.mrf.mxu0
        %v3498 = vadd.f32 0.0, %v3497
        %v3499 = vpop.f32.mrf.mxu0
        %3500 = vmatprep.mubr.f32.mxu0 0.0
        %3501 = vmatmul.mubr.f32.gmra.mxu0 %v924
        %v3502 = vpop.f32.mrf.mxu0
        %v3503 = vadd.f32 0.0, %v3502
        %v3504 = vpop.f32.mrf.mxu0
        %3505 = vmatprep.mubr.f32.mxu0 0.0
        %3506 = vmatmul.mubr.f32.gmra.mxu0 %v927
        %v3507 = vpop.f32.mrf.mxu0
        %v3508 = vadd.f32 0.0, %v3507
        %v3509 = vpop.f32.mrf.mxu0
        %3510 = vmatprep.mubr.f32.mxu0 0.0
        %3511 = vmatmul.mubr.f32.gmra.mxu0 %v930
        %v3512 = vpop.f32.mrf.mxu0
        %v3513 = vadd.f32 0.0, %v3512
        %v3514 = vpop.f32.mrf.mxu0
        %3515 = vmatprep.mubr.f32.mxu0 0.0
        %3516 = vmatmul.mubr.f32.gmra.mxu0 %v933
        %v3517 = vpop.f32.mrf.mxu0
        %v3518 = vadd.f32 0.0, %v3517
        %v3519 = vpop.f32.mrf.mxu0
        %3520 = vmatprep.mubr.f32.mxu0 0.0
        %3521 = vmatmul.mubr.f32.gmra.mxu0 %v936
        %v3522 = vpop.f32.mrf.mxu0
        %v3523 = vadd.f32 0.0, %v3522
        %v3524 = vpop.f32.mrf.mxu0
        %3525 = vmatprep.mubr.f32.mxu0 0.0
        %3526 = vmatmul.mubr.f32.gmra.mxu0 %v939
        %v3527 = vpop.f32.mrf.mxu0
        %v3528 = vadd.f32 0.0, %v3527
        %v3529 = vpop.f32.mrf.mxu0
        %3530 = vmatprep.mubr.f32.mxu0 0.0
        %3531 = vmatmul.mubr.f32.gmra.mxu0 %v942
        %v3532 = vpop.f32.mrf.mxu0
        %v3533 = vadd.f32 0.0, %v3532
        %v3534 = vpop.f32.mrf.mxu0
        %3535 = vmatprep.mubr.f32.mxu0 0.0
        %3536 = vmatmul.mubr.f32.gmra.mxu0 %v945
        %v3537 = vpop.f32.mrf.mxu0
        %v3538 = vadd.f32 0.0, %v3537
        %v3539 = vpop.f32.mrf.mxu0
        %3540 = vmatprep.mubr.f32.mxu0 0.0
        %3541 = vmatmul.mubr.f32.gmra.mxu0 %v948
        %v3542 = vpop.f32.mrf.mxu0
        %v3543 = vadd.f32 0.0, %v3542
        %v3544 = vpop.f32.mrf.mxu0
        %3545 = vmatprep.mubr.f32.mxu0 0.0
        %3546 = vmatmul.mubr.f32.gmra.mxu0 %v951
        %v3547 = vpop.f32.mrf.mxu0
        %v3548 = vadd.f32 0.0, %v3547
        %v3549 = vpop.f32.mrf.mxu0
        %3550 = vmatprep.mubr.f32.mxu0 0.0
        %3551 = vmatmul.mubr.f32.gmra.mxu0 %v954
        %v3552 = vpop.f32.mrf.mxu0
        %v3553 = vadd.f32 0.0, %v3552
        %v3554 = vpop.f32.mrf.mxu0
        %3555 = vmatprep.mubr.f32.mxu0 0.0
        %3556 = vmatmul.mubr.f32.gmra.mxu0 %v957
        %v3557 = vpop.f32.mrf.mxu0
        %v3558 = vadd.f32 0.0, %v3557
        %v3559 = vpop.f32.mrf.mxu0
        %3560 = vmatprep.mubr.f32.mxu0 0.0
        %3561 = vmatmul.mubr.f32.gmra.mxu0 %v960
        %v3562 = vpop.f32.mrf.mxu0
        %v3563 = vadd.f32 0.0, %v3562
        %v3564 = vpop.f32.mrf.mxu0
        %3565 = vdwg.mxu0
        %v3566 = vmax.f32 %v3488, 0.0
        %v3567 = vmax.f32 %v3493, 0.0
        %v3568 = vmax.f32 %v3498, 0.0
        %v3569 = vmax.f32 %v3503, 0.0
        %v3570 = vmax.f32 %v3508, 0.0
        %v3571 = vmax.f32 %v3513, 0.0
        %v3572 = vmax.f32 %v3518, 0.0
        %v3573 = vmax.f32 %v3523, 0.0
        %v3574 = vmax.f32 %v3528, 0.0
        %v3575 = vmax.f32 %v3533, 0.0
        %v3576 = vmax.f32 %v3538, 0.0
        %v3577 = vmax.f32 %v3543, 0.0
        %v3578 = vmax.f32 %v3548, 0.0
        %v3579 = vmax.f32 %v3553, 0.0
        %v3580 = vmax.f32 %v3558, 0.0
        %v3581 = vmax.f32 %v3563, 0.0
        %s3582 = scalar_lea.vmem %s2, 1024
        %v3583 = vld [vmem:[%s3582] sm:$0xff]
        %v3584 = vld [vmem:[%s3582 + $0x8] sm:$0xff]
        %v3585 = vld [vmem:[%s3582 + $0x10] sm:$0xff]
        %v3586 = vld [vmem:[%s3582 + $0x18] sm:$0xff]
        %v3587 = vld [vmem:[%s3582 + $0x20] sm:$0xff]
        %v3588 = vld [vmem:[%s3582 + $0x28] sm:$0xff]
        %v3589 = vld [vmem:[%s3582 + $0x30] sm:$0xff]
        %v3590 = vld [vmem:[%s3582 + $0x38] sm:$0xff]
        %v3591 = vld [vmem:[%s3582 + $0x40] sm:$0xff]
        %v3592 = vld [vmem:[%s3582 + $0x48] sm:$0xff]
        %v3593 = vld [vmem:[%s3582 + $0x50] sm:$0xff]
        %v3594 = vld [vmem:[%s3582 + $0x58] sm:$0xff]
        %v3595 = vld [vmem:[%s3582 + $0x60] sm:$0xff]
        %v3596 = vld [vmem:[%s3582 + $0x68] sm:$0xff]
        %v3597 = vld [vmem:[%s3582 + $0x70] sm:$0xff]
        %v3598 = vld [vmem:[%s3582 + $0x78] sm:$0xff]
        %3600 = vset.pattern.permute.xlu0 0
        %3601 = vperm.xlu0 %3600, %v3583
        %v3602 = vpop.permute.xlu0 %3601
        %3605 = vset.pattern.permute.xlu0 0
        %3606 = vperm.xlu0 %3605, %v3584
        %v3607 = vpop.permute.xlu0 %3606
        %3610 = vset.pattern.permute.xlu0 0
        %3611 = vperm.xlu0 %3610, %v3585
        %v3612 = vpop.permute.xlu0 %3611
        %3615 = vset.pattern.permute.xlu0 0
        %3616 = vperm.xlu0 %3615, %v3586
        %v3617 = vpop.permute.xlu0 %3616
        %3620 = vset.pattern.permute.xlu0 0
        %3621 = vperm.xlu0 %3620, %v3587
        %v3622 = vpop.permute.xlu0 %3621
        %3625 = vset.pattern.permute.xlu0 0
        %3626 = vperm.xlu0 %3625, %v3588
        %v3627 = vpop.permute.xlu0 %3626
        %3630 = vset.pattern.permute.xlu0 0
        %3631 = vperm.xlu0 %3630, %v3589
        %v3632 = vpop.permute.xlu0 %3631
        %3635 = vset.pattern.permute.xlu0 0
        %3636 = vperm.xlu0 %3635, %v3590
        %v3637 = vpop.permute.xlu0 %3636
        %3640 = vset.pattern.permute.xlu0 0
        %3641 = vperm.xlu0 %3640, %v3591
        %v3642 = vpop.permute.xlu0 %3641
        %3645 = vset.pattern.permute.xlu0 0
        %3646 = vperm.xlu0 %3645, %v3592
        %v3647 = vpop.permute.xlu0 %3646
        %3650 = vset.pattern.permute.xlu0 0
        %3651 = vperm.xlu0 %3650, %v3593
        %v3652 = vpop.permute.xlu0 %3651
        %3655 = vset.pattern.permute.xlu0 0
        %3656 = vperm.xlu0 %3655, %v3594
        %v3657 = vpop.permute.xlu0 %3656
        %3660 = vset.pattern.permute.xlu0 0
        %3661 = vperm.xlu0 %3660, %v3595
        %v3662 = vpop.permute.xlu0 %3661
        %3665 = vset.pattern.permute.xlu0 0
        %3666 = vperm.xlu0 %3665, %v3596
        %v3667 = vpop.permute.xlu0 %3666
        %3670 = vset.pattern.permute.xlu0 0
        %3671 = vperm.xlu0 %3670, %v3597
        %v3672 = vpop.permute.xlu0 %3671
        %3675 = vset.pattern.permute.xlu0 0
        %3676 = vperm.xlu0 %3675, %v3598
        %v3677 = vpop.permute.xlu0 %3676
        %v3679 = vmul.f32 %v3566, %v3602
        %v3680 = vmul.f32 %v3567, %v3607
        %v3681 = vmul.f32 %v3568, %v3612
        %v3682 = vmul.f32 %v3569, %v3617
        %v3683 = vmul.f32 %v3570, %v3622
        %v3684 = vmul.f32 %v3571, %v3627
        %v3685 = vmul.f32 %v3572, %v3632
        %v3686 = vmul.f32 %v3573, %v3637
        %v3687 = vmul.f32 %v3574, %v3642
        %v3688 = vmul.f32 %v3575, %v3647
        %v3689 = vmul.f32 %v3576, %v3652
        %v3690 = vmul.f32 %v3577, %v3657
        %v3691 = vmul.f32 %v3578, %v3662
        %v3692 = vmul.f32 %v3579, %v3667
        %v3693 = vmul.f32 %v3580, %v3672
        %v3694 = vmul.f32 %v3581, %v3677
        %v3695 = vadd.f32 %v3679, %v3683
        %v3696 = vadd.f32 %v3680, %v3684
        %v3697 = vadd.f32 %v3681, %v3685
        %v3698 = vadd.f32 %v3682, %v3686
        %v3699 = vadd.f32 %v3695, %v3687
        %v3700 = vadd.f32 %v3696, %v3688
        %v3701 = vadd.f32 %v3697, %v3689
        %v3702 = vadd.f32 %v3698, %v3690
        %v3703 = vadd.f32 %v3699, %v3691
        %v3704 = vadd.f32 %v3700, %v3692
        %v3705 = vadd.f32 %v3701, %v3693
        %v3706 = vadd.f32 %v3702, %v3694
        %v3707 = vld [vmem:[#allocation2] sm:$0xff]
        %v3708 = vld [vmem:[#allocation2 + $0x8] sm:$0xff]
        %v3709 = vld [vmem:[#allocation2 + $0x10] sm:$0xff]
        %v3710 = vld [vmem:[#allocation2 + $0x18] sm:$0xff]
        %v3711 = vadd.f32 %v3707, %v3703
        %v3712 = vadd.f32 %v3708, %v3704
        %v3713 = vadd.f32 %v3709, %v3705
        %v3714 = vadd.f32 %v3710, %v3706
        %3715 = vst [vmem:[#allocation2] sm:$0xff] %v3711
        %3716 = vst [vmem:[#allocation2 + $0x8] sm:$0xff] %v3712
        %3717 = vst [vmem:[#allocation2 + $0x10] sm:$0xff] %v3713
        %3718 = vst [vmem:[#allocation2 + $0x18] sm:$0xff] %v3714
        %s3719 = scalar_lea.vmem %s850, 360 [#allocation3]
        %v3720 = vld [vmem:[%s3719] sm:$0xff]
        %v3721 = vld [vmem:[%s3719 + $0x8] sm:$0xff]
        %v3722 = vld [vmem:[%s3719 + $0x10] sm:$0xff]
        %v3723 = vld [vmem:[%s3719 + $0x18] sm:$0xff]
        %v3724 = vld [vmem:[%s3719 + $0x20] sm:$0x1]
        %v3726 = vsel %vm962, %v3724, 0
        %3728 = vmatprep.subr.mxu0 0.0
        %3729 = vmatpush1.msra.mxu0 0.0
        %3730 = vmatprep.subr.mxu0 0.0
        %3731 = vmatpush1.msra.mxu0 0.0
        %3732 = vmatprep.subr.mxu0 0.0
        %3733 = vmatpush1.msra.mxu0 0.0
        %3734 = vmatprep.subr.mxu0 0.0
        %3735 = vmatpush1.msra.mxu0 0.0
        %3736 = vmatprep.subr.mxu0 0.0
        %3737 = vmatpush1.msra.mxu0 0.0
        %3738 = vmatprep.subr.mxu0 0.0
        %3739 = vmatpush1.msra.mxu0 0.0
        %3740 = vmatprep.subr.mxu0 0.0
        %3741 = vmatpush1.msra.mxu0 0.0
        %3742 = vmatprep.subr.mxu0 0.0
        %3743 = vmatpush1.msra.mxu0 0.0
        %3744 = vmatprep.subr.mxu0 0.0
        %3745 = vmatpush1.msra.mxu0 0.0
        %3746 = vmatprep.subr.mxu0 0.0
        %3747 = vmatpush1.msra.mxu0 0.0
        %3748 = vmatprep.subr.mxu0 0.0
        %3749 = vmatpush1.msra.mxu0 0.0
        %3750 = vmatprep.subr.mxu0 0.0
        %3751 = vmatpush1.msra.mxu0 %v3726
        %3752 = vmatprep.subr.mxu0 0.0
        %3753 = vmatpush1.msra.mxu0 %v3723
        %3754 = vmatprep.subr.mxu0 0.0
        %3755 = vmatpush1.msra.mxu0 %v3722
        %3756 = vmatprep.subr.mxu0 0.0
        %3757 = vmatpush1.msra.mxu0 %v3721
        %3758 = vmatprep.subr.mxu0 0.0
        %3759 = vmatpush1.msra.mxu0 %v3720
        %3760 = vmatprep.subr.mxu0 0.0
        %3761 = vmatpush2.msra.mxu0 0.0
        %3762 = vmatprep.subr.mxu0 0.0
        %3763 = vmatpush2.msra.mxu0 0.0
        %3764 = vmatprep.subr.mxu0 0.0
        %3765 = vmatpush2.msra.mxu0 0.0
        %3766 = vmatprep.subr.mxu0 0.0
        %3767 = vmatpush2.msra.mxu0 0.0
        %3768 = vmatprep.subr.mxu0 0.0
        %3769 = vmatpush2.msra.mxu0 0.0
        %3770 = vmatprep.subr.mxu0 0.0
        %3771 = vmatpush2.msra.mxu0 0.0
        %3772 = vmatprep.subr.mxu0 0.0
        %3773 = vmatpush2.msra.mxu0 0.0
        %3774 = vmatprep.subr.mxu0 0.0
        %3775 = vmatpush2.msra.mxu0 0.0
        %3776 = vmatprep.subr.mxu0 0.0
        %3777 = vmatpush2.msra.mxu0 0.0
        %3778 = vmatprep.subr.mxu0 0.0
        %3779 = vmatpush2.msra.mxu0 0.0
        %3780 = vmatprep.subr.mxu0 0.0
        %3781 = vmatpush2.msra.mxu0 0.0
        %3782 = vmatprep.subr.mxu0 0.0
        %3783 = vmatpush2.msra.mxu0 0.0
        %3784 = vmatprep.subr.mxu0 0.0
        %3785 = vmatpush2.msra.mxu0 0.0
        %3786 = vmatprep.subr.mxu0 0.0
        %3787 = vmatpush2.msra.mxu0 0.0
        %3788 = vmatprep.subr.mxu0 0.0
        %3789 = vmatpush2.msra.mxu0 0.0
        %3790 = vmatprep.subr.mxu0 0.0
        %3791 = vmatpush2.msra.mxu0 0.0
        %3792 = vmatprep.mubr.f32.mxu0 0.0
        %3793 = vmatmul.mubr.f32.gmra.mxu0 %v915
        %v3794 = vpop.f32.mrf.mxu0
        %v3795 = vadd.f32 0.0, %v3794
        %v3796 = vpop.f32.mrf.mxu0
        %3797 = vmatprep.mubr.f32.mxu0 0.0
        %3798 = vmatmul.mubr.f32.gmra.mxu0 %v918
        %v3799 = vpop.f32.mrf.mxu0
        %v3800 = vadd.f32 0.0, %v3799
        %v3801 = vpop.f32.mrf.mxu0
        %3802 = vmatprep.mubr.f32.mxu0 0.0
        %3803 = vmatmul.mubr.f32.gmra.mxu0 %v921
        %v3804 = vpop.f32.mrf.mxu0
        %v3805 = vadd.f32 0.0, %v3804
        %v3806 = vpop.f32.mrf.mxu0
        %3807 = vmatprep.mubr.f32.mxu0 0.0
        %3808 = vmatmul.mubr.f32.gmra.mxu0 %v924
        %v3809 = vpop.f32.mrf.mxu0
        %v3810 = vadd.f32 0.0, %v3809
        %v3811 = vpop.f32.mrf.mxu0
        %3812 = vmatprep.mubr.f32.mxu0 0.0
        %3813 = vmatmul.mubr.f32.gmra.mxu0 %v927
        %v3814 = vpop.f32.mrf.mxu0
        %v3815 = vadd.f32 0.0, %v3814
        %v3816 = vpop.f32.mrf.mxu0
        %3817 = vmatprep.mubr.f32.mxu0 0.0
        %3818 = vmatmul.mubr.f32.gmra.mxu0 %v930
        %v3819 = vpop.f32.mrf.mxu0
        %v3820 = vadd.f32 0.0, %v3819
        %v3821 = vpop.f32.mrf.mxu0
        %3822 = vmatprep.mubr.f32.mxu0 0.0
        %3823 = vmatmul.mubr.f32.gmra.mxu0 %v933
        %v3824 = vpop.f32.mrf.mxu0
        %v3825 = vadd.f32 0.0, %v3824
        %v3826 = vpop.f32.mrf.mxu0
        %3827 = vmatprep.mubr.f32.mxu0 0.0
        %3828 = vmatmul.mubr.f32.gmra.mxu0 %v936
        %v3829 = vpop.f32.mrf.mxu0
        %v3830 = vadd.f32 0.0, %v3829
        %v3831 = vpop.f32.mrf.mxu0
        %3832 = vmatprep.mubr.f32.mxu0 0.0
        %3833 = vmatmul.mubr.f32.gmra.mxu0 %v939
        %v3834 = vpop.f32.mrf.mxu0
        %v3835 = vadd.f32 0.0, %v3834
        %v3836 = vpop.f32.mrf.mxu0
        %3837 = vmatprep.mubr.f32.mxu0 0.0
        %3838 = vmatmul.mubr.f32.gmra.mxu0 %v942
        %v3839 = vpop.f32.mrf.mxu0
        %v3840 = vadd.f32 0.0, %v3839
        %v3841 = vpop.f32.mrf.mxu0
        %3842 = vmatprep.mubr.f32.mxu0 0.0
        %3843 = vmatmul.mubr.f32.gmra.mxu0 %v945
        %v3844 = vpop.f32.mrf.mxu0
        %v3845 = vadd.f32 0.0, %v3844
        %v3846 = vpop.f32.mrf.mxu0
        %3847 = vmatprep.mubr.f32.mxu0 0.0
        %3848 = vmatmul.mubr.f32.gmra.mxu0 %v948
        %v3849 = vpop.f32.mrf.mxu0
        %v3850 = vadd.f32 0.0, %v3849
        %v3851 = vpop.f32.mrf.mxu0
        %3852 = vmatprep.mubr.f32.mxu0 0.0
        %3853 = vmatmul.mubr.f32.gmra.mxu0 %v951
        %v3854 = vpop.f32.mrf.mxu0
        %v3855 = vadd.f32 0.0, %v3854
        %v3856 = vpop.f32.mrf.mxu0
        %3857 = vmatprep.mubr.f32.mxu0 0.0
        %3858 = vmatmul.mubr.f32.gmra.mxu0 %v954
        %v3859 = vpop.f32.mrf.mxu0
        %v3860 = vadd.f32 0.0, %v3859
        %v3861 = vpop.f32.mrf.mxu0
        %3862 = vmatprep.mubr.f32.mxu0 0.0
        %3863 = vmatmul.mubr.f32.gmra.mxu0 %v957
        %v3864 = vpop.f32.mrf.mxu0
        %v3865 = vadd.f32 0.0, %v3864
        %v3866 = vpop.f32.mrf.mxu0
        %3867 = vmatprep.mubr.f32.mxu0 0.0
        %3868 = vmatmul.mubr.f32.gmra.mxu0 %v960
        %v3869 = vpop.f32.mrf.mxu0
        %v3870 = vadd.f32 0.0, %v3869
        %v3871 = vpop.f32.mrf.mxu0
        %3872 = vdwg.mxu0
        %v3873 = vmax.f32 %v3795, 0.0
        %v3874 = vmax.f32 %v3800, 0.0
        %v3875 = vmax.f32 %v3805, 0.0
        %v3876 = vmax.f32 %v3810, 0.0
        %v3877 = vmax.f32 %v3815, 0.0
        %v3878 = vmax.f32 %v3820, 0.0
        %v3879 = vmax.f32 %v3825, 0.0
        %v3880 = vmax.f32 %v3830, 0.0
        %v3881 = vmax.f32 %v3835, 0.0
        %v3882 = vmax.f32 %v3840, 0.0
        %v3883 = vmax.f32 %v3845, 0.0
        %v3884 = vmax.f32 %v3850, 0.0
        %v3885 = vmax.f32 %v3855, 0.0
        %v3886 = vmax.f32 %v3860, 0.0
        %v3887 = vmax.f32 %v3865, 0.0
        %v3888 = vmax.f32 %v3870, 0.0
        %s3889 = scalar_lea.vmem %s2, 1152
        %v3890 = vld [vmem:[%s3889] sm:$0xff]
        %v3891 = vld [vmem:[%s3889 + $0x8] sm:$0xff]
        %v3892 = vld [vmem:[%s3889 + $0x10] sm:$0xff]
        %v3893 = vld [vmem:[%s3889 + $0x18] sm:$0xff]
        %v3894 = vld [vmem:[%s3889 + $0x20] sm:$0xff]
        %v3895 = vld [vmem:[%s3889 + $0x28] sm:$0xff]
        %v3896 = vld [vmem:[%s3889 + $0x30] sm:$0xff]
        %v3897 = vld [vmem:[%s3889 + $0x38] sm:$0xff]
        %v3898 = vld [vmem:[%s3889 + $0x40] sm:$0xff]
        %v3899 = vld [vmem:[%s3889 + $0x48] sm:$0xff]
        %v3900 = vld [vmem:[%s3889 + $0x50] sm:$0xff]
        %v3901 = vld [vmem:[%s3889 + $0x58] sm:$0xff]
        %v3902 = vld [vmem:[%s3889 + $0x60] sm:$0xff]
        %v3903 = vld [vmem:[%s3889 + $0x68] sm:$0xff]
        %v3904 = vld [vmem:[%s3889 + $0x70] sm:$0xff]
        %v3905 = vld [vmem:[%s3889 + $0x78] sm:$0xff]
        %3907 = vset.pattern.permute.xlu0 0
        %3908 = vperm.xlu0 %3907, %v3890
        %v3909 = vpop.permute.xlu0 %3908
        %3912 = vset.pattern.permute.xlu0 0
        %3913 = vperm.xlu0 %3912, %v3891
        %v3914 = vpop.permute.xlu0 %3913
        %3917 = vset.pattern.permute.xlu0 0
        %3918 = vperm.xlu0 %3917, %v3892
        %v3919 = vpop.permute.xlu0 %3918
        %3922 = vset.pattern.permute.xlu0 0
        %3923 = vperm.xlu0 %3922, %v3893
        %v3924 = vpop.permute.xlu0 %3923
        %3927 = vset.pattern.permute.xlu0 0
        %3928 = vperm.xlu0 %3927, %v3894
        %v3929 = vpop.permute.xlu0 %3928
        %3932 = vset.pattern.permute.xlu0 0
        %3933 = vperm.xlu0 %3932, %v3895
        %v3934 = vpop.permute.xlu0 %3933
        %3937 = vset.pattern.permute.xlu0 0
        %3938 = vperm.xlu0 %3937, %v3896
        %v3939 = vpop.permute.xlu0 %3938
        %3942 = vset.pattern.permute.xlu0 0
        %3943 = vperm.xlu0 %3942, %v3897
        %v3944 = vpop.permute.xlu0 %3943
        %3947 = vset.pattern.permute.xlu0 0
        %3948 = vperm.xlu0 %3947, %v3898
        %v3949 = vpop.permute.xlu0 %3948
        %3952 = vset.pattern.permute.xlu0 0
        %3953 = vperm.xlu0 %3952, %v3899
        %v3954 = vpop.permute.xlu0 %3953
        %3957 = vset.pattern.permute.xlu0 0
        %3958 = vperm.xlu0 %3957, %v3900
        %v3959 = vpop.permute.xlu0 %3958
        %3962 = vset.pattern.permute.xlu0 0
        %3963 = vperm.xlu0 %3962, %v3901
        %v3964 = vpop.permute.xlu0 %3963
        %3967 = vset.pattern.permute.xlu0 0
        %3968 = vperm.xlu0 %3967, %v3902
        %v3969 = vpop.permute.xlu0 %3968
        %3972 = vset.pattern.permute.xlu0 0
        %3973 = vperm.xlu0 %3972, %v3903
        %v3974 = vpop.permute.xlu0 %3973
        %3977 = vset.pattern.permute.xlu0 0
        %3978 = vperm.xlu0 %3977, %v3904
        %v3979 = vpop.permute.xlu0 %3978
        %3982 = vset.pattern.permute.xlu0 0
        %3983 = vperm.xlu0 %3982, %v3905
        %v3984 = vpop.permute.xlu0 %3983
        %v3986 = vmul.f32 %v3873, %v3909
        %v3987 = vmul.f32 %v3874, %v3914
        %v3988 = vmul.f32 %v3875, %v3919
        %v3989 = vmul.f32 %v3876, %v3924
        %v3990 = vmul.f32 %v3877, %v3929
        %v3991 = vmul.f32 %v3878, %v3934
        %v3992 = vmul.f32 %v3879, %v3939
        %v3993 = vmul.f32 %v3880, %v3944
        %v3994 = vmul.f32 %v3881, %v3949
        %v3995 = vmul.f32 %v3882, %v3954
        %v3996 = vmul.f32 %v3883, %v3959
        %v3997 = vmul.f32 %v3884, %v3964
        %v3998 = vmul.f32 %v3885, %v3969
        %v3999 = vmul.f32 %v3886, %v3974
        %v4000 = vmul.f32 %v3887, %v3979
        %v4001 = vmul.f32 %v3888, %v3984
        %v4002 = vadd.f32 %v3986, %v3990
        %v4003 = vadd.f32 %v3987, %v3991
        %v4004 = vadd.f32 %v3988, %v3992
        %v4005 = vadd.f32 %v3989, %v3993
        %v4006 = vadd.f32 %v4002, %v3994
        %v4007 = vadd.f32 %v4003, %v3995
        %v4008 = vadd.f32 %v4004, %v3996
        %v4009 = vadd.f32 %v4005, %v3997
        %v4010 = vadd.f32 %v4006, %v3998
        %v4011 = vadd.f32 %v4007, %v3999
        %v4012 = vadd.f32 %v4008, %v4000
        %v4013 = vadd.f32 %v4009, %v4001
        %v4014 = vld [vmem:[#allocation2] sm:$0xff]
        %v4015 = vld [vmem:[#allocation2 + $0x8] sm:$0xff]
        %v4016 = vld [vmem:[#allocation2 + $0x10] sm:$0xff]
        %v4017 = vld [vmem:[#allocation2 + $0x18] sm:$0xff]
        %v4018 = vadd.f32 %v4014, %v4010
        %v4019 = vadd.f32 %v4015, %v4011
        %v4020 = vadd.f32 %v4016, %v4012
        %v4021 = vadd.f32 %v4017, %v4013
        %4022 = vst [vmem:[#allocation2] sm:$0xff] %v4018
        %4023 = vst [vmem:[#allocation2 + $0x8] sm:$0xff] %v4019
        %4024 = vst [vmem:[#allocation2 + $0x10] sm:$0xff] %v4020
        %4025 = vst [vmem:[#allocation2 + $0x18] sm:$0xff] %v4021
        %s4026 = scalar_lea.vmem %s850, 400 [#allocation3]
        %v4027 = vld [vmem:[%s4026] sm:$0xff]
        %v4028 = vld [vmem:[%s4026 + $0x8] sm:$0xff]
        %v4029 = vld [vmem:[%s4026 + $0x10] sm:$0xff]
        %v4030 = vld [vmem:[%s4026 + $0x18] sm:$0xff]
        %v4031 = vld [vmem:[%s4026 + $0x20] sm:$0x1]
        %v4033 = vsel %vm962, %v4031, 0
        %4035 = vmatprep.subr.mxu0 0.0
        %4036 = vmatpush1.msra.mxu0 0.0
        %4037 = vmatprep.subr.mxu0 0.0
        %4038 = vmatpush1.msra.mxu0 0.0
        %4039 = vmatprep.subr.mxu0 0.0
        %4040 = vmatpush1.msra.mxu0 0.0
        %4041 = vmatprep.subr.mxu0 0.0
        %4042 = vmatpush1.msra.mxu0 0.0
        %4043 = vmatprep.subr.mxu0 0.0
        %4044 = vmatpush1.msra.mxu0 0.0
        %4045 = vmatprep.subr.mxu0 0.0
        %4046 = vmatpush1.msra.mxu0 0.0
        %4047 = vmatprep.subr.mxu0 0.0
        %4048 = vmatpush1.msra.mxu0 0.0
        %4049 = vmatprep.subr.mxu0 0.0
        %4050 = vmatpush1.msra.mxu0 0.0
        %4051 = vmatprep.subr.mxu0 0.0
        %4052 = vmatpush1.msra.mxu0 0.0
        %4053 = vmatprep.subr.mxu0 0.0
        %4054 = vmatpush1.msra.mxu0 0.0
        %4055 = vmatprep.subr.mxu0 0.0
        %4056 = vmatpush1.msra.mxu0 0.0
        %4057 = vmatprep.subr.mxu0 0.0
        %4058 = vmatpush1.msra.mxu0 %v4033
        %4059 = vmatprep.subr.mxu0 0.0
        %4060 = vmatpush1.msra.mxu0 %v4030
        %4061 = vmatprep.subr.mxu0 0.0
        %4062 = vmatpush1.msra.mxu0 %v4029
        %4063 = vmatprep.subr.mxu0 0.0
        %4064 = vmatpush1.msra.mxu0 %v4028
        %4065 = vmatprep.subr.mxu0 0.0
        %4066 = vmatpush1.msra.mxu0 %v4027
        %4067 = vmatprep.subr.mxu0 0.0
        %4068 = vmatpush2.msra.mxu0 0.0
        %4069 = vmatprep.subr.mxu0 0.0
        %4070 = vmatpush2.msra.mxu0 0.0
        %4071 = vmatprep.subr.mxu0 0.0
        %4072 = vmatpush2.msra.mxu0 0.0
        %4073 = vmatprep.subr.mxu0 0.0
        %4074 = vmatpush2.msra.mxu0 0.0
        %4075 = vmatprep.subr.mxu0 0.0
        %4076 = vmatpush2.msra.mxu0 0.0
        %4077 = vmatprep.subr.mxu0 0.0
        %4078 = vmatpush2.msra.mxu0 0.0
        %4079 = vmatprep.subr.mxu0 0.0
        %4080 = vmatpush2.msra.mxu0 0.0
        %4081 = vmatprep.subr.mxu0 0.0
        %4082 = vmatpush2.msra.mxu0 0.0
        %4083 = vmatprep.subr.mxu0 0.0
        %4084 = vmatpush2.msra.mxu0 0.0
        %4085 = vmatprep.subr.mxu0 0.0
        %4086 = vmatpush2.msra.mxu0 0.0
        %4087 = vmatprep.subr.mxu0 0.0
        %4088 = vmatpush2.msra.mxu0 0.0
        %4089 = vmatprep.subr.mxu0 0.0
        %4090 = vmatpush2.msra.mxu0 0.0
        %4091 = vmatprep.subr.mxu0 0.0
        %4092 = vmatpush2.msra.mxu0 0.0
        %4093 = vmatprep.subr.mxu0 0.0
        %4094 = vmatpush2.msra.mxu0 0.0
        %4095 = vmatprep.subr.mxu0 0.0
        %4096 = vmatpush2.msra.mxu0 0.0
        %4097 = vmatprep.subr.mxu0 0.0
        %4098 = vmatpush2.msra.mxu0 0.0
        %4099 = vmatprep.mubr.f32.mxu0 0.0
        %4100 = vmatmul.mubr.f32.gmra.mxu0 %v915
        %v4101 = vpop.f32.mrf.mxu0
        %v4102 = vadd.f32 0.0, %v4101
        %v4103 = vpop.f32.mrf.mxu0
        %4104 = vmatprep.mubr.f32.mxu0 0.0
        %4105 = vmatmul.mubr.f32.gmra.mxu0 %v918
        %v4106 = vpop.f32.mrf.mxu0
        %v4107 = vadd.f32 0.0, %v4106
        %v4108 = vpop.f32.mrf.mxu0
        %4109 = vmatprep.mubr.f32.mxu0 0.0
        %4110 = vmatmul.mubr.f32.gmra.mxu0 %v921
        %v4111 = vpop.f32.mrf.mxu0
        %v4112 = vadd.f32 0.0, %v4111
        %v4113 = vpop.f32.mrf.mxu0
        %4114 = vmatprep.mubr.f32.mxu0 0.0
        %4115 = vmatmul.mubr.f32.gmra.mxu0 %v924
        %v4116 = vpop.f32.mrf.mxu0
        %v4117 = vadd.f32 0.0, %v4116
        %v4118 = vpop.f32.mrf.mxu0
        %4119 = vmatprep.mubr.f32.mxu0 0.0
        %4120 = vmatmul.mubr.f32.gmra.mxu0 %v927
        %v4121 = vpop.f32.mrf.mxu0
        %v4122 = vadd.f32 0.0, %v4121
        %v4123 = vpop.f32.mrf.mxu0
        %4124 = vmatprep.mubr.f32.mxu0 0.0
        %4125 = vmatmul.mubr.f32.gmra.mxu0 %v930
        %v4126 = vpop.f32.mrf.mxu0
        %v4127 = vadd.f32 0.0, %v4126
        %v4128 = vpop.f32.mrf.mxu0
        %4129 = vmatprep.mubr.f32.mxu0 0.0
        %4130 = vmatmul.mubr.f32.gmra.mxu0 %v933
        %v4131 = vpop.f32.mrf.mxu0
        %v4132 = vadd.f32 0.0, %v4131
        %v4133 = vpop.f32.mrf.mxu0
        %4134 = vmatprep.mubr.f32.mxu0 0.0
        %4135 = vmatmul.mubr.f32.gmra.mxu0 %v936
        %v4136 = vpop.f32.mrf.mxu0
        %v4137 = vadd.f32 0.0, %v4136
        %v4138 = vpop.f32.mrf.mxu0
        %4139 = vmatprep.mubr.f32.mxu0 0.0
        %4140 = vmatmul.mubr.f32.gmra.mxu0 %v939
        %v4141 = vpop.f32.mrf.mxu0
        %v4142 = vadd.f32 0.0, %v4141
        %v4143 = vpop.f32.mrf.mxu0
        %4144 = vmatprep.mubr.f32.mxu0 0.0
        %4145 = vmatmul.mubr.f32.gmra.mxu0 %v942
        %v4146 = vpop.f32.mrf.mxu0
        %v4147 = vadd.f32 0.0, %v4146
        %v4148 = vpop.f32.mrf.mxu0
        %4149 = vmatprep.mubr.f32.mxu0 0.0
        %4150 = vmatmul.mubr.f32.gmra.mxu0 %v945
        %v4151 = vpop.f32.mrf.mxu0
        %v4152 = vadd.f32 0.0, %v4151
        %v4153 = vpop.f32.mrf.mxu0
        %4154 = vmatprep.mubr.f32.mxu0 0.0
        %4155 = vmatmul.mubr.f32.gmra.mxu0 %v948
        %v4156 = vpop.f32.mrf.mxu0
        %v4157 = vadd.f32 0.0, %v4156
        %v4158 = vpop.f32.mrf.mxu0
        %4159 = vmatprep.mubr.f32.mxu0 0.0
        %4160 = vmatmul.mubr.f32.gmra.mxu0 %v951
        %v4161 = vpop.f32.mrf.mxu0
        %v4162 = vadd.f32 0.0, %v4161
        %v4163 = vpop.f32.mrf.mxu0
        %4164 = vmatprep.mubr.f32.mxu0 0.0
        %4165 = vmatmul.mubr.f32.gmra.mxu0 %v954
        %v4166 = vpop.f32.mrf.mxu0
        %v4167 = vadd.f32 0.0, %v4166
        %v4168 = vpop.f32.mrf.mxu0
        %4169 = vmatprep.mubr.f32.mxu0 0.0
        %4170 = vmatmul.mubr.f32.gmra.mxu0 %v957
        %v4171 = vpop.f32.mrf.mxu0
        %v4172 = vadd.f32 0.0, %v4171
        %v4173 = vpop.f32.mrf.mxu0
        %4174 = vmatprep.mubr.f32.mxu0 0.0
        %4175 = vmatmul.mubr.f32.gmra.mxu0 %v960
        %v4176 = vpop.f32.mrf.mxu0
        %v4177 = vadd.f32 0.0, %v4176
        %v4178 = vpop.f32.mrf.mxu0
        %4179 = vdwg.mxu0
        %v4180 = vmax.f32 %v4102, 0.0
        %v4181 = vmax.f32 %v4107, 0.0
        %v4182 = vmax.f32 %v4112, 0.0
        %v4183 = vmax.f32 %v4117, 0.0
        %v4184 = vmax.f32 %v4122, 0.0
        %v4185 = vmax.f32 %v4127, 0.0
        %v4186 = vmax.f32 %v4132, 0.0
        %v4187 = vmax.f32 %v4137, 0.0
        %v4188 = vmax.f32 %v4142, 0.0
        %v4189 = vmax.f32 %v4147, 0.0
        %v4190 = vmax.f32 %v4152, 0.0
        %v4191 = vmax.f32 %v4157, 0.0
        %v4192 = vmax.f32 %v4162, 0.0
        %v4193 = vmax.f32 %v4167, 0.0
        %v4194 = vmax.f32 %v4172, 0.0
        %v4195 = vmax.f32 %v4177, 0.0
        %s4196 = scalar_lea.vmem %s2, 1280
        %v4197 = vld [vmem:[%s4196] sm:$0xff]
        %v4198 = vld [vmem:[%s4196 + $0x8] sm:$0xff]
        %v4199 = vld [vmem:[%s4196 + $0x10] sm:$0xff]
        %v4200 = vld [vmem:[%s4196 + $0x18] sm:$0xff]
        %v4201 = vld [vmem:[%s4196 + $0x20] sm:$0xff]
        %v4202 = vld [vmem:[%s4196 + $0x28] sm:$0xff]
        %v4203 = vld [vmem:[%s4196 + $0x30] sm:$0xff]
        %v4204 = vld [vmem:[%s4196 + $0x38] sm:$0xff]
        %v4205 = vld [vmem:[%s4196 + $0x40] sm:$0xff]
        %v4206 = vld [vmem:[%s4196 + $0x48] sm:$0xff]
        %v4207 = vld [vmem:[%s4196 + $0x50] sm:$0xff]
        %v4208 = vld [vmem:[%s4196 + $0x58] sm:$0xff]
        %v4209 = vld [vmem:[%s4196 + $0x60] sm:$0xff]
        %v4210 = vld [vmem:[%s4196 + $0x68] sm:$0xff]
        %v4211 = vld [vmem:[%s4196 + $0x70] sm:$0xff]
        %v4212 = vld [vmem:[%s4196 + $0x78] sm:$0xff]
        %4214 = vset.pattern.permute.xlu0 0
        %4215 = vperm.xlu0 %4214, %v4197
        %v4216 = vpop.permute.xlu0 %4215
        %4219 = vset.pattern.permute.xlu0 0
        %4220 = vperm.xlu0 %4219, %v4198
        %v4221 = vpop.permute.xlu0 %4220
        %4224 = vset.pattern.permute.xlu0 0
        %4225 = vperm.xlu0 %4224, %v4199
        %v4226 = vpop.permute.xlu0 %4225
        %4229 = vset.pattern.permute.xlu0 0
        %4230 = vperm.xlu0 %4229, %v4200
        %v4231 = vpop.permute.xlu0 %4230
        %4234 = vset.pattern.permute.xlu0 0
        %4235 = vperm.xlu0 %4234, %v4201
        %v4236 = vpop.permute.xlu0 %4235
        %4239 = vset.pattern.permute.xlu0 0
        %4240 = vperm.xlu0 %4239, %v4202
        %v4241 = vpop.permute.xlu0 %4240
        %4244 = vset.pattern.permute.xlu0 0
        %4245 = vperm.xlu0 %4244, %v4203
        %v4246 = vpop.permute.xlu0 %4245
        %4249 = vset.pattern.permute.xlu0 0
        %4250 = vperm.xlu0 %4249, %v4204
        %v4251 = vpop.permute.xlu0 %4250
        %4254 = vset.pattern.permute.xlu0 0
        %4255 = vperm.xlu0 %4254, %v4205
        %v4256 = vpop.permute.xlu0 %4255
        %4259 = vset.pattern.permute.xlu0 0
        %4260 = vperm.xlu0 %4259, %v4206
        %v4261 = vpop.permute.xlu0 %4260
        %4264 = vset.pattern.permute.xlu0 0
        %4265 = vperm.xlu0 %4264, %v4207
        %v4266 = vpop.permute.xlu0 %4265
        %4269 = vset.pattern.permute.xlu0 0
        %4270 = vperm.xlu0 %4269, %v4208
        %v4271 = vpop.permute.xlu0 %4270
        %4274 = vset.pattern.permute.xlu0 0
        %4275 = vperm.xlu0 %4274, %v4209
        %v4276 = vpop.permute.xlu0 %4275
        %4279 = vset.pattern.permute.xlu0 0
        %4280 = vperm.xlu0 %4279, %v4210
        %v4281 = vpop.permute.xlu0 %4280
        %4284 = vset.pattern.permute.xlu0 0
        %4285 = vperm.xlu0 %4284, %v4211
        %v4286 = vpop.permute.xlu0 %4285
        %4289 = vset.pattern.permute.xlu0 0
        %4290 = vperm.xlu0 %4289, %v4212
        %v4291 = vpop.permute.xlu0 %4290
        %v4293 = vmul.f32 %v4180, %v4216
        %v4294 = vmul.f32 %v4181, %v4221
        %v4295 = vmul.f32 %v4182, %v4226
        %v4296 = vmul.f32 %v4183, %v4231
        %v4297 = vmul.f32 %v4184, %v4236
        %v4298 = vmul.f32 %v4185, %v4241
        %v4299 = vmul.f32 %v4186, %v4246
        %v4300 = vmul.f32 %v4187, %v4251
        %v4301 = vmul.f32 %v4188, %v4256
        %v4302 = vmul.f32 %v4189, %v4261
        %v4303 = vmul.f32 %v4190, %v4266
        %v4304 = vmul.f32 %v4191, %v4271
        %v4305 = vmul.f32 %v4192, %v4276
        %v4306 = vmul.f32 %v4193, %v4281
        %v4307 = vmul.f32 %v4194, %v4286
        %v4308 = vmul.f32 %v4195, %v4291
        %v4309 = vadd.f32 %v4293, %v4297
        %v4310 = vadd.f32 %v4294, %v4298
        %v4311 = vadd.f32 %v4295, %v4299
        %v4312 = vadd.f32 %v4296, %v4300
        %v4313 = vadd.f32 %v4309, %v4301
        %v4314 = vadd.f32 %v4310, %v4302
        %v4315 = vadd.f32 %v4311, %v4303
        %v4316 = vadd.f32 %v4312, %v4304
        %v4317 = vadd.f32 %v4313, %v4305
        %v4318 = vadd.f32 %v4314, %v4306
        %v4319 = vadd.f32 %v4315, %v4307
        %v4320 = vadd.f32 %v4316, %v4308
        %v4321 = vld [vmem:[#allocation2] sm:$0xff]
        %v4322 = vld [vmem:[#allocation2 + $0x8] sm:$0xff]
        %v4323 = vld [vmem:[#allocation2 + $0x10] sm:$0xff]
        %v4324 = vld [vmem:[#allocation2 + $0x18] sm:$0xff]
        %v4325 = vadd.f32 %v4321, %v4317
        %v4326 = vadd.f32 %v4322, %v4318
        %v4327 = vadd.f32 %v4323, %v4319
        %v4328 = vadd.f32 %v4324, %v4320
        %4329 = vst [vmem:[#allocation2] sm:$0xff] %v4325
        %4330 = vst [vmem:[#allocation2 + $0x8] sm:$0xff] %v4326
        %4331 = vst [vmem:[#allocation2 + $0x10] sm:$0xff] %v4327
        %4332 = vst [vmem:[#allocation2 + $0x18] sm:$0xff] %v4328
        %s4333 = scalar_lea.vmem %s850, 440 [#allocation3]
        %v4334 = vld [vmem:[%s4333] sm:$0xff]
        %v4335 = vld [vmem:[%s4333 + $0x8] sm:$0xff]
        %v4336 = vld [vmem:[%s4333 + $0x10] sm:$0xff]
        %v4337 = vld [vmem:[%s4333 + $0x18] sm:$0xff]
        %v4338 = vld [vmem:[%s4333 + $0x20] sm:$0x1]
        %v4340 = vsel %vm962, %v4338, 0
        %4342 = vmatprep.subr.mxu0 0.0
        %4343 = vmatpush1.msra.mxu0 0.0
        %4344 = vmatprep.subr.mxu0 0.0
        %4345 = vmatpush1.msra.mxu0 0.0
        %4346 = vmatprep.subr.mxu0 0.0
        %4347 = vmatpush1.msra.mxu0 0.0
        %4348 = vmatprep.subr.mxu0 0.0
        %4349 = vmatpush1.msra.mxu0 0.0
        %4350 = vmatprep.subr.mxu0 0.0
        %4351 = vmatpush1.msra.mxu0 0.0
        %4352 = vmatprep.subr.mxu0 0.0
        %4353 = vmatpush1.msra.mxu0 0.0
        %4354 = vmatprep.subr.mxu0 0.0
        %4355 = vmatpush1.msra.mxu0 0.0
        %4356 = vmatprep.subr.mxu0 0.0
        %4357 = vmatpush1.msra.mxu0 0.0
        %4358 = vmatprep.subr.mxu0 0.0
        %4359 = vmatpush1.msra.mxu0 0.0
        %4360 = vmatprep.subr.mxu0 0.0
        %4361 = vmatpush1.msra.mxu0 0.0
        %4362 = vmatprep.subr.mxu0 0.0
        %4363 = vmatpush1.msra.mxu0 0.0
        %4364 = vmatprep.subr.mxu0 0.0
        %4365 = vmatpush1.msra.mxu0 %v4340
        %4366 = vmatprep.subr.mxu0 0.0
        %4367 = vmatpush1.msra.mxu0 %v4337
        %4368 = vmatprep.subr.mxu0 0.0
        %4369 = vmatpush1.msra.mxu0 %v4336
        %4370 = vmatprep.subr.mxu0 0.0
        %4371 = vmatpush1.msra.mxu0 %v4335
        %4372 = vmatprep.subr.mxu0 0.0
        %4373 = vmatpush1.msra.mxu0 %v4334
        %4374 = vmatprep.subr.mxu0 0.0
        %4375 = vmatpush2.msra.mxu0 0.0
        %4376 = vmatprep.subr.mxu0 0.0
        %4377 = vmatpush2.msra.mxu0 0.0
        %4378 = vmatprep.subr.mxu0 0.0
        %4379 = vmatpush2.msra.mxu0 0.0
        %4380 = vmatprep.subr.mxu0 0.0
        %4381 = vmatpush2.msra.mxu0 0.0
        %4382 = vmatprep.subr.mxu0 0.0
        %4383 = vmatpush2.msra.mxu0 0.0
        %4384 = vmatprep.subr.mxu0 0.0
        %4385 = vmatpush2.msra.mxu0 0.0
        %4386 = vmatprep.subr.mxu0 0.0
        %4387 = vmatpush2.msra.mxu0 0.0
        %4388 = vmatprep.subr.mxu0 0.0
        %4389 = vmatpush2.msra.mxu0 0.0
        %4390 = vmatprep.subr.mxu0 0.0
        %4391 = vmatpush2.msra.mxu0 0.0
        %4392 = vmatprep.subr.mxu0 0.0
        %4393 = vmatpush2.msra.mxu0 0.0
        %4394 = vmatprep.subr.mxu0 0.0
        %4395 = vmatpush2.msra.mxu0 0.0
        %4396 = vmatprep.subr.mxu0 0.0
        %4397 = vmatpush2.msra.mxu0 0.0
        %4398 = vmatprep.subr.mxu0 0.0
        %4399 = vmatpush2.msra.mxu0 0.0
        %4400 = vmatprep.subr.mxu0 0.0
        %4401 = vmatpush2.msra.mxu0 0.0
        %4402 = vmatprep.subr.mxu0 0.0
        %4403 = vmatpush2.msra.mxu0 0.0
        %4404 = vmatprep.subr.mxu0 0.0
        %4405 = vmatpush2.msra.mxu0 0.0
        %4406 = vmatprep.mubr.f32.mxu0 0.0
        %4407 = vmatmul.mubr.f32.gmra.mxu0 %v915
        %v4408 = vpop.f32.mrf.mxu0
        %v4409 = vadd.f32 0.0, %v4408
        %v4410 = vpop.f32.mrf.mxu0
        %4411 = vmatprep.mubr.f32.mxu0 0.0
        %4412 = vmatmul.mubr.f32.gmra.mxu0 %v918
        %v4413 = vpop.f32.mrf.mxu0
        %v4414 = vadd.f32 0.0, %v4413
        %v4415 = vpop.f32.mrf.mxu0
        %4416 = vmatprep.mubr.f32.mxu0 0.0
        %4417 = vmatmul.mubr.f32.gmra.mxu0 %v921
        %v4418 = vpop.f32.mrf.mxu0
        %v4419 = vadd.f32 0.0, %v4418
        %v4420 = vpop.f32.mrf.mxu0
        %4421 = vmatprep.mubr.f32.mxu0 0.0
        %4422 = vmatmul.mubr.f32.gmra.mxu0 %v924
        %v4423 = vpop.f32.mrf.mxu0
        %v4424 = vadd.f32 0.0, %v4423
        %v4425 = vpop.f32.mrf.mxu0
        %4426 = vmatprep.mubr.f32.mxu0 0.0
        %4427 = vmatmul.mubr.f32.gmra.mxu0 %v927
        %v4428 = vpop.f32.mrf.mxu0
        %v4429 = vadd.f32 0.0, %v4428
        %v4430 = vpop.f32.mrf.mxu0
        %4431 = vmatprep.mubr.f32.mxu0 0.0
        %4432 = vmatmul.mubr.f32.gmra.mxu0 %v930
        %v4433 = vpop.f32.mrf.mxu0
        %v4434 = vadd.f32 0.0, %v4433
        %v4435 = vpop.f32.mrf.mxu0
        %4436 = vmatprep.mubr.f32.mxu0 0.0
        %4437 = vmatmul.mubr.f32.gmra.mxu0 %v933
        %v4438 = vpop.f32.mrf.mxu0
        %v4439 = vadd.f32 0.0, %v4438
        %v4440 = vpop.f32.mrf.mxu0
        %4441 = vmatprep.mubr.f32.mxu0 0.0
        %4442 = vmatmul.mubr.f32.gmra.mxu0 %v936
        %v4443 = vpop.f32.mrf.mxu0
        %v4444 = vadd.f32 0.0, %v4443
        %v4445 = vpop.f32.mrf.mxu0
        %4446 = vmatprep.mubr.f32.mxu0 0.0
        %4447 = vmatmul.mubr.f32.gmra.mxu0 %v939
        %v4448 = vpop.f32.mrf.mxu0
        %v4449 = vadd.f32 0.0, %v4448
        %v4450 = vpop.f32.mrf.mxu0
        %4451 = vmatprep.mubr.f32.mxu0 0.0
        %4452 = vmatmul.mubr.f32.gmra.mxu0 %v942
        %v4453 = vpop.f32.mrf.mxu0
        %v4454 = vadd.f32 0.0, %v4453
        %v4455 = vpop.f32.mrf.mxu0
        %4456 = vmatprep.mubr.f32.mxu0 0.0
        %4457 = vmatmul.mubr.f32.gmra.mxu0 %v945
        %v4458 = vpop.f32.mrf.mxu0
        %v4459 = vadd.f32 0.0, %v4458
        %v4460 = vpop.f32.mrf.mxu0
        %4461 = vmatprep.mubr.f32.mxu0 0.0
        %4462 = vmatmul.mubr.f32.gmra.mxu0 %v948
        %v4463 = vpop.f32.mrf.mxu0
        %v4464 = vadd.f32 0.0, %v4463
        %v4465 = vpop.f32.mrf.mxu0
        %4466 = vmatprep.mubr.f32.mxu0 0.0
        %4467 = vmatmul.mubr.f32.gmra.mxu0 %v951
        %v4468 = vpop.f32.mrf.mxu0
        %v4469 = vadd.f32 0.0, %v4468
        %v4470 = vpop.f32.mrf.mxu0
        %4471 = vmatprep.mubr.f32.mxu0 0.0
        %4472 = vmatmul.mubr.f32.gmra.mxu0 %v954
        %v4473 = vpop.f32.mrf.mxu0
        %v4474 = vadd.f32 0.0, %v4473
        %v4475 = vpop.f32.mrf.mxu0
        %4476 = vmatprep.mubr.f32.mxu0 0.0
        %4477 = vmatmul.mubr.f32.gmra.mxu0 %v957
        %v4478 = vpop.f32.mrf.mxu0
        %v4479 = vadd.f32 0.0, %v4478
        %v4480 = vpop.f32.mrf.mxu0
        %4481 = vmatprep.mubr.f32.mxu0 0.0
        %4482 = vmatmul.mubr.f32.gmra.mxu0 %v960
        %v4483 = vpop.f32.mrf.mxu0
        %v4484 = vadd.f32 0.0, %v4483
        %v4485 = vpop.f32.mrf.mxu0
        %4486 = vdwg.mxu0
        %v4487 = vmax.f32 %v4409, 0.0
        %v4488 = vmax.f32 %v4414, 0.0
        %v4489 = vmax.f32 %v4419, 0.0
        %v4490 = vmax.f32 %v4424, 0.0
        %v4491 = vmax.f32 %v4429, 0.0
        %v4492 = vmax.f32 %v4434, 0.0
        %v4493 = vmax.f32 %v4439, 0.0
        %v4494 = vmax.f32 %v4444, 0.0
        %v4495 = vmax.f32 %v4449, 0.0
        %v4496 = vmax.f32 %v4454, 0.0
        %v4497 = vmax.f32 %v4459, 0.0
        %v4498 = vmax.f32 %v4464, 0.0
        %v4499 = vmax.f32 %v4469, 0.0
        %v4500 = vmax.f32 %v4474, 0.0
        %v4501 = vmax.f32 %v4479, 0.0
        %v4502 = vmax.f32 %v4484, 0.0
        %s4503 = scalar_lea.vmem %s2, 1408
        %v4504 = vld [vmem:[%s4503] sm:$0xff]
        %v4505 = vld [vmem:[%s4503 + $0x8] sm:$0xff]
        %v4506 = vld [vmem:[%s4503 + $0x10] sm:$0xff]
        %v4507 = vld [vmem:[%s4503 + $0x18] sm:$0xff]
        %v4508 = vld [vmem:[%s4503 + $0x20] sm:$0xff]
        %v4509 = vld [vmem:[%s4503 + $0x28] sm:$0xff]
        %v4510 = vld [vmem:[%s4503 + $0x30] sm:$0xff]
        %v4511 = vld [vmem:[%s4503 + $0x38] sm:$0xff]
        %v4512 = vld [vmem:[%s4503 + $0x40] sm:$0xff]
        %v4513 = vld [vmem:[%s4503 + $0x48] sm:$0xff]
        %v4514 = vld [vmem:[%s4503 + $0x50] sm:$0xff]
        %v4515 = vld [vmem:[%s4503 + $0x58] sm:$0xff]
        %v4516 = vld [vmem:[%s4503 + $0x60] sm:$0xff]
        %v4517 = vld [vmem:[%s4503 + $0x68] sm:$0xff]
        %v4518 = vld [vmem:[%s4503 + $0x70] sm:$0xff]
        %v4519 = vld [vmem:[%s4503 + $0x78] sm:$0xff]
        %4521 = vset.pattern.permute.xlu0 0
        %4522 = vperm.xlu0 %4521, %v4504
        %v4523 = vpop.permute.xlu0 %4522
        %4526 = vset.pattern.permute.xlu0 0
        %4527 = vperm.xlu0 %4526, %v4505
        %v4528 = vpop.permute.xlu0 %4527
        %4531 = vset.pattern.permute.xlu0 0
        %4532 = vperm.xlu0 %4531, %v4506
        %v4533 = vpop.permute.xlu0 %4532
        %4536 = vset.pattern.permute.xlu0 0
        %4537 = vperm.xlu0 %4536, %v4507
        %v4538 = vpop.permute.xlu0 %4537
        %4541 = vset.pattern.permute.xlu0 0
        %4542 = vperm.xlu0 %4541, %v4508
        %v4543 = vpop.permute.xlu0 %4542
        %4546 = vset.pattern.permute.xlu0 0
        %4547 = vperm.xlu0 %4546, %v4509
        %v4548 = vpop.permute.xlu0 %4547
        %4551 = vset.pattern.permute.xlu0 0
        %4552 = vperm.xlu0 %4551, %v4510
        %v4553 = vpop.permute.xlu0 %4552
        %4556 = vset.pattern.permute.xlu0 0
        %4557 = vperm.xlu0 %4556, %v4511
        %v4558 = vpop.permute.xlu0 %4557
        %4561 = vset.pattern.permute.xlu0 0
        %4562 = vperm.xlu0 %4561, %v4512
        %v4563 = vpop.permute.xlu0 %4562
        %4566 = vset.pattern.permute.xlu0 0
        %4567 = vperm.xlu0 %4566, %v4513
        %v4568 = vpop.permute.xlu0 %4567
        %4571 = vset.pattern.permute.xlu0 0
        %4572 = vperm.xlu0 %4571, %v4514
        %v4573 = vpop.permute.xlu0 %4572
        %4576 = vset.pattern.permute.xlu0 0
        %4577 = vperm.xlu0 %4576, %v4515
        %v4578 = vpop.permute.xlu0 %4577
        %4581 = vset.pattern.permute.xlu0 0
        %4582 = vperm.xlu0 %4581, %v4516
        %v4583 = vpop.permute.xlu0 %4582
        %4586 = vset.pattern.permute.xlu0 0
        %4587 = vperm.xlu0 %4586, %v4517
        %v4588 = vpop.permute.xlu0 %4587
        %4591 = vset.pattern.permute.xlu0 0
        %4592 = vperm.xlu0 %4591, %v4518
        %v4593 = vpop.permute.xlu0 %4592
        %4596 = vset.pattern.permute.xlu0 0
        %4597 = vperm.xlu0 %4596, %v4519
        %v4598 = vpop.permute.xlu0 %4597
        %v4600 = vmul.f32 %v4487, %v4523
        %v4601 = vmul.f32 %v4488, %v4528
        %v4602 = vmul.f32 %v4489, %v4533
        %v4603 = vmul.f32 %v4490, %v4538
        %v4604 = vmul.f32 %v4491, %v4543
        %v4605 = vmul.f32 %v4492, %v4548
        %v4606 = vmul.f32 %v4493, %v4553
        %v4607 = vmul.f32 %v4494, %v4558
        %v4608 = vmul.f32 %v4495, %v4563
        %v4609 = vmul.f32 %v4496, %v4568
        %v4610 = vmul.f32 %v4497, %v4573
        %v4611 = vmul.f32 %v4498, %v4578
        %v4612 = vmul.f32 %v4499, %v4583
        %v4613 = vmul.f32 %v4500, %v4588
        %v4614 = vmul.f32 %v4501, %v4593
        %v4615 = vmul.f32 %v4502, %v4598
        %v4616 = vadd.f32 %v4600, %v4604
        %v4617 = vadd.f32 %v4601, %v4605
        %v4618 = vadd.f32 %v4602, %v4606
        %v4619 = vadd.f32 %v4603, %v4607
        %v4620 = vadd.f32 %v4616, %v4608
        %v4621 = vadd.f32 %v4617, %v4609
        %v4622 = vadd.f32 %v4618, %v4610
        %v4623 = vadd.f32 %v4619, %v4611
        %v4624 = vadd.f32 %v4620, %v4612
        %v4625 = vadd.f32 %v4621, %v4613
        %v4626 = vadd.f32 %v4622, %v4614
        %v4627 = vadd.f32 %v4623, %v4615
        %v4628 = vld [vmem:[#allocation2] sm:$0xff]
        %v4629 = vld [vmem:[#allocation2 + $0x8] sm:$0xff]
        %v4630 = vld [vmem:[#allocation2 + $0x10] sm:$0xff]
        %v4631 = vld [vmem:[#allocation2 + $0x18] sm:$0xff]
        %v4632 = vadd.f32 %v4628, %v4624
        %v4633 = vadd.f32 %v4629, %v4625
        %v4634 = vadd.f32 %v4630, %v4626
        %v4635 = vadd.f32 %v4631, %v4627
        %4636 = vst [vmem:[#allocation2] sm:$0xff] %v4632
        %4637 = vst [vmem:[#allocation2 + $0x8] sm:$0xff] %v4633
        %4638 = vst [vmem:[#allocation2 + $0x10] sm:$0xff] %v4634
        %4639 = vst [vmem:[#allocation2 + $0x18] sm:$0xff] %v4635
        %s4640 = scalar_lea.vmem %s850, 480 [#allocation3]
        %v4641 = vld [vmem:[%s4640] sm:$0xff]
        %v4642 = vld [vmem:[%s4640 + $0x8] sm:$0xff]
        %v4643 = vld [vmem:[%s4640 + $0x10] sm:$0xff]
        %v4644 = vld [vmem:[%s4640 + $0x18] sm:$0xff]
        %v4645 = vld [vmem:[%s4640 + $0x20] sm:$0x1]
        %v4647 = vsel %vm962, %v4645, 0
        %4649 = vmatprep.subr.mxu0 0.0
        %4650 = vmatpush1.msra.mxu0 0.0
        %4651 = vmatprep.subr.mxu0 0.0
        %4652 = vmatpush1.msra.mxu0 0.0
        %4653 = vmatprep.subr.mxu0 0.0
        %4654 = vmatpush1.msra.mxu0 0.0
        %4655 = vmatprep.subr.mxu0 0.0
        %4656 = vmatpush1.msra.mxu0 0.0
        %4657 = vmatprep.subr.mxu0 0.0
        %4658 = vmatpush1.msra.mxu0 0.0
        %4659 = vmatprep.subr.mxu0 0.0
        %4660 = vmatpush1.msra.mxu0 0.0
        %4661 = vmatprep.subr.mxu0 0.0
        %4662 = vmatpush1.msra.mxu0 0.0
        %4663 = vmatprep.subr.mxu0 0.0
        %4664 = vmatpush1.msra.mxu0 0.0
        %4665 = vmatprep.subr.mxu0 0.0
        %4666 = vmatpush1.msra.mxu0 0.0
        %4667 = vmatprep.subr.mxu0 0.0
        %4668 = vmatpush1.msra.mxu0 0.0
        %4669 = vmatprep.subr.mxu0 0.0
        %4670 = vmatpush1.msra.mxu0 0.0
        %4671 = vmatprep.subr.mxu0 0.0
        %4672 = vmatpush1.msra.mxu0 %v4647
        %4673 = vmatprep.subr.mxu0 0.0
        %4674 = vmatpush1.msra.mxu0 %v4644
        %4675 = vmatprep.subr.mxu0 0.0
        %4676 = vmatpush1.msra.mxu0 %v4643
        %4677 = vmatprep.subr.mxu0 0.0
        %4678 = vmatpush1.msra.mxu0 %v4642
        %4679 = vmatprep.subr.mxu0 0.0
        %4680 = vmatpush1.msra.mxu0 %v4641
        %4681 = vmatprep.subr.mxu0 0.0
        %4682 = vmatpush2.msra.mxu0 0.0
        %4683 = vmatprep.subr.mxu0 0.0
        %4684 = vmatpush2.msra.mxu0 0.0
        %4685 = vmatprep.subr.mxu0 0.0
        %4686 = vmatpush2.msra.mxu0 0.0
        %4687 = vmatprep.subr.mxu0 0.0
        %4688 = vmatpush2.msra.mxu0 0.0
        %4689 = vmatprep.subr.mxu0 0.0
        %4690 = vmatpush2.msra.mxu0 0.0
        %4691 = vmatprep.subr.mxu0 0.0
        %4692 = vmatpush2.msra.mxu0 0.0
        %4693 = vmatprep.subr.mxu0 0.0
        %4694 = vmatpush2.msra.mxu0 0.0
        %4695 = vmatprep.subr.mxu0 0.0
        %4696 = vmatpush2.msra.mxu0 0.0
        %4697 = vmatprep.subr.mxu0 0.0
        %4698 = vmatpush2.msra.mxu0 0.0
        %4699 = vmatprep.subr.mxu0 0.0
        %4700 = vmatpush2.msra.mxu0 0.0
        %4701 = vmatprep.subr.mxu0 0.0
        %4702 = vmatpush2.msra.mxu0 0.0
        %4703 = vmatprep.subr.mxu0 0.0
        %4704 = vmatpush2.msra.mxu0 0.0
        %4705 = vmatprep.subr.mxu0 0.0
        %4706 = vmatpush2.msra.mxu0 0.0
        %4707 = vmatprep.subr.mxu0 0.0
        %4708 = vmatpush2.msra.mxu0 0.0
        %4709 = vmatprep.subr.mxu0 0.0
        %4710 = vmatpush2.msra.mxu0 0.0
        %4711 = vmatprep.subr.mxu0 0.0
        %4712 = vmatpush2.msra.mxu0 0.0
        %4713 = vmatprep.mubr.f32.mxu0 0.0
        %4714 = vmatmul.mubr.f32.gmra.mxu0 %v915
        %v4715 = vpop.f32.mrf.mxu0
        %v4716 = vadd.f32 0.0, %v4715
        %v4717 = vpop.f32.mrf.mxu0
        %4718 = vmatprep.mubr.f32.mxu0 0.0
        %4719 = vmatmul.mubr.f32.gmra.mxu0 %v918
        %v4720 = vpop.f32.mrf.mxu0
        %v4721 = vadd.f32 0.0, %v4720
        %v4722 = vpop.f32.mrf.mxu0
        %4723 = vmatprep.mubr.f32.mxu0 0.0
        %4724 = vmatmul.mubr.f32.gmra.mxu0 %v921
        %v4725 = vpop.f32.mrf.mxu0
        %v4726 = vadd.f32 0.0, %v4725
        %v4727 = vpop.f32.mrf.mxu0
        %4728 = vmatprep.mubr.f32.mxu0 0.0
        %4729 = vmatmul.mubr.f32.gmra.mxu0 %v924
        %v4730 = vpop.f32.mrf.mxu0
        %v4731 = vadd.f32 0.0, %v4730
        %v4732 = vpop.f32.mrf.mxu0
        %4733 = vmatprep.mubr.f32.mxu0 0.0
        %4734 = vmatmul.mubr.f32.gmra.mxu0 %v927
        %v4735 = vpop.f32.mrf.mxu0
        %v4736 = vadd.f32 0.0, %v4735
        %v4737 = vpop.f32.mrf.mxu0
        %4738 = vmatprep.mubr.f32.mxu0 0.0
        %4739 = vmatmul.mubr.f32.gmra.mxu0 %v930
        %v4740 = vpop.f32.mrf.mxu0
        %v4741 = vadd.f32 0.0, %v4740
        %v4742 = vpop.f32.mrf.mxu0
        %4743 = vmatprep.mubr.f32.mxu0 0.0
        %4744 = vmatmul.mubr.f32.gmra.mxu0 %v933
        %v4745 = vpop.f32.mrf.mxu0
        %v4746 = vadd.f32 0.0, %v4745
        %v4747 = vpop.f32.mrf.mxu0
        %4748 = vmatprep.mubr.f32.mxu0 0.0
        %4749 = vmatmul.mubr.f32.gmra.mxu0 %v936
        %v4750 = vpop.f32.mrf.mxu0
        %v4751 = vadd.f32 0.0, %v4750
        %v4752 = vpop.f32.mrf.mxu0
        %4753 = vmatprep.mubr.f32.mxu0 0.0
        %4754 = vmatmul.mubr.f32.gmra.mxu0 %v939
        %v4755 = vpop.f32.mrf.mxu0
        %v4756 = vadd.f32 0.0, %v4755
        %v4757 = vpop.f32.mrf.mxu0
        %4758 = vmatprep.mubr.f32.mxu0 0.0
        %4759 = vmatmul.mubr.f32.gmra.mxu0 %v942
        %v4760 = vpop.f32.mrf.mxu0
        %v4761 = vadd.f32 0.0, %v4760
        %v4762 = vpop.f32.mrf.mxu0
        %4763 = vmatprep.mubr.f32.mxu0 0.0
        %4764 = vmatmul.mubr.f32.gmra.mxu0 %v945
        %v4765 = vpop.f32.mrf.mxu0
        %v4766 = vadd.f32 0.0, %v4765
        %v4767 = vpop.f32.mrf.mxu0
        %4768 = vmatprep.mubr.f32.mxu0 0.0
        %4769 = vmatmul.mubr.f32.gmra.mxu0 %v948
        %v4770 = vpop.f32.mrf.mxu0
        %v4771 = vadd.f32 0.0, %v4770
        %v4772 = vpop.f32.mrf.mxu0
        %4773 = vmatprep.mubr.f32.mxu0 0.0
        %4774 = vmatmul.mubr.f32.gmra.mxu0 %v951
        %v4775 = vpop.f32.mrf.mxu0
        %v4776 = vadd.f32 0.0, %v4775
        %v4777 = vpop.f32.mrf.mxu0
        %4778 = vmatprep.mubr.f32.mxu0 0.0
        %4779 = vmatmul.mubr.f32.gmra.mxu0 %v954
        %v4780 = vpop.f32.mrf.mxu0
        %v4781 = vadd.f32 0.0, %v4780
        %v4782 = vpop.f32.mrf.mxu0
        %4783 = vmatprep.mubr.f32.mxu0 0.0
        %4784 = vmatmul.mubr.f32.gmra.mxu0 %v957
        %v4785 = vpop.f32.mrf.mxu0
        %v4786 = vadd.f32 0.0, %v4785
        %v4787 = vpop.f32.mrf.mxu0
        %4788 = vmatprep.mubr.f32.mxu0 0.0
        %4789 = vmatmul.mubr.f32.gmra.mxu0 %v960
        %v4790 = vpop.f32.mrf.mxu0
        %v4791 = vadd.f32 0.0, %v4790
        %v4792 = vpop.f32.mrf.mxu0
        %4793 = vdwg.mxu0
        %v4794 = vmax.f32 %v4716, 0.0
        %v4795 = vmax.f32 %v4721, 0.0
        %v4796 = vmax.f32 %v4726, 0.0
        %v4797 = vmax.f32 %v4731, 0.0
        %v4798 = vmax.f32 %v4736, 0.0
        %v4799 = vmax.f32 %v4741, 0.0
        %v4800 = vmax.f32 %v4746, 0.0
        %v4801 = vmax.f32 %v4751, 0.0
        %v4802 = vmax.f32 %v4756, 0.0
        %v4803 = vmax.f32 %v4761, 0.0
        %v4804 = vmax.f32 %v4766, 0.0
        %v4805 = vmax.f32 %v4771, 0.0
        %v4806 = vmax.f32 %v4776, 0.0
        %v4807 = vmax.f32 %v4781, 0.0
        %v4808 = vmax.f32 %v4786, 0.0
        %v4809 = vmax.f32 %v4791, 0.0
        %s4810 = scalar_lea.vmem %s2, 1536
        %v4811 = vld [vmem:[%s4810] sm:$0xff]
        %v4812 = vld [vmem:[%s4810 + $0x8] sm:$0xff]
        %v4813 = vld [vmem:[%s4810 + $0x10] sm:$0xff]
        %v4814 = vld [vmem:[%s4810 + $0x18] sm:$0xff]
        %v4815 = vld [vmem:[%s4810 + $0x20] sm:$0xff]
        %v4816 = vld [vmem:[%s4810 + $0x28] sm:$0xff]
        %v4817 = vld [vmem:[%s4810 + $0x30] sm:$0xff]
        %v4818 = vld [vmem:[%s4810 + $0x38] sm:$0xff]
        %v4819 = vld [vmem:[%s4810 + $0x40] sm:$0xff]
        %v4820 = vld [vmem:[%s4810 + $0x48] sm:$0xff]
        %v4821 = vld [vmem:[%s4810 + $0x50] sm:$0xff]
        %v4822 = vld [vmem:[%s4810 + $0x58] sm:$0xff]
        %v4823 = vld [vmem:[%s4810 + $0x60] sm:$0xff]
        %v4824 = vld [vmem:[%s4810 + $0x68] sm:$0xff]
        %v4825 = vld [vmem:[%s4810 + $0x70] sm:$0xff]
        %v4826 = vld [vmem:[%s4810 + $0x78] sm:$0xff]
        %4828 = vset.pattern.permute.xlu0 0
        %4829 = vperm.xlu0 %4828, %v4811
        %v4830 = vpop.permute.xlu0 %4829
        %4833 = vset.pattern.permute.xlu0 0
        %4834 = vperm.xlu0 %4833, %v4812
        %v4835 = vpop.permute.xlu0 %4834
        %4838 = vset.pattern.permute.xlu0 0
        %4839 = vperm.xlu0 %4838, %v4813
        %v4840 = vpop.permute.xlu0 %4839
        %4843 = vset.pattern.permute.xlu0 0
        %4844 = vperm.xlu0 %4843, %v4814
        %v4845 = vpop.permute.xlu0 %4844
        %4848 = vset.pattern.permute.xlu0 0
        %4849 = vperm.xlu0 %4848, %v4815
        %v4850 = vpop.permute.xlu0 %4849
        %4853 = vset.pattern.permute.xlu0 0
        %4854 = vperm.xlu0 %4853, %v4816
        %v4855 = vpop.permute.xlu0 %4854
        %4858 = vset.pattern.permute.xlu0 0
        %4859 = vperm.xlu0 %4858, %v4817
        %v4860 = vpop.permute.xlu0 %4859
        %4863 = vset.pattern.permute.xlu0 0
        %4864 = vperm.xlu0 %4863, %v4818
        %v4865 = vpop.permute.xlu0 %4864
        %4868 = vset.pattern.permute.xlu0 0
        %4869 = vperm.xlu0 %4868, %v4819
        %v4870 = vpop.permute.xlu0 %4869
        %4873 = vset.pattern.permute.xlu0 0
        %4874 = vperm.xlu0 %4873, %v4820
        %v4875 = vpop.permute.xlu0 %4874
        %4878 = vset.pattern.permute.xlu0 0
        %4879 = vperm.xlu0 %4878, %v4821
        %v4880 = vpop.permute.xlu0 %4879
        %4883 = vset.pattern.permute.xlu0 0
        %4884 = vperm.xlu0 %4883, %v4822
        %v4885 = vpop.permute.xlu0 %4884
        %4888 = vset.pattern.permute.xlu0 0
        %4889 = vperm.xlu0 %4888, %v4823
        %v4890 = vpop.permute.xlu0 %4889
        %4893 = vset.pattern.permute.xlu0 0
        %4894 = vperm.xlu0 %4893, %v4824
        %v4895 = vpop.permute.xlu0 %4894
        %4898 = vset.pattern.permute.xlu0 0
        %4899 = vperm.xlu0 %4898, %v4825
        %v4900 = vpop.permute.xlu0 %4899
        %4903 = vset.pattern.permute.xlu0 0
        %4904 = vperm.xlu0 %4903, %v4826
        %v4905 = vpop.permute.xlu0 %4904
        %v4907 = vmul.f32 %v4794, %v4830
        %v4908 = vmul.f32 %v4795, %v4835
        %v4909 = vmul.f32 %v4796, %v4840
        %v4910 = vmul.f32 %v4797, %v4845
        %v4911 = vmul.f32 %v4798, %v4850
        %v4912 = vmul.f32 %v4799, %v4855
        %v4913 = vmul.f32 %v4800, %v4860
        %v4914 = vmul.f32 %v4801, %v4865
        %v4915 = vmul.f32 %v4802, %v4870
        %v4916 = vmul.f32 %v4803, %v4875
        %v4917 = vmul.f32 %v4804, %v4880
        %v4918 = vmul.f32 %v4805, %v4885
        %v4919 = vmul.f32 %v4806, %v4890
        %v4920 = vmul.f32 %v4807, %v4895
        %v4921 = vmul.f32 %v4808, %v4900
        %v4922 = vmul.f32 %v4809, %v4905
        %v4923 = vadd.f32 %v4907, %v4911
        %v4924 = vadd.f32 %v4908, %v4912
        %v4925 = vadd.f32 %v4909, %v4913
        %v4926 = vadd.f32 %v4910, %v4914
        %v4927 = vadd.f32 %v4923, %v4915
        %v4928 = vadd.f32 %v4924, %v4916
        %v4929 = vadd.f32 %v4925, %v4917
        %v4930 = vadd.f32 %v4926, %v4918
        %v4931 = vadd.f32 %v4927, %v4919
        %v4932 = vadd.f32 %v4928, %v4920
        %v4933 = vadd.f32 %v4929, %v4921
        %v4934 = vadd.f32 %v4930, %v4922
        %v4935 = vld [vmem:[#allocation2] sm:$0xff]
        %v4936 = vld [vmem:[#allocation2 + $0x8] sm:$0xff]
        %v4937 = vld [vmem:[#allocation2 + $0x10] sm:$0xff]
        %v4938 = vld [vmem:[#allocation2 + $0x18] sm:$0xff]
        %v4939 = vadd.f32 %v4935, %v4931
        %v4940 = vadd.f32 %v4936, %v4932
        %v4941 = vadd.f32 %v4937, %v4933
        %v4942 = vadd.f32 %v4938, %v4934
        %4943 = vst [vmem:[#allocation2] sm:$0xff] %v4939
        %4944 = vst [vmem:[#allocation2 + $0x8] sm:$0xff] %v4940
        %4945 = vst [vmem:[#allocation2 + $0x10] sm:$0xff] %v4941
        %4946 = vst [vmem:[#allocation2 + $0x18] sm:$0xff] %v4942
        %s4947 = scalar_lea.vmem %s850, 520 [#allocation3]
        %v4948 = vld [vmem:[%s4947] sm:$0xff]
        %v4949 = vld [vmem:[%s4947 + $0x8] sm:$0xff]
        %v4950 = vld [vmem:[%s4947 + $0x10] sm:$0xff]
        %v4951 = vld [vmem:[%s4947 + $0x18] sm:$0xff]
        %v4952 = vld [vmem:[%s4947 + $0x20] sm:$0x1]
        %v4954 = vsel %vm962, %v4952, 0
        %4956 = vmatprep.subr.mxu0 0.0
        %4957 = vmatpush1.msra.mxu0 0.0
        %4958 = vmatprep.subr.mxu0 0.0
        %4959 = vmatpush1.msra.mxu0 0.0
        %4960 = vmatprep.subr.mxu0 0.0
        %4961 = vmatpush1.msra.mxu0 0.0
        %4962 = vmatprep.subr.mxu0 0.0
        %4963 = vmatpush1.msra.mxu0 0.0
        %4964 = vmatprep.subr.mxu0 0.0
        %4965 = vmatpush1.msra.mxu0 0.0
        %4966 = vmatprep.subr.mxu0 0.0
        %4967 = vmatpush1.msra.mxu0 0.0
        %4968 = vmatprep.subr.mxu0 0.0
        %4969 = vmatpush1.msra.mxu0 0.0
        %4970 = vmatprep.subr.mxu0 0.0
        %4971 = vmatpush1.msra.mxu0 0.0
        %4972 = vmatprep.subr.mxu0 0.0
        %4973 = vmatpush1.msra.mxu0 0.0
        %4974 = vmatprep.subr.mxu0 0.0
        %4975 = vmatpush1.msra.mxu0 0.0
        %4976 = vmatprep.subr.mxu0 0.0
        %4977 = vmatpush1.msra.mxu0 0.0
        %4978 = vmatprep.subr.mxu0 0.0
        %4979 = vmatpush1.msra.mxu0 %v4954
        %4980 = vmatprep.subr.mxu0 0.0
        %4981 = vmatpush1.msra.mxu0 %v4951
        %4982 = vmatprep.subr.mxu0 0.0
        %4983 = vmatpush1.msra.mxu0 %v4950
        %4984 = vmatprep.subr.mxu0 0.0
        %4985 = vmatpush1.msra.mxu0 %v4949
        %4986 = vmatprep.subr.mxu0 0.0
        %4987 = vmatpush1.msra.mxu0 %v4948
        %4988 = vmatprep.subr.mxu0 0.0
        %4989 = vmatpush2.msra.mxu0 0.0
        %4990 = vmatprep.subr.mxu0 0.0
        %4991 = vmatpush2.msra.mxu0 0.0
        %4992 = vmatprep.subr.mxu0 0.0
        %4993 = vmatpush2.msra.mxu0 0.0
        %4994 = vmatprep.subr.mxu0 0.0
        %4995 = vmatpush2.msra.mxu0 0.0
        %4996 = vmatprep.subr.mxu0 0.0
        %4997 = vmatpush2.msra.mxu0 0.0
        %4998 = vmatprep.subr.mxu0 0.0
        %4999 = vmatpush2.msra.mxu0 0.0
        %5000 = vmatprep.subr.mxu0 0.0
        %5001 = vmatpush2.msra.mxu0 0.0
        %5002 = vmatprep.subr.mxu0 0.0
        %5003 = vmatpush2.msra.mxu0 0.0
        %5004 = vmatprep.subr.mxu0 0.0
        %5005 = vmatpush2.msra.mxu0 0.0
        %5006 = vmatprep.subr.mxu0 0.0
        %5007 = vmatpush2.msra.mxu0 0.0
        %5008 = vmatprep.subr.mxu0 0.0
        %5009 = vmatpush2.msra.mxu0 0.0
        %5010 = vmatprep.subr.mxu0 0.0
        %5011 = vmatpush2.msra.mxu0 0.0
        %5012 = vmatprep.subr.mxu0 0.0
        %5013 = vmatpush2.msra.mxu0 0.0
        %5014 = vmatprep.subr.mxu0 0.0
        %5015 = vmatpush2.msra.mxu0 0.0
        %5016 = vmatprep.subr.mxu0 0.0
        %5017 = vmatpush2.msra.mxu0 0.0
        %5018 = vmatprep.subr.mxu0 0.0
        %5019 = vmatpush2.msra.mxu0 0.0
        %5020 = vmatprep.mubr.f32.mxu0 0.0
        %5021 = vmatmul.mubr.f32.gmra.mxu0 %v915
        %v5022 = vpop.f32.mrf.mxu0
        %v5023 = vadd.f32 0.0, %v5022
        %v5024 = vpop.f32.mrf.mxu0
        %5025 = vmatprep.mubr.f32.mxu0 0.0
        %5026 = vmatmul.mubr.f32.gmra.mxu0 %v918
        %v5027 = vpop.f32.mrf.mxu0
        %v5028 = vadd.f32 0.0, %v5027
        %v5029 = vpop.f32.mrf.mxu0
        %5030 = vmatprep.mubr.f32.mxu0 0.0
        %5031 = vmatmul.mubr.f32.gmra.mxu0 %v921
        %v5032 = vpop.f32.mrf.mxu0
        %v5033 = vadd.f32 0.0, %v5032
        %v5034 = vpop.f32.mrf.mxu0
        %5035 = vmatprep.mubr.f32.mxu0 0.0
        %5036 = vmatmul.mubr.f32.gmra.mxu0 %v924
        %v5037 = vpop.f32.mrf.mxu0
        %v5038 = vadd.f32 0.0, %v5037
        %v5039 = vpop.f32.mrf.mxu0
        %5040 = vmatprep.mubr.f32.mxu0 0.0
        %5041 = vmatmul.mubr.f32.gmra.mxu0 %v927
        %v5042 = vpop.f32.mrf.mxu0
        %v5043 = vadd.f32 0.0, %v5042
        %v5044 = vpop.f32.mrf.mxu0
        %5045 = vmatprep.mubr.f32.mxu0 0.0
        %5046 = vmatmul.mubr.f32.gmra.mxu0 %v930
        %v5047 = vpop.f32.mrf.mxu0
        %v5048 = vadd.f32 0.0, %v5047
        %v5049 = vpop.f32.mrf.mxu0
        %5050 = vmatprep.mubr.f32.mxu0 0.0
        %5051 = vmatmul.mubr.f32.gmra.mxu0 %v933
        %v5052 = vpop.f32.mrf.mxu0
        %v5053 = vadd.f32 0.0, %v5052
        %v5054 = vpop.f32.mrf.mxu0
        %5055 = vmatprep.mubr.f32.mxu0 0.0
        %5056 = vmatmul.mubr.f32.gmra.mxu0 %v936
        %v5057 = vpop.f32.mrf.mxu0
        %v5058 = vadd.f32 0.0, %v5057
        %v5059 = vpop.f32.mrf.mxu0
        %5060 = vmatprep.mubr.f32.mxu0 0.0
        %5061 = vmatmul.mubr.f32.gmra.mxu0 %v939
        %v5062 = vpop.f32.mrf.mxu0
        %v5063 = vadd.f32 0.0, %v5062
        %v5064 = vpop.f32.mrf.mxu0
        %5065 = vmatprep.mubr.f32.mxu0 0.0
        %5066 = vmatmul.mubr.f32.gmra.mxu0 %v942
        %v5067 = vpop.f32.mrf.mxu0
        %v5068 = vadd.f32 0.0, %v5067
        %v5069 = vpop.f32.mrf.mxu0
        %5070 = vmatprep.mubr.f32.mxu0 0.0
        %5071 = vmatmul.mubr.f32.gmra.mxu0 %v945
        %v5072 = vpop.f32.mrf.mxu0
        %v5073 = vadd.f32 0.0, %v5072
        %v5074 = vpop.f32.mrf.mxu0
        %5075 = vmatprep.mubr.f32.mxu0 0.0
        %5076 = vmatmul.mubr.f32.gmra.mxu0 %v948
        %v5077 = vpop.f32.mrf.mxu0
        %v5078 = vadd.f32 0.0, %v5077
        %v5079 = vpop.f32.mrf.mxu0
        %5080 = vmatprep.mubr.f32.mxu0 0.0
        %5081 = vmatmul.mubr.f32.gmra.mxu0 %v951
        %v5082 = vpop.f32.mrf.mxu0
        %v5083 = vadd.f32 0.0, %v5082
        %v5084 = vpop.f32.mrf.mxu0
        %5085 = vmatprep.mubr.f32.mxu0 0.0
        %5086 = vmatmul.mubr.f32.gmra.mxu0 %v954
        %v5087 = vpop.f32.mrf.mxu0
        %v5088 = vadd.f32 0.0, %v5087
        %v5089 = vpop.f32.mrf.mxu0
        %5090 = vmatprep.mubr.f32.mxu0 0.0
        %5091 = vmatmul.mubr.f32.gmra.mxu0 %v957
        %v5092 = vpop.f32.mrf.mxu0
        %v5093 = vadd.f32 0.0, %v5092
        %v5094 = vpop.f32.mrf.mxu0
        %5095 = vmatprep.mubr.f32.mxu0 0.0
        %5096 = vmatmul.mubr.f32.gmra.mxu0 %v960
        %v5097 = vpop.f32.mrf.mxu0
        %v5098 = vadd.f32 0.0, %v5097
        %v5099 = vpop.f32.mrf.mxu0
        %5100 = vdwg.mxu0
        %v5101 = vmax.f32 %v5023, 0.0
        %v5102 = vmax.f32 %v5028, 0.0
        %v5103 = vmax.f32 %v5033, 0.0
        %v5104 = vmax.f32 %v5038, 0.0
        %v5105 = vmax.f32 %v5043, 0.0
        %v5106 = vmax.f32 %v5048, 0.0
        %v5107 = vmax.f32 %v5053, 0.0
        %v5108 = vmax.f32 %v5058, 0.0
        %v5109 = vmax.f32 %v5063, 0.0
        %v5110 = vmax.f32 %v5068, 0.0
        %v5111 = vmax.f32 %v5073, 0.0
        %v5112 = vmax.f32 %v5078, 0.0
        %v5113 = vmax.f32 %v5083, 0.0
        %v5114 = vmax.f32 %v5088, 0.0
        %v5115 = vmax.f32 %v5093, 0.0
        %v5116 = vmax.f32 %v5098, 0.0
        %s5117 = scalar_lea.vmem %s2, 1664
        %v5118 = vld [vmem:[%s5117] sm:$0xff]
        %v5119 = vld [vmem:[%s5117 + $0x8] sm:$0xff]
        %v5120 = vld [vmem:[%s5117 + $0x10] sm:$0xff]
        %v5121 = vld [vmem:[%s5117 + $0x18] sm:$0xff]
        %v5122 = vld [vmem:[%s5117 + $0x20] sm:$0xff]
        %v5123 = vld [vmem:[%s5117 + $0x28] sm:$0xff]
        %v5124 = vld [vmem:[%s5117 + $0x30] sm:$0xff]
        %v5125 = vld [vmem:[%s5117 + $0x38] sm:$0xff]
        %v5126 = vld [vmem:[%s5117 + $0x40] sm:$0xff]
        %v5127 = vld [vmem:[%s5117 + $0x48] sm:$0xff]
        %v5128 = vld [vmem:[%s5117 + $0x50] sm:$0xff]
        %v5129 = vld [vmem:[%s5117 + $0x58] sm:$0xff]
        %v5130 = vld [vmem:[%s5117 + $0x60] sm:$0xff]
        %v5131 = vld [vmem:[%s5117 + $0x68] sm:$0xff]
        %v5132 = vld [vmem:[%s5117 + $0x70] sm:$0xff]
        %v5133 = vld [vmem:[%s5117 + $0x78] sm:$0xff]
        %5135 = vset.pattern.permute.xlu0 0
        %5136 = vperm.xlu0 %5135, %v5118
        %v5137 = vpop.permute.xlu0 %5136
        %5140 = vset.pattern.permute.xlu0 0
        %5141 = vperm.xlu0 %5140, %v5119
        %v5142 = vpop.permute.xlu0 %5141
        %5145 = vset.pattern.permute.xlu0 0
        %5146 = vperm.xlu0 %5145, %v5120
        %v5147 = vpop.permute.xlu0 %5146
        %5150 = vset.pattern.permute.xlu0 0
        %5151 = vperm.xlu0 %5150, %v5121
        %v5152 = vpop.permute.xlu0 %5151
        %5155 = vset.pattern.permute.xlu0 0
        %5156 = vperm.xlu0 %5155, %v5122
        %v5157 = vpop.permute.xlu0 %5156
        %5160 = vset.pattern.permute.xlu0 0
        %5161 = vperm.xlu0 %5160, %v5123
        %v5162 = vpop.permute.xlu0 %5161
        %5165 = vset.pattern.permute.xlu0 0
        %5166 = vperm.xlu0 %5165, %v5124
        %v5167 = vpop.permute.xlu0 %5166
        %5170 = vset.pattern.permute.xlu0 0
        %5171 = vperm.xlu0 %5170, %v5125
        %v5172 = vpop.permute.xlu0 %5171
        %5175 = vset.pattern.permute.xlu0 0
        %5176 = vperm.xlu0 %5175, %v5126
        %v5177 = vpop.permute.xlu0 %5176
        %5180 = vset.pattern.permute.xlu0 0
        %5181 = vperm.xlu0 %5180, %v5127
        %v5182 = vpop.permute.xlu0 %5181
        %5185 = vset.pattern.permute.xlu0 0
        %5186 = vperm.xlu0 %5185, %v5128
        %v5187 = vpop.permute.xlu0 %5186
        %5190 = vset.pattern.permute.xlu0 0
        %5191 = vperm.xlu0 %5190, %v5129
        %v5192 = vpop.permute.xlu0 %5191
        %5195 = vset.pattern.permute.xlu0 0
        %5196 = vperm.xlu0 %5195, %v5130
        %v5197 = vpop.permute.xlu0 %5196
        %5200 = vset.pattern.permute.xlu0 0
        %5201 = vperm.xlu0 %5200, %v5131
        %v5202 = vpop.permute.xlu0 %5201
        %5205 = vset.pattern.permute.xlu0 0
        %5206 = vperm.xlu0 %5205, %v5132
        %v5207 = vpop.permute.xlu0 %5206
        %5210 = vset.pattern.permute.xlu0 0
        %5211 = vperm.xlu0 %5210, %v5133
        %v5212 = vpop.permute.xlu0 %5211
        %v5214 = vmul.f32 %v5101, %v5137
        %v5215 = vmul.f32 %v5102, %v5142
        %v5216 = vmul.f32 %v5103, %v5147
        %v5217 = vmul.f32 %v5104, %v5152
        %v5218 = vmul.f32 %v5105, %v5157
        %v5219 = vmul.f32 %v5106, %v5162
        %v5220 = vmul.f32 %v5107, %v5167
        %v5221 = vmul.f32 %v5108, %v5172
        %v5222 = vmul.f32 %v5109, %v5177
        %v5223 = vmul.f32 %v5110, %v5182
        %v5224 = vmul.f32 %v5111, %v5187
        %v5225 = vmul.f32 %v5112, %v5192
        %v5226 = vmul.f32 %v5113, %v5197
        %v5227 = vmul.f32 %v5114, %v5202
        %v5228 = vmul.f32 %v5115, %v5207
        %v5229 = vmul.f32 %v5116, %v5212
        %v5230 = vadd.f32 %v5214, %v5218
        %v5231 = vadd.f32 %v5215, %v5219
        %v5232 = vadd.f32 %v5216, %v5220
        %v5233 = vadd.f32 %v5217, %v5221
        %v5234 = vadd.f32 %v5230, %v5222
        %v5235 = vadd.f32 %v5231, %v5223
        %v5236 = vadd.f32 %v5232, %v5224
        %v5237 = vadd.f32 %v5233, %v5225
        %v5238 = vadd.f32 %v5234, %v5226
        %v5239 = vadd.f32 %v5235, %v5227
        %v5240 = vadd.f32 %v5236, %v5228
        %v5241 = vadd.f32 %v5237, %v5229
        %v5242 = vld [vmem:[#allocation2] sm:$0xff]
        %v5243 = vld [vmem:[#allocation2 + $0x8] sm:$0xff]
        %v5244 = vld [vmem:[#allocation2 + $0x10] sm:$0xff]
        %v5245 = vld [vmem:[#allocation2 + $0x18] sm:$0xff]
        %v5246 = vadd.f32 %v5242, %v5238
        %v5247 = vadd.f32 %v5243, %v5239
        %v5248 = vadd.f32 %v5244, %v5240
        %v5249 = vadd.f32 %v5245, %v5241
        %5250 = vst [vmem:[#allocation2] sm:$0xff] %v5246
        %5251 = vst [vmem:[#allocation2 + $0x8] sm:$0xff] %v5247
        %5252 = vst [vmem:[#allocation2 + $0x10] sm:$0xff] %v5248
        %5253 = vst [vmem:[#allocation2 + $0x18] sm:$0xff] %v5249
        %s5254 = scalar_lea.vmem %s850, 560 [#allocation3]
        %v5255 = vld [vmem:[%s5254] sm:$0xff]
        %v5256 = vld [vmem:[%s5254 + $0x8] sm:$0xff]
        %v5257 = vld [vmem:[%s5254 + $0x10] sm:$0xff]
        %v5258 = vld [vmem:[%s5254 + $0x18] sm:$0xff]
        %v5259 = vld [vmem:[%s5254 + $0x20] sm:$0x1]
        %v5261 = vsel %vm962, %v5259, 0
        %5263 = vmatprep.subr.mxu0 0.0
        %5264 = vmatpush1.msra.mxu0 0.0
        %5265 = vmatprep.subr.mxu0 0.0
        %5266 = vmatpush1.msra.mxu0 0.0
        %5267 = vmatprep.subr.mxu0 0.0
        %5268 = vmatpush1.msra.mxu0 0.0
        %5269 = vmatprep.subr.mxu0 0.0
        %5270 = vmatpush1.msra.mxu0 0.0
        %5271 = vmatprep.subr.mxu0 0.0
        %5272 = vmatpush1.msra.mxu0 0.0
        %5273 = vmatprep.subr.mxu0 0.0
        %5274 = vmatpush1.msra.mxu0 0.0
        %5275 = vmatprep.subr.mxu0 0.0
        %5276 = vmatpush1.msra.mxu0 0.0
        %5277 = vmatprep.subr.mxu0 0.0
        %5278 = vmatpush1.msra.mxu0 0.0
        %5279 = vmatprep.subr.mxu0 0.0
        %5280 = vmatpush1.msra.mxu0 0.0
        %5281 = vmatprep.subr.mxu0 0.0
        %5282 = vmatpush1.msra.mxu0 0.0
        %5283 = vmatprep.subr.mxu0 0.0
        %5284 = vmatpush1.msra.mxu0 0.0
        %5285 = vmatprep.subr.mxu0 0.0
        %5286 = vmatpush1.msra.mxu0 %v5261
        %5287 = vmatprep.subr.mxu0 0.0
        %5288 = vmatpush1.msra.mxu0 %v5258
        %5289 = vmatprep.subr.mxu0 0.0
        %5290 = vmatpush1.msra.mxu0 %v5257
        %5291 = vmatprep.subr.mxu0 0.0
        %5292 = vmatpush1.msra.mxu0 %v5256
        %5293 = vmatprep.subr.mxu0 0.0
        %5294 = vmatpush1.msra.mxu0 %v5255
        %5295 = vmatprep.subr.mxu0 0.0
        %5296 = vmatpush2.msra.mxu0 0.0
        %5297 = vmatprep.subr.mxu0 0.0
        %5298 = vmatpush2.msra.mxu0 0.0
        %5299 = vmatprep.subr.mxu0 0.0
        %5300 = vmatpush2.msra.mxu0 0.0
        %5301 = vmatprep.subr.mxu0 0.0
        %5302 = vmatpush2.msra.mxu0 0.0
        %5303 = vmatprep.subr.mxu0 0.0
        %5304 = vmatpush2.msra.mxu0 0.0
        %5305 = vmatprep.subr.mxu0 0.0
        %5306 = vmatpush2.msra.mxu0 0.0
        %5307 = vmatprep.subr.mxu0 0.0
        %5308 = vmatpush2.msra.mxu0 0.0
        %5309 = vmatprep.subr.mxu0 0.0
        %5310 = vmatpush2.msra.mxu0 0.0
        %5311 = vmatprep.subr.mxu0 0.0
        %5312 = vmatpush2.msra.mxu0 0.0
        %5313 = vmatprep.subr.mxu0 0.0
        %5314 = vmatpush2.msra.mxu0 0.0
        %5315 = vmatprep.subr.mxu0 0.0
        %5316 = vmatpush2.msra.mxu0 0.0
        %5317 = vmatprep.subr.mxu0 0.0
        %5318 = vmatpush2.msra.mxu0 0.0
        %5319 = vmatprep.subr.mxu0 0.0
        %5320 = vmatpush2.msra.mxu0 0.0
        %5321 = vmatprep.subr.mxu0 0.0
        %5322 = vmatpush2.msra.mxu0 0.0
        %5323 = vmatprep.subr.mxu0 0.0
        %5324 = vmatpush2.msra.mxu0 0.0
        %5325 = vmatprep.subr.mxu0 0.0
        %5326 = vmatpush2.msra.mxu0 0.0
        %5327 = vmatprep.mubr.f32.mxu0 0.0
        %5328 = vmatmul.mubr.f32.gmra.mxu0 %v915
        %v5329 = vpop.f32.mrf.mxu0
        %v5330 = vadd.f32 0.0, %v5329
        %v5331 = vpop.f32.mrf.mxu0
        %5332 = vmatprep.mubr.f32.mxu0 0.0
        %5333 = vmatmul.mubr.f32.gmra.mxu0 %v918
        %v5334 = vpop.f32.mrf.mxu0
        %v5335 = vadd.f32 0.0, %v5334
        %v5336 = vpop.f32.mrf.mxu0
        %5337 = vmatprep.mubr.f32.mxu0 0.0
        %5338 = vmatmul.mubr.f32.gmra.mxu0 %v921
        %v5339 = vpop.f32.mrf.mxu0
        %v5340 = vadd.f32 0.0, %v5339
        %v5341 = vpop.f32.mrf.mxu0
        %5342 = vmatprep.mubr.f32.mxu0 0.0
        %5343 = vmatmul.mubr.f32.gmra.mxu0 %v924
        %v5344 = vpop.f32.mrf.mxu0
        %v5345 = vadd.f32 0.0, %v5344
        %v5346 = vpop.f32.mrf.mxu0
        %5347 = vmatprep.mubr.f32.mxu0 0.0
        %5348 = vmatmul.mubr.f32.gmra.mxu0 %v927
        %v5349 = vpop.f32.mrf.mxu0
        %v5350 = vadd.f32 0.0, %v5349
        %v5351 = vpop.f32.mrf.mxu0
        %5352 = vmatprep.mubr.f32.mxu0 0.0
        %5353 = vmatmul.mubr.f32.gmra.mxu0 %v930
        %v5354 = vpop.f32.mrf.mxu0
        %v5355 = vadd.f32 0.0, %v5354
        %v5356 = vpop.f32.mrf.mxu0
        %5357 = vmatprep.mubr.f32.mxu0 0.0
        %5358 = vmatmul.mubr.f32.gmra.mxu0 %v933
        %v5359 = vpop.f32.mrf.mxu0
        %v5360 = vadd.f32 0.0, %v5359
        %v5361 = vpop.f32.mrf.mxu0
        %5362 = vmatprep.mubr.f32.mxu0 0.0
        %5363 = vmatmul.mubr.f32.gmra.mxu0 %v936
        %v5364 = vpop.f32.mrf.mxu0
        %v5365 = vadd.f32 0.0, %v5364
        %v5366 = vpop.f32.mrf.mxu0
        %5367 = vmatprep.mubr.f32.mxu0 0.0
        %5368 = vmatmul.mubr.f32.gmra.mxu0 %v939
        %v5369 = vpop.f32.mrf.mxu0
        %v5370 = vadd.f32 0.0, %v5369
        %v5371 = vpop.f32.mrf.mxu0
        %5372 = vmatprep.mubr.f32.mxu0 0.0
        %5373 = vmatmul.mubr.f32.gmra.mxu0 %v942
        %v5374 = vpop.f32.mrf.mxu0
        %v5375 = vadd.f32 0.0, %v5374
        %v5376 = vpop.f32.mrf.mxu0
        %5377 = vmatprep.mubr.f32.mxu0 0.0
        %5378 = vmatmul.mubr.f32.gmra.mxu0 %v945
        %v5379 = vpop.f32.mrf.mxu0
        %v5380 = vadd.f32 0.0, %v5379
        %v5381 = vpop.f32.mrf.mxu0
        %5382 = vmatprep.mubr.f32.mxu0 0.0
        %5383 = vmatmul.mubr.f32.gmra.mxu0 %v948
        %v5384 = vpop.f32.mrf.mxu0
        %v5385 = vadd.f32 0.0, %v5384
        %v5386 = vpop.f32.mrf.mxu0
        %5387 = vmatprep.mubr.f32.mxu0 0.0
        %5388 = vmatmul.mubr.f32.gmra.mxu0 %v951
        %v5389 = vpop.f32.mrf.mxu0
        %v5390 = vadd.f32 0.0, %v5389
        %v5391 = vpop.f32.mrf.mxu0
        %5392 = vmatprep.mubr.f32.mxu0 0.0
        %5393 = vmatmul.mubr.f32.gmra.mxu0 %v954
        %v5394 = vpop.f32.mrf.mxu0
        %v5395 = vadd.f32 0.0, %v5394
        %v5396 = vpop.f32.mrf.mxu0
        %5397 = vmatprep.mubr.f32.mxu0 0.0
        %5398 = vmatmul.mubr.f32.gmra.mxu0 %v957
        %v5399 = vpop.f32.mrf.mxu0
        %v5400 = vadd.f32 0.0, %v5399
        %v5401 = vpop.f32.mrf.mxu0
        %5402 = vmatprep.mubr.f32.mxu0 0.0
        %5403 = vmatmul.mubr.f32.gmra.mxu0 %v960
        %v5404 = vpop.f32.mrf.mxu0
        %v5405 = vadd.f32 0.0, %v5404
        %v5406 = vpop.f32.mrf.mxu0
        %5407 = vdwg.mxu0
        %v5408 = vmax.f32 %v5330, 0.0
        %v5409 = vmax.f32 %v5335, 0.0
        %v5410 = vmax.f32 %v5340, 0.0
        %v5411 = vmax.f32 %v5345, 0.0
        %v5412 = vmax.f32 %v5350, 0.0
        %v5413 = vmax.f32 %v5355, 0.0
        %v5414 = vmax.f32 %v5360, 0.0
        %v5415 = vmax.f32 %v5365, 0.0
        %v5416 = vmax.f32 %v5370, 0.0
        %v5417 = vmax.f32 %v5375, 0.0
        %v5418 = vmax.f32 %v5380, 0.0
        %v5419 = vmax.f32 %v5385, 0.0
        %v5420 = vmax.f32 %v5390, 0.0
        %v5421 = vmax.f32 %v5395, 0.0
        %v5422 = vmax.f32 %v5400, 0.0
        %v5423 = vmax.f32 %v5405, 0.0
        %s5424 = scalar_lea.vmem %s2, 1792
        %v5425 = vld [vmem:[%s5424] sm:$0xff]
        %v5426 = vld [vmem:[%s5424 + $0x8] sm:$0xff]
        %v5427 = vld [vmem:[%s5424 + $0x10] sm:$0xff]
        %v5428 = vld [vmem:[%s5424 + $0x18] sm:$0xff]
        %v5429 = vld [vmem:[%s5424 + $0x20] sm:$0xff]
        %v5430 = vld [vmem:[%s5424 + $0x28] sm:$0xff]
        %v5431 = vld [vmem:[%s5424 + $0x30] sm:$0xff]
        %v5432 = vld [vmem:[%s5424 + $0x38] sm:$0xff]
        %v5433 = vld [vmem:[%s5424 + $0x40] sm:$0xff]
        %v5434 = vld [vmem:[%s5424 + $0x48] sm:$0xff]
        %v5435 = vld [vmem:[%s5424 + $0x50] sm:$0xff]
        %v5436 = vld [vmem:[%s5424 + $0x58] sm:$0xff]
        %v5437 = vld [vmem:[%s5424 + $0x60] sm:$0xff]
        %v5438 = vld [vmem:[%s5424 + $0x68] sm:$0xff]
        %v5439 = vld [vmem:[%s5424 + $0x70] sm:$0xff]
        %v5440 = vld [vmem:[%s5424 + $0x78] sm:$0xff]
        %5442 = vset.pattern.permute.xlu0 0
        %5443 = vperm.xlu0 %5442, %v5425
        %v5444 = vpop.permute.xlu0 %5443
        %5447 = vset.pattern.permute.xlu0 0
        %5448 = vperm.xlu0 %5447, %v5426
        %v5449 = vpop.permute.xlu0 %5448
        %5452 = vset.pattern.permute.xlu0 0
        %5453 = vperm.xlu0 %5452, %v5427
        %v5454 = vpop.permute.xlu0 %5453
        %5457 = vset.pattern.permute.xlu0 0
        %5458 = vperm.xlu0 %5457, %v5428
        %v5459 = vpop.permute.xlu0 %5458
        %5462 = vset.pattern.permute.xlu0 0
        %5463 = vperm.xlu0 %5462, %v5429
        %v5464 = vpop.permute.xlu0 %5463
        %5467 = vset.pattern.permute.xlu0 0
        %5468 = vperm.xlu0 %5467, %v5430
        %v5469 = vpop.permute.xlu0 %5468
        %5472 = vset.pattern.permute.xlu0 0
        %5473 = vperm.xlu0 %5472, %v5431
        %v5474 = vpop.permute.xlu0 %5473
        %5477 = vset.pattern.permute.xlu0 0
        %5478 = vperm.xlu0 %5477, %v5432
        %v5479 = vpop.permute.xlu0 %5478
        %5482 = vset.pattern.permute.xlu0 0
        %5483 = vperm.xlu0 %5482, %v5433
        %v5484 = vpop.permute.xlu0 %5483
        %5487 = vset.pattern.permute.xlu0 0
        %5488 = vperm.xlu0 %5487, %v5434
        %v5489 = vpop.permute.xlu0 %5488
        %5492 = vset.pattern.permute.xlu0 0
        %5493 = vperm.xlu0 %5492, %v5435
        %v5494 = vpop.permute.xlu0 %5493
        %5497 = vset.pattern.permute.xlu0 0
        %5498 = vperm.xlu0 %5497, %v5436
        %v5499 = vpop.permute.xlu0 %5498
        %5502 = vset.pattern.permute.xlu0 0
        %5503 = vperm.xlu0 %5502, %v5437
        %v5504 = vpop.permute.xlu0 %5503
        %5507 = vset.pattern.permute.xlu0 0
        %5508 = vperm.xlu0 %5507, %v5438
        %v5509 = vpop.permute.xlu0 %5508
        %5512 = vset.pattern.permute.xlu0 0
        %5513 = vperm.xlu0 %5512, %v5439
        %v5514 = vpop.permute.xlu0 %5513
        %5517 = vset.pattern.permute.xlu0 0
        %5518 = vperm.xlu0 %5517, %v5440
        %v5519 = vpop.permute.xlu0 %5518
        %v5521 = vmul.f32 %v5408, %v5444
        %v5522 = vmul.f32 %v5409, %v5449
        %v5523 = vmul.f32 %v5410, %v5454
        %v5524 = vmul.f32 %v5411, %v5459
        %v5525 = vmul.f32 %v5412, %v5464
        %v5526 = vmul.f32 %v5413, %v5469
        %v5527 = vmul.f32 %v5414, %v5474
        %v5528 = vmul.f32 %v5415, %v5479
        %v5529 = vmul.f32 %v5416, %v5484
        %v5530 = vmul.f32 %v5417, %v5489
        %v5531 = vmul.f32 %v5418, %v5494
        %v5532 = vmul.f32 %v5419, %v5499
        %v5533 = vmul.f32 %v5420, %v5504
        %v5534 = vmul.f32 %v5421, %v5509
        %v5535 = vmul.f32 %v5422, %v5514
        %v5536 = vmul.f32 %v5423, %v5519
        %v5537 = vadd.f32 %v5521, %v5525
        %v5538 = vadd.f32 %v5522, %v5526
        %v5539 = vadd.f32 %v5523, %v5527
        %v5540 = vadd.f32 %v5524, %v5528
        %v5541 = vadd.f32 %v5537, %v5529
        %v5542 = vadd.f32 %v5538, %v5530
        %v5543 = vadd.f32 %v5539, %v5531
        %v5544 = vadd.f32 %v5540, %v5532
        %v5545 = vadd.f32 %v5541, %v5533
        %v5546 = vadd.f32 %v5542, %v5534
        %v5547 = vadd.f32 %v5543, %v5535
        %v5548 = vadd.f32 %v5544, %v5536
        %v5549 = vld [vmem:[#allocation2] sm:$0xff]
        %v5550 = vld [vmem:[#allocation2 + $0x8] sm:$0xff]
        %v5551 = vld [vmem:[#allocation2 + $0x10] sm:$0xff]
        %v5552 = vld [vmem:[#allocation2 + $0x18] sm:$0xff]
        %v5553 = vadd.f32 %v5549, %v5545
        %v5554 = vadd.f32 %v5550, %v5546
        %v5555 = vadd.f32 %v5551, %v5547
        %v5556 = vadd.f32 %v5552, %v5548
        %5557 = vst [vmem:[#allocation2] sm:$0xff] %v5553
        %5558 = vst [vmem:[#allocation2 + $0x8] sm:$0xff] %v5554
        %5559 = vst [vmem:[#allocation2 + $0x10] sm:$0xff] %v5555
        %5560 = vst [vmem:[#allocation2 + $0x18] sm:$0xff] %v5556
        %s5561 = scalar_lea.vmem %s850, 600 [#allocation3]
        %v5562 = vld [vmem:[%s5561] sm:$0xff]
        %v5563 = vld [vmem:[%s5561 + $0x8] sm:$0xff]
        %v5564 = vld [vmem:[%s5561 + $0x10] sm:$0xff]
        %v5565 = vld [vmem:[%s5561 + $0x18] sm:$0xff]
        %v5566 = vld [vmem:[%s5561 + $0x20] sm:$0x1]
        %v5568 = vsel %vm962, %v5566, 0
        %5570 = vmatprep.subr.mxu0 0.0
        %5571 = vmatpush1.msra.mxu0 0.0
        %5572 = vmatprep.subr.mxu0 0.0
        %5573 = vmatpush1.msra.mxu0 0.0
        %5574 = vmatprep.subr.mxu0 0.0
        %5575 = vmatpush1.msra.mxu0 0.0
        %5576 = vmatprep.subr.mxu0 0.0
        %5577 = vmatpush1.msra.mxu0 0.0
        %5578 = vmatprep.subr.mxu0 0.0
        %5579 = vmatpush1.msra.mxu0 0.0
        %5580 = vmatprep.subr.mxu0 0.0
        %5581 = vmatpush1.msra.mxu0 0.0
        %5582 = vmatprep.subr.mxu0 0.0
        %5583 = vmatpush1.msra.mxu0 0.0
        %5584 = vmatprep.subr.mxu0 0.0
        %5585 = vmatpush1.msra.mxu0 0.0
        %5586 = vmatprep.subr.mxu0 0.0
        %5587 = vmatpush1.msra.mxu0 0.0
        %5588 = vmatprep.subr.mxu0 0.0
        %5589 = vmatpush1.msra.mxu0 0.0
        %5590 = vmatprep.subr.mxu0 0.0
        %5591 = vmatpush1.msra.mxu0 0.0
        %5592 = vmatprep.subr.mxu0 0.0
        %5593 = vmatpush1.msra.mxu0 %v5568
        %5594 = vmatprep.subr.mxu0 0.0
        %5595 = vmatpush1.msra.mxu0 %v5565
        %5596 = vmatprep.subr.mxu0 0.0
        %5597 = vmatpush1.msra.mxu0 %v5564
        %5598 = vmatprep.subr.mxu0 0.0
        %5599 = vmatpush1.msra.mxu0 %v5563
        %5600 = vmatprep.subr.mxu0 0.0
        %5601 = vmatpush1.msra.mxu0 %v5562
        %5602 = vmatprep.subr.mxu0 0.0
        %5603 = vmatpush2.msra.mxu0 0.0
        %5604 = vmatprep.subr.mxu0 0.0
        %5605 = vmatpush2.msra.mxu0 0.0
        %5606 = vmatprep.subr.mxu0 0.0
        %5607 = vmatpush2.msra.mxu0 0.0
        %5608 = vmatprep.subr.mxu0 0.0
        %5609 = vmatpush2.msra.mxu0 0.0
        %5610 = vmatprep.subr.mxu0 0.0
        %5611 = vmatpush2.msra.mxu0 0.0
        %5612 = vmatprep.subr.mxu0 0.0
        %5613 = vmatpush2.msra.mxu0 0.0
        %5614 = vmatprep.subr.mxu0 0.0
        %5615 = vmatpush2.msra.mxu0 0.0
        %5616 = vmatprep.subr.mxu0 0.0
        %5617 = vmatpush2.msra.mxu0 0.0
        %5618 = vmatprep.subr.mxu0 0.0
        %5619 = vmatpush2.msra.mxu0 0.0
        %5620 = vmatprep.subr.mxu0 0.0
        %5621 = vmatpush2.msra.mxu0 0.0
        %5622 = vmatprep.subr.mxu0 0.0
        %5623 = vmatpush2.msra.mxu0 0.0
        %5624 = vmatprep.subr.mxu0 0.0
        %5625 = vmatpush2.msra.mxu0 0.0
        %5626 = vmatprep.subr.mxu0 0.0
        %5627 = vmatpush2.msra.mxu0 0.0
        %5628 = vmatprep.subr.mxu0 0.0
        %5629 = vmatpush2.msra.mxu0 0.0
        %5630 = vmatprep.subr.mxu0 0.0
        %5631 = vmatpush2.msra.mxu0 0.0
        %5632 = vmatprep.subr.mxu0 0.0
        %5633 = vmatpush2.msra.mxu0 0.0
        %5634 = vmatprep.mubr.f32.mxu0 0.0
        %5635 = vmatmul.mubr.f32.gmra.mxu0 %v915
        %v5636 = vpop.f32.mrf.mxu0
        %v5637 = vadd.f32 0.0, %v5636
        %v5638 = vpop.f32.mrf.mxu0
        %5639 = vmatprep.mubr.f32.mxu0 0.0
        %5640 = vmatmul.mubr.f32.gmra.mxu0 %v918
        %v5641 = vpop.f32.mrf.mxu0
        %v5642 = vadd.f32 0.0, %v5641
        %v5643 = vpop.f32.mrf.mxu0
        %5644 = vmatprep.mubr.f32.mxu0 0.0
        %5645 = vmatmul.mubr.f32.gmra.mxu0 %v921
        %v5646 = vpop.f32.mrf.mxu0
        %v5647 = vadd.f32 0.0, %v5646
        %v5648 = vpop.f32.mrf.mxu0
        %5649 = vmatprep.mubr.f32.mxu0 0.0
        %5650 = vmatmul.mubr.f32.gmra.mxu0 %v924
        %v5651 = vpop.f32.mrf.mxu0
        %v5652 = vadd.f32 0.0, %v5651
        %v5653 = vpop.f32.mrf.mxu0
        %5654 = vmatprep.mubr.f32.mxu0 0.0
        %5655 = vmatmul.mubr.f32.gmra.mxu0 %v927
        %v5656 = vpop.f32.mrf.mxu0
        %v5657 = vadd.f32 0.0, %v5656
        %v5658 = vpop.f32.mrf.mxu0
        %5659 = vmatprep.mubr.f32.mxu0 0.0
        %5660 = vmatmul.mubr.f32.gmra.mxu0 %v930
        %v5661 = vpop.f32.mrf.mxu0
        %v5662 = vadd.f32 0.0, %v5661
        %v5663 = vpop.f32.mrf.mxu0
        %5664 = vmatprep.mubr.f32.mxu0 0.0
        %5665 = vmatmul.mubr.f32.gmra.mxu0 %v933
        %v5666 = vpop.f32.mrf.mxu0
        %v5667 = vadd.f32 0.0, %v5666
        %v5668 = vpop.f32.mrf.mxu0
        %5669 = vmatprep.mubr.f32.mxu0 0.0
        %5670 = vmatmul.mubr.f32.gmra.mxu0 %v936
        %v5671 = vpop.f32.mrf.mxu0
        %v5672 = vadd.f32 0.0, %v5671
        %v5673 = vpop.f32.mrf.mxu0
        %5674 = vmatprep.mubr.f32.mxu0 0.0
        %5675 = vmatmul.mubr.f32.gmra.mxu0 %v939
        %v5676 = vpop.f32.mrf.mxu0
        %v5677 = vadd.f32 0.0, %v5676
        %v5678 = vpop.f32.mrf.mxu0
        %5679 = vmatprep.mubr.f32.mxu0 0.0
        %5680 = vmatmul.mubr.f32.gmra.mxu0 %v942
        %v5681 = vpop.f32.mrf.mxu0
        %v5682 = vadd.f32 0.0, %v5681
        %v5683 = vpop.f32.mrf.mxu0
        %5684 = vmatprep.mubr.f32.mxu0 0.0
        %5685 = vmatmul.mubr.f32.gmra.mxu0 %v945
        %v5686 = vpop.f32.mrf.mxu0
        %v5687 = vadd.f32 0.0, %v5686
        %v5688 = vpop.f32.mrf.mxu0
        %5689 = vmatprep.mubr.f32.mxu0 0.0
        %5690 = vmatmul.mubr.f32.gmra.mxu0 %v948
        %v5691 = vpop.f32.mrf.mxu0
        %v5692 = vadd.f32 0.0, %v5691
        %v5693 = vpop.f32.mrf.mxu0
        %5694 = vmatprep.mubr.f32.mxu0 0.0
        %5695 = vmatmul.mubr.f32.gmra.mxu0 %v951
        %v5696 = vpop.f32.mrf.mxu0
        %v5697 = vadd.f32 0.0, %v5696
        %v5698 = vpop.f32.mrf.mxu0
        %5699 = vmatprep.mubr.f32.mxu0 0.0
        %5700 = vmatmul.mubr.f32.gmra.mxu0 %v954
        %v5701 = vpop.f32.mrf.mxu0
        %v5702 = vadd.f32 0.0, %v5701
        %v5703 = vpop.f32.mrf.mxu0
        %5704 = vmatprep.mubr.f32.mxu0 0.0
        %5705 = vmatmul.mubr.f32.gmra.mxu0 %v957
        %v5706 = vpop.f32.mrf.mxu0
        %v5707 = vadd.f32 0.0, %v5706
        %v5708 = vpop.f32.mrf.mxu0
        %5709 = vmatprep.mubr.f32.mxu0 0.0
        %5710 = vmatmul.mubr.f32.gmra.mxu0 %v960
        %v5711 = vpop.f32.mrf.mxu0
        %v5712 = vadd.f32 0.0, %v5711
        %v5713 = vpop.f32.mrf.mxu0
        %5714 = vdwg.mxu0
        %v5715 = vmax.f32 %v5637, 0.0
        %v5716 = vmax.f32 %v5642, 0.0
        %v5717 = vmax.f32 %v5647, 0.0
        %v5718 = vmax.f32 %v5652, 0.0
        %v5719 = vmax.f32 %v5657, 0.0
        %v5720 = vmax.f32 %v5662, 0.0
        %v5721 = vmax.f32 %v5667, 0.0
        %v5722 = vmax.f32 %v5672, 0.0
        %v5723 = vmax.f32 %v5677, 0.0
        %v5724 = vmax.f32 %v5682, 0.0
        %v5725 = vmax.f32 %v5687, 0.0
        %v5726 = vmax.f32 %v5692, 0.0
        %v5727 = vmax.f32 %v5697, 0.0
        %v5728 = vmax.f32 %v5702, 0.0
        %v5729 = vmax.f32 %v5707, 0.0
        %v5730 = vmax.f32 %v5712, 0.0
        %s5731 = scalar_lea.vmem %s2, 1920
        %v5732 = vld [vmem:[%s5731] sm:$0xff]
        %v5733 = vld [vmem:[%s5731 + $0x8] sm:$0xff]
        %v5734 = vld [vmem:[%s5731 + $0x10] sm:$0xff]
        %v5735 = vld [vmem:[%s5731 + $0x18] sm:$0xff]
        %v5736 = vld [vmem:[%s5731 + $0x20] sm:$0xff]
        %v5737 = vld [vmem:[%s5731 + $0x28] sm:$0xff]
        %v5738 = vld [vmem:[%s5731 + $0x30] sm:$0xff]
        %v5739 = vld [vmem:[%s5731 + $0x38] sm:$0xff]
        %v5740 = vld [vmem:[%s5731 + $0x40] sm:$0xff]
        %v5741 = vld [vmem:[%s5731 + $0x48] sm:$0xff]
        %v5742 = vld [vmem:[%s5731 + $0x50] sm:$0xff]
        %v5743 = vld [vmem:[%s5731 + $0x58] sm:$0xff]
        %v5744 = vld [vmem:[%s5731 + $0x60] sm:$0xff]
        %v5745 = vld [vmem:[%s5731 + $0x68] sm:$0xff]
        %v5746 = vld [vmem:[%s5731 + $0x70] sm:$0xff]
        %v5747 = vld [vmem:[%s5731 + $0x78] sm:$0xff]
        %5749 = vset.pattern.permute.xlu0 0
        %5750 = vperm.xlu0 %5749, %v5732
        %v5751 = vpop.permute.xlu0 %5750
        %5754 = vset.pattern.permute.xlu0 0
        %5755 = vperm.xlu0 %5754, %v5733
        %v5756 = vpop.permute.xlu0 %5755
        %5759 = vset.pattern.permute.xlu0 0
        %5760 = vperm.xlu0 %5759, %v5734
        %v5761 = vpop.permute.xlu0 %5760
        %5764 = vset.pattern.permute.xlu0 0
        %5765 = vperm.xlu0 %5764, %v5735
        %v5766 = vpop.permute.xlu0 %5765
        %5769 = vset.pattern.permute.xlu0 0
        %5770 = vperm.xlu0 %5769, %v5736
        %v5771 = vpop.permute.xlu0 %5770
        %5774 = vset.pattern.permute.xlu0 0
        %5775 = vperm.xlu0 %5774, %v5737
        %v5776 = vpop.permute.xlu0 %5775
        %5779 = vset.pattern.permute.xlu0 0
        %5780 = vperm.xlu0 %5779, %v5738
        %v5781 = vpop.permute.xlu0 %5780
        %5784 = vset.pattern.permute.xlu0 0
        %5785 = vperm.xlu0 %5784, %v5739
        %v5786 = vpop.permute.xlu0 %5785
        %5789 = vset.pattern.permute.xlu0 0
        %5790 = vperm.xlu0 %5789, %v5740
        %v5791 = vpop.permute.xlu0 %5790
        %5794 = vset.pattern.permute.xlu0 0
        %5795 = vperm.xlu0 %5794, %v5741
        %v5796 = vpop.permute.xlu0 %5795
        %5799 = vset.pattern.permute.xlu0 0
        %5800 = vperm.xlu0 %5799, %v5742
        %v5801 = vpop.permute.xlu0 %5800
        %5804 = vset.pattern.permute.xlu0 0
        %5805 = vperm.xlu0 %5804, %v5743
        %v5806 = vpop.permute.xlu0 %5805
        %5809 = vset.pattern.permute.xlu0 0
        %5810 = vperm.xlu0 %5809, %v5744
        %v5811 = vpop.permute.xlu0 %5810
        %5814 = vset.pattern.permute.xlu0 0
        %5815 = vperm.xlu0 %5814, %v5745
        %v5816 = vpop.permute.xlu0 %5815
        %5819 = vset.pattern.permute.xlu0 0
        %5820 = vperm.xlu0 %5819, %v5746
        %v5821 = vpop.permute.xlu0 %5820
        %5824 = vset.pattern.permute.xlu0 0
        %5825 = vperm.xlu0 %5824, %v5747
        %v5826 = vpop.permute.xlu0 %5825
        %v5828 = vmul.f32 %v5715, %v5751
        %v5829 = vmul.f32 %v5716, %v5756
        %v5830 = vmul.f32 %v5717, %v5761
        %v5831 = vmul.f32 %v5718, %v5766
        %v5832 = vmul.f32 %v5719, %v5771
        %v5833 = vmul.f32 %v5720, %v5776
        %v5834 = vmul.f32 %v5721, %v5781
        %v5835 = vmul.f32 %v5722, %v5786
        %v5836 = vmul.f32 %v5723, %v5791
        %v5837 = vmul.f32 %v5724, %v5796
        %v5838 = vmul.f32 %v5725, %v5801
        %v5839 = vmul.f32 %v5726, %v5806
        %v5840 = vmul.f32 %v5727, %v5811
        %v5841 = vmul.f32 %v5728, %v5816
        %v5842 = vmul.f32 %v5729, %v5821
        %v5843 = vmul.f32 %v5730, %v5826
        %v5844 = vadd.f32 %v5828, %v5832
        %v5845 = vadd.f32 %v5829, %v5833
        %v5846 = vadd.f32 %v5830, %v5834
        %v5847 = vadd.f32 %v5831, %v5835
        %v5848 = vadd.f32 %v5844, %v5836
        %v5849 = vadd.f32 %v5845, %v5837
        %v5850 = vadd.f32 %v5846, %v5838
        %v5851 = vadd.f32 %v5847, %v5839
        %v5852 = vadd.f32 %v5848, %v5840
        %v5853 = vadd.f32 %v5849, %v5841
        %v5854 = vadd.f32 %v5850, %v5842
        %v5855 = vadd.f32 %v5851, %v5843
        %v5856 = vld [vmem:[#allocation2] sm:$0xff]
        %v5857 = vld [vmem:[#allocation2 + $0x8] sm:$0xff]
        %v5858 = vld [vmem:[#allocation2 + $0x10] sm:$0xff]
        %v5859 = vld [vmem:[#allocation2 + $0x18] sm:$0xff]
        %v5860 = vadd.f32 %v5856, %v5852
        %v5861 = vadd.f32 %v5857, %v5853
        %v5862 = vadd.f32 %v5858, %v5854
        %v5863 = vadd.f32 %v5859, %v5855
        %5864 = vst [vmem:[#allocation2] sm:$0xff] %v5860
        %5865 = vst [vmem:[#allocation2 + $0x8] sm:$0xff] %v5861
        %5866 = vst [vmem:[#allocation2 + $0x10] sm:$0xff] %v5862
        %5867 = vst [vmem:[#allocation2 + $0x18] sm:$0xff] %v5863
        %s5868 = scalar_lea.vmem %s850, 640 [#allocation3]
        %v5869 = vld [vmem:[%s5868] sm:$0xff]
        %v5870 = vld [vmem:[%s5868 + $0x8] sm:$0xff]
        %v5871 = vld [vmem:[%s5868 + $0x10] sm:$0xff]
        %v5872 = vld [vmem:[%s5868 + $0x18] sm:$0xff]
        %v5873 = vld [vmem:[%s5868 + $0x20] sm:$0x1]
        %v5875 = vsel %vm962, %v5873, 0
        %5877 = vmatprep.subr.mxu0 0.0
        %5878 = vmatpush1.msra.mxu0 0.0
        %5879 = vmatprep.subr.mxu0 0.0
        %5880 = vmatpush1.msra.mxu0 0.0
        %5881 = vmatprep.subr.mxu0 0.0
        %5882 = vmatpush1.msra.mxu0 0.0
        %5883 = vmatprep.subr.mxu0 0.0
        %5884 = vmatpush1.msra.mxu0 0.0
        %5885 = vmatprep.subr.mxu0 0.0
        %5886 = vmatpush1.msra.mxu0 0.0
        %5887 = vmatprep.subr.mxu0 0.0
        %5888 = vmatpush1.msra.mxu0 0.0
        %5889 = vmatprep.subr.mxu0 0.0
        %5890 = vmatpush1.msra.mxu0 0.0
        %5891 = vmatprep.subr.mxu0 0.0
        %5892 = vmatpush1.msra.mxu0 0.0
        %5893 = vmatprep.subr.mxu0 0.0
        %5894 = vmatpush1.msra.mxu0 0.0
        %5895 = vmatprep.subr.mxu0 0.0
        %5896 = vmatpush1.msra.mxu0 0.0
        %5897 = vmatprep.subr.mxu0 0.0
        %5898 = vmatpush1.msra.mxu0 0.0
        %5899 = vmatprep.subr.mxu0 0.0
        %5900 = vmatpush1.msra.mxu0 %v5875
        %5901 = vmatprep.subr.mxu0 0.0
        %5902 = vmatpush1.msra.mxu0 %v5872
        %5903 = vmatprep.subr.mxu0 0.0
        %5904 = vmatpush1.msra.mxu0 %v5871
        %5905 = vmatprep.subr.mxu0 0.0
        %5906 = vmatpush1.msra.mxu0 %v5870
        %5907 = vmatprep.subr.mxu0 0.0
        %5908 = vmatpush1.msra.mxu0 %v5869
        %5909 = vmatprep.subr.mxu0 0.0
        %5910 = vmatpush2.msra.mxu0 0.0
        %5911 = vmatprep.subr.mxu0 0.0
        %5912 = vmatpush2.msra.mxu0 0.0
        %5913 = vmatprep.subr.mxu0 0.0
        %5914 = vmatpush2.msra.mxu0 0.0
        %5915 = vmatprep.subr.mxu0 0.0
        %5916 = vmatpush2.msra.mxu0 0.0
        %5917 = vmatprep.subr.mxu0 0.0
        %5918 = vmatpush2.msra.mxu0 0.0
        %5919 = vmatprep.subr.mxu0 0.0
        %5920 = vmatpush2.msra.mxu0 0.0
        %5921 = vmatprep.subr.mxu0 0.0
        %5922 = vmatpush2.msra.mxu0 0.0
        %5923 = vmatprep.subr.mxu0 0.0
        %5924 = vmatpush2.msra.mxu0 0.0
        %5925 = vmatprep.subr.mxu0 0.0
        %5926 = vmatpush2.msra.mxu0 0.0
        %5927 = vmatprep.subr.mxu0 0.0
        %5928 = vmatpush2.msra.mxu0 0.0
        %5929 = vmatprep.subr.mxu0 0.0
        %5930 = vmatpush2.msra.mxu0 0.0
        %5931 = vmatprep.subr.mxu0 0.0
        %5932 = vmatpush2.msra.mxu0 0.0
        %5933 = vmatprep.subr.mxu0 0.0
        %5934 = vmatpush2.msra.mxu0 0.0
        %5935 = vmatprep.subr.mxu0 0.0
        %5936 = vmatpush2.msra.mxu0 0.0
        %5937 = vmatprep.subr.mxu0 0.0
        %5938 = vmatpush2.msra.mxu0 0.0
        %5939 = vmatprep.subr.mxu0 0.0
        %5940 = vmatpush2.msra.mxu0 0.0
        %5941 = vmatprep.mubr.f32.mxu0 0.0
        %5942 = vmatmul.mubr.f32.gmra.mxu0 %v915
        %v5943 = vpop.f32.mrf.mxu0
        %v5944 = vadd.f32 0.0, %v5943
        %v5945 = vpop.f32.mrf.mxu0
        %5946 = vmatprep.mubr.f32.mxu0 0.0
        %5947 = vmatmul.mubr.f32.gmra.mxu0 %v918
        %v5948 = vpop.f32.mrf.mxu0
        %v5949 = vadd.f32 0.0, %v5948
        %v5950 = vpop.f32.mrf.mxu0
        %5951 = vmatprep.mubr.f32.mxu0 0.0
        %5952 = vmatmul.mubr.f32.gmra.mxu0 %v921
        %v5953 = vpop.f32.mrf.mxu0
        %v5954 = vadd.f32 0.0, %v5953
        %v5955 = vpop.f32.mrf.mxu0
        %5956 = vmatprep.mubr.f32.mxu0 0.0
        %5957 = vmatmul.mubr.f32.gmra.mxu0 %v924
        %v5958 = vpop.f32.mrf.mxu0
        %v5959 = vadd.f32 0.0, %v5958
        %v5960 = vpop.f32.mrf.mxu0
        %5961 = vmatprep.mubr.f32.mxu0 0.0
        %5962 = vmatmul.mubr.f32.gmra.mxu0 %v927
        %v5963 = vpop.f32.mrf.mxu0
        %v5964 = vadd.f32 0.0, %v5963
        %v5965 = vpop.f32.mrf.mxu0
        %5966 = vmatprep.mubr.f32.mxu0 0.0
        %5967 = vmatmul.mubr.f32.gmra.mxu0 %v930
        %v5968 = vpop.f32.mrf.mxu0
        %v5969 = vadd.f32 0.0, %v5968
        %v5970 = vpop.f32.mrf.mxu0
        %5971 = vmatprep.mubr.f32.mxu0 0.0
        %5972 = vmatmul.mubr.f32.gmra.mxu0 %v933
        %v5973 = vpop.f32.mrf.mxu0
        %v5974 = vadd.f32 0.0, %v5973
        %v5975 = vpop.f32.mrf.mxu0
        %5976 = vmatprep.mubr.f32.mxu0 0.0
        %5977 = vmatmul.mubr.f32.gmra.mxu0 %v936
        %v5978 = vpop.f32.mrf.mxu0
        %v5979 = vadd.f32 0.0, %v5978
        %v5980 = vpop.f32.mrf.mxu0
        %5981 = vmatprep.mubr.f32.mxu0 0.0
        %5982 = vmatmul.mubr.f32.gmra.mxu0 %v939
        %v5983 = vpop.f32.mrf.mxu0
        %v5984 = vadd.f32 0.0, %v5983
        %v5985 = vpop.f32.mrf.mxu0
        %5986 = vmatprep.mubr.f32.mxu0 0.0
        %5987 = vmatmul.mubr.f32.gmra.mxu0 %v942
        %v5988 = vpop.f32.mrf.mxu0
        %v5989 = vadd.f32 0.0, %v5988
        %v5990 = vpop.f32.mrf.mxu0
        %5991 = vmatprep.mubr.f32.mxu0 0.0
        %5992 = vmatmul.mubr.f32.gmra.mxu0 %v945
        %v5993 = vpop.f32.mrf.mxu0
        %v5994 = vadd.f32 0.0, %v5993
        %v5995 = vpop.f32.mrf.mxu0
        %5996 = vmatprep.mubr.f32.mxu0 0.0
        %5997 = vmatmul.mubr.f32.gmra.mxu0 %v948
        %v5998 = vpop.f32.mrf.mxu0
        %v5999 = vadd.f32 0.0, %v5998
        %v6000 = vpop.f32.mrf.mxu0
        %6001 = vmatprep.mubr.f32.mxu0 0.0
        %6002 = vmatmul.mubr.f32.gmra.mxu0 %v951
        %v6003 = vpop.f32.mrf.mxu0
        %v6004 = vadd.f32 0.0, %v6003
        %v6005 = vpop.f32.mrf.mxu0
        %6006 = vmatprep.mubr.f32.mxu0 0.0
        %6007 = vmatmul.mubr.f32.gmra.mxu0 %v954
        %v6008 = vpop.f32.mrf.mxu0
        %v6009 = vadd.f32 0.0, %v6008
        %v6010 = vpop.f32.mrf.mxu0
        %6011 = vmatprep.mubr.f32.mxu0 0.0
        %6012 = vmatmul.mubr.f32.gmra.mxu0 %v957
        %v6013 = vpop.f32.mrf.mxu0
        %v6014 = vadd.f32 0.0, %v6013
        %v6015 = vpop.f32.mrf.mxu0
        %6016 = vmatprep.mubr.f32.mxu0 0.0
        %6017 = vmatmul.mubr.f32.gmra.mxu0 %v960
        %v6018 = vpop.f32.mrf.mxu0
        %v6019 = vadd.f32 0.0, %v6018
        %v6020 = vpop.f32.mrf.mxu0
        %6021 = vdwg.mxu0
        %v6022 = vmax.f32 %v5944, 0.0
        %v6023 = vmax.f32 %v5949, 0.0
        %v6024 = vmax.f32 %v5954, 0.0
        %v6025 = vmax.f32 %v5959, 0.0
        %v6026 = vmax.f32 %v5964, 0.0
        %v6027 = vmax.f32 %v5969, 0.0
        %v6028 = vmax.f32 %v5974, 0.0
        %v6029 = vmax.f32 %v5979, 0.0
        %v6030 = vmax.f32 %v5984, 0.0
        %v6031 = vmax.f32 %v5989, 0.0
        %v6032 = vmax.f32 %v5994, 0.0
        %v6033 = vmax.f32 %v5999, 0.0
        %v6034 = vmax.f32 %v6004, 0.0
        %v6035 = vmax.f32 %v6009, 0.0
        %v6036 = vmax.f32 %v6014, 0.0
        %v6037 = vmax.f32 %v6019, 0.0
        %s6038 = scalar_lea.vmem %s2, 2048
        %v6039 = vld [vmem:[%s6038] sm:$0xff]
        %v6040 = vld [vmem:[%s6038 + $0x8] sm:$0xff]
        %v6041 = vld [vmem:[%s6038 + $0x10] sm:$0xff]
        %v6042 = vld [vmem:[%s6038 + $0x18] sm:$0xff]
        %v6043 = vld [vmem:[%s6038 + $0x20] sm:$0xff]
        %v6044 = vld [vmem:[%s6038 + $0x28] sm:$0xff]
        %v6045 = vld [vmem:[%s6038 + $0x30] sm:$0xff]
        %v6046 = vld [vmem:[%s6038 + $0x38] sm:$0xff]
        %v6047 = vld [vmem:[%s6038 + $0x40] sm:$0xff]
        %v6048 = vld [vmem:[%s6038 + $0x48] sm:$0xff]
        %v6049 = vld [vmem:[%s6038 + $0x50] sm:$0xff]
        %v6050 = vld [vmem:[%s6038 + $0x58] sm:$0xff]
        %v6051 = vld [vmem:[%s6038 + $0x60] sm:$0xff]
        %v6052 = vld [vmem:[%s6038 + $0x68] sm:$0xff]
        %v6053 = vld [vmem:[%s6038 + $0x70] sm:$0xff]
        %v6054 = vld [vmem:[%s6038 + $0x78] sm:$0xff]
        %6056 = vset.pattern.permute.xlu0 0
        %6057 = vperm.xlu0 %6056, %v6039
        %v6058 = vpop.permute.xlu0 %6057
        %6061 = vset.pattern.permute.xlu0 0
        %6062 = vperm.xlu0 %6061, %v6040
        %v6063 = vpop.permute.xlu0 %6062
        %6066 = vset.pattern.permute.xlu0 0
        %6067 = vperm.xlu0 %6066, %v6041
        %v6068 = vpop.permute.xlu0 %6067
        %6071 = vset.pattern.permute.xlu0 0
        %6072 = vperm.xlu0 %6071, %v6042
        %v6073 = vpop.permute.xlu0 %6072
        %6076 = vset.pattern.permute.xlu0 0
        %6077 = vperm.xlu0 %6076, %v6043
        %v6078 = vpop.permute.xlu0 %6077
        %6081 = vset.pattern.permute.xlu0 0
        %6082 = vperm.xlu0 %6081, %v6044
        %v6083 = vpop.permute.xlu0 %6082
        %6086 = vset.pattern.permute.xlu0 0
        %6087 = vperm.xlu0 %6086, %v6045
        %v6088 = vpop.permute.xlu0 %6087
        %6091 = vset.pattern.permute.xlu0 0
        %6092 = vperm.xlu0 %6091, %v6046
        %v6093 = vpop.permute.xlu0 %6092
        %6096 = vset.pattern.permute.xlu0 0
        %6097 = vperm.xlu0 %6096, %v6047
        %v6098 = vpop.permute.xlu0 %6097
        %6101 = vset.pattern.permute.xlu0 0
        %6102 = vperm.xlu0 %6101, %v6048
        %v6103 = vpop.permute.xlu0 %6102
        %6106 = vset.pattern.permute.xlu0 0
        %6107 = vperm.xlu0 %6106, %v6049
        %v6108 = vpop.permute.xlu0 %6107
        %6111 = vset.pattern.permute.xlu0 0
        %6112 = vperm.xlu0 %6111, %v6050
        %v6113 = vpop.permute.xlu0 %6112
        %6116 = vset.pattern.permute.xlu0 0
        %6117 = vperm.xlu0 %6116, %v6051
        %v6118 = vpop.permute.xlu0 %6117
        %6121 = vset.pattern.permute.xlu0 0
        %6122 = vperm.xlu0 %6121, %v6052
        %v6123 = vpop.permute.xlu0 %6122
        %6126 = vset.pattern.permute.xlu0 0
        %6127 = vperm.xlu0 %6126, %v6053
        %v6128 = vpop.permute.xlu0 %6127
        %6131 = vset.pattern.permute.xlu0 0
        %6132 = vperm.xlu0 %6131, %v6054
        %v6133 = vpop.permute.xlu0 %6132
        %v6135 = vmul.f32 %v6022, %v6058
        %v6136 = vmul.f32 %v6023, %v6063
        %v6137 = vmul.f32 %v6024, %v6068
        %v6138 = vmul.f32 %v6025, %v6073
        %v6139 = vmul.f32 %v6026, %v6078
        %v6140 = vmul.f32 %v6027, %v6083
        %v6141 = vmul.f32 %v6028, %v6088
        %v6142 = vmul.f32 %v6029, %v6093
        %v6143 = vmul.f32 %v6030, %v6098
        %v6144 = vmul.f32 %v6031, %v6103
        %v6145 = vmul.f32 %v6032, %v6108
        %v6146 = vmul.f32 %v6033, %v6113
        %v6147 = vmul.f32 %v6034, %v6118
        %v6148 = vmul.f32 %v6035, %v6123
        %v6149 = vmul.f32 %v6036, %v6128
        %v6150 = vmul.f32 %v6037, %v6133
        %v6151 = vadd.f32 %v6135, %v6139
        %v6152 = vadd.f32 %v6136, %v6140
        %v6153 = vadd.f32 %v6137, %v6141
        %v6154 = vadd.f32 %v6138, %v6142
        %v6155 = vadd.f32 %v6151, %v6143
        %v6156 = vadd.f32 %v6152, %v6144
        %v6157 = vadd.f32 %v6153, %v6145
        %v6158 = vadd.f32 %v6154, %v6146
        %v6159 = vadd.f32 %v6155, %v6147
        %v6160 = vadd.f32 %v6156, %v6148
        %v6161 = vadd.f32 %v6157, %v6149
        %v6162 = vadd.f32 %v6158, %v6150
        %v6163 = vld [vmem:[#allocation2] sm:$0xff]
        %v6164 = vld [vmem:[#allocation2 + $0x8] sm:$0xff]
        %v6165 = vld [vmem:[#allocation2 + $0x10] sm:$0xff]
        %v6166 = vld [vmem:[#allocation2 + $0x18] sm:$0xff]
        %v6167 = vadd.f32 %v6163, %v6159
        %v6168 = vadd.f32 %v6164, %v6160
        %v6169 = vadd.f32 %v6165, %v6161
        %v6170 = vadd.f32 %v6166, %v6162
        %6171 = vst [vmem:[#allocation2] sm:$0xff] %v6167
        %6172 = vst [vmem:[#allocation2 + $0x8] sm:$0xff] %v6168
        %6173 = vst [vmem:[#allocation2 + $0x10] sm:$0xff] %v6169
        %6174 = vst [vmem:[#allocation2 + $0x18] sm:$0xff] %v6170
        %s6175 = scalar_lea.vmem %s850, 680 [#allocation3]
        %v6176 = vld [vmem:[%s6175] sm:$0xff]
        %v6177 = vld [vmem:[%s6175 + $0x8] sm:$0xff]
        %v6178 = vld [vmem:[%s6175 + $0x10] sm:$0xff]
        %v6179 = vld [vmem:[%s6175 + $0x18] sm:$0xff]
        %v6180 = vld [vmem:[%s6175 + $0x20] sm:$0x1]
        %v6182 = vsel %vm962, %v6180, 0
        %6184 = vmatprep.subr.mxu0 0.0
        %6185 = vmatpush1.msra.mxu0 0.0
        %6186 = vmatprep.subr.mxu0 0.0
        %6187 = vmatpush1.msra.mxu0 0.0
        %6188 = vmatprep.subr.mxu0 0.0
        %6189 = vmatpush1.msra.mxu0 0.0
        %6190 = vmatprep.subr.mxu0 0.0
        %6191 = vmatpush1.msra.mxu0 0.0
        %6192 = vmatprep.subr.mxu0 0.0
        %6193 = vmatpush1.msra.mxu0 0.0
        %6194 = vmatprep.subr.mxu0 0.0
        %6195 = vmatpush1.msra.mxu0 0.0
        %6196 = vmatprep.subr.mxu0 0.0
        %6197 = vmatpush1.msra.mxu0 0.0
        %6198 = vmatprep.subr.mxu0 0.0
        %6199 = vmatpush1.msra.mxu0 0.0
        %6200 = vmatprep.subr.mxu0 0.0
        %6201 = vmatpush1.msra.mxu0 0.0
        %6202 = vmatprep.subr.mxu0 0.0
        %6203 = vmatpush1.msra.mxu0 0.0
        %6204 = vmatprep.subr.mxu0 0.0
        %6205 = vmatpush1.msra.mxu0 0.0
        %6206 = vmatprep.subr.mxu0 0.0
        %6207 = vmatpush1.msra.mxu0 %v6182
        %6208 = vmatprep.subr.mxu0 0.0
        %6209 = vmatpush1.msra.mxu0 %v6179
        %6210 = vmatprep.subr.mxu0 0.0
        %6211 = vmatpush1.msra.mxu0 %v6178
        %6212 = vmatprep.subr.mxu0 0.0
        %6213 = vmatpush1.msra.mxu0 %v6177
        %6214 = vmatprep.subr.mxu0 0.0
        %6215 = vmatpush1.msra.mxu0 %v6176
        %6216 = vmatprep.subr.mxu0 0.0
        %6217 = vmatpush2.msra.mxu0 0.0
        %6218 = vmatprep.subr.mxu0 0.0
        %6219 = vmatpush2.msra.mxu0 0.0
        %6220 = vmatprep.subr.mxu0 0.0
        %6221 = vmatpush2.msra.mxu0 0.0
        %6222 = vmatprep.subr.mxu0 0.0
        %6223 = vmatpush2.msra.mxu0 0.0
        %6224 = vmatprep.subr.mxu0 0.0
        %6225 = vmatpush2.msra.mxu0 0.0
        %6226 = vmatprep.subr.mxu0 0.0
        %6227 = vmatpush2.msra.mxu0 0.0
        %6228 = vmatprep.subr.mxu0 0.0
        %6229 = vmatpush2.msra.mxu0 0.0
        %6230 = vmatprep.subr.mxu0 0.0
        %6231 = vmatpush2.msra.mxu0 0.0
        %6232 = vmatprep.subr.mxu0 0.0
        %6233 = vmatpush2.msra.mxu0 0.0
        %6234 = vmatprep.subr.mxu0 0.0
        %6235 = vmatpush2.msra.mxu0 0.0
        %6236 = vmatprep.subr.mxu0 0.0
        %6237 = vmatpush2.msra.mxu0 0.0
        %6238 = vmatprep.subr.mxu0 0.0
        %6239 = vmatpush2.msra.mxu0 0.0
        %6240 = vmatprep.subr.mxu0 0.0
        %6241 = vmatpush2.msra.mxu0 0.0
        %6242 = vmatprep.subr.mxu0 0.0
        %6243 = vmatpush2.msra.mxu0 0.0
        %6244 = vmatprep.subr.mxu0 0.0
        %6245 = vmatpush2.msra.mxu0 0.0
        %6246 = vmatprep.subr.mxu0 0.0
        %6247 = vmatpush2.msra.mxu0 0.0
        %6248 = vmatprep.mubr.f32.mxu0 0.0
        %6249 = vmatmul.mubr.f32.gmra.mxu0 %v915
        %v6250 = vpop.f32.mrf.mxu0
        %v6251 = vadd.f32 0.0, %v6250
        %v6252 = vpop.f32.mrf.mxu0
        %6253 = vmatprep.mubr.f32.mxu0 0.0
        %6254 = vmatmul.mubr.f32.gmra.mxu0 %v918
        %v6255 = vpop.f32.mrf.mxu0
        %v6256 = vadd.f32 0.0, %v6255
        %v6257 = vpop.f32.mrf.mxu0
        %6258 = vmatprep.mubr.f32.mxu0 0.0
        %6259 = vmatmul.mubr.f32.gmra.mxu0 %v921
        %v6260 = vpop.f32.mrf.mxu0
        %v6261 = vadd.f32 0.0, %v6260
        %v6262 = vpop.f32.mrf.mxu0
        %6263 = vmatprep.mubr.f32.mxu0 0.0
        %6264 = vmatmul.mubr.f32.gmra.mxu0 %v924
        %v6265 = vpop.f32.mrf.mxu0
        %v6266 = vadd.f32 0.0, %v6265
        %v6267 = vpop.f32.mrf.mxu0
        %6268 = vmatprep.mubr.f32.mxu0 0.0
        %6269 = vmatmul.mubr.f32.gmra.mxu0 %v927
        %v6270 = vpop.f32.mrf.mxu0
        %v6271 = vadd.f32 0.0, %v6270
        %v6272 = vpop.f32.mrf.mxu0
        %6273 = vmatprep.mubr.f32.mxu0 0.0
        %6274 = vmatmul.mubr.f32.gmra.mxu0 %v930
        %v6275 = vpop.f32.mrf.mxu0
        %v6276 = vadd.f32 0.0, %v6275
        %v6277 = vpop.f32.mrf.mxu0
        %6278 = vmatprep.mubr.f32.mxu0 0.0
        %6279 = vmatmul.mubr.f32.gmra.mxu0 %v933
        %v6280 = vpop.f32.mrf.mxu0
        %v6281 = vadd.f32 0.0, %v6280
        %v6282 = vpop.f32.mrf.mxu0
        %6283 = vmatprep.mubr.f32.mxu0 0.0
        %6284 = vmatmul.mubr.f32.gmra.mxu0 %v936
        %v6285 = vpop.f32.mrf.mxu0
        %v6286 = vadd.f32 0.0, %v6285
        %v6287 = vpop.f32.mrf.mxu0
        %6288 = vmatprep.mubr.f32.mxu0 0.0
        %6289 = vmatmul.mubr.f32.gmra.mxu0 %v939
        %v6290 = vpop.f32.mrf.mxu0
        %v6291 = vadd.f32 0.0, %v6290
        %v6292 = vpop.f32.mrf.mxu0
        %6293 = vmatprep.mubr.f32.mxu0 0.0
        %6294 = vmatmul.mubr.f32.gmra.mxu0 %v942
        %v6295 = vpop.f32.mrf.mxu0
        %v6296 = vadd.f32 0.0, %v6295
        %v6297 = vpop.f32.mrf.mxu0
        %6298 = vmatprep.mubr.f32.mxu0 0.0
        %6299 = vmatmul.mubr.f32.gmra.mxu0 %v945
        %v6300 = vpop.f32.mrf.mxu0
        %v6301 = vadd.f32 0.0, %v6300
        %v6302 = vpop.f32.mrf.mxu0
        %6303 = vmatprep.mubr.f32.mxu0 0.0
        %6304 = vmatmul.mubr.f32.gmra.mxu0 %v948
        %v6305 = vpop.f32.mrf.mxu0
        %v6306 = vadd.f32 0.0, %v6305
        %v6307 = vpop.f32.mrf.mxu0
        %6308 = vmatprep.mubr.f32.mxu0 0.0
        %6309 = vmatmul.mubr.f32.gmra.mxu0 %v951
        %v6310 = vpop.f32.mrf.mxu0
        %v6311 = vadd.f32 0.0, %v6310
        %v6312 = vpop.f32.mrf.mxu0
        %6313 = vmatprep.mubr.f32.mxu0 0.0
        %6314 = vmatmul.mubr.f32.gmra.mxu0 %v954
        %v6315 = vpop.f32.mrf.mxu0
        %v6316 = vadd.f32 0.0, %v6315
        %v6317 = vpop.f32.mrf.mxu0
        %6318 = vmatprep.mubr.f32.mxu0 0.0
        %6319 = vmatmul.mubr.f32.gmra.mxu0 %v957
        %v6320 = vpop.f32.mrf.mxu0
        %v6321 = vadd.f32 0.0, %v6320
        %v6322 = vpop.f32.mrf.mxu0
        %6323 = vmatprep.mubr.f32.mxu0 0.0
        %6324 = vmatmul.mubr.f32.gmra.mxu0 %v960
        %v6325 = vpop.f32.mrf.mxu0
        %v6326 = vadd.f32 0.0, %v6325
        %v6327 = vpop.f32.mrf.mxu0
        %6328 = vdwg.mxu0
        %v6329 = vmax.f32 %v6251, 0.0
        %v6330 = vmax.f32 %v6256, 0.0
        %v6331 = vmax.f32 %v6261, 0.0
        %v6332 = vmax.f32 %v6266, 0.0
        %v6333 = vmax.f32 %v6271, 0.0
        %v6334 = vmax.f32 %v6276, 0.0
        %v6335 = vmax.f32 %v6281, 0.0
        %v6336 = vmax.f32 %v6286, 0.0
        %v6337 = vmax.f32 %v6291, 0.0
        %v6338 = vmax.f32 %v6296, 0.0
        %v6339 = vmax.f32 %v6301, 0.0
        %v6340 = vmax.f32 %v6306, 0.0
        %v6341 = vmax.f32 %v6311, 0.0
        %v6342 = vmax.f32 %v6316, 0.0
        %v6343 = vmax.f32 %v6321, 0.0
        %v6344 = vmax.f32 %v6326, 0.0
        %s6345 = scalar_lea.vmem %s2, 2176
        %v6346 = vld [vmem:[%s6345] sm:$0xff]
        %v6347 = vld [vmem:[%s6345 + $0x8] sm:$0xff]
        %v6348 = vld [vmem:[%s6345 + $0x10] sm:$0xff]
        %v6349 = vld [vmem:[%s6345 + $0x18] sm:$0xff]
        %v6350 = vld [vmem:[%s6345 + $0x20] sm:$0xff]
        %v6351 = vld [vmem:[%s6345 + $0x28] sm:$0xff]
        %v6352 = vld [vmem:[%s6345 + $0x30] sm:$0xff]
        %v6353 = vld [vmem:[%s6345 + $0x38] sm:$0xff]
        %v6354 = vld [vmem:[%s6345 + $0x40] sm:$0xff]
        %v6355 = vld [vmem:[%s6345 + $0x48] sm:$0xff]
        %v6356 = vld [vmem:[%s6345 + $0x50] sm:$0xff]
        %v6357 = vld [vmem:[%s6345 + $0x58] sm:$0xff]
        %v6358 = vld [vmem:[%s6345 + $0x60] sm:$0xff]
        %v6359 = vld [vmem:[%s6345 + $0x68] sm:$0xff]
        %v6360 = vld [vmem:[%s6345 + $0x70] sm:$0xff]
        %v6361 = vld [vmem:[%s6345 + $0x78] sm:$0xff]
        %6363 = vset.pattern.permute.xlu0 0
        %6364 = vperm.xlu0 %6363, %v6346
        %v6365 = vpop.permute.xlu0 %6364
        %6368 = vset.pattern.permute.xlu0 0
        %6369 = vperm.xlu0 %6368, %v6347
        %v6370 = vpop.permute.xlu0 %6369
        %6373 = vset.pattern.permute.xlu0 0
        %6374 = vperm.xlu0 %6373, %v6348
        %v6375 = vpop.permute.xlu0 %6374
        %6378 = vset.pattern.permute.xlu0 0
        %6379 = vperm.xlu0 %6378, %v6349
        %v6380 = vpop.permute.xlu0 %6379
        %6383 = vset.pattern.permute.xlu0 0
        %6384 = vperm.xlu0 %6383, %v6350
        %v6385 = vpop.permute.xlu0 %6384
        %6388 = vset.pattern.permute.xlu0 0
        %6389 = vperm.xlu0 %6388, %v6351
        %v6390 = vpop.permute.xlu0 %6389
        %6393 = vset.pattern.permute.xlu0 0
        %6394 = vperm.xlu0 %6393, %v6352
        %v6395 = vpop.permute.xlu0 %6394
        %6398 = vset.pattern.permute.xlu0 0
        %6399 = vperm.xlu0 %6398, %v6353
        %v6400 = vpop.permute.xlu0 %6399
        %6403 = vset.pattern.permute.xlu0 0
        %6404 = vperm.xlu0 %6403, %v6354
        %v6405 = vpop.permute.xlu0 %6404
        %6408 = vset.pattern.permute.xlu0 0
        %6409 = vperm.xlu0 %6408, %v6355
        %v6410 = vpop.permute.xlu0 %6409
        %6413 = vset.pattern.permute.xlu0 0
        %6414 = vperm.xlu0 %6413, %v6356
        %v6415 = vpop.permute.xlu0 %6414
        %6418 = vset.pattern.permute.xlu0 0
        %6419 = vperm.xlu0 %6418, %v6357
        %v6420 = vpop.permute.xlu0 %6419
        %6423 = vset.pattern.permute.xlu0 0
        %6424 = vperm.xlu0 %6423, %v6358
        %v6425 = vpop.permute.xlu0 %6424
        %6428 = vset.pattern.permute.xlu0 0
        %6429 = vperm.xlu0 %6428, %v6359
        %v6430 = vpop.permute.xlu0 %6429
        %6433 = vset.pattern.permute.xlu0 0
        %6434 = vperm.xlu0 %6433, %v6360
        %v6435 = vpop.permute.xlu0 %6434
        %6438 = vset.pattern.permute.xlu0 0
        %6439 = vperm.xlu0 %6438, %v6361
        %v6440 = vpop.permute.xlu0 %6439
        %v6442 = vmul.f32 %v6329, %v6365
        %v6443 = vmul.f32 %v6330, %v6370
        %v6444 = vmul.f32 %v6331, %v6375
        %v6445 = vmul.f32 %v6332, %v6380
        %v6446 = vmul.f32 %v6333, %v6385
        %v6447 = vmul.f32 %v6334, %v6390
        %v6448 = vmul.f32 %v6335, %v6395
        %v6449 = vmul.f32 %v6336, %v6400
        %v6450 = vmul.f32 %v6337, %v6405
        %v6451 = vmul.f32 %v6338, %v6410
        %v6452 = vmul.f32 %v6339, %v6415
        %v6453 = vmul.f32 %v6340, %v6420
        %v6454 = vmul.f32 %v6341, %v6425
        %v6455 = vmul.f32 %v6342, %v6430
        %v6456 = vmul.f32 %v6343, %v6435
        %v6457 = vmul.f32 %v6344, %v6440
        %v6458 = vadd.f32 %v6442, %v6446
        %v6459 = vadd.f32 %v6443, %v6447
        %v6460 = vadd.f32 %v6444, %v6448
        %v6461 = vadd.f32 %v6445, %v6449
        %v6462 = vadd.f32 %v6458, %v6450
        %v6463 = vadd.f32 %v6459, %v6451
        %v6464 = vadd.f32 %v6460, %v6452
        %v6465 = vadd.f32 %v6461, %v6453
        %v6466 = vadd.f32 %v6462, %v6454
        %v6467 = vadd.f32 %v6463, %v6455
        %v6468 = vadd.f32 %v6464, %v6456
        %v6469 = vadd.f32 %v6465, %v6457
        %v6470 = vld [vmem:[#allocation2] sm:$0xff]
        %v6471 = vld [vmem:[#allocation2 + $0x8] sm:$0xff]
        %v6472 = vld [vmem:[#allocation2 + $0x10] sm:$0xff]
        %v6473 = vld [vmem:[#allocation2 + $0x18] sm:$0xff]
        %v6474 = vadd.f32 %v6470, %v6466
        %v6475 = vadd.f32 %v6471, %v6467
        %v6476 = vadd.f32 %v6472, %v6468
        %v6477 = vadd.f32 %v6473, %v6469
        %6478 = vst [vmem:[#allocation2] sm:$0xff] %v6474
        %6479 = vst [vmem:[#allocation2 + $0x8] sm:$0xff] %v6475
        %6480 = vst [vmem:[#allocation2 + $0x10] sm:$0xff] %v6476
        %6481 = vst [vmem:[#allocation2 + $0x18] sm:$0xff] %v6477
        %s6482 = scalar_lea.vmem %s850, 720 [#allocation3]
        %v6483 = vld [vmem:[%s6482] sm:$0xff]
        %v6484 = vld [vmem:[%s6482 + $0x8] sm:$0xff]
        %v6485 = vld [vmem:[%s6482 + $0x10] sm:$0xff]
        %v6486 = vld [vmem:[%s6482 + $0x18] sm:$0xff]
        %v6487 = vld [vmem:[%s6482 + $0x20] sm:$0x1]
        %v6489 = vsel %vm962, %v6487, 0
        %6491 = vmatprep.subr.mxu0 0.0
        %6492 = vmatpush1.msra.mxu0 0.0
        %6493 = vmatprep.subr.mxu0 0.0
        %6494 = vmatpush1.msra.mxu0 0.0
        %6495 = vmatprep.subr.mxu0 0.0
        %6496 = vmatpush1.msra.mxu0 0.0
        %6497 = vmatprep.subr.mxu0 0.0
        %6498 = vmatpush1.msra.mxu0 0.0
        %6499 = vmatprep.subr.mxu0 0.0
        %6500 = vmatpush1.msra.mxu0 0.0
        %6501 = vmatprep.subr.mxu0 0.0
        %6502 = vmatpush1.msra.mxu0 0.0
        %6503 = vmatprep.subr.mxu0 0.0
        %6504 = vmatpush1.msra.mxu0 0.0
        %6505 = vmatprep.subr.mxu0 0.0
        %6506 = vmatpush1.msra.mxu0 0.0
        %6507 = vmatprep.subr.mxu0 0.0
        %6508 = vmatpush1.msra.mxu0 0.0
        %6509 = vmatprep.subr.mxu0 0.0
        %6510 = vmatpush1.msra.mxu0 0.0
        %6511 = vmatprep.subr.mxu0 0.0
        %6512 = vmatpush1.msra.mxu0 0.0
        %6513 = vmatprep.subr.mxu0 0.0
        %6514 = vmatpush1.msra.mxu0 %v6489
        %6515 = vmatprep.subr.mxu0 0.0
        %6516 = vmatpush1.msra.mxu0 %v6486
        %6517 = vmatprep.subr.mxu0 0.0
        %6518 = vmatpush1.msra.mxu0 %v6485
        %6519 = vmatprep.subr.mxu0 0.0
        %6520 = vmatpush1.msra.mxu0 %v6484
        %6521 = vmatprep.subr.mxu0 0.0
        %6522 = vmatpush1.msra.mxu0 %v6483
        %6523 = vmatprep.subr.mxu0 0.0
        %6524 = vmatpush2.msra.mxu0 0.0
        %6525 = vmatprep.subr.mxu0 0.0
        %6526 = vmatpush2.msra.mxu0 0.0
        %6527 = vmatprep.subr.mxu0 0.0
        %6528 = vmatpush2.msra.mxu0 0.0
        %6529 = vmatprep.subr.mxu0 0.0
        %6530 = vmatpush2.msra.mxu0 0.0
        %6531 = vmatprep.subr.mxu0 0.0
        %6532 = vmatpush2.msra.mxu0 0.0
        %6533 = vmatprep.subr.mxu0 0.0
        %6534 = vmatpush2.msra.mxu0 0.0
        %6535 = vmatprep.subr.mxu0 0.0
        %6536 = vmatpush2.msra.mxu0 0.0
        %6537 = vmatprep.subr.mxu0 0.0
        %6538 = vmatpush2.msra.mxu0 0.0
        %6539 = vmatprep.subr.mxu0 0.0
        %6540 = vmatpush2.msra.mxu0 0.0
        %6541 = vmatprep.subr.mxu0 0.0
        %6542 = vmatpush2.msra.mxu0 0.0
        %6543 = vmatprep.subr.mxu0 0.0
        %6544 = vmatpush2.msra.mxu0 0.0
        %6545 = vmatprep.subr.mxu0 0.0
        %6546 = vmatpush2.msra.mxu0 0.0
        %6547 = vmatprep.subr.mxu0 0.0
        %6548 = vmatpush2.msra.mxu0 0.0
        %6549 = vmatprep.subr.mxu0 0.0
        %6550 = vmatpush2.msra.mxu0 0.0
        %6551 = vmatprep.subr.mxu0 0.0
        %6552 = vmatpush2.msra.mxu0 0.0
        %6553 = vmatprep.subr.mxu0 0.0
        %6554 = vmatpush2.msra.mxu0 0.0
        %6555 = vmatprep.mubr.f32.mxu0 0.0
        %6556 = vmatmul.mubr.f32.gmra.mxu0 %v915
        %v6557 = vpop.f32.mrf.mxu0
        %v6558 = vadd.f32 0.0, %v6557
        %v6559 = vpop.f32.mrf.mxu0
        %6560 = vmatprep.mubr.f32.mxu0 0.0
        %6561 = vmatmul.mubr.f32.gmra.mxu0 %v918
        %v6562 = vpop.f32.mrf.mxu0
        %v6563 = vadd.f32 0.0, %v6562
        %v6564 = vpop.f32.mrf.mxu0
        %6565 = vmatprep.mubr.f32.mxu0 0.0
        %6566 = vmatmul.mubr.f32.gmra.mxu0 %v921
        %v6567 = vpop.f32.mrf.mxu0
        %v6568 = vadd.f32 0.0, %v6567
        %v6569 = vpop.f32.mrf.mxu0
        %6570 = vmatprep.mubr.f32.mxu0 0.0
        %6571 = vmatmul.mubr.f32.gmra.mxu0 %v924
        %v6572 = vpop.f32.mrf.mxu0
        %v6573 = vadd.f32 0.0, %v6572
        %v6574 = vpop.f32.mrf.mxu0
        %6575 = vmatprep.mubr.f32.mxu0 0.0
        %6576 = vmatmul.mubr.f32.gmra.mxu0 %v927
        %v6577 = vpop.f32.mrf.mxu0
        %v6578 = vadd.f32 0.0, %v6577
        %v6579 = vpop.f32.mrf.mxu0
        %6580 = vmatprep.mubr.f32.mxu0 0.0
        %6581 = vmatmul.mubr.f32.gmra.mxu0 %v930
        %v6582 = vpop.f32.mrf.mxu0
        %v6583 = vadd.f32 0.0, %v6582
        %v6584 = vpop.f32.mrf.mxu0
        %6585 = vmatprep.mubr.f32.mxu0 0.0
        %6586 = vmatmul.mubr.f32.gmra.mxu0 %v933
        %v6587 = vpop.f32.mrf.mxu0
        %v6588 = vadd.f32 0.0, %v6587
        %v6589 = vpop.f32.mrf.mxu0
        %6590 = vmatprep.mubr.f32.mxu0 0.0
        %6591 = vmatmul.mubr.f32.gmra.mxu0 %v936
        %v6592 = vpop.f32.mrf.mxu0
        %v6593 = vadd.f32 0.0, %v6592
        %v6594 = vpop.f32.mrf.mxu0
        %6595 = vmatprep.mubr.f32.mxu0 0.0
        %6596 = vmatmul.mubr.f32.gmra.mxu0 %v939
        %v6597 = vpop.f32.mrf.mxu0
        %v6598 = vadd.f32 0.0, %v6597
        %v6599 = vpop.f32.mrf.mxu0
        %6600 = vmatprep.mubr.f32.mxu0 0.0
        %6601 = vmatmul.mubr.f32.gmra.mxu0 %v942
        %v6602 = vpop.f32.mrf.mxu0
        %v6603 = vadd.f32 0.0, %v6602
        %v6604 = vpop.f32.mrf.mxu0
        %6605 = vmatprep.mubr.f32.mxu0 0.0
        %6606 = vmatmul.mubr.f32.gmra.mxu0 %v945
        %v6607 = vpop.f32.mrf.mxu0
        %v6608 = vadd.f32 0.0, %v6607
        %v6609 = vpop.f32.mrf.mxu0
        %6610 = vmatprep.mubr.f32.mxu0 0.0
        %6611 = vmatmul.mubr.f32.gmra.mxu0 %v948
        %v6612 = vpop.f32.mrf.mxu0
        %v6613 = vadd.f32 0.0, %v6612
        %v6614 = vpop.f32.mrf.mxu0
        %6615 = vmatprep.mubr.f32.mxu0 0.0
        %6616 = vmatmul.mubr.f32.gmra.mxu0 %v951
        %v6617 = vpop.f32.mrf.mxu0
        %v6618 = vadd.f32 0.0, %v6617
        %v6619 = vpop.f32.mrf.mxu0
        %6620 = vmatprep.mubr.f32.mxu0 0.0
        %6621 = vmatmul.mubr.f32.gmra.mxu0 %v954
        %v6622 = vpop.f32.mrf.mxu0
        %v6623 = vadd.f32 0.0, %v6622
        %v6624 = vpop.f32.mrf.mxu0
        %6625 = vmatprep.mubr.f32.mxu0 0.0
        %6626 = vmatmul.mubr.f32.gmra.mxu0 %v957
        %v6627 = vpop.f32.mrf.mxu0
        %v6628 = vadd.f32 0.0, %v6627
        %v6629 = vpop.f32.mrf.mxu0
        %6630 = vmatprep.mubr.f32.mxu0 0.0
        %6631 = vmatmul.mubr.f32.gmra.mxu0 %v960
        %v6632 = vpop.f32.mrf.mxu0
        %v6633 = vadd.f32 0.0, %v6632
        %v6634 = vpop.f32.mrf.mxu0
        %6635 = vdwg.mxu0
        %v6636 = vmax.f32 %v6558, 0.0
        %v6637 = vmax.f32 %v6563, 0.0
        %v6638 = vmax.f32 %v6568, 0.0
        %v6639 = vmax.f32 %v6573, 0.0
        %v6640 = vmax.f32 %v6578, 0.0
        %v6641 = vmax.f32 %v6583, 0.0
        %v6642 = vmax.f32 %v6588, 0.0
        %v6643 = vmax.f32 %v6593, 0.0
        %v6644 = vmax.f32 %v6598, 0.0
        %v6645 = vmax.f32 %v6603, 0.0
        %v6646 = vmax.f32 %v6608, 0.0
        %v6647 = vmax.f32 %v6613, 0.0
        %v6648 = vmax.f32 %v6618, 0.0
        %v6649 = vmax.f32 %v6623, 0.0
        %v6650 = vmax.f32 %v6628, 0.0
        %v6651 = vmax.f32 %v6633, 0.0
        %s6652 = scalar_lea.vmem %s2, 2304
        %v6653 = vld [vmem:[%s6652] sm:$0xff]
        %v6654 = vld [vmem:[%s6652 + $0x8] sm:$0xff]
        %v6655 = vld [vmem:[%s6652 + $0x10] sm:$0xff]
        %v6656 = vld [vmem:[%s6652 + $0x18] sm:$0xff]
        %v6657 = vld [vmem:[%s6652 + $0x20] sm:$0xff]
        %v6658 = vld [vmem:[%s6652 + $0x28] sm:$0xff]
        %v6659 = vld [vmem:[%s6652 + $0x30] sm:$0xff]
        %v6660 = vld [vmem:[%s6652 + $0x38] sm:$0xff]
        %v6661 = vld [vmem:[%s6652 + $0x40] sm:$0xff]
        %v6662 = vld [vmem:[%s6652 + $0x48] sm:$0xff]
        %v6663 = vld [vmem:[%s6652 + $0x50] sm:$0xff]
        %v6664 = vld [vmem:[%s6652 + $0x58] sm:$0xff]
        %v6665 = vld [vmem:[%s6652 + $0x60] sm:$0xff]
        %v6666 = vld [vmem:[%s6652 + $0x68] sm:$0xff]
        %v6667 = vld [vmem:[%s6652 + $0x70] sm:$0xff]
        %v6668 = vld [vmem:[%s6652 + $0x78] sm:$0xff]
        %6670 = vset.pattern.permute.xlu0 0
        %6671 = vperm.xlu0 %6670, %v6653
        %v6672 = vpop.permute.xlu0 %6671
        %6675 = vset.pattern.permute.xlu0 0
        %6676 = vperm.xlu0 %6675, %v6654
        %v6677 = vpop.permute.xlu0 %6676
        %6680 = vset.pattern.permute.xlu0 0
        %6681 = vperm.xlu0 %6680, %v6655
        %v6682 = vpop.permute.xlu0 %6681
        %6685 = vset.pattern.permute.xlu0 0
        %6686 = vperm.xlu0 %6685, %v6656
        %v6687 = vpop.permute.xlu0 %6686
        %6690 = vset.pattern.permute.xlu0 0
        %6691 = vperm.xlu0 %6690, %v6657
        %v6692 = vpop.permute.xlu0 %6691
        %6695 = vset.pattern.permute.xlu0 0
        %6696 = vperm.xlu0 %6695, %v6658
        %v6697 = vpop.permute.xlu0 %6696
        %6700 = vset.pattern.permute.xlu0 0
        %6701 = vperm.xlu0 %6700, %v6659
        %v6702 = vpop.permute.xlu0 %6701
        %6705 = vset.pattern.permute.xlu0 0
        %6706 = vperm.xlu0 %6705, %v6660
        %v6707 = vpop.permute.xlu0 %6706
        %6710 = vset.pattern.permute.xlu0 0
        %6711 = vperm.xlu0 %6710, %v6661
        %v6712 = vpop.permute.xlu0 %6711
        %6715 = vset.pattern.permute.xlu0 0
        %6716 = vperm.xlu0 %6715, %v6662
        %v6717 = vpop.permute.xlu0 %6716
        %6720 = vset.pattern.permute.xlu0 0
        %6721 = vperm.xlu0 %6720, %v6663
        %v6722 = vpop.permute.xlu0 %6721
        %6725 = vset.pattern.permute.xlu0 0
        %6726 = vperm.xlu0 %6725, %v6664
        %v6727 = vpop.permute.xlu0 %6726
        %6730 = vset.pattern.permute.xlu0 0
        %6731 = vperm.xlu0 %6730, %v6665
        %v6732 = vpop.permute.xlu0 %6731
        %6735 = vset.pattern.permute.xlu0 0
        %6736 = vperm.xlu0 %6735, %v6666
        %v6737 = vpop.permute.xlu0 %6736
        %6740 = vset.pattern.permute.xlu0 0
        %6741 = vperm.xlu0 %6740, %v6667
        %v6742 = vpop.permute.xlu0 %6741
        %6745 = vset.pattern.permute.xlu0 0
        %6746 = vperm.xlu0 %6745, %v6668
        %v6747 = vpop.permute.xlu0 %6746
        %v6749 = vmul.f32 %v6636, %v6672
        %v6750 = vmul.f32 %v6637, %v6677
        %v6751 = vmul.f32 %v6638, %v6682
        %v6752 = vmul.f32 %v6639, %v6687
        %v6753 = vmul.f32 %v6640, %v6692
        %v6754 = vmul.f32 %v6641, %v6697
        %v6755 = vmul.f32 %v6642, %v6702
        %v6756 = vmul.f32 %v6643, %v6707
        %v6757 = vmul.f32 %v6644, %v6712
        %v6758 = vmul.f32 %v6645, %v6717
        %v6759 = vmul.f32 %v6646, %v6722
        %v6760 = vmul.f32 %v6647, %v6727
        %v6761 = vmul.f32 %v6648, %v6732
        %v6762 = vmul.f32 %v6649, %v6737
        %v6763 = vmul.f32 %v6650, %v6742
        %v6764 = vmul.f32 %v6651, %v6747
        %v6765 = vadd.f32 %v6749, %v6753
        %v6766 = vadd.f32 %v6750, %v6754
        %v6767 = vadd.f32 %v6751, %v6755
        %v6768 = vadd.f32 %v6752, %v6756
        %v6769 = vadd.f32 %v6765, %v6757
        %v6770 = vadd.f32 %v6766, %v6758
        %v6771 = vadd.f32 %v6767, %v6759
        %v6772 = vadd.f32 %v6768, %v6760
        %v6773 = vadd.f32 %v6769, %v6761
        %v6774 = vadd.f32 %v6770, %v6762
        %v6775 = vadd.f32 %v6771, %v6763
        %v6776 = vadd.f32 %v6772, %v6764
        %v6777 = vld [vmem:[#allocation2] sm:$0xff]
        %v6778 = vld [vmem:[#allocation2 + $0x8] sm:$0xff]
        %v6779 = vld [vmem:[#allocation2 + $0x10] sm:$0xff]
        %v6780 = vld [vmem:[#allocation2 + $0x18] sm:$0xff]
        %v6781 = vadd.f32 %v6777, %v6773
        %v6782 = vadd.f32 %v6778, %v6774
        %v6783 = vadd.f32 %v6779, %v6775
        %v6784 = vadd.f32 %v6780, %v6776
        %6785 = vst [vmem:[#allocation2] sm:$0xff] %v6781
        %6786 = vst [vmem:[#allocation2 + $0x8] sm:$0xff] %v6782
        %6787 = vst [vmem:[#allocation2 + $0x10] sm:$0xff] %v6783
        %6788 = vst [vmem:[#allocation2 + $0x18] sm:$0xff] %v6784
        %s6789 = scalar_lea.vmem %s850, 760 [#allocation3]
        %v6790 = vld [vmem:[%s6789] sm:$0xff]
        %v6791 = vld [vmem:[%s6789 + $0x8] sm:$0xff]
        %v6792 = vld [vmem:[%s6789 + $0x10] sm:$0xff]
        %v6793 = vld [vmem:[%s6789 + $0x18] sm:$0xff]
        %v6794 = vld [vmem:[%s6789 + $0x20] sm:$0x1]
        %v6796 = vsel %vm962, %v6794, 0
        %6798 = vmatprep.subr.mxu0 0.0
        %6799 = vmatpush1.msra.mxu0 0.0
        %6800 = vmatprep.subr.mxu0 0.0
        %6801 = vmatpush1.msra.mxu0 0.0
        %6802 = vmatprep.subr.mxu0 0.0
        %6803 = vmatpush1.msra.mxu0 0.0
        %6804 = vmatprep.subr.mxu0 0.0
        %6805 = vmatpush1.msra.mxu0 0.0
        %6806 = vmatprep.subr.mxu0 0.0
        %6807 = vmatpush1.msra.mxu0 0.0
        %6808 = vmatprep.subr.mxu0 0.0
        %6809 = vmatpush1.msra.mxu0 0.0
        %6810 = vmatprep.subr.mxu0 0.0
        %6811 = vmatpush1.msra.mxu0 0.0
        %6812 = vmatprep.subr.mxu0 0.0
        %6813 = vmatpush1.msra.mxu0 0.0
        %6814 = vmatprep.subr.mxu0 0.0
        %6815 = vmatpush1.msra.mxu0 0.0
        %6816 = vmatprep.subr.mxu0 0.0
        %6817 = vmatpush1.msra.mxu0 0.0
        %6818 = vmatprep.subr.mxu0 0.0
        %6819 = vmatpush1.msra.mxu0 0.0
        %6820 = vmatprep.subr.mxu0 0.0
        %6821 = vmatpush1.msra.mxu0 %v6796
        %6822 = vmatprep.subr.mxu0 0.0
        %6823 = vmatpush1.msra.mxu0 %v6793
        %6824 = vmatprep.subr.mxu0 0.0
        %6825 = vmatpush1.msra.mxu0 %v6792
        %6826 = vmatprep.subr.mxu0 0.0
        %6827 = vmatpush1.msra.mxu0 %v6791
        %6828 = vmatprep.subr.mxu0 0.0
        %6829 = vmatpush1.msra.mxu0 %v6790
        %6830 = vmatprep.subr.mxu0 0.0
        %6831 = vmatpush2.msra.mxu0 0.0
        %6832 = vmatprep.subr.mxu0 0.0
        %6833 = vmatpush2.msra.mxu0 0.0
        %6834 = vmatprep.subr.mxu0 0.0
        %6835 = vmatpush2.msra.mxu0 0.0
        %6836 = vmatprep.subr.mxu0 0.0
        %6837 = vmatpush2.msra.mxu0 0.0
        %6838 = vmatprep.subr.mxu0 0.0
        %6839 = vmatpush2.msra.mxu0 0.0
        %6840 = vmatprep.subr.mxu0 0.0
        %6841 = vmatpush2.msra.mxu0 0.0
        %6842 = vmatprep.subr.mxu0 0.0
        %6843 = vmatpush2.msra.mxu0 0.0
        %6844 = vmatprep.subr.mxu0 0.0
        %6845 = vmatpush2.msra.mxu0 0.0
        %6846 = vmatprep.subr.mxu0 0.0
        %6847 = vmatpush2.msra.mxu0 0.0
        %6848 = vmatprep.subr.mxu0 0.0
        %6849 = vmatpush2.msra.mxu0 0.0
        %6850 = vmatprep.subr.mxu0 0.0
        %6851 = vmatpush2.msra.mxu0 0.0
        %6852 = vmatprep.subr.mxu0 0.0
        %6853 = vmatpush2.msra.mxu0 0.0
        %6854 = vmatprep.subr.mxu0 0.0
        %6855 = vmatpush2.msra.mxu0 0.0
        %6856 = vmatprep.subr.mxu0 0.0
        %6857 = vmatpush2.msra.mxu0 0.0
        %6858 = vmatprep.subr.mxu0 0.0
        %6859 = vmatpush2.msra.mxu0 0.0
        %6860 = vmatprep.subr.mxu0 0.0
        %6861 = vmatpush2.msra.mxu0 0.0
        %6862 = vmatprep.mubr.f32.mxu0 0.0
        %6863 = vmatmul.mubr.f32.gmra.mxu0 %v915
        %v6864 = vpop.f32.mrf.mxu0
        %v6865 = vadd.f32 0.0, %v6864
        %v6866 = vpop.f32.mrf.mxu0
        %6867 = vmatprep.mubr.f32.mxu0 0.0
        %6868 = vmatmul.mubr.f32.gmra.mxu0 %v918
        %v6869 = vpop.f32.mrf.mxu0
        %v6870 = vadd.f32 0.0, %v6869
        %v6871 = vpop.f32.mrf.mxu0
        %6872 = vmatprep.mubr.f32.mxu0 0.0
        %6873 = vmatmul.mubr.f32.gmra.mxu0 %v921
        %v6874 = vpop.f32.mrf.mxu0
        %v6875 = vadd.f32 0.0, %v6874
        %v6876 = vpop.f32.mrf.mxu0
        %6877 = vmatprep.mubr.f32.mxu0 0.0
        %6878 = vmatmul.mubr.f32.gmra.mxu0 %v924
        %v6879 = vpop.f32.mrf.mxu0
        %v6880 = vadd.f32 0.0, %v6879
        %v6881 = vpop.f32.mrf.mxu0
        %6882 = vmatprep.mubr.f32.mxu0 0.0
        %6883 = vmatmul.mubr.f32.gmra.mxu0 %v927
        %v6884 = vpop.f32.mrf.mxu0
        %v6885 = vadd.f32 0.0, %v6884
        %v6886 = vpop.f32.mrf.mxu0
        %6887 = vmatprep.mubr.f32.mxu0 0.0
        %6888 = vmatmul.mubr.f32.gmra.mxu0 %v930
        %v6889 = vpop.f32.mrf.mxu0
        %v6890 = vadd.f32 0.0, %v6889
        %v6891 = vpop.f32.mrf.mxu0
        %6892 = vmatprep.mubr.f32.mxu0 0.0
        %6893 = vmatmul.mubr.f32.gmra.mxu0 %v933
        %v6894 = vpop.f32.mrf.mxu0
        %v6895 = vadd.f32 0.0, %v6894
        %v6896 = vpop.f32.mrf.mxu0
        %6897 = vmatprep.mubr.f32.mxu0 0.0
        %6898 = vmatmul.mubr.f32.gmra.mxu0 %v936
        %v6899 = vpop.f32.mrf.mxu0
        %v6900 = vadd.f32 0.0, %v6899
        %v6901 = vpop.f32.mrf.mxu0
        %6902 = vmatprep.mubr.f32.mxu0 0.0
        %6903 = vmatmul.mubr.f32.gmra.mxu0 %v939
        %v6904 = vpop.f32.mrf.mxu0
        %v6905 = vadd.f32 0.0, %v6904
        %v6906 = vpop.f32.mrf.mxu0
        %6907 = vmatprep.mubr.f32.mxu0 0.0
        %6908 = vmatmul.mubr.f32.gmra.mxu0 %v942
        %v6909 = vpop.f32.mrf.mxu0
        %v6910 = vadd.f32 0.0, %v6909
        %v6911 = vpop.f32.mrf.mxu0
        %6912 = vmatprep.mubr.f32.mxu0 0.0
        %6913 = vmatmul.mubr.f32.gmra.mxu0 %v945
        %v6914 = vpop.f32.mrf.mxu0
        %v6915 = vadd.f32 0.0, %v6914
        %v6916 = vpop.f32.mrf.mxu0
        %6917 = vmatprep.mubr.f32.mxu0 0.0
        %6918 = vmatmul.mubr.f32.gmra.mxu0 %v948
        %v6919 = vpop.f32.mrf.mxu0
        %v6920 = vadd.f32 0.0, %v6919
        %v6921 = vpop.f32.mrf.mxu0
        %6922 = vmatprep.mubr.f32.mxu0 0.0
        %6923 = vmatmul.mubr.f32.gmra.mxu0 %v951
        %v6924 = vpop.f32.mrf.mxu0
        %v6925 = vadd.f32 0.0, %v6924
        %v6926 = vpop.f32.mrf.mxu0
        %6927 = vmatprep.mubr.f32.mxu0 0.0
        %6928 = vmatmul.mubr.f32.gmra.mxu0 %v954
        %v6929 = vpop.f32.mrf.mxu0
        %v6930 = vadd.f32 0.0, %v6929
        %v6931 = vpop.f32.mrf.mxu0
        %6932 = vmatprep.mubr.f32.mxu0 0.0
        %6933 = vmatmul.mubr.f32.gmra.mxu0 %v957
        %v6934 = vpop.f32.mrf.mxu0
        %v6935 = vadd.f32 0.0, %v6934
        %v6936 = vpop.f32.mrf.mxu0
        %6937 = vmatprep.mubr.f32.mxu0 0.0
        %6938 = vmatmul.mubr.f32.gmra.mxu0 %v960
        %v6939 = vpop.f32.mrf.mxu0
        %v6940 = vadd.f32 0.0, %v6939
        %v6941 = vpop.f32.mrf.mxu0
        %6942 = vdwg.mxu0
        %v6943 = vmax.f32 %v6865, 0.0
        %v6944 = vmax.f32 %v6870, 0.0
        %v6945 = vmax.f32 %v6875, 0.0
        %v6946 = vmax.f32 %v6880, 0.0
        %v6947 = vmax.f32 %v6885, 0.0
        %v6948 = vmax.f32 %v6890, 0.0
        %v6949 = vmax.f32 %v6895, 0.0
        %v6950 = vmax.f32 %v6900, 0.0
        %v6951 = vmax.f32 %v6905, 0.0
        %v6952 = vmax.f32 %v6910, 0.0
        %v6953 = vmax.f32 %v6915, 0.0
        %v6954 = vmax.f32 %v6920, 0.0
        %v6955 = vmax.f32 %v6925, 0.0
        %v6956 = vmax.f32 %v6930, 0.0
        %v6957 = vmax.f32 %v6935, 0.0
        %v6958 = vmax.f32 %v6940, 0.0
        %s6959 = scalar_lea.vmem %s2, 2432
        %v6960 = vld [vmem:[%s6959] sm:$0xff]
        %v6961 = vld [vmem:[%s6959 + $0x8] sm:$0xff]
        %v6962 = vld [vmem:[%s6959 + $0x10] sm:$0xff]
        %v6963 = vld [vmem:[%s6959 + $0x18] sm:$0xff]
        %v6964 = vld [vmem:[%s6959 + $0x20] sm:$0xff]
        %v6965 = vld [vmem:[%s6959 + $0x28] sm:$0xff]
        %v6966 = vld [vmem:[%s6959 + $0x30] sm:$0xff]
        %v6967 = vld [vmem:[%s6959 + $0x38] sm:$0xff]
        %v6968 = vld [vmem:[%s6959 + $0x40] sm:$0xff]
        %v6969 = vld [vmem:[%s6959 + $0x48] sm:$0xff]
        %v6970 = vld [vmem:[%s6959 + $0x50] sm:$0xff]
        %v6971 = vld [vmem:[%s6959 + $0x58] sm:$0xff]
        %v6972 = vld [vmem:[%s6959 + $0x60] sm:$0xff]
        %v6973 = vld [vmem:[%s6959 + $0x68] sm:$0xff]
        %v6974 = vld [vmem:[%s6959 + $0x70] sm:$0xff]
        %v6975 = vld [vmem:[%s6959 + $0x78] sm:$0xff]
        %6977 = vset.pattern.permute.xlu0 0
        %6978 = vperm.xlu0 %6977, %v6960
        %v6979 = vpop.permute.xlu0 %6978
        %6982 = vset.pattern.permute.xlu0 0
        %6983 = vperm.xlu0 %6982, %v6961
        %v6984 = vpop.permute.xlu0 %6983
        %6987 = vset.pattern.permute.xlu0 0
        %6988 = vperm.xlu0 %6987, %v6962
        %v6989 = vpop.permute.xlu0 %6988
        %6992 = vset.pattern.permute.xlu0 0
        %6993 = vperm.xlu0 %6992, %v6963
        %v6994 = vpop.permute.xlu0 %6993
        %6997 = vset.pattern.permute.xlu0 0
        %6998 = vperm.xlu0 %6997, %v6964
        %v6999 = vpop.permute.xlu0 %6998
        %7002 = vset.pattern.permute.xlu0 0
        %7003 = vperm.xlu0 %7002, %v6965
        %v7004 = vpop.permute.xlu0 %7003
        %7007 = vset.pattern.permute.xlu0 0
        %7008 = vperm.xlu0 %7007, %v6966
        %v7009 = vpop.permute.xlu0 %7008
        %7012 = vset.pattern.permute.xlu0 0
        %7013 = vperm.xlu0 %7012, %v6967
        %v7014 = vpop.permute.xlu0 %7013
        %7017 = vset.pattern.permute.xlu0 0
        %7018 = vperm.xlu0 %7017, %v6968
        %v7019 = vpop.permute.xlu0 %7018
        %7022 = vset.pattern.permute.xlu0 0
        %7023 = vperm.xlu0 %7022, %v6969
        %v7024 = vpop.permute.xlu0 %7023
        %7027 = vset.pattern.permute.xlu0 0
        %7028 = vperm.xlu0 %7027, %v6970
        %v7029 = vpop.permute.xlu0 %7028
        %7032 = vset.pattern.permute.xlu0 0
        %7033 = vperm.xlu0 %7032, %v6971
        %v7034 = vpop.permute.xlu0 %7033
        %7037 = vset.pattern.permute.xlu0 0
        %7038 = vperm.xlu0 %7037, %v6972
        %v7039 = vpop.permute.xlu0 %7038
        %7042 = vset.pattern.permute.xlu0 0
        %7043 = vperm.xlu0 %7042, %v6973
        %v7044 = vpop.permute.xlu0 %7043
        %7047 = vset.pattern.permute.xlu0 0
        %7048 = vperm.xlu0 %7047, %v6974
        %v7049 = vpop.permute.xlu0 %7048
        %7052 = vset.pattern.permute.xlu0 0
        %7053 = vperm.xlu0 %7052, %v6975
        %v7054 = vpop.permute.xlu0 %7053
        %v7056 = vmul.f32 %v6943, %v6979
        %v7057 = vmul.f32 %v6944, %v6984
        %v7058 = vmul.f32 %v6945, %v6989
        %v7059 = vmul.f32 %v6946, %v6994
        %v7060 = vmul.f32 %v6947, %v6999
        %v7061 = vmul.f32 %v6948, %v7004
        %v7062 = vmul.f32 %v6949, %v7009
        %v7063 = vmul.f32 %v6950, %v7014
        %v7064 = vmul.f32 %v6951, %v7019
        %v7065 = vmul.f32 %v6952, %v7024
        %v7066 = vmul.f32 %v6953, %v7029
        %v7067 = vmul.f32 %v6954, %v7034
        %v7068 = vmul.f32 %v6955, %v7039
        %v7069 = vmul.f32 %v6956, %v7044
        %v7070 = vmul.f32 %v6957, %v7049
        %v7071 = vmul.f32 %v6958, %v7054
        %v7072 = vadd.f32 %v7056, %v7060
        %v7073 = vadd.f32 %v7057, %v7061
        %v7074 = vadd.f32 %v7058, %v7062
        %v7075 = vadd.f32 %v7059, %v7063
        %v7076 = vadd.f32 %v7072, %v7064
        %v7077 = vadd.f32 %v7073, %v7065
        %v7078 = vadd.f32 %v7074, %v7066
        %v7079 = vadd.f32 %v7075, %v7067
        %v7080 = vadd.f32 %v7076, %v7068
        %v7081 = vadd.f32 %v7077, %v7069
        %v7082 = vadd.f32 %v7078, %v7070
        %v7083 = vadd.f32 %v7079, %v7071
        %v7084 = vld [vmem:[#allocation2] sm:$0xff]
        %v7085 = vld [vmem:[#allocation2 + $0x8] sm:$0xff]
        %v7086 = vld [vmem:[#allocation2 + $0x10] sm:$0xff]
        %v7087 = vld [vmem:[#allocation2 + $0x18] sm:$0xff]
        %v7088 = vadd.f32 %v7084, %v7080
        %v7089 = vadd.f32 %v7085, %v7081
        %v7090 = vadd.f32 %v7086, %v7082
        %v7091 = vadd.f32 %v7087, %v7083
        %7092 = vst [vmem:[#allocation2] sm:$0xff] %v7088
        %7093 = vst [vmem:[#allocation2 + $0x8] sm:$0xff] %v7089
        %7094 = vst [vmem:[#allocation2 + $0x10] sm:$0xff] %v7090
        %7095 = vst [vmem:[#allocation2 + $0x18] sm:$0xff] %v7091
        %s7096 = scalar_lea.vmem %s850, 800 [#allocation3]
        %v7097 = vld [vmem:[%s7096] sm:$0xff]
        %v7098 = vld [vmem:[%s7096 + $0x8] sm:$0xff]
        %v7099 = vld [vmem:[%s7096 + $0x10] sm:$0xff]
        %v7100 = vld [vmem:[%s7096 + $0x18] sm:$0xff]
        %v7101 = vld [vmem:[%s7096 + $0x20] sm:$0x1]
        %v7103 = vsel %vm962, %v7101, 0
        %7105 = vmatprep.subr.mxu0 0.0
        %7106 = vmatpush1.msra.mxu0 0.0
        %7107 = vmatprep.subr.mxu0 0.0
        %7108 = vmatpush1.msra.mxu0 0.0
        %7109 = vmatprep.subr.mxu0 0.0
        %7110 = vmatpush1.msra.mxu0 0.0
        %7111 = vmatprep.subr.mxu0 0.0
        %7112 = vmatpush1.msra.mxu0 0.0
        %7113 = vmatprep.subr.mxu0 0.0
        %7114 = vmatpush1.msra.mxu0 0.0
        %7115 = vmatprep.subr.mxu0 0.0
        %7116 = vmatpush1.msra.mxu0 0.0
        %7117 = vmatprep.subr.mxu0 0.0
        %7118 = vmatpush1.msra.mxu0 0.0
        %7119 = vmatprep.subr.mxu0 0.0
        %7120 = vmatpush1.msra.mxu0 0.0
        %7121 = vmatprep.subr.mxu0 0.0
        %7122 = vmatpush1.msra.mxu0 0.0
        %7123 = vmatprep.subr.mxu0 0.0
        %7124 = vmatpush1.msra.mxu0 0.0
        %7125 = vmatprep.subr.mxu0 0.0
        %7126 = vmatpush1.msra.mxu0 0.0
        %7127 = vmatprep.subr.mxu0 0.0
        %7128 = vmatpush1.msra.mxu0 %v7103
        %7129 = vmatprep.subr.mxu0 0.0
        %7130 = vmatpush1.msra.mxu0 %v7100
        %7131 = vmatprep.subr.mxu0 0.0
        %7132 = vmatpush1.msra.mxu0 %v7099
        %7133 = vmatprep.subr.mxu0 0.0
        %7134 = vmatpush1.msra.mxu0 %v7098
        %7135 = vmatprep.subr.mxu0 0.0
        %7136 = vmatpush1.msra.mxu0 %v7097
        %7137 = vmatprep.subr.mxu0 0.0
        %7138 = vmatpush2.msra.mxu0 0.0
        %7139 = vmatprep.subr.mxu0 0.0
        %7140 = vmatpush2.msra.mxu0 0.0
        %7141 = vmatprep.subr.mxu0 0.0
        %7142 = vmatpush2.msra.mxu0 0.0
        %7143 = vmatprep.subr.mxu0 0.0
        %7144 = vmatpush2.msra.mxu0 0.0
        %7145 = vmatprep.subr.mxu0 0.0
        %7146 = vmatpush2.msra.mxu0 0.0
        %7147 = vmatprep.subr.mxu0 0.0
        %7148 = vmatpush2.msra.mxu0 0.0
        %7149 = vmatprep.subr.mxu0 0.0
        %7150 = vmatpush2.msra.mxu0 0.0
        %7151 = vmatprep.subr.mxu0 0.0
        %7152 = vmatpush2.msra.mxu0 0.0
        %7153 = vmatprep.subr.mxu0 0.0
        %7154 = vmatpush2.msra.mxu0 0.0
        %7155 = vmatprep.subr.mxu0 0.0
        %7156 = vmatpush2.msra.mxu0 0.0
        %7157 = vmatprep.subr.mxu0 0.0
        %7158 = vmatpush2.msra.mxu0 0.0
        %7159 = vmatprep.subr.mxu0 0.0
        %7160 = vmatpush2.msra.mxu0 0.0
        %7161 = vmatprep.subr.mxu0 0.0
        %7162 = vmatpush2.msra.mxu0 0.0
        %7163 = vmatprep.subr.mxu0 0.0
        %7164 = vmatpush2.msra.mxu0 0.0
        %7165 = vmatprep.subr.mxu0 0.0
        %7166 = vmatpush2.msra.mxu0 0.0
        %7167 = vmatprep.subr.mxu0 0.0
        %7168 = vmatpush2.msra.mxu0 0.0
        %7169 = vmatprep.mubr.f32.mxu0 0.0
        %7170 = vmatmul.mubr.f32.gmra.mxu0 %v915
        %v7171 = vpop.f32.mrf.mxu0
        %v7172 = vadd.f32 0.0, %v7171
        %v7173 = vpop.f32.mrf.mxu0
        %7174 = vmatprep.mubr.f32.mxu0 0.0
        %7175 = vmatmul.mubr.f32.gmra.mxu0 %v918
        %v7176 = vpop.f32.mrf.mxu0
        %v7177 = vadd.f32 0.0, %v7176
        %v7178 = vpop.f32.mrf.mxu0
        %7179 = vmatprep.mubr.f32.mxu0 0.0
        %7180 = vmatmul.mubr.f32.gmra.mxu0 %v921
        %v7181 = vpop.f32.mrf.mxu0
        %v7182 = vadd.f32 0.0, %v7181
        %v7183 = vpop.f32.mrf.mxu0
        %7184 = vmatprep.mubr.f32.mxu0 0.0
        %7185 = vmatmul.mubr.f32.gmra.mxu0 %v924
        %v7186 = vpop.f32.mrf.mxu0
        %v7187 = vadd.f32 0.0, %v7186
        %v7188 = vpop.f32.mrf.mxu0
        %7189 = vmatprep.mubr.f32.mxu0 0.0
        %7190 = vmatmul.mubr.f32.gmra.mxu0 %v927
        %v7191 = vpop.f32.mrf.mxu0
        %v7192 = vadd.f32 0.0, %v7191
        %v7193 = vpop.f32.mrf.mxu0
        %7194 = vmatprep.mubr.f32.mxu0 0.0
        %7195 = vmatmul.mubr.f32.gmra.mxu0 %v930
        %v7196 = vpop.f32.mrf.mxu0
        %v7197 = vadd.f32 0.0, %v7196
        %v7198 = vpop.f32.mrf.mxu0
        %7199 = vmatprep.mubr.f32.mxu0 0.0
        %7200 = vmatmul.mubr.f32.gmra.mxu0 %v933
        %v7201 = vpop.f32.mrf.mxu0
        %v7202 = vadd.f32 0.0, %v7201
        %v7203 = vpop.f32.mrf.mxu0
        %7204 = vmatprep.mubr.f32.mxu0 0.0
        %7205 = vmatmul.mubr.f32.gmra.mxu0 %v936
        %v7206 = vpop.f32.mrf.mxu0
        %v7207 = vadd.f32 0.0, %v7206
        %v7208 = vpop.f32.mrf.mxu0
        %7209 = vmatprep.mubr.f32.mxu0 0.0
        %7210 = vmatmul.mubr.f32.gmra.mxu0 %v939
        %v7211 = vpop.f32.mrf.mxu0
        %v7212 = vadd.f32 0.0, %v7211
        %v7213 = vpop.f32.mrf.mxu0
        %7214 = vmatprep.mubr.f32.mxu0 0.0
        %7215 = vmatmul.mubr.f32.gmra.mxu0 %v942
        %v7216 = vpop.f32.mrf.mxu0
        %v7217 = vadd.f32 0.0, %v7216
        %v7218 = vpop.f32.mrf.mxu0
        %7219 = vmatprep.mubr.f32.mxu0 0.0
        %7220 = vmatmul.mubr.f32.gmra.mxu0 %v945
        %v7221 = vpop.f32.mrf.mxu0
        %v7222 = vadd.f32 0.0, %v7221
        %v7223 = vpop.f32.mrf.mxu0
        %7224 = vmatprep.mubr.f32.mxu0 0.0
        %7225 = vmatmul.mubr.f32.gmra.mxu0 %v948
        %v7226 = vpop.f32.mrf.mxu0
        %v7227 = vadd.f32 0.0, %v7226
        %v7228 = vpop.f32.mrf.mxu0
        %7229 = vmatprep.mubr.f32.mxu0 0.0
        %7230 = vmatmul.mubr.f32.gmra.mxu0 %v951
        %v7231 = vpop.f32.mrf.mxu0
        %v7232 = vadd.f32 0.0, %v7231
        %v7233 = vpop.f32.mrf.mxu0
        %7234 = vmatprep.mubr.f32.mxu0 0.0
        %7235 = vmatmul.mubr.f32.gmra.mxu0 %v954
        %v7236 = vpop.f32.mrf.mxu0
        %v7237 = vadd.f32 0.0, %v7236
        %v7238 = vpop.f32.mrf.mxu0
        %7239 = vmatprep.mubr.f32.mxu0 0.0
        %7240 = vmatmul.mubr.f32.gmra.mxu0 %v957
        %v7241 = vpop.f32.mrf.mxu0
        %v7242 = vadd.f32 0.0, %v7241
        %v7243 = vpop.f32.mrf.mxu0
        %7244 = vmatprep.mubr.f32.mxu0 0.0
        %7245 = vmatmul.mubr.f32.gmra.mxu0 %v960
        %v7246 = vpop.f32.mrf.mxu0
        %v7247 = vadd.f32 0.0, %v7246
        %v7248 = vpop.f32.mrf.mxu0
        %7249 = vdwg.mxu0
        %v7250 = vmax.f32 %v7172, 0.0
        %v7251 = vmax.f32 %v7177, 0.0
        %v7252 = vmax.f32 %v7182, 0.0
        %v7253 = vmax.f32 %v7187, 0.0
        %v7254 = vmax.f32 %v7192, 0.0
        %v7255 = vmax.f32 %v7197, 0.0
        %v7256 = vmax.f32 %v7202, 0.0
        %v7257 = vmax.f32 %v7207, 0.0
        %v7258 = vmax.f32 %v7212, 0.0
        %v7259 = vmax.f32 %v7217, 0.0
        %v7260 = vmax.f32 %v7222, 0.0
        %v7261 = vmax.f32 %v7227, 0.0
        %v7262 = vmax.f32 %v7232, 0.0
        %v7263 = vmax.f32 %v7237, 0.0
        %v7264 = vmax.f32 %v7242, 0.0
        %v7265 = vmax.f32 %v7247, 0.0
        %s7266 = scalar_lea.vmem %s2, 2560
        %v7267 = vld [vmem:[%s7266] sm:$0xff]
        %v7268 = vld [vmem:[%s7266 + $0x8] sm:$0xff]
        %v7269 = vld [vmem:[%s7266 + $0x10] sm:$0xff]
        %v7270 = vld [vmem:[%s7266 + $0x18] sm:$0xff]
        %v7271 = vld [vmem:[%s7266 + $0x20] sm:$0xff]
        %v7272 = vld [vmem:[%s7266 + $0x28] sm:$0xff]
        %v7273 = vld [vmem:[%s7266 + $0x30] sm:$0xff]
        %v7274 = vld [vmem:[%s7266 + $0x38] sm:$0xff]
        %v7275 = vld [vmem:[%s7266 + $0x40] sm:$0xff]
        %v7276 = vld [vmem:[%s7266 + $0x48] sm:$0xff]
        %v7277 = vld [vmem:[%s7266 + $0x50] sm:$0xff]
        %v7278 = vld [vmem:[%s7266 + $0x58] sm:$0xff]
        %v7279 = vld [vmem:[%s7266 + $0x60] sm:$0xff]
        %v7280 = vld [vmem:[%s7266 + $0x68] sm:$0xff]
        %v7281 = vld [vmem:[%s7266 + $0x70] sm:$0xff]
        %v7282 = vld [vmem:[%s7266 + $0x78] sm:$0xff]
        %7284 = vset.pattern.permute.xlu0 0
        %7285 = vperm.xlu0 %7284, %v7267
        %v7286 = vpop.permute.xlu0 %7285
        %7289 = vset.pattern.permute.xlu0 0
        %7290 = vperm.xlu0 %7289, %v7268
        %v7291 = vpop.permute.xlu0 %7290
        %7294 = vset.pattern.permute.xlu0 0
        %7295 = vperm.xlu0 %7294, %v7269
        %v7296 = vpop.permute.xlu0 %7295
        %7299 = vset.pattern.permute.xlu0 0
        %7300 = vperm.xlu0 %7299, %v7270
        %v7301 = vpop.permute.xlu0 %7300
        %7304 = vset.pattern.permute.xlu0 0
        %7305 = vperm.xlu0 %7304, %v7271
        %v7306 = vpop.permute.xlu0 %7305
        %7309 = vset.pattern.permute.xlu0 0
        %7310 = vperm.xlu0 %7309, %v7272
        %v7311 = vpop.permute.xlu0 %7310
        %7314 = vset.pattern.permute.xlu0 0
        %7315 = vperm.xlu0 %7314, %v7273
        %v7316 = vpop.permute.xlu0 %7315
        %7319 = vset.pattern.permute.xlu0 0
        %7320 = vperm.xlu0 %7319, %v7274
        %v7321 = vpop.permute.xlu0 %7320
        %7324 = vset.pattern.permute.xlu0 0
        %7325 = vperm.xlu0 %7324, %v7275
        %v7326 = vpop.permute.xlu0 %7325
        %7329 = vset.pattern.permute.xlu0 0
        %7330 = vperm.xlu0 %7329, %v7276
        %v7331 = vpop.permute.xlu0 %7330
        %7334 = vset.pattern.permute.xlu0 0
        %7335 = vperm.xlu0 %7334, %v7277
        %v7336 = vpop.permute.xlu0 %7335
        %7339 = vset.pattern.permute.xlu0 0
        %7340 = vperm.xlu0 %7339, %v7278
        %v7341 = vpop.permute.xlu0 %7340
        %7344 = vset.pattern.permute.xlu0 0
        %7345 = vperm.xlu0 %7344, %v7279
        %v7346 = vpop.permute.xlu0 %7345
        %7349 = vset.pattern.permute.xlu0 0
        %7350 = vperm.xlu0 %7349, %v7280
        %v7351 = vpop.permute.xlu0 %7350
        %7354 = vset.pattern.permute.xlu0 0
        %7355 = vperm.xlu0 %7354, %v7281
        %v7356 = vpop.permute.xlu0 %7355
        %7359 = vset.pattern.permute.xlu0 0
        %7360 = vperm.xlu0 %7359, %v7282
        %v7361 = vpop.permute.xlu0 %7360
        %v7363 = vmul.f32 %v7250, %v7286
        %v7364 = vmul.f32 %v7251, %v7291
        %v7365 = vmul.f32 %v7252, %v7296
        %v7366 = vmul.f32 %v7253, %v7301
        %v7367 = vmul.f32 %v7254, %v7306
        %v7368 = vmul.f32 %v7255, %v7311
        %v7369 = vmul.f32 %v7256, %v7316
        %v7370 = vmul.f32 %v7257, %v7321
        %v7371 = vmul.f32 %v7258, %v7326
        %v7372 = vmul.f32 %v7259, %v7331
        %v7373 = vmul.f32 %v7260, %v7336
        %v7374 = vmul.f32 %v7261, %v7341
        %v7375 = vmul.f32 %v7262, %v7346
        %v7376 = vmul.f32 %v7263, %v7351
        %v7377 = vmul.f32 %v7264, %v7356
        %v7378 = vmul.f32 %v7265, %v7361
        %v7379 = vadd.f32 %v7363, %v7367
        %v7380 = vadd.f32 %v7364, %v7368
        %v7381 = vadd.f32 %v7365, %v7369
        %v7382 = vadd.f32 %v7366, %v7370
        %v7383 = vadd.f32 %v7379, %v7371
        %v7384 = vadd.f32 %v7380, %v7372
        %v7385 = vadd.f32 %v7381, %v7373
        %v7386 = vadd.f32 %v7382, %v7374
        %v7387 = vadd.f32 %v7383, %v7375
        %v7388 = vadd.f32 %v7384, %v7376
        %v7389 = vadd.f32 %v7385, %v7377
        %v7390 = vadd.f32 %v7386, %v7378
        %v7391 = vld [vmem:[#allocation2] sm:$0xff]
        %v7392 = vld [vmem:[#allocation2 + $0x8] sm:$0xff]
        %v7393 = vld [vmem:[#allocation2 + $0x10] sm:$0xff]
        %v7394 = vld [vmem:[#allocation2 + $0x18] sm:$0xff]
        %v7395 = vadd.f32 %v7391, %v7387
        %v7396 = vadd.f32 %v7392, %v7388
        %v7397 = vadd.f32 %v7393, %v7389
        %v7398 = vadd.f32 %v7394, %v7390
        %7399 = vst [vmem:[#allocation2] sm:$0xff] %v7395
        %7400 = vst [vmem:[#allocation2 + $0x8] sm:$0xff] %v7396
        %7401 = vst [vmem:[#allocation2 + $0x10] sm:$0xff] %v7397
        %7402 = vst [vmem:[#allocation2 + $0x18] sm:$0xff] %v7398
        %s7403 = scalar_lea.vmem %s850, 840 [#allocation3]
        %v7404 = vld [vmem:[%s7403] sm:$0xff]
        %v7405 = vld [vmem:[%s7403 + $0x8] sm:$0xff]
        %v7406 = vld [vmem:[%s7403 + $0x10] sm:$0xff]
        %v7407 = vld [vmem:[%s7403 + $0x18] sm:$0xff]
        %v7408 = vld [vmem:[%s7403 + $0x20] sm:$0x1]
        %v7410 = vsel %vm962, %v7408, 0
        %7412 = vmatprep.subr.mxu0 0.0
        %7413 = vmatpush1.msra.mxu0 0.0
        %7414 = vmatprep.subr.mxu0 0.0
        %7415 = vmatpush1.msra.mxu0 0.0
        %7416 = vmatprep.subr.mxu0 0.0
        %7417 = vmatpush1.msra.mxu0 0.0
        %7418 = vmatprep.subr.mxu0 0.0
        %7419 = vmatpush1.msra.mxu0 0.0
        %7420 = vmatprep.subr.mxu0 0.0
        %7421 = vmatpush1.msra.mxu0 0.0
        %7422 = vmatprep.subr.mxu0 0.0
        %7423 = vmatpush1.msra.mxu0 0.0
        %7424 = vmatprep.subr.mxu0 0.0
        %7425 = vmatpush1.msra.mxu0 0.0
        %7426 = vmatprep.subr.mxu0 0.0
        %7427 = vmatpush1.msra.mxu0 0.0
        %7428 = vmatprep.subr.mxu0 0.0
        %7429 = vmatpush1.msra.mxu0 0.0
        %7430 = vmatprep.subr.mxu0 0.0
        %7431 = vmatpush1.msra.mxu0 0.0
        %7432 = vmatprep.subr.mxu0 0.0
        %7433 = vmatpush1.msra.mxu0 0.0
        %7434 = vmatprep.subr.mxu0 0.0
        %7435 = vmatpush1.msra.mxu0 %v7410
        %7436 = vmatprep.subr.mxu0 0.0
        %7437 = vmatpush1.msra.mxu0 %v7407
        %7438 = vmatprep.subr.mxu0 0.0
        %7439 = vmatpush1.msra.mxu0 %v7406
        %7440 = vmatprep.subr.mxu0 0.0
        %7441 = vmatpush1.msra.mxu0 %v7405
        %7442 = vmatprep.subr.mxu0 0.0
        %7443 = vmatpush1.msra.mxu0 %v7404
        %7444 = vmatprep.subr.mxu0 0.0
        %7445 = vmatpush2.msra.mxu0 0.0
        %7446 = vmatprep.subr.mxu0 0.0
        %7447 = vmatpush2.msra.mxu0 0.0
        %7448 = vmatprep.subr.mxu0 0.0
        %7449 = vmatpush2.msra.mxu0 0.0
        %7450 = vmatprep.subr.mxu0 0.0
        %7451 = vmatpush2.msra.mxu0 0.0
        %7452 = vmatprep.subr.mxu0 0.0
        %7453 = vmatpush2.msra.mxu0 0.0
        %7454 = vmatprep.subr.mxu0 0.0
        %7455 = vmatpush2.msra.mxu0 0.0
        %7456 = vmatprep.subr.mxu0 0.0
        %7457 = vmatpush2.msra.mxu0 0.0
        %7458 = vmatprep.subr.mxu0 0.0
        %7459 = vmatpush2.msra.mxu0 0.0
        %7460 = vmatprep.subr.mxu0 0.0
        %7461 = vmatpush2.msra.mxu0 0.0
        %7462 = vmatprep.subr.mxu0 0.0
        %7463 = vmatpush2.msra.mxu0 0.0
        %7464 = vmatprep.subr.mxu0 0.0
        %7465 = vmatpush2.msra.mxu0 0.0
        %7466 = vmatprep.subr.mxu0 0.0
        %7467 = vmatpush2.msra.mxu0 0.0
        %7468 = vmatprep.subr.mxu0 0.0
        %7469 = vmatpush2.msra.mxu0 0.0
        %7470 = vmatprep.subr.mxu0 0.0
        %7471 = vmatpush2.msra.mxu0 0.0
        %7472 = vmatprep.subr.mxu0 0.0
        %7473 = vmatpush2.msra.mxu0 0.0
        %7474 = vmatprep.subr.mxu0 0.0
        %7475 = vmatpush2.msra.mxu0 0.0
        %7476 = vmatprep.mubr.f32.mxu0 0.0
        %7477 = vmatmul.mubr.f32.gmra.mxu0 %v915
        %v7478 = vpop.f32.mrf.mxu0
        %v7479 = vadd.f32 0.0, %v7478
        %v7480 = vpop.f32.mrf.mxu0
        %7481 = vmatprep.mubr.f32.mxu0 0.0
        %7482 = vmatmul.mubr.f32.gmra.mxu0 %v918
        %v7483 = vpop.f32.mrf.mxu0
        %v7484 = vadd.f32 0.0, %v7483
        %v7485 = vpop.f32.mrf.mxu0
        %7486 = vmatprep.mubr.f32.mxu0 0.0
        %7487 = vmatmul.mubr.f32.gmra.mxu0 %v921
        %v7488 = vpop.f32.mrf.mxu0
        %v7489 = vadd.f32 0.0, %v7488
        %v7490 = vpop.f32.mrf.mxu0
        %7491 = vmatprep.mubr.f32.mxu0 0.0
        %7492 = vmatmul.mubr.f32.gmra.mxu0 %v924
        %v7493 = vpop.f32.mrf.mxu0
        %v7494 = vadd.f32 0.0, %v7493
        %v7495 = vpop.f32.mrf.mxu0
        %7496 = vmatprep.mubr.f32.mxu0 0.0
        %7497 = vmatmul.mubr.f32.gmra.mxu0 %v927
        %v7498 = vpop.f32.mrf.mxu0
        %v7499 = vadd.f32 0.0, %v7498
        %v7500 = vpop.f32.mrf.mxu0
        %7501 = vmatprep.mubr.f32.mxu0 0.0
        %7502 = vmatmul.mubr.f32.gmra.mxu0 %v930
        %v7503 = vpop.f32.mrf.mxu0
        %v7504 = vadd.f32 0.0, %v7503
        %v7505 = vpop.f32.mrf.mxu0
        %7506 = vmatprep.mubr.f32.mxu0 0.0
        %7507 = vmatmul.mubr.f32.gmra.mxu0 %v933
        %v7508 = vpop.f32.mrf.mxu0
        %v7509 = vadd.f32 0.0, %v7508
        %v7510 = vpop.f32.mrf.mxu0
        %7511 = vmatprep.mubr.f32.mxu0 0.0
        %7512 = vmatmul.mubr.f32.gmra.mxu0 %v936
        %v7513 = vpop.f32.mrf.mxu0
        %v7514 = vadd.f32 0.0, %v7513
        %v7515 = vpop.f32.mrf.mxu0
        %7516 = vmatprep.mubr.f32.mxu0 0.0
        %7517 = vmatmul.mubr.f32.gmra.mxu0 %v939
        %v7518 = vpop.f32.mrf.mxu0
        %v7519 = vadd.f32 0.0, %v7518
        %v7520 = vpop.f32.mrf.mxu0
        %7521 = vmatprep.mubr.f32.mxu0 0.0
        %7522 = vmatmul.mubr.f32.gmra.mxu0 %v942
        %v7523 = vpop.f32.mrf.mxu0
        %v7524 = vadd.f32 0.0, %v7523
        %v7525 = vpop.f32.mrf.mxu0
        %7526 = vmatprep.mubr.f32.mxu0 0.0
        %7527 = vmatmul.mubr.f32.gmra.mxu0 %v945
        %v7528 = vpop.f32.mrf.mxu0
        %v7529 = vadd.f32 0.0, %v7528
        %v7530 = vpop.f32.mrf.mxu0
        %7531 = vmatprep.mubr.f32.mxu0 0.0
        %7532 = vmatmul.mubr.f32.gmra.mxu0 %v948
        %v7533 = vpop.f32.mrf.mxu0
        %v7534 = vadd.f32 0.0, %v7533
        %v7535 = vpop.f32.mrf.mxu0
        %7536 = vmatprep.mubr.f32.mxu0 0.0
        %7537 = vmatmul.mubr.f32.gmra.mxu0 %v951
        %v7538 = vpop.f32.mrf.mxu0
        %v7539 = vadd.f32 0.0, %v7538
        %v7540 = vpop.f32.mrf.mxu0
        %7541 = vmatprep.mubr.f32.mxu0 0.0
        %7542 = vmatmul.mubr.f32.gmra.mxu0 %v954
        %v7543 = vpop.f32.mrf.mxu0
        %v7544 = vadd.f32 0.0, %v7543
        %v7545 = vpop.f32.mrf.mxu0
        %7546 = vmatprep.mubr.f32.mxu0 0.0
        %7547 = vmatmul.mubr.f32.gmra.mxu0 %v957
        %v7548 = vpop.f32.mrf.mxu0
        %v7549 = vadd.f32 0.0, %v7548
        %v7550 = vpop.f32.mrf.mxu0
        %7551 = vmatprep.mubr.f32.mxu0 0.0
        %7552 = vmatmul.mubr.f32.gmra.mxu0 %v960
        %v7553 = vpop.f32.mrf.mxu0
        %v7554 = vadd.f32 0.0, %v7553
        %v7555 = vpop.f32.mrf.mxu0
        %7556 = vdwg.mxu0
        %v7557 = vmax.f32 %v7479, 0.0
        %v7558 = vmax.f32 %v7484, 0.0
        %v7559 = vmax.f32 %v7489, 0.0
        %v7560 = vmax.f32 %v7494, 0.0
        %v7561 = vmax.f32 %v7499, 0.0
        %v7562 = vmax.f32 %v7504, 0.0
        %v7563 = vmax.f32 %v7509, 0.0
        %v7564 = vmax.f32 %v7514, 0.0
        %v7565 = vmax.f32 %v7519, 0.0
        %v7566 = vmax.f32 %v7524, 0.0
        %v7567 = vmax.f32 %v7529, 0.0
        %v7568 = vmax.f32 %v7534, 0.0
        %v7569 = vmax.f32 %v7539, 0.0
        %v7570 = vmax.f32 %v7544, 0.0
        %v7571 = vmax.f32 %v7549, 0.0
        %v7572 = vmax.f32 %v7554, 0.0
        %s7573 = scalar_lea.vmem %s2, 2688
        %v7574 = vld [vmem:[%s7573] sm:$0xff]
        %v7575 = vld [vmem:[%s7573 + $0x8] sm:$0xff]
        %v7576 = vld [vmem:[%s7573 + $0x10] sm:$0xff]
        %v7577 = vld [vmem:[%s7573 + $0x18] sm:$0xff]
        %v7578 = vld [vmem:[%s7573 + $0x20] sm:$0xff]
        %v7579 = vld [vmem:[%s7573 + $0x28] sm:$0xff]
        %v7580 = vld [vmem:[%s7573 + $0x30] sm:$0xff]
        %v7581 = vld [vmem:[%s7573 + $0x38] sm:$0xff]
        %v7582 = vld [vmem:[%s7573 + $0x40] sm:$0xff]
        %v7583 = vld [vmem:[%s7573 + $0x48] sm:$0xff]
        %v7584 = vld [vmem:[%s7573 + $0x50] sm:$0xff]
        %v7585 = vld [vmem:[%s7573 + $0x58] sm:$0xff]
        %v7586 = vld [vmem:[%s7573 + $0x60] sm:$0xff]
        %v7587 = vld [vmem:[%s7573 + $0x68] sm:$0xff]
        %v7588 = vld [vmem:[%s7573 + $0x70] sm:$0xff]
        %v7589 = vld [vmem:[%s7573 + $0x78] sm:$0xff]
        %7591 = vset.pattern.permute.xlu0 0
        %7592 = vperm.xlu0 %7591, %v7574
        %v7593 = vpop.permute.xlu0 %7592
        %7596 = vset.pattern.permute.xlu0 0
        %7597 = vperm.xlu0 %7596, %v7575
        %v7598 = vpop.permute.xlu0 %7597
        %7601 = vset.pattern.permute.xlu0 0
        %7602 = vperm.xlu0 %7601, %v7576
        %v7603 = vpop.permute.xlu0 %7602
        %7606 = vset.pattern.permute.xlu0 0
        %7607 = vperm.xlu0 %7606, %v7577
        %v7608 = vpop.permute.xlu0 %7607
        %7611 = vset.pattern.permute.xlu0 0
        %7612 = vperm.xlu0 %7611, %v7578
        %v7613 = vpop.permute.xlu0 %7612
        %7616 = vset.pattern.permute.xlu0 0
        %7617 = vperm.xlu0 %7616, %v7579
        %v7618 = vpop.permute.xlu0 %7617
        %7621 = vset.pattern.permute.xlu0 0
        %7622 = vperm.xlu0 %7621, %v7580
        %v7623 = vpop.permute.xlu0 %7622
        %7626 = vset.pattern.permute.xlu0 0
        %7627 = vperm.xlu0 %7626, %v7581
        %v7628 = vpop.permute.xlu0 %7627
        %7631 = vset.pattern.permute.xlu0 0
        %7632 = vperm.xlu0 %7631, %v7582
        %v7633 = vpop.permute.xlu0 %7632
        %7636 = vset.pattern.permute.xlu0 0
        %7637 = vperm.xlu0 %7636, %v7583
        %v7638 = vpop.permute.xlu0 %7637
        %7641 = vset.pattern.permute.xlu0 0
        %7642 = vperm.xlu0 %7641, %v7584
        %v7643 = vpop.permute.xlu0 %7642
        %7646 = vset.pattern.permute.xlu0 0
        %7647 = vperm.xlu0 %7646, %v7585
        %v7648 = vpop.permute.xlu0 %7647
        %7651 = vset.pattern.permute.xlu0 0
        %7652 = vperm.xlu0 %7651, %v7586
        %v7653 = vpop.permute.xlu0 %7652
        %7656 = vset.pattern.permute.xlu0 0
        %7657 = vperm.xlu0 %7656, %v7587
        %v7658 = vpop.permute.xlu0 %7657
        %7661 = vset.pattern.permute.xlu0 0
        %7662 = vperm.xlu0 %7661, %v7588
        %v7663 = vpop.permute.xlu0 %7662
        %7666 = vset.pattern.permute.xlu0 0
        %7667 = vperm.xlu0 %7666, %v7589
        %v7668 = vpop.permute.xlu0 %7667
        %v7670 = vmul.f32 %v7557, %v7593
        %v7671 = vmul.f32 %v7558, %v7598
        %v7672 = vmul.f32 %v7559, %v7603
        %v7673 = vmul.f32 %v7560, %v7608
        %v7674 = vmul.f32 %v7561, %v7613
        %v7675 = vmul.f32 %v7562, %v7618
        %v7676 = vmul.f32 %v7563, %v7623
        %v7677 = vmul.f32 %v7564, %v7628
        %v7678 = vmul.f32 %v7565, %v7633
        %v7679 = vmul.f32 %v7566, %v7638
        %v7680 = vmul.f32 %v7567, %v7643
        %v7681 = vmul.f32 %v7568, %v7648
        %v7682 = vmul.f32 %v7569, %v7653
        %v7683 = vmul.f32 %v7570, %v7658
        %v7684 = vmul.f32 %v7571, %v7663
        %v7685 = vmul.f32 %v7572, %v7668
        %v7686 = vadd.f32 %v7670, %v7674
        %v7687 = vadd.f32 %v7671, %v7675
        %v7688 = vadd.f32 %v7672, %v7676
        %v7689 = vadd.f32 %v7673, %v7677
        %v7690 = vadd.f32 %v7686, %v7678
        %v7691 = vadd.f32 %v7687, %v7679
        %v7692 = vadd.f32 %v7688, %v7680
        %v7693 = vadd.f32 %v7689, %v7681
        %v7694 = vadd.f32 %v7690, %v7682
        %v7695 = vadd.f32 %v7691, %v7683
        %v7696 = vadd.f32 %v7692, %v7684
        %v7697 = vadd.f32 %v7693, %v7685
        %v7698 = vld [vmem:[#allocation2] sm:$0xff]
        %v7699 = vld [vmem:[#allocation2 + $0x8] sm:$0xff]
        %v7700 = vld [vmem:[#allocation2 + $0x10] sm:$0xff]
        %v7701 = vld [vmem:[#allocation2 + $0x18] sm:$0xff]
        %v7702 = vadd.f32 %v7698, %v7694
        %v7703 = vadd.f32 %v7699, %v7695
        %v7704 = vadd.f32 %v7700, %v7696
        %v7705 = vadd.f32 %v7701, %v7697
        %7706 = vst [vmem:[#allocation2] sm:$0xff] %v7702
        %7707 = vst [vmem:[#allocation2 + $0x8] sm:$0xff] %v7703
        %7708 = vst [vmem:[#allocation2 + $0x10] sm:$0xff] %v7704
        %7709 = vst [vmem:[#allocation2 + $0x18] sm:$0xff] %v7705
        %s7710 = scalar_lea.vmem %s850, 880 [#allocation3]
        %v7711 = vld [vmem:[%s7710] sm:$0xff]
        %v7712 = vld [vmem:[%s7710 + $0x8] sm:$0xff]
        %v7713 = vld [vmem:[%s7710 + $0x10] sm:$0xff]
        %v7714 = vld [vmem:[%s7710 + $0x18] sm:$0xff]
        %v7715 = vld [vmem:[%s7710 + $0x20] sm:$0x1]
        %v7717 = vsel %vm962, %v7715, 0
        %7719 = vmatprep.subr.mxu0 0.0
        %7720 = vmatpush1.msra.mxu0 0.0
        %7721 = vmatprep.subr.mxu0 0.0
        %7722 = vmatpush1.msra.mxu0 0.0
        %7723 = vmatprep.subr.mxu0 0.0
        %7724 = vmatpush1.msra.mxu0 0.0
        %7725 = vmatprep.subr.mxu0 0.0
        %7726 = vmatpush1.msra.mxu0 0.0
        %7727 = vmatprep.subr.mxu0 0.0
        %7728 = vmatpush1.msra.mxu0 0.0
        %7729 = vmatprep.subr.mxu0 0.0
        %7730 = vmatpush1.msra.mxu0 0.0
        %7731 = vmatprep.subr.mxu0 0.0
        %7732 = vmatpush1.msra.mxu0 0.0
        %7733 = vmatprep.subr.mxu0 0.0
        %7734 = vmatpush1.msra.mxu0 0.0
        %7735 = vmatprep.subr.mxu0 0.0
        %7736 = vmatpush1.msra.mxu0 0.0
        %7737 = vmatprep.subr.mxu0 0.0
        %7738 = vmatpush1.msra.mxu0 0.0
        %7739 = vmatprep.subr.mxu0 0.0
        %7740 = vmatpush1.msra.mxu0 0.0
        %7741 = vmatprep.subr.mxu0 0.0
        %7742 = vmatpush1.msra.mxu0 %v7717
        %7743 = vmatprep.subr.mxu0 0.0
        %7744 = vmatpush1.msra.mxu0 %v7714
        %7745 = vmatprep.subr.mxu0 0.0
        %7746 = vmatpush1.msra.mxu0 %v7713
        %7747 = vmatprep.subr.mxu0 0.0
        %7748 = vmatpush1.msra.mxu0 %v7712
        %7749 = vmatprep.subr.mxu0 0.0
        %7750 = vmatpush1.msra.mxu0 %v7711
        %7751 = vmatprep.subr.mxu0 0.0
        %7752 = vmatpush2.msra.mxu0 0.0
        %7753 = vmatprep.subr.mxu0 0.0
        %7754 = vmatpush2.msra.mxu0 0.0
        %7755 = vmatprep.subr.mxu0 0.0
        %7756 = vmatpush2.msra.mxu0 0.0
        %7757 = vmatprep.subr.mxu0 0.0
        %7758 = vmatpush2.msra.mxu0 0.0
        %7759 = vmatprep.subr.mxu0 0.0
        %7760 = vmatpush2.msra.mxu0 0.0
        %7761 = vmatprep.subr.mxu0 0.0
        %7762 = vmatpush2.msra.mxu0 0.0
        %7763 = vmatprep.subr.mxu0 0.0
        %7764 = vmatpush2.msra.mxu0 0.0
        %7765 = vmatprep.subr.mxu0 0.0
        %7766 = vmatpush2.msra.mxu0 0.0
        %7767 = vmatprep.subr.mxu0 0.0
        %7768 = vmatpush2.msra.mxu0 0.0
        %7769 = vmatprep.subr.mxu0 0.0
        %7770 = vmatpush2.msra.mxu0 0.0
        %7771 = vmatprep.subr.mxu0 0.0
        %7772 = vmatpush2.msra.mxu0 0.0
        %7773 = vmatprep.subr.mxu0 0.0
        %7774 = vmatpush2.msra.mxu0 0.0
        %7775 = vmatprep.subr.mxu0 0.0
        %7776 = vmatpush2.msra.mxu0 0.0
        %7777 = vmatprep.subr.mxu0 0.0
        %7778 = vmatpush2.msra.mxu0 0.0
        %7779 = vmatprep.subr.mxu0 0.0
        %7780 = vmatpush2.msra.mxu0 0.0
        %7781 = vmatprep.subr.mxu0 0.0
        %7782 = vmatpush2.msra.mxu0 0.0
        %7783 = vmatprep.mubr.f32.mxu0 0.0
        %7784 = vmatmul.mubr.f32.gmra.mxu0 %v915
        %v7785 = vpop.f32.mrf.mxu0
        %v7786 = vadd.f32 0.0, %v7785
        %v7787 = vpop.f32.mrf.mxu0
        %7788 = vmatprep.mubr.f32.mxu0 0.0
        %7789 = vmatmul.mubr.f32.gmra.mxu0 %v918
        %v7790 = vpop.f32.mrf.mxu0
        %v7791 = vadd.f32 0.0, %v7790
        %v7792 = vpop.f32.mrf.mxu0
        %7793 = vmatprep.mubr.f32.mxu0 0.0
        %7794 = vmatmul.mubr.f32.gmra.mxu0 %v921
        %v7795 = vpop.f32.mrf.mxu0
        %v7796 = vadd.f32 0.0, %v7795
        %v7797 = vpop.f32.mrf.mxu0
        %7798 = vmatprep.mubr.f32.mxu0 0.0
        %7799 = vmatmul.mubr.f32.gmra.mxu0 %v924
        %v7800 = vpop.f32.mrf.mxu0
        %v7801 = vadd.f32 0.0, %v7800
        %v7802 = vpop.f32.mrf.mxu0
        %7803 = vmatprep.mubr.f32.mxu0 0.0
        %7804 = vmatmul.mubr.f32.gmra.mxu0 %v927
        %v7805 = vpop.f32.mrf.mxu0
        %v7806 = vadd.f32 0.0, %v7805
        %v7807 = vpop.f32.mrf.mxu0
        %7808 = vmatprep.mubr.f32.mxu0 0.0
        %7809 = vmatmul.mubr.f32.gmra.mxu0 %v930
        %v7810 = vpop.f32.mrf.mxu0
        %v7811 = vadd.f32 0.0, %v7810
        %v7812 = vpop.f32.mrf.mxu0
        %7813 = vmatprep.mubr.f32.mxu0 0.0
        %7814 = vmatmul.mubr.f32.gmra.mxu0 %v933
        %v7815 = vpop.f32.mrf.mxu0
        %v7816 = vadd.f32 0.0, %v7815
        %v7817 = vpop.f32.mrf.mxu0
        %7818 = vmatprep.mubr.f32.mxu0 0.0
        %7819 = vmatmul.mubr.f32.gmra.mxu0 %v936
        %v7820 = vpop.f32.mrf.mxu0
        %v7821 = vadd.f32 0.0, %v7820
        %v7822 = vpop.f32.mrf.mxu0
        %7823 = vmatprep.mubr.f32.mxu0 0.0
        %7824 = vmatmul.mubr.f32.gmra.mxu0 %v939
        %v7825 = vpop.f32.mrf.mxu0
        %v7826 = vadd.f32 0.0, %v7825
        %v7827 = vpop.f32.mrf.mxu0
        %7828 = vmatprep.mubr.f32.mxu0 0.0
        %7829 = vmatmul.mubr.f32.gmra.mxu0 %v942
        %v7830 = vpop.f32.mrf.mxu0
        %v7831 = vadd.f32 0.0, %v7830
        %v7832 = vpop.f32.mrf.mxu0
        %7833 = vmatprep.mubr.f32.mxu0 0.0
        %7834 = vmatmul.mubr.f32.gmra.mxu0 %v945
        %v7835 = vpop.f32.mrf.mxu0
        %v7836 = vadd.f32 0.0, %v7835
        %v7837 = vpop.f32.mrf.mxu0
        %7838 = vmatprep.mubr.f32.mxu0 0.0
        %7839 = vmatmul.mubr.f32.gmra.mxu0 %v948
        %v7840 = vpop.f32.mrf.mxu0
        %v7841 = vadd.f32 0.0, %v7840
        %v7842 = vpop.f32.mrf.mxu0
        %7843 = vmatprep.mubr.f32.mxu0 0.0
        %7844 = vmatmul.mubr.f32.gmra.mxu0 %v951
        %v7845 = vpop.f32.mrf.mxu0
        %v7846 = vadd.f32 0.0, %v7845
        %v7847 = vpop.f32.mrf.mxu0
        %7848 = vmatprep.mubr.f32.mxu0 0.0
        %7849 = vmatmul.mubr.f32.gmra.mxu0 %v954
        %v7850 = vpop.f32.mrf.mxu0
        %v7851 = vadd.f32 0.0, %v7850
        %v7852 = vpop.f32.mrf.mxu0
        %7853 = vmatprep.mubr.f32.mxu0 0.0
        %7854 = vmatmul.mubr.f32.gmra.mxu0 %v957
        %v7855 = vpop.f32.mrf.mxu0
        %v7856 = vadd.f32 0.0, %v7855
        %v7857 = vpop.f32.mrf.mxu0
        %7858 = vmatprep.mubr.f32.mxu0 0.0
        %7859 = vmatmul.mubr.f32.gmra.mxu0 %v960
        %v7860 = vpop.f32.mrf.mxu0
        %v7861 = vadd.f32 0.0, %v7860
        %v7862 = vpop.f32.mrf.mxu0
        %7863 = vdwg.mxu0
        %v7864 = vmax.f32 %v7786, 0.0
        %v7865 = vmax.f32 %v7791, 0.0
        %v7866 = vmax.f32 %v7796, 0.0
        %v7867 = vmax.f32 %v7801, 0.0
        %v7868 = vmax.f32 %v7806, 0.0
        %v7869 = vmax.f32 %v7811, 0.0
        %v7870 = vmax.f32 %v7816, 0.0
        %v7871 = vmax.f32 %v7821, 0.0
        %v7872 = vmax.f32 %v7826, 0.0
        %v7873 = vmax.f32 %v7831, 0.0
        %v7874 = vmax.f32 %v7836, 0.0
        %v7875 = vmax.f32 %v7841, 0.0
        %v7876 = vmax.f32 %v7846, 0.0
        %v7877 = vmax.f32 %v7851, 0.0
        %v7878 = vmax.f32 %v7856, 0.0
        %v7879 = vmax.f32 %v7861, 0.0
        %s7880 = scalar_lea.vmem %s2, 2816
        %v7881 = vld [vmem:[%s7880] sm:$0xff]
        %v7882 = vld [vmem:[%s7880 + $0x8] sm:$0xff]
        %v7883 = vld [vmem:[%s7880 + $0x10] sm:$0xff]
        %v7884 = vld [vmem:[%s7880 + $0x18] sm:$0xff]
        %v7885 = vld [vmem:[%s7880 + $0x20] sm:$0xff]
        %v7886 = vld [vmem:[%s7880 + $0x28] sm:$0xff]
        %v7887 = vld [vmem:[%s7880 + $0x30] sm:$0xff]
        %v7888 = vld [vmem:[%s7880 + $0x38] sm:$0xff]
        %v7889 = vld [vmem:[%s7880 + $0x40] sm:$0xff]
        %v7890 = vld [vmem:[%s7880 + $0x48] sm:$0xff]
        %v7891 = vld [vmem:[%s7880 + $0x50] sm:$0xff]
        %v7892 = vld [vmem:[%s7880 + $0x58] sm:$0xff]
        %v7893 = vld [vmem:[%s7880 + $0x60] sm:$0xff]
        %v7894 = vld [vmem:[%s7880 + $0x68] sm:$0xff]
        %v7895 = vld [vmem:[%s7880 + $0x70] sm:$0xff]
        %v7896 = vld [vmem:[%s7880 + $0x78] sm:$0xff]
        %7898 = vset.pattern.permute.xlu0 0
        %7899 = vperm.xlu0 %7898, %v7881
        %v7900 = vpop.permute.xlu0 %7899
        %7903 = vset.pattern.permute.xlu0 0
        %7904 = vperm.xlu0 %7903, %v7882
        %v7905 = vpop.permute.xlu0 %7904
        %7908 = vset.pattern.permute.xlu0 0
        %7909 = vperm.xlu0 %7908, %v7883
        %v7910 = vpop.permute.xlu0 %7909
        %7913 = vset.pattern.permute.xlu0 0
        %7914 = vperm.xlu0 %7913, %v7884
        %v7915 = vpop.permute.xlu0 %7914
        %7918 = vset.pattern.permute.xlu0 0
        %7919 = vperm.xlu0 %7918, %v7885
        %v7920 = vpop.permute.xlu0 %7919
        %7923 = vset.pattern.permute.xlu0 0
        %7924 = vperm.xlu0 %7923, %v7886
        %v7925 = vpop.permute.xlu0 %7924
        %7928 = vset.pattern.permute.xlu0 0
        %7929 = vperm.xlu0 %7928, %v7887
        %v7930 = vpop.permute.xlu0 %7929
        %7933 = vset.pattern.permute.xlu0 0
        %7934 = vperm.xlu0 %7933, %v7888
        %v7935 = vpop.permute.xlu0 %7934
        %7938 = vset.pattern.permute.xlu0 0
        %7939 = vperm.xlu0 %7938, %v7889
        %v7940 = vpop.permute.xlu0 %7939
        %7943 = vset.pattern.permute.xlu0 0
        %7944 = vperm.xlu0 %7943, %v7890
        %v7945 = vpop.permute.xlu0 %7944
        %7948 = vset.pattern.permute.xlu0 0
        %7949 = vperm.xlu0 %7948, %v7891
        %v7950 = vpop.permute.xlu0 %7949
        %7953 = vset.pattern.permute.xlu0 0
        %7954 = vperm.xlu0 %7953, %v7892
        %v7955 = vpop.permute.xlu0 %7954
        %7958 = vset.pattern.permute.xlu0 0
        %7959 = vperm.xlu0 %7958, %v7893
        %v7960 = vpop.permute.xlu0 %7959
        %7963 = vset.pattern.permute.xlu0 0
        %7964 = vperm.xlu0 %7963, %v7894
        %v7965 = vpop.permute.xlu0 %7964
        %7968 = vset.pattern.permute.xlu0 0
        %7969 = vperm.xlu0 %7968, %v7895
        %v7970 = vpop.permute.xlu0 %7969
        %7973 = vset.pattern.permute.xlu0 0
        %7974 = vperm.xlu0 %7973, %v7896
        %v7975 = vpop.permute.xlu0 %7974
        %v7977 = vmul.f32 %v7864, %v7900
        %v7978 = vmul.f32 %v7865, %v7905
        %v7979 = vmul.f32 %v7866, %v7910
        %v7980 = vmul.f32 %v7867, %v7915
        %v7981 = vmul.f32 %v7868, %v7920
        %v7982 = vmul.f32 %v7869, %v7925
        %v7983 = vmul.f32 %v7870, %v7930
        %v7984 = vmul.f32 %v7871, %v7935
        %v7985 = vmul.f32 %v7872, %v7940
        %v7986 = vmul.f32 %v7873, %v7945
        %v7987 = vmul.f32 %v7874, %v7950
        %v7988 = vmul.f32 %v7875, %v7955
        %v7989 = vmul.f32 %v7876, %v7960
        %v7990 = vmul.f32 %v7877, %v7965
        %v7991 = vmul.f32 %v7878, %v7970
        %v7992 = vmul.f32 %v7879, %v7975
        %v7993 = vadd.f32 %v7977, %v7981
        %v7994 = vadd.f32 %v7978, %v7982
        %v7995 = vadd.f32 %v7979, %v7983
        %v7996 = vadd.f32 %v7980, %v7984
        %v7997 = vadd.f32 %v7993, %v7985
        %v7998 = vadd.f32 %v7994, %v7986
        %v7999 = vadd.f32 %v7995, %v7987
        %v8000 = vadd.f32 %v7996, %v7988
        %v8001 = vadd.f32 %v7997, %v7989
        %v8002 = vadd.f32 %v7998, %v7990
        %v8003 = vadd.f32 %v7999, %v7991
        %v8004 = vadd.f32 %v8000, %v7992
        %v8005 = vld [vmem:[#allocation2] sm:$0xff]
        %v8006 = vld [vmem:[#allocation2 + $0x8] sm:$0xff]
        %v8007 = vld [vmem:[#allocation2 + $0x10] sm:$0xff]
        %v8008 = vld [vmem:[#allocation2 + $0x18] sm:$0xff]
        %v8009 = vadd.f32 %v8005, %v8001
        %v8010 = vadd.f32 %v8006, %v8002
        %v8011 = vadd.f32 %v8007, %v8003
        %v8012 = vadd.f32 %v8008, %v8004
        %8013 = vst [vmem:[#allocation2] sm:$0xff] %v8009
        %8014 = vst [vmem:[#allocation2 + $0x8] sm:$0xff] %v8010
        %8015 = vst [vmem:[#allocation2 + $0x10] sm:$0xff] %v8011
        %8016 = vst [vmem:[#allocation2 + $0x18] sm:$0xff] %v8012
        %s8017 = scalar_lea.vmem %s850, 920 [#allocation3]
        %v8018 = vld [vmem:[%s8017] sm:$0xff]
        %v8019 = vld [vmem:[%s8017 + $0x8] sm:$0xff]
        %v8020 = vld [vmem:[%s8017 + $0x10] sm:$0xff]
        %v8021 = vld [vmem:[%s8017 + $0x18] sm:$0xff]
        %v8022 = vld [vmem:[%s8017 + $0x20] sm:$0x1]
        %v8024 = vsel %vm962, %v8022, 0
        %8026 = vmatprep.subr.mxu0 0.0
        %8027 = vmatpush1.msra.mxu0 0.0
        %8028 = vmatprep.subr.mxu0 0.0
        %8029 = vmatpush1.msra.mxu0 0.0
        %8030 = vmatprep.subr.mxu0 0.0
        %8031 = vmatpush1.msra.mxu0 0.0
        %8032 = vmatprep.subr.mxu0 0.0
        %8033 = vmatpush1.msra.mxu0 0.0
        %8034 = vmatprep.subr.mxu0 0.0
        %8035 = vmatpush1.msra.mxu0 0.0
        %8036 = vmatprep.subr.mxu0 0.0
        %8037 = vmatpush1.msra.mxu0 0.0
        %8038 = vmatprep.subr.mxu0 0.0
        %8039 = vmatpush1.msra.mxu0 0.0
        %8040 = vmatprep.subr.mxu0 0.0
        %8041 = vmatpush1.msra.mxu0 0.0
        %8042 = vmatprep.subr.mxu0 0.0
        %8043 = vmatpush1.msra.mxu0 0.0
        %8044 = vmatprep.subr.mxu0 0.0
        %8045 = vmatpush1.msra.mxu0 0.0
        %8046 = vmatprep.subr.mxu0 0.0
        %8047 = vmatpush1.msra.mxu0 0.0
        %8048 = vmatprep.subr.mxu0 0.0
        %8049 = vmatpush1.msra.mxu0 %v8024
        %8050 = vmatprep.subr.mxu0 0.0
        %8051 = vmatpush1.msra.mxu0 %v8021
        %8052 = vmatprep.subr.mxu0 0.0
        %8053 = vmatpush1.msra.mxu0 %v8020
        %8054 = vmatprep.subr.mxu0 0.0
        %8055 = vmatpush1.msra.mxu0 %v8019
        %8056 = vmatprep.subr.mxu0 0.0
        %8057 = vmatpush1.msra.mxu0 %v8018
        %8058 = vmatprep.subr.mxu0 0.0
        %8059 = vmatpush2.msra.mxu0 0.0
        %8060 = vmatprep.subr.mxu0 0.0
        %8061 = vmatpush2.msra.mxu0 0.0
        %8062 = vmatprep.subr.mxu0 0.0
        %8063 = vmatpush2.msra.mxu0 0.0
        %8064 = vmatprep.subr.mxu0 0.0
        %8065 = vmatpush2.msra.mxu0 0.0
        %8066 = vmatprep.subr.mxu0 0.0
        %8067 = vmatpush2.msra.mxu0 0.0
        %8068 = vmatprep.subr.mxu0 0.0
        %8069 = vmatpush2.msra.mxu0 0.0
        %8070 = vmatprep.subr.mxu0 0.0
        %8071 = vmatpush2.msra.mxu0 0.0
        %8072 = vmatprep.subr.mxu0 0.0
        %8073 = vmatpush2.msra.mxu0 0.0
        %8074 = vmatprep.subr.mxu0 0.0
        %8075 = vmatpush2.msra.mxu0 0.0
        %8076 = vmatprep.subr.mxu0 0.0
        %8077 = vmatpush2.msra.mxu0 0.0
        %8078 = vmatprep.subr.mxu0 0.0
        %8079 = vmatpush2.msra.mxu0 0.0
        %8080 = vmatprep.subr.mxu0 0.0
        %8081 = vmatpush2.msra.mxu0 0.0
        %8082 = vmatprep.subr.mxu0 0.0
        %8083 = vmatpush2.msra.mxu0 0.0
        %8084 = vmatprep.subr.mxu0 0.0
        %8085 = vmatpush2.msra.mxu0 0.0
        %8086 = vmatprep.subr.mxu0 0.0
        %8087 = vmatpush2.msra.mxu0 0.0
        %8088 = vmatprep.subr.mxu0 0.0
        %8089 = vmatpush2.msra.mxu0 0.0
        %8090 = vmatprep.mubr.f32.mxu0 0.0
        %8091 = vmatmul.mubr.f32.gmra.mxu0 %v915
        %v8092 = vpop.f32.mrf.mxu0
        %v8093 = vadd.f32 0.0, %v8092
        %v8094 = vpop.f32.mrf.mxu0
        %8095 = vmatprep.mubr.f32.mxu0 0.0
        %8096 = vmatmul.mubr.f32.gmra.mxu0 %v918
        %v8097 = vpop.f32.mrf.mxu0
        %v8098 = vadd.f32 0.0, %v8097
        %v8099 = vpop.f32.mrf.mxu0
        %8100 = vmatprep.mubr.f32.mxu0 0.0
        %8101 = vmatmul.mubr.f32.gmra.mxu0 %v921
        %v8102 = vpop.f32.mrf.mxu0
        %v8103 = vadd.f32 0.0, %v8102
        %v8104 = vpop.f32.mrf.mxu0
        %8105 = vmatprep.mubr.f32.mxu0 0.0
        %8106 = vmatmul.mubr.f32.gmra.mxu0 %v924
        %v8107 = vpop.f32.mrf.mxu0
        %v8108 = vadd.f32 0.0, %v8107
        %v8109 = vpop.f32.mrf.mxu0
        %8110 = vmatprep.mubr.f32.mxu0 0.0
        %8111 = vmatmul.mubr.f32.gmra.mxu0 %v927
        %v8112 = vpop.f32.mrf.mxu0
        %v8113 = vadd.f32 0.0, %v8112
        %v8114 = vpop.f32.mrf.mxu0
        %8115 = vmatprep.mubr.f32.mxu0 0.0
        %8116 = vmatmul.mubr.f32.gmra.mxu0 %v930
        %v8117 = vpop.f32.mrf.mxu0
        %v8118 = vadd.f32 0.0, %v8117
        %v8119 = vpop.f32.mrf.mxu0
        %8120 = vmatprep.mubr.f32.mxu0 0.0
        %8121 = vmatmul.mubr.f32.gmra.mxu0 %v933
        %v8122 = vpop.f32.mrf.mxu0
        %v8123 = vadd.f32 0.0, %v8122
        %v8124 = vpop.f32.mrf.mxu0
        %8125 = vmatprep.mubr.f32.mxu0 0.0
        %8126 = vmatmul.mubr.f32.gmra.mxu0 %v936
        %v8127 = vpop.f32.mrf.mxu0
        %v8128 = vadd.f32 0.0, %v8127
        %v8129 = vpop.f32.mrf.mxu0
        %8130 = vmatprep.mubr.f32.mxu0 0.0
        %8131 = vmatmul.mubr.f32.gmra.mxu0 %v939
        %v8132 = vpop.f32.mrf.mxu0
        %v8133 = vadd.f32 0.0, %v8132
        %v8134 = vpop.f32.mrf.mxu0
        %8135 = vmatprep.mubr.f32.mxu0 0.0
        %8136 = vmatmul.mubr.f32.gmra.mxu0 %v942
        %v8137 = vpop.f32.mrf.mxu0
        %v8138 = vadd.f32 0.0, %v8137
        %v8139 = vpop.f32.mrf.mxu0
        %8140 = vmatprep.mubr.f32.mxu0 0.0
        %8141 = vmatmul.mubr.f32.gmra.mxu0 %v945
        %v8142 = vpop.f32.mrf.mxu0
        %v8143 = vadd.f32 0.0, %v8142
        %v8144 = vpop.f32.mrf.mxu0
        %8145 = vmatprep.mubr.f32.mxu0 0.0
        %8146 = vmatmul.mubr.f32.gmra.mxu0 %v948
        %v8147 = vpop.f32.mrf.mxu0
        %v8148 = vadd.f32 0.0, %v8147
        %v8149 = vpop.f32.mrf.mxu0
        %8150 = vmatprep.mubr.f32.mxu0 0.0
        %8151 = vmatmul.mubr.f32.gmra.mxu0 %v951
        %v8152 = vpop.f32.mrf.mxu0
        %v8153 = vadd.f32 0.0, %v8152
        %v8154 = vpop.f32.mrf.mxu0
        %8155 = vmatprep.mubr.f32.mxu0 0.0
        %8156 = vmatmul.mubr.f32.gmra.mxu0 %v954
        %v8157 = vpop.f32.mrf.mxu0
        %v8158 = vadd.f32 0.0, %v8157
        %v8159 = vpop.f32.mrf.mxu0
        %8160 = vmatprep.mubr.f32.mxu0 0.0
        %8161 = vmatmul.mubr.f32.gmra.mxu0 %v957
        %v8162 = vpop.f32.mrf.mxu0
        %v8163 = vadd.f32 0.0, %v8162
        %v8164 = vpop.f32.mrf.mxu0
        %8165 = vmatprep.mubr.f32.mxu0 0.0
        %8166 = vmatmul.mubr.f32.gmra.mxu0 %v960
        %v8167 = vpop.f32.mrf.mxu0
        %v8168 = vadd.f32 0.0, %v8167
        %v8169 = vpop.f32.mrf.mxu0
        %8170 = vdwg.mxu0
        %v8171 = vmax.f32 %v8093, 0.0
        %v8172 = vmax.f32 %v8098, 0.0
        %v8173 = vmax.f32 %v8103, 0.0
        %v8174 = vmax.f32 %v8108, 0.0
        %v8175 = vmax.f32 %v8113, 0.0
        %v8176 = vmax.f32 %v8118, 0.0
        %v8177 = vmax.f32 %v8123, 0.0
        %v8178 = vmax.f32 %v8128, 0.0
        %v8179 = vmax.f32 %v8133, 0.0
        %v8180 = vmax.f32 %v8138, 0.0
        %v8181 = vmax.f32 %v8143, 0.0
        %v8182 = vmax.f32 %v8148, 0.0
        %v8183 = vmax.f32 %v8153, 0.0
        %v8184 = vmax.f32 %v8158, 0.0
        %v8185 = vmax.f32 %v8163, 0.0
        %v8186 = vmax.f32 %v8168, 0.0
        %s8187 = scalar_lea.vmem %s2, 2944
        %v8188 = vld [vmem:[%s8187] sm:$0xff]
        %v8189 = vld [vmem:[%s8187 + $0x8] sm:$0xff]
        %v8190 = vld [vmem:[%s8187 + $0x10] sm:$0xff]
        %v8191 = vld [vmem:[%s8187 + $0x18] sm:$0xff]
        %v8192 = vld [vmem:[%s8187 + $0x20] sm:$0xff]
        %v8193 = vld [vmem:[%s8187 + $0x28] sm:$0xff]
        %v8194 = vld [vmem:[%s8187 + $0x30] sm:$0xff]
        %v8195 = vld [vmem:[%s8187 + $0x38] sm:$0xff]
        %v8196 = vld [vmem:[%s8187 + $0x40] sm:$0xff]
        %v8197 = vld [vmem:[%s8187 + $0x48] sm:$0xff]
        %v8198 = vld [vmem:[%s8187 + $0x50] sm:$0xff]
        %v8199 = vld [vmem:[%s8187 + $0x58] sm:$0xff]
        %v8200 = vld [vmem:[%s8187 + $0x60] sm:$0xff]
        %v8201 = vld [vmem:[%s8187 + $0x68] sm:$0xff]
        %v8202 = vld [vmem:[%s8187 + $0x70] sm:$0xff]
        %v8203 = vld [vmem:[%s8187 + $0x78] sm:$0xff]
        %8205 = vset.pattern.permute.xlu0 0
        %8206 = vperm.xlu0 %8205, %v8188
        %v8207 = vpop.permute.xlu0 %8206
        %8210 = vset.pattern.permute.xlu0 0
        %8211 = vperm.xlu0 %8210, %v8189
        %v8212 = vpop.permute.xlu0 %8211
        %8215 = vset.pattern.permute.xlu0 0
        %8216 = vperm.xlu0 %8215, %v8190
        %v8217 = vpop.permute.xlu0 %8216
        %8220 = vset.pattern.permute.xlu0 0
        %8221 = vperm.xlu0 %8220, %v8191
        %v8222 = vpop.permute.xlu0 %8221
        %8225 = vset.pattern.permute.xlu0 0
        %8226 = vperm.xlu0 %8225, %v8192
        %v8227 = vpop.permute.xlu0 %8226
        %8230 = vset.pattern.permute.xlu0 0
        %8231 = vperm.xlu0 %8230, %v8193
        %v8232 = vpop.permute.xlu0 %8231
        %8235 = vset.pattern.permute.xlu0 0
        %8236 = vperm.xlu0 %8235, %v8194
        %v8237 = vpop.permute.xlu0 %8236
        %8240 = vset.pattern.permute.xlu0 0
        %8241 = vperm.xlu0 %8240, %v8195
        %v8242 = vpop.permute.xlu0 %8241
        %8245 = vset.pattern.permute.xlu0 0
        %8246 = vperm.xlu0 %8245, %v8196
        %v8247 = vpop.permute.xlu0 %8246
        %8250 = vset.pattern.permute.xlu0 0
        %8251 = vperm.xlu0 %8250, %v8197
        %v8252 = vpop.permute.xlu0 %8251
        %8255 = vset.pattern.permute.xlu0 0
        %8256 = vperm.xlu0 %8255, %v8198
        %v8257 = vpop.permute.xlu0 %8256
        %8260 = vset.pattern.permute.xlu0 0
        %8261 = vperm.xlu0 %8260, %v8199
        %v8262 = vpop.permute.xlu0 %8261
        %8265 = vset.pattern.permute.xlu0 0
        %8266 = vperm.xlu0 %8265, %v8200
        %v8267 = vpop.permute.xlu0 %8266
        %8270 = vset.pattern.permute.xlu0 0
        %8271 = vperm.xlu0 %8270, %v8201
        %v8272 = vpop.permute.xlu0 %8271
        %8275 = vset.pattern.permute.xlu0 0
        %8276 = vperm.xlu0 %8275, %v8202
        %v8277 = vpop.permute.xlu0 %8276
        %8280 = vset.pattern.permute.xlu0 0
        %8281 = vperm.xlu0 %8280, %v8203
        %v8282 = vpop.permute.xlu0 %8281
        %v8284 = vmul.f32 %v8171, %v8207
        %v8285 = vmul.f32 %v8172, %v8212
        %v8286 = vmul.f32 %v8173, %v8217
        %v8287 = vmul.f32 %v8174, %v8222
        %v8288 = vmul.f32 %v8175, %v8227
        %v8289 = vmul.f32 %v8176, %v8232
        %v8290 = vmul.f32 %v8177, %v8237
        %v8291 = vmul.f32 %v8178, %v8242
        %v8292 = vmul.f32 %v8179, %v8247
        %v8293 = vmul.f32 %v8180, %v8252
        %v8294 = vmul.f32 %v8181, %v8257
        %v8295 = vmul.f32 %v8182, %v8262
        %v8296 = vmul.f32 %v8183, %v8267
        %v8297 = vmul.f32 %v8184, %v8272
        %v8298 = vmul.f32 %v8185, %v8277
        %v8299 = vmul.f32 %v8186, %v8282
        %v8300 = vadd.f32 %v8284, %v8288
        %v8301 = vadd.f32 %v8285, %v8289
        %v8302 = vadd.f32 %v8286, %v8290
        %v8303 = vadd.f32 %v8287, %v8291
        %v8304 = vadd.f32 %v8300, %v8292
        %v8305 = vadd.f32 %v8301, %v8293
        %v8306 = vadd.f32 %v8302, %v8294
        %v8307 = vadd.f32 %v8303, %v8295
        %v8308 = vadd.f32 %v8304, %v8296
        %v8309 = vadd.f32 %v8305, %v8297
        %v8310 = vadd.f32 %v8306, %v8298
        %v8311 = vadd.f32 %v8307, %v8299
        %v8312 = vld [vmem:[#allocation2] sm:$0xff]
        %v8313 = vld [vmem:[#allocation2 + $0x8] sm:$0xff]
        %v8314 = vld [vmem:[#allocation2 + $0x10] sm:$0xff]
        %v8315 = vld [vmem:[#allocation2 + $0x18] sm:$0xff]
        %v8316 = vadd.f32 %v8312, %v8308
        %v8317 = vadd.f32 %v8313, %v8309
        %v8318 = vadd.f32 %v8314, %v8310
        %v8319 = vadd.f32 %v8315, %v8311
        %8320 = vst [vmem:[#allocation2] sm:$0xff] %v8316
        %8321 = vst [vmem:[#allocation2 + $0x8] sm:$0xff] %v8317
        %8322 = vst [vmem:[#allocation2 + $0x10] sm:$0xff] %v8318
        %8323 = vst [vmem:[#allocation2 + $0x18] sm:$0xff] %v8319
        %s8324 = scalar_lea.vmem %s850, 960 [#allocation3]
        %v8325 = vld [vmem:[%s8324] sm:$0xff]
        %v8326 = vld [vmem:[%s8324 + $0x8] sm:$0xff]
        %v8327 = vld [vmem:[%s8324 + $0x10] sm:$0xff]
        %v8328 = vld [vmem:[%s8324 + $0x18] sm:$0xff]
        %v8329 = vld [vmem:[%s8324 + $0x20] sm:$0x1]
        %v8331 = vsel %vm962, %v8329, 0
        %8333 = vmatprep.subr.mxu0 0.0
        %8334 = vmatpush1.msra.mxu0 0.0
        %8335 = vmatprep.subr.mxu0 0.0
        %8336 = vmatpush1.msra.mxu0 0.0
        %8337 = vmatprep.subr.mxu0 0.0
        %8338 = vmatpush1.msra.mxu0 0.0
        %8339 = vmatprep.subr.mxu0 0.0
        %8340 = vmatpush1.msra.mxu0 0.0
        %8341 = vmatprep.subr.mxu0 0.0
        %8342 = vmatpush1.msra.mxu0 0.0
        %8343 = vmatprep.subr.mxu0 0.0
        %8344 = vmatpush1.msra.mxu0 0.0
        %8345 = vmatprep.subr.mxu0 0.0
        %8346 = vmatpush1.msra.mxu0 0.0
        %8347 = vmatprep.subr.mxu0 0.0
        %8348 = vmatpush1.msra.mxu0 0.0
        %8349 = vmatprep.subr.mxu0 0.0
        %8350 = vmatpush1.msra.mxu0 0.0
        %8351 = vmatprep.subr.mxu0 0.0
        %8352 = vmatpush1.msra.mxu0 0.0
        %8353 = vmatprep.subr.mxu0 0.0
        %8354 = vmatpush1.msra.mxu0 0.0
        %8355 = vmatprep.subr.mxu0 0.0
        %8356 = vmatpush1.msra.mxu0 %v8331
        %8357 = vmatprep.subr.mxu0 0.0
        %8358 = vmatpush1.msra.mxu0 %v8328
        %8359 = vmatprep.subr.mxu0 0.0
        %8360 = vmatpush1.msra.mxu0 %v8327
        %8361 = vmatprep.subr.mxu0 0.0
        %8362 = vmatpush1.msra.mxu0 %v8326
        %8363 = vmatprep.subr.mxu0 0.0
        %8364 = vmatpush1.msra.mxu0 %v8325
        %8365 = vmatprep.subr.mxu0 0.0
        %8366 = vmatpush2.msra.mxu0 0.0
        %8367 = vmatprep.subr.mxu0 0.0
        %8368 = vmatpush2.msra.mxu0 0.0
        %8369 = vmatprep.subr.mxu0 0.0
        %8370 = vmatpush2.msra.mxu0 0.0
        %8371 = vmatprep.subr.mxu0 0.0
        %8372 = vmatpush2.msra.mxu0 0.0
        %8373 = vmatprep.subr.mxu0 0.0
        %8374 = vmatpush2.msra.mxu0 0.0
        %8375 = vmatprep.subr.mxu0 0.0
        %8376 = vmatpush2.msra.mxu0 0.0
        %8377 = vmatprep.subr.mxu0 0.0
        %8378 = vmatpush2.msra.mxu0 0.0
        %8379 = vmatprep.subr.mxu0 0.0
        %8380 = vmatpush2.msra.mxu0 0.0
        %8381 = vmatprep.subr.mxu0 0.0
        %8382 = vmatpush2.msra.mxu0 0.0
        %8383 = vmatprep.subr.mxu0 0.0
        %8384 = vmatpush2.msra.mxu0 0.0
        %8385 = vmatprep.subr.mxu0 0.0
        %8386 = vmatpush2.msra.mxu0 0.0
        %8387 = vmatprep.subr.mxu0 0.0
        %8388 = vmatpush2.msra.mxu0 0.0
        %8389 = vmatprep.subr.mxu0 0.0
        %8390 = vmatpush2.msra.mxu0 0.0
        %8391 = vmatprep.subr.mxu0 0.0
        %8392 = vmatpush2.msra.mxu0 0.0
        %8393 = vmatprep.subr.mxu0 0.0
        %8394 = vmatpush2.msra.mxu0 0.0
        %8395 = vmatprep.subr.mxu0 0.0
        %8396 = vmatpush2.msra.mxu0 0.0
        %8397 = vmatprep.mubr.f32.mxu0 0.0
        %8398 = vmatmul.mubr.f32.gmra.mxu0 %v915
        %v8399 = vpop.f32.mrf.mxu0
        %v8400 = vadd.f32 0.0, %v8399
        %v8401 = vpop.f32.mrf.mxu0
        %8402 = vmatprep.mubr.f32.mxu0 0.0
        %8403 = vmatmul.mubr.f32.gmra.mxu0 %v918
        %v8404 = vpop.f32.mrf.mxu0
        %v8405 = vadd.f32 0.0, %v8404
        %v8406 = vpop.f32.mrf.mxu0
        %8407 = vmatprep.mubr.f32.mxu0 0.0
        %8408 = vmatmul.mubr.f32.gmra.mxu0 %v921
        %v8409 = vpop.f32.mrf.mxu0
        %v8410 = vadd.f32 0.0, %v8409
        %v8411 = vpop.f32.mrf.mxu0
        %8412 = vmatprep.mubr.f32.mxu0 0.0
        %8413 = vmatmul.mubr.f32.gmra.mxu0 %v924
        %v8414 = vpop.f32.mrf.mxu0
        %v8415 = vadd.f32 0.0, %v8414
        %v8416 = vpop.f32.mrf.mxu0
        %8417 = vmatprep.mubr.f32.mxu0 0.0
        %8418 = vmatmul.mubr.f32.gmra.mxu0 %v927
        %v8419 = vpop.f32.mrf.mxu0
        %v8420 = vadd.f32 0.0, %v8419
        %v8421 = vpop.f32.mrf.mxu0
        %8422 = vmatprep.mubr.f32.mxu0 0.0
        %8423 = vmatmul.mubr.f32.gmra.mxu0 %v930
        %v8424 = vpop.f32.mrf.mxu0
        %v8425 = vadd.f32 0.0, %v8424
        %v8426 = vpop.f32.mrf.mxu0
        %8427 = vmatprep.mubr.f32.mxu0 0.0
        %8428 = vmatmul.mubr.f32.gmra.mxu0 %v933
        %v8429 = vpop.f32.mrf.mxu0
        %v8430 = vadd.f32 0.0, %v8429
        %v8431 = vpop.f32.mrf.mxu0
        %8432 = vmatprep.mubr.f32.mxu0 0.0
        %8433 = vmatmul.mubr.f32.gmra.mxu0 %v936
        %v8434 = vpop.f32.mrf.mxu0
        %v8435 = vadd.f32 0.0, %v8434
        %v8436 = vpop.f32.mrf.mxu0
        %8437 = vmatprep.mubr.f32.mxu0 0.0
        %8438 = vmatmul.mubr.f32.gmra.mxu0 %v939
        %v8439 = vpop.f32.mrf.mxu0
        %v8440 = vadd.f32 0.0, %v8439
        %v8441 = vpop.f32.mrf.mxu0
        %8442 = vmatprep.mubr.f32.mxu0 0.0
        %8443 = vmatmul.mubr.f32.gmra.mxu0 %v942
        %v8444 = vpop.f32.mrf.mxu0
        %v8445 = vadd.f32 0.0, %v8444
        %v8446 = vpop.f32.mrf.mxu0
        %8447 = vmatprep.mubr.f32.mxu0 0.0
        %8448 = vmatmul.mubr.f32.gmra.mxu0 %v945
        %v8449 = vpop.f32.mrf.mxu0
        %v8450 = vadd.f32 0.0, %v8449
        %v8451 = vpop.f32.mrf.mxu0
        %8452 = vmatprep.mubr.f32.mxu0 0.0
        %8453 = vmatmul.mubr.f32.gmra.mxu0 %v948
        %v8454 = vpop.f32.mrf.mxu0
        %v8455 = vadd.f32 0.0, %v8454
        %v8456 = vpop.f32.mrf.mxu0
        %8457 = vmatprep.mubr.f32.mxu0 0.0
        %8458 = vmatmul.mubr.f32.gmra.mxu0 %v951
        %v8459 = vpop.f32.mrf.mxu0
        %v8460 = vadd.f32 0.0, %v8459
        %v8461 = vpop.f32.mrf.mxu0
        %8462 = vmatprep.mubr.f32.mxu0 0.0
        %8463 = vmatmul.mubr.f32.gmra.mxu0 %v954
        %v8464 = vpop.f32.mrf.mxu0
        %v8465 = vadd.f32 0.0, %v8464
        %v8466 = vpop.f32.mrf.mxu0
        %8467 = vmatprep.mubr.f32.mxu0 0.0
        %8468 = vmatmul.mubr.f32.gmra.mxu0 %v957
        %v8469 = vpop.f32.mrf.mxu0
        %v8470 = vadd.f32 0.0, %v8469
        %v8471 = vpop.f32.mrf.mxu0
        %8472 = vmatprep.mubr.f32.mxu0 0.0
        %8473 = vmatmul.mubr.f32.gmra.mxu0 %v960
        %v8474 = vpop.f32.mrf.mxu0
        %v8475 = vadd.f32 0.0, %v8474
        %v8476 = vpop.f32.mrf.mxu0
        %8477 = vdwg.mxu0
        %v8478 = vmax.f32 %v8400, 0.0
        %v8479 = vmax.f32 %v8405, 0.0
        %v8480 = vmax.f32 %v8410, 0.0
        %v8481 = vmax.f32 %v8415, 0.0
        %v8482 = vmax.f32 %v8420, 0.0
        %v8483 = vmax.f32 %v8425, 0.0
        %v8484 = vmax.f32 %v8430, 0.0
        %v8485 = vmax.f32 %v8435, 0.0
        %v8486 = vmax.f32 %v8440, 0.0
        %v8487 = vmax.f32 %v8445, 0.0
        %v8488 = vmax.f32 %v8450, 0.0
        %v8489 = vmax.f32 %v8455, 0.0
        %v8490 = vmax.f32 %v8460, 0.0
        %v8491 = vmax.f32 %v8465, 0.0
        %v8492 = vmax.f32 %v8470, 0.0
        %v8493 = vmax.f32 %v8475, 0.0
        %s8494 = scalar_lea.vmem %s2, 3072
        %v8495 = vld [vmem:[%s8494] sm:$0xff]
        %v8496 = vld [vmem:[%s8494 + $0x8] sm:$0xff]
        %v8497 = vld [vmem:[%s8494 + $0x10] sm:$0xff]
        %v8498 = vld [vmem:[%s8494 + $0x18] sm:$0xff]
        %v8499 = vld [vmem:[%s8494 + $0x20] sm:$0xff]
        %v8500 = vld [vmem:[%s8494 + $0x28] sm:$0xff]
        %v8501 = vld [vmem:[%s8494 + $0x30] sm:$0xff]
        %v8502 = vld [vmem:[%s8494 + $0x38] sm:$0xff]
        %v8503 = vld [vmem:[%s8494 + $0x40] sm:$0xff]
        %v8504 = vld [vmem:[%s8494 + $0x48] sm:$0xff]
        %v8505 = vld [vmem:[%s8494 + $0x50] sm:$0xff]
        %v8506 = vld [vmem:[%s8494 + $0x58] sm:$0xff]
        %v8507 = vld [vmem:[%s8494 + $0x60] sm:$0xff]
        %v8508 = vld [vmem:[%s8494 + $0x68] sm:$0xff]
        %v8509 = vld [vmem:[%s8494 + $0x70] sm:$0xff]
        %v8510 = vld [vmem:[%s8494 + $0x78] sm:$0xff]
        %8512 = vset.pattern.permute.xlu0 0
        %8513 = vperm.xlu0 %8512, %v8495
        %v8514 = vpop.permute.xlu0 %8513
        %8517 = vset.pattern.permute.xlu0 0
        %8518 = vperm.xlu0 %8517, %v8496
        %v8519 = vpop.permute.xlu0 %8518
        %8522 = vset.pattern.permute.xlu0 0
        %8523 = vperm.xlu0 %8522, %v8497
        %v8524 = vpop.permute.xlu0 %8523
        %8527 = vset.pattern.permute.xlu0 0
        %8528 = vperm.xlu0 %8527, %v8498
        %v8529 = vpop.permute.xlu0 %8528
        %8532 = vset.pattern.permute.xlu0 0
        %8533 = vperm.xlu0 %8532, %v8499
        %v8534 = vpop.permute.xlu0 %8533
        %8537 = vset.pattern.permute.xlu0 0
        %8538 = vperm.xlu0 %8537, %v8500
        %v8539 = vpop.permute.xlu0 %8538
        %8542 = vset.pattern.permute.xlu0 0
        %8543 = vperm.xlu0 %8542, %v8501
        %v8544 = vpop.permute.xlu0 %8543
        %8547 = vset.pattern.permute.xlu0 0
        %8548 = vperm.xlu0 %8547, %v8502
        %v8549 = vpop.permute.xlu0 %8548
        %8552 = vset.pattern.permute.xlu0 0
        %8553 = vperm.xlu0 %8552, %v8503
        %v8554 = vpop.permute.xlu0 %8553
        %8557 = vset.pattern.permute.xlu0 0
        %8558 = vperm.xlu0 %8557, %v8504
        %v8559 = vpop.permute.xlu0 %8558
        %8562 = vset.pattern.permute.xlu0 0
        %8563 = vperm.xlu0 %8562, %v8505
        %v8564 = vpop.permute.xlu0 %8563
        %8567 = vset.pattern.permute.xlu0 0
        %8568 = vperm.xlu0 %8567, %v8506
        %v8569 = vpop.permute.xlu0 %8568
        %8572 = vset.pattern.permute.xlu0 0
        %8573 = vperm.xlu0 %8572, %v8507
        %v8574 = vpop.permute.xlu0 %8573
        %8577 = vset.pattern.permute.xlu0 0
        %8578 = vperm.xlu0 %8577, %v8508
        %v8579 = vpop.permute.xlu0 %8578
        %8582 = vset.pattern.permute.xlu0 0
        %8583 = vperm.xlu0 %8582, %v8509
        %v8584 = vpop.permute.xlu0 %8583
        %8587 = vset.pattern.permute.xlu0 0
        %8588 = vperm.xlu0 %8587, %v8510
        %v8589 = vpop.permute.xlu0 %8588
        %v8591 = vmul.f32 %v8478, %v8514
        %v8592 = vmul.f32 %v8479, %v8519
        %v8593 = vmul.f32 %v8480, %v8524
        %v8594 = vmul.f32 %v8481, %v8529
        %v8595 = vmul.f32 %v8482, %v8534
        %v8596 = vmul.f32 %v8483, %v8539
        %v8597 = vmul.f32 %v8484, %v8544
        %v8598 = vmul.f32 %v8485, %v8549
        %v8599 = vmul.f32 %v8486, %v8554
        %v8600 = vmul.f32 %v8487, %v8559
        %v8601 = vmul.f32 %v8488, %v8564
        %v8602 = vmul.f32 %v8489, %v8569
        %v8603 = vmul.f32 %v8490, %v8574
        %v8604 = vmul.f32 %v8491, %v8579
        %v8605 = vmul.f32 %v8492, %v8584
        %v8606 = vmul.f32 %v8493, %v8589
        %v8607 = vadd.f32 %v8591, %v8595
        %v8608 = vadd.f32 %v8592, %v8596
        %v8609 = vadd.f32 %v8593, %v8597
        %v8610 = vadd.f32 %v8594, %v8598
        %v8611 = vadd.f32 %v8607, %v8599
        %v8612 = vadd.f32 %v8608, %v8600
        %v8613 = vadd.f32 %v8609, %v8601
        %v8614 = vadd.f32 %v8610, %v8602
        %v8615 = vadd.f32 %v8611, %v8603
        %v8616 = vadd.f32 %v8612, %v8604
        %v8617 = vadd.f32 %v8613, %v8605
        %v8618 = vadd.f32 %v8614, %v8606
        %v8619 = vld [vmem:[#allocation2] sm:$0xff]
        %v8620 = vld [vmem:[#allocation2 + $0x8] sm:$0xff]
        %v8621 = vld [vmem:[#allocation2 + $0x10] sm:$0xff]
        %v8622 = vld [vmem:[#allocation2 + $0x18] sm:$0xff]
        %v8623 = vadd.f32 %v8619, %v8615
        %v8624 = vadd.f32 %v8620, %v8616
        %v8625 = vadd.f32 %v8621, %v8617
        %v8626 = vadd.f32 %v8622, %v8618
        %8627 = vst [vmem:[#allocation2] sm:$0xff] %v8623
        %8628 = vst [vmem:[#allocation2 + $0x8] sm:$0xff] %v8624
        %8629 = vst [vmem:[#allocation2 + $0x10] sm:$0xff] %v8625
        %8630 = vst [vmem:[#allocation2 + $0x18] sm:$0xff] %v8626
        %s8631 = scalar_lea.vmem %s850, 1000 [#allocation3]
        %v8632 = vld [vmem:[%s8631] sm:$0xff]
        %v8633 = vld [vmem:[%s8631 + $0x8] sm:$0xff]
        %v8634 = vld [vmem:[%s8631 + $0x10] sm:$0xff]
        %v8635 = vld [vmem:[%s8631 + $0x18] sm:$0xff]
        %v8636 = vld [vmem:[%s8631 + $0x20] sm:$0x1]
        %v8638 = vsel %vm962, %v8636, 0
        %8640 = vmatprep.subr.mxu0 0.0
        %8641 = vmatpush1.msra.mxu0 0.0
        %8642 = vmatprep.subr.mxu0 0.0
        %8643 = vmatpush1.msra.mxu0 0.0
        %8644 = vmatprep.subr.mxu0 0.0
        %8645 = vmatpush1.msra.mxu0 0.0
        %8646 = vmatprep.subr.mxu0 0.0
        %8647 = vmatpush1.msra.mxu0 0.0
        %8648 = vmatprep.subr.mxu0 0.0
        %8649 = vmatpush1.msra.mxu0 0.0
        %8650 = vmatprep.subr.mxu0 0.0
        %8651 = vmatpush1.msra.mxu0 0.0
        %8652 = vmatprep.subr.mxu0 0.0
        %8653 = vmatpush1.msra.mxu0 0.0
        %8654 = vmatprep.subr.mxu0 0.0
        %8655 = vmatpush1.msra.mxu0 0.0
        %8656 = vmatprep.subr.mxu0 0.0
        %8657 = vmatpush1.msra.mxu0 0.0
        %8658 = vmatprep.subr.mxu0 0.0
        %8659 = vmatpush1.msra.mxu0 0.0
        %8660 = vmatprep.subr.mxu0 0.0
        %8661 = vmatpush1.msra.mxu0 0.0
        %8662 = vmatprep.subr.mxu0 0.0
        %8663 = vmatpush1.msra.mxu0 %v8638
        %8664 = vmatprep.subr.mxu0 0.0
        %8665 = vmatpush1.msra.mxu0 %v8635
        %8666 = vmatprep.subr.mxu0 0.0
        %8667 = vmatpush1.msra.mxu0 %v8634
        %8668 = vmatprep.subr.mxu0 0.0
        %8669 = vmatpush1.msra.mxu0 %v8633
        %8670 = vmatprep.subr.mxu0 0.0
        %8671 = vmatpush1.msra.mxu0 %v8632
        %8672 = vmatprep.subr.mxu0 0.0
        %8673 = vmatpush2.msra.mxu0 0.0
        %8674 = vmatprep.subr.mxu0 0.0
        %8675 = vmatpush2.msra.mxu0 0.0
        %8676 = vmatprep.subr.mxu0 0.0
        %8677 = vmatpush2.msra.mxu0 0.0
        %8678 = vmatprep.subr.mxu0 0.0
        %8679 = vmatpush2.msra.mxu0 0.0
        %8680 = vmatprep.subr.mxu0 0.0
        %8681 = vmatpush2.msra.mxu0 0.0
        %8682 = vmatprep.subr.mxu0 0.0
        %8683 = vmatpush2.msra.mxu0 0.0
        %8684 = vmatprep.subr.mxu0 0.0
        %8685 = vmatpush2.msra.mxu0 0.0
        %8686 = vmatprep.subr.mxu0 0.0
        %8687 = vmatpush2.msra.mxu0 0.0
        %8688 = vmatprep.subr.mxu0 0.0
        %8689 = vmatpush2.msra.mxu0 0.0
        %8690 = vmatprep.subr.mxu0 0.0
        %8691 = vmatpush2.msra.mxu0 0.0
        %8692 = vmatprep.subr.mxu0 0.0
        %8693 = vmatpush2.msra.mxu0 0.0
        %8694 = vmatprep.subr.mxu0 0.0
        %8695 = vmatpush2.msra.mxu0 0.0
        %8696 = vmatprep.subr.mxu0 0.0
        %8697 = vmatpush2.msra.mxu0 0.0
        %8698 = vmatprep.subr.mxu0 0.0
        %8699 = vmatpush2.msra.mxu0 0.0
        %8700 = vmatprep.subr.mxu0 0.0
        %8701 = vmatpush2.msra.mxu0 0.0
        %8702 = vmatprep.subr.mxu0 0.0
        %8703 = vmatpush2.msra.mxu0 0.0
        %8704 = vmatprep.mubr.f32.mxu0 0.0
        %8705 = vmatmul.mubr.f32.gmra.mxu0 %v915
        %v8706 = vpop.f32.mrf.mxu0
        %v8707 = vadd.f32 0.0, %v8706
        %v8708 = vpop.f32.mrf.mxu0
        %8709 = vmatprep.mubr.f32.mxu0 0.0
        %8710 = vmatmul.mubr.f32.gmra.mxu0 %v918
        %v8711 = vpop.f32.mrf.mxu0
        %v8712 = vadd.f32 0.0, %v8711
        %v8713 = vpop.f32.mrf.mxu0
        %8714 = vmatprep.mubr.f32.mxu0 0.0
        %8715 = vmatmul.mubr.f32.gmra.mxu0 %v921
        %v8716 = vpop.f32.mrf.mxu0
        %v8717 = vadd.f32 0.0, %v8716
        %v8718 = vpop.f32.mrf.mxu0
        %8719 = vmatprep.mubr.f32.mxu0 0.0
        %8720 = vmatmul.mubr.f32.gmra.mxu0 %v924
        %v8721 = vpop.f32.mrf.mxu0
        %v8722 = vadd.f32 0.0, %v8721
        %v8723 = vpop.f32.mrf.mxu0
        %8724 = vmatprep.mubr.f32.mxu0 0.0
        %8725 = vmatmul.mubr.f32.gmra.mxu0 %v927
        %v8726 = vpop.f32.mrf.mxu0
        %v8727 = vadd.f32 0.0, %v8726
        %v8728 = vpop.f32.mrf.mxu0
        %8729 = vmatprep.mubr.f32.mxu0 0.0
        %8730 = vmatmul.mubr.f32.gmra.mxu0 %v930
        %v8731 = vpop.f32.mrf.mxu0
        %v8732 = vadd.f32 0.0, %v8731
        %v8733 = vpop.f32.mrf.mxu0
        %8734 = vmatprep.mubr.f32.mxu0 0.0
        %8735 = vmatmul.mubr.f32.gmra.mxu0 %v933
        %v8736 = vpop.f32.mrf.mxu0
        %v8737 = vadd.f32 0.0, %v8736
        %v8738 = vpop.f32.mrf.mxu0
        %8739 = vmatprep.mubr.f32.mxu0 0.0
        %8740 = vmatmul.mubr.f32.gmra.mxu0 %v936
        %v8741 = vpop.f32.mrf.mxu0
        %v8742 = vadd.f32 0.0, %v8741
        %v8743 = vpop.f32.mrf.mxu0
        %8744 = vmatprep.mubr.f32.mxu0 0.0
        %8745 = vmatmul.mubr.f32.gmra.mxu0 %v939
        %v8746 = vpop.f32.mrf.mxu0
        %v8747 = vadd.f32 0.0, %v8746
        %v8748 = vpop.f32.mrf.mxu0
        %8749 = vmatprep.mubr.f32.mxu0 0.0
        %8750 = vmatmul.mubr.f32.gmra.mxu0 %v942
        %v8751 = vpop.f32.mrf.mxu0
        %v8752 = vadd.f32 0.0, %v8751
        %v8753 = vpop.f32.mrf.mxu0
        %8754 = vmatprep.mubr.f32.mxu0 0.0
        %8755 = vmatmul.mubr.f32.gmra.mxu0 %v945
        %v8756 = vpop.f32.mrf.mxu0
        %v8757 = vadd.f32 0.0, %v8756
        %v8758 = vpop.f32.mrf.mxu0
        %8759 = vmatprep.mubr.f32.mxu0 0.0
        %8760 = vmatmul.mubr.f32.gmra.mxu0 %v948
        %v8761 = vpop.f32.mrf.mxu0
        %v8762 = vadd.f32 0.0, %v8761
        %v8763 = vpop.f32.mrf.mxu0
        %8764 = vmatprep.mubr.f32.mxu0 0.0
        %8765 = vmatmul.mubr.f32.gmra.mxu0 %v951
        %v8766 = vpop.f32.mrf.mxu0
        %v8767 = vadd.f32 0.0, %v8766
        %v8768 = vpop.f32.mrf.mxu0
        %8769 = vmatprep.mubr.f32.mxu0 0.0
        %8770 = vmatmul.mubr.f32.gmra.mxu0 %v954
        %v8771 = vpop.f32.mrf.mxu0
        %v8772 = vadd.f32 0.0, %v8771
        %v8773 = vpop.f32.mrf.mxu0
        %8774 = vmatprep.mubr.f32.mxu0 0.0
        %8775 = vmatmul.mubr.f32.gmra.mxu0 %v957
        %v8776 = vpop.f32.mrf.mxu0
        %v8777 = vadd.f32 0.0, %v8776
        %v8778 = vpop.f32.mrf.mxu0
        %8779 = vmatprep.mubr.f32.mxu0 0.0
        %8780 = vmatmul.mubr.f32.gmra.mxu0 %v960
        %v8781 = vpop.f32.mrf.mxu0
        %v8782 = vadd.f32 0.0, %v8781
        %v8783 = vpop.f32.mrf.mxu0
        %8784 = vdwg.mxu0
        %v8785 = vmax.f32 %v8707, 0.0
        %v8786 = vmax.f32 %v8712, 0.0
        %v8787 = vmax.f32 %v8717, 0.0
        %v8788 = vmax.f32 %v8722, 0.0
        %v8789 = vmax.f32 %v8727, 0.0
        %v8790 = vmax.f32 %v8732, 0.0
        %v8791 = vmax.f32 %v8737, 0.0
        %v8792 = vmax.f32 %v8742, 0.0
        %v8793 = vmax.f32 %v8747, 0.0
        %v8794 = vmax.f32 %v8752, 0.0
        %v8795 = vmax.f32 %v8757, 0.0
        %v8796 = vmax.f32 %v8762, 0.0
        %v8797 = vmax.f32 %v8767, 0.0
        %v8798 = vmax.f32 %v8772, 0.0
        %v8799 = vmax.f32 %v8777, 0.0
        %v8800 = vmax.f32 %v8782, 0.0
        %s8801 = scalar_lea.vmem %s2, 3200
        %v8802 = vld [vmem:[%s8801] sm:$0xff]
        %v8803 = vld [vmem:[%s8801 + $0x8] sm:$0xff]
        %v8804 = vld [vmem:[%s8801 + $0x10] sm:$0xff]
        %v8805 = vld [vmem:[%s8801 + $0x18] sm:$0xff]
        %v8806 = vld [vmem:[%s8801 + $0x20] sm:$0xff]
        %v8807 = vld [vmem:[%s8801 + $0x28] sm:$0xff]
        %v8808 = vld [vmem:[%s8801 + $0x30] sm:$0xff]
        %v8809 = vld [vmem:[%s8801 + $0x38] sm:$0xff]
        %v8810 = vld [vmem:[%s8801 + $0x40] sm:$0xff]
        %v8811 = vld [vmem:[%s8801 + $0x48] sm:$0xff]
        %v8812 = vld [vmem:[%s8801 + $0x50] sm:$0xff]
        %v8813 = vld [vmem:[%s8801 + $0x58] sm:$0xff]
        %v8814 = vld [vmem:[%s8801 + $0x60] sm:$0xff]
        %v8815 = vld [vmem:[%s8801 + $0x68] sm:$0xff]
        %v8816 = vld [vmem:[%s8801 + $0x70] sm:$0xff]
        %v8817 = vld [vmem:[%s8801 + $0x78] sm:$0xff]
        %8819 = vset.pattern.permute.xlu0 0
        %8820 = vperm.xlu0 %8819, %v8802
        %v8821 = vpop.permute.xlu0 %8820
        %8824 = vset.pattern.permute.xlu0 0
        %8825 = vperm.xlu0 %8824, %v8803
        %v8826 = vpop.permute.xlu0 %8825
        %8829 = vset.pattern.permute.xlu0 0
        %8830 = vperm.xlu0 %8829, %v8804
        %v8831 = vpop.permute.xlu0 %8830
        %8834 = vset.pattern.permute.xlu0 0
        %8835 = vperm.xlu0 %8834, %v8805
        %v8836 = vpop.permute.xlu0 %8835
        %8839 = vset.pattern.permute.xlu0 0
        %8840 = vperm.xlu0 %8839, %v8806
        %v8841 = vpop.permute.xlu0 %8840
        %8844 = vset.pattern.permute.xlu0 0
        %8845 = vperm.xlu0 %8844, %v8807
        %v8846 = vpop.permute.xlu0 %8845
        %8849 = vset.pattern.permute.xlu0 0
        %8850 = vperm.xlu0 %8849, %v8808
        %v8851 = vpop.permute.xlu0 %8850
        %8854 = vset.pattern.permute.xlu0 0
        %8855 = vperm.xlu0 %8854, %v8809
        %v8856 = vpop.permute.xlu0 %8855
        %8859 = vset.pattern.permute.xlu0 0
        %8860 = vperm.xlu0 %8859, %v8810
        %v8861 = vpop.permute.xlu0 %8860
        %8864 = vset.pattern.permute.xlu0 0
        %8865 = vperm.xlu0 %8864, %v8811
        %v8866 = vpop.permute.xlu0 %8865
        %8869 = vset.pattern.permute.xlu0 0
        %8870 = vperm.xlu0 %8869, %v8812
        %v8871 = vpop.permute.xlu0 %8870
        %8874 = vset.pattern.permute.xlu0 0
        %8875 = vperm.xlu0 %8874, %v8813
        %v8876 = vpop.permute.xlu0 %8875
        %8879 = vset.pattern.permute.xlu0 0
        %8880 = vperm.xlu0 %8879, %v8814
        %v8881 = vpop.permute.xlu0 %8880
        %8884 = vset.pattern.permute.xlu0 0
        %8885 = vperm.xlu0 %8884, %v8815
        %v8886 = vpop.permute.xlu0 %8885
        %8889 = vset.pattern.permute.xlu0 0
        %8890 = vperm.xlu0 %8889, %v8816
        %v8891 = vpop.permute.xlu0 %8890
        %8894 = vset.pattern.permute.xlu0 0
        %8895 = vperm.xlu0 %8894, %v8817
        %v8896 = vpop.permute.xlu0 %8895
        %v8898 = vmul.f32 %v8785, %v8821
        %v8899 = vmul.f32 %v8786, %v8826
        %v8900 = vmul.f32 %v8787, %v8831
        %v8901 = vmul.f32 %v8788, %v8836
        %v8902 = vmul.f32 %v8789, %v8841
        %v8903 = vmul.f32 %v8790, %v8846
        %v8904 = vmul.f32 %v8791, %v8851
        %v8905 = vmul.f32 %v8792, %v8856
        %v8906 = vmul.f32 %v8793, %v8861
        %v8907 = vmul.f32 %v8794, %v8866
        %v8908 = vmul.f32 %v8795, %v8871
        %v8909 = vmul.f32 %v8796, %v8876
        %v8910 = vmul.f32 %v8797, %v8881
        %v8911 = vmul.f32 %v8798, %v8886
        %v8912 = vmul.f32 %v8799, %v8891
        %v8913 = vmul.f32 %v8800, %v8896
        %v8914 = vadd.f32 %v8898, %v8902
        %v8915 = vadd.f32 %v8899, %v8903
        %v8916 = vadd.f32 %v8900, %v8904
        %v8917 = vadd.f32 %v8901, %v8905
        %v8918 = vadd.f32 %v8914, %v8906
        %v8919 = vadd.f32 %v8915, %v8907
        %v8920 = vadd.f32 %v8916, %v8908
        %v8921 = vadd.f32 %v8917, %v8909
        %v8922 = vadd.f32 %v8918, %v8910
        %v8923 = vadd.f32 %v8919, %v8911
        %v8924 = vadd.f32 %v8920, %v8912
        %v8925 = vadd.f32 %v8921, %v8913
        %v8926 = vld [vmem:[#allocation2] sm:$0xff]
        %v8927 = vld [vmem:[#allocation2 + $0x8] sm:$0xff]
        %v8928 = vld [vmem:[#allocation2 + $0x10] sm:$0xff]
        %v8929 = vld [vmem:[#allocation2 + $0x18] sm:$0xff]
        %v8930 = vadd.f32 %v8926, %v8922
        %v8931 = vadd.f32 %v8927, %v8923
        %v8932 = vadd.f32 %v8928, %v8924
        %v8933 = vadd.f32 %v8929, %v8925
        %8934 = vst [vmem:[#allocation2] sm:$0xff] %v8930
        %8935 = vst [vmem:[#allocation2 + $0x8] sm:$0xff] %v8931
        %8936 = vst [vmem:[#allocation2 + $0x10] sm:$0xff] %v8932
        %8937 = vst [vmem:[#allocation2 + $0x18] sm:$0xff] %v8933
        %s8938 = scalar_lea.vmem %s850, 1040 [#allocation3]
        %v8939 = vld [vmem:[%s8938] sm:$0xff]
        %v8940 = vld [vmem:[%s8938 + $0x8] sm:$0xff]
        %v8941 = vld [vmem:[%s8938 + $0x10] sm:$0xff]
        %v8942 = vld [vmem:[%s8938 + $0x18] sm:$0xff]
        %v8943 = vld [vmem:[%s8938 + $0x20] sm:$0x1]
        %v8945 = vsel %vm962, %v8943, 0
        %8947 = vmatprep.subr.mxu0 0.0
        %8948 = vmatpush1.msra.mxu0 0.0
        %8949 = vmatprep.subr.mxu0 0.0
        %8950 = vmatpush1.msra.mxu0 0.0
        %8951 = vmatprep.subr.mxu0 0.0
        %8952 = vmatpush1.msra.mxu0 0.0
        %8953 = vmatprep.subr.mxu0 0.0
        %8954 = vmatpush1.msra.mxu0 0.0
        %8955 = vmatprep.subr.mxu0 0.0
        %8956 = vmatpush1.msra.mxu0 0.0
        %8957 = vmatprep.subr.mxu0 0.0
        %8958 = vmatpush1.msra.mxu0 0.0
        %8959 = vmatprep.subr.mxu0 0.0
        %8960 = vmatpush1.msra.mxu0 0.0
        %8961 = vmatprep.subr.mxu0 0.0
        %8962 = vmatpush1.msra.mxu0 0.0
        %8963 = vmatprep.subr.mxu0 0.0
        %8964 = vmatpush1.msra.mxu0 0.0
        %8965 = vmatprep.subr.mxu0 0.0
        %8966 = vmatpush1.msra.mxu0 0.0
        %8967 = vmatprep.subr.mxu0 0.0
        %8968 = vmatpush1.msra.mxu0 0.0
        %8969 = vmatprep.subr.mxu0 0.0
        %8970 = vmatpush1.msra.mxu0 %v8945
        %8971 = vmatprep.subr.mxu0 0.0
        %8972 = vmatpush1.msra.mxu0 %v8942
        %8973 = vmatprep.subr.mxu0 0.0
        %8974 = vmatpush1.msra.mxu0 %v8941
        %8975 = vmatprep.subr.mxu0 0.0
        %8976 = vmatpush1.msra.mxu0 %v8940
        %8977 = vmatprep.subr.mxu0 0.0
        %8978 = vmatpush1.msra.mxu0 %v8939
        %8979 = vmatprep.subr.mxu0 0.0
        %8980 = vmatpush2.msra.mxu0 0.0
        %8981 = vmatprep.subr.mxu0 0.0
        %8982 = vmatpush2.msra.mxu0 0.0
        %8983 = vmatprep.subr.mxu0 0.0
        %8984 = vmatpush2.msra.mxu0 0.0
        %8985 = vmatprep.subr.mxu0 0.0
        %8986 = vmatpush2.msra.mxu0 0.0
        %8987 = vmatprep.subr.mxu0 0.0
        %8988 = vmatpush2.msra.mxu0 0.0
        %8989 = vmatprep.subr.mxu0 0.0
        %8990 = vmatpush2.msra.mxu0 0.0
        %8991 = vmatprep.subr.mxu0 0.0
        %8992 = vmatpush2.msra.mxu0 0.0
        %8993 = vmatprep.subr.mxu0 0.0
        %8994 = vmatpush2.msra.mxu0 0.0
        %8995 = vmatprep.subr.mxu0 0.0
        %8996 = vmatpush2.msra.mxu0 0.0
        %8997 = vmatprep.subr.mxu0 0.0
        %8998 = vmatpush2.msra.mxu0 0.0
        %8999 = vmatprep.subr.mxu0 0.0
        %9000 = vmatpush2.msra.mxu0 0.0
        %9001 = vmatprep.subr.mxu0 0.0
        %9002 = vmatpush2.msra.mxu0 0.0
        %9003 = vmatprep.subr.mxu0 0.0
        %9004 = vmatpush2.msra.mxu0 0.0
        %9005 = vmatprep.subr.mxu0 0.0
        %9006 = vmatpush2.msra.mxu0 0.0
        %9007 = vmatprep.subr.mxu0 0.0
        %9008 = vmatpush2.msra.mxu0 0.0
        %9009 = vmatprep.subr.mxu0 0.0
        %9010 = vmatpush2.msra.mxu0 0.0
        %9011 = vmatprep.mubr.f32.mxu0 0.0
        %9012 = vmatmul.mubr.f32.gmra.mxu0 %v915
        %v9013 = vpop.f32.mrf.mxu0
        %v9014 = vadd.f32 0.0, %v9013
        %v9015 = vpop.f32.mrf.mxu0
        %9016 = vmatprep.mubr.f32.mxu0 0.0
        %9017 = vmatmul.mubr.f32.gmra.mxu0 %v918
        %v9018 = vpop.f32.mrf.mxu0
        %v9019 = vadd.f32 0.0, %v9018
        %v9020 = vpop.f32.mrf.mxu0
        %9021 = vmatprep.mubr.f32.mxu0 0.0
        %9022 = vmatmul.mubr.f32.gmra.mxu0 %v921
        %v9023 = vpop.f32.mrf.mxu0
        %v9024 = vadd.f32 0.0, %v9023
        %v9025 = vpop.f32.mrf.mxu0
        %9026 = vmatprep.mubr.f32.mxu0 0.0
        %9027 = vmatmul.mubr.f32.gmra.mxu0 %v924
        %v9028 = vpop.f32.mrf.mxu0
        %v9029 = vadd.f32 0.0, %v9028
        %v9030 = vpop.f32.mrf.mxu0
        %9031 = vmatprep.mubr.f32.mxu0 0.0
        %9032 = vmatmul.mubr.f32.gmra.mxu0 %v927
        %v9033 = vpop.f32.mrf.mxu0
        %v9034 = vadd.f32 0.0, %v9033
        %v9035 = vpop.f32.mrf.mxu0
        %9036 = vmatprep.mubr.f32.mxu0 0.0
        %9037 = vmatmul.mubr.f32.gmra.mxu0 %v930
        %v9038 = vpop.f32.mrf.mxu0
        %v9039 = vadd.f32 0.0, %v9038
        %v9040 = vpop.f32.mrf.mxu0
        %9041 = vmatprep.mubr.f32.mxu0 0.0
        %9042 = vmatmul.mubr.f32.gmra.mxu0 %v933
        %v9043 = vpop.f32.mrf.mxu0
        %v9044 = vadd.f32 0.0, %v9043
        %v9045 = vpop.f32.mrf.mxu0
        %9046 = vmatprep.mubr.f32.mxu0 0.0
        %9047 = vmatmul.mubr.f32.gmra.mxu0 %v936
        %v9048 = vpop.f32.mrf.mxu0
        %v9049 = vadd.f32 0.0, %v9048
        %v9050 = vpop.f32.mrf.mxu0
        %9051 = vmatprep.mubr.f32.mxu0 0.0
        %9052 = vmatmul.mubr.f32.gmra.mxu0 %v939
        %v9053 = vpop.f32.mrf.mxu0
        %v9054 = vadd.f32 0.0, %v9053
        %v9055 = vpop.f32.mrf.mxu0
        %9056 = vmatprep.mubr.f32.mxu0 0.0
        %9057 = vmatmul.mubr.f32.gmra.mxu0 %v942
        %v9058 = vpop.f32.mrf.mxu0
        %v9059 = vadd.f32 0.0, %v9058
        %v9060 = vpop.f32.mrf.mxu0
        %9061 = vmatprep.mubr.f32.mxu0 0.0
        %9062 = vmatmul.mubr.f32.gmra.mxu0 %v945
        %v9063 = vpop.f32.mrf.mxu0
        %v9064 = vadd.f32 0.0, %v9063
        %v9065 = vpop.f32.mrf.mxu0
        %9066 = vmatprep.mubr.f32.mxu0 0.0
        %9067 = vmatmul.mubr.f32.gmra.mxu0 %v948
        %v9068 = vpop.f32.mrf.mxu0
        %v9069 = vadd.f32 0.0, %v9068
        %v9070 = vpop.f32.mrf.mxu0
        %9071 = vmatprep.mubr.f32.mxu0 0.0
        %9072 = vmatmul.mubr.f32.gmra.mxu0 %v951
        %v9073 = vpop.f32.mrf.mxu0
        %v9074 = vadd.f32 0.0, %v9073
        %v9075 = vpop.f32.mrf.mxu0
        %9076 = vmatprep.mubr.f32.mxu0 0.0
        %9077 = vmatmul.mubr.f32.gmra.mxu0 %v954
        %v9078 = vpop.f32.mrf.mxu0
        %v9079 = vadd.f32 0.0, %v9078
        %v9080 = vpop.f32.mrf.mxu0
        %9081 = vmatprep.mubr.f32.mxu0 0.0
        %9082 = vmatmul.mubr.f32.gmra.mxu0 %v957
        %v9083 = vpop.f32.mrf.mxu0
        %v9084 = vadd.f32 0.0, %v9083
        %v9085 = vpop.f32.mrf.mxu0
        %9086 = vmatprep.mubr.f32.mxu0 0.0
        %9087 = vmatmul.mubr.f32.gmra.mxu0 %v960
        %v9088 = vpop.f32.mrf.mxu0
        %v9089 = vadd.f32 0.0, %v9088
        %v9090 = vpop.f32.mrf.mxu0
        %9091 = vdwg.mxu0
        %v9092 = vmax.f32 %v9014, 0.0
        %v9093 = vmax.f32 %v9019, 0.0
        %v9094 = vmax.f32 %v9024, 0.0
        %v9095 = vmax.f32 %v9029, 0.0
        %v9096 = vmax.f32 %v9034, 0.0
        %v9097 = vmax.f32 %v9039, 0.0
        %v9098 = vmax.f32 %v9044, 0.0
        %v9099 = vmax.f32 %v9049, 0.0
        %v9100 = vmax.f32 %v9054, 0.0
        %v9101 = vmax.f32 %v9059, 0.0
        %v9102 = vmax.f32 %v9064, 0.0
        %v9103 = vmax.f32 %v9069, 0.0
        %v9104 = vmax.f32 %v9074, 0.0
        %v9105 = vmax.f32 %v9079, 0.0
        %v9106 = vmax.f32 %v9084, 0.0
        %v9107 = vmax.f32 %v9089, 0.0
        %s9108 = scalar_lea.vmem %s2, 3328
        %v9109 = vld [vmem:[%s9108] sm:$0xff]
        %v9110 = vld [vmem:[%s9108 + $0x8] sm:$0xff]
        %v9111 = vld [vmem:[%s9108 + $0x10] sm:$0xff]
        %v9112 = vld [vmem:[%s9108 + $0x18] sm:$0xff]
        %v9113 = vld [vmem:[%s9108 + $0x20] sm:$0xff]
        %v9114 = vld [vmem:[%s9108 + $0x28] sm:$0xff]
        %v9115 = vld [vmem:[%s9108 + $0x30] sm:$0xff]
        %v9116 = vld [vmem:[%s9108 + $0x38] sm:$0xff]
        %v9117 = vld [vmem:[%s9108 + $0x40] sm:$0xff]
        %v9118 = vld [vmem:[%s9108 + $0x48] sm:$0xff]
        %v9119 = vld [vmem:[%s9108 + $0x50] sm:$0xff]
        %v9120 = vld [vmem:[%s9108 + $0x58] sm:$0xff]
        %v9121 = vld [vmem:[%s9108 + $0x60] sm:$0xff]
        %v9122 = vld [vmem:[%s9108 + $0x68] sm:$0xff]
        %v9123 = vld [vmem:[%s9108 + $0x70] sm:$0xff]
        %v9124 = vld [vmem:[%s9108 + $0x78] sm:$0xff]
        %9126 = vset.pattern.permute.xlu0 0
        %9127 = vperm.xlu0 %9126, %v9109
        %v9128 = vpop.permute.xlu0 %9127
        %9131 = vset.pattern.permute.xlu0 0
        %9132 = vperm.xlu0 %9131, %v9110
        %v9133 = vpop.permute.xlu0 %9132
        %9136 = vset.pattern.permute.xlu0 0
        %9137 = vperm.xlu0 %9136, %v9111
        %v9138 = vpop.permute.xlu0 %9137
        %9141 = vset.pattern.permute.xlu0 0
        %9142 = vperm.xlu0 %9141, %v9112
        %v9143 = vpop.permute.xlu0 %9142
        %9146 = vset.pattern.permute.xlu0 0
        %9147 = vperm.xlu0 %9146, %v9113
        %v9148 = vpop.permute.xlu0 %9147
        %9151 = vset.pattern.permute.xlu0 0
        %9152 = vperm.xlu0 %9151, %v9114
        %v9153 = vpop.permute.xlu0 %9152
        %9156 = vset.pattern.permute.xlu0 0
        %9157 = vperm.xlu0 %9156, %v9115
        %v9158 = vpop.permute.xlu0 %9157
        %9161 = vset.pattern.permute.xlu0 0
        %9162 = vperm.xlu0 %9161, %v9116
        %v9163 = vpop.permute.xlu0 %9162
        %9166 = vset.pattern.permute.xlu0 0
        %9167 = vperm.xlu0 %9166, %v9117
        %v9168 = vpop.permute.xlu0 %9167
        %9171 = vset.pattern.permute.xlu0 0
        %9172 = vperm.xlu0 %9171, %v9118
        %v9173 = vpop.permute.xlu0 %9172
        %9176 = vset.pattern.permute.xlu0 0
        %9177 = vperm.xlu0 %9176, %v9119
        %v9178 = vpop.permute.xlu0 %9177
        %9181 = vset.pattern.permute.xlu0 0
        %9182 = vperm.xlu0 %9181, %v9120
        %v9183 = vpop.permute.xlu0 %9182
        %9186 = vset.pattern.permute.xlu0 0
        %9187 = vperm.xlu0 %9186, %v9121
        %v9188 = vpop.permute.xlu0 %9187
        %9191 = vset.pattern.permute.xlu0 0
        %9192 = vperm.xlu0 %9191, %v9122
        %v9193 = vpop.permute.xlu0 %9192
        %9196 = vset.pattern.permute.xlu0 0
        %9197 = vperm.xlu0 %9196, %v9123
        %v9198 = vpop.permute.xlu0 %9197
        %9201 = vset.pattern.permute.xlu0 0
        %9202 = vperm.xlu0 %9201, %v9124
        %v9203 = vpop.permute.xlu0 %9202
        %v9205 = vmul.f32 %v9092, %v9128
        %v9206 = vmul.f32 %v9093, %v9133
        %v9207 = vmul.f32 %v9094, %v9138
        %v9208 = vmul.f32 %v9095, %v9143
        %v9209 = vmul.f32 %v9096, %v9148
        %v9210 = vmul.f32 %v9097, %v9153
        %v9211 = vmul.f32 %v9098, %v9158
        %v9212 = vmul.f32 %v9099, %v9163
        %v9213 = vmul.f32 %v9100, %v9168
        %v9214 = vmul.f32 %v9101, %v9173
        %v9215 = vmul.f32 %v9102, %v9178
        %v9216 = vmul.f32 %v9103, %v9183
        %v9217 = vmul.f32 %v9104, %v9188
        %v9218 = vmul.f32 %v9105, %v9193
        %v9219 = vmul.f32 %v9106, %v9198
        %v9220 = vmul.f32 %v9107, %v9203
        %v9221 = vadd.f32 %v9205, %v9209
        %v9222 = vadd.f32 %v9206, %v9210
        %v9223 = vadd.f32 %v9207, %v9211
        %v9224 = vadd.f32 %v9208, %v9212
        %v9225 = vadd.f32 %v9221, %v9213
        %v9226 = vadd.f32 %v9222, %v9214
        %v9227 = vadd.f32 %v9223, %v9215
        %v9228 = vadd.f32 %v9224, %v9216
        %v9229 = vadd.f32 %v9225, %v9217
        %v9230 = vadd.f32 %v9226, %v9218
        %v9231 = vadd.f32 %v9227, %v9219
        %v9232 = vadd.f32 %v9228, %v9220
        %v9233 = vld [vmem:[#allocation2] sm:$0xff]
        %v9234 = vld [vmem:[#allocation2 + $0x8] sm:$0xff]
        %v9235 = vld [vmem:[#allocation2 + $0x10] sm:$0xff]
        %v9236 = vld [vmem:[#allocation2 + $0x18] sm:$0xff]
        %v9237 = vadd.f32 %v9233, %v9229
        %v9238 = vadd.f32 %v9234, %v9230
        %v9239 = vadd.f32 %v9235, %v9231
        %v9240 = vadd.f32 %v9236, %v9232
        %9241 = vst [vmem:[#allocation2] sm:$0xff] %v9237
        %9242 = vst [vmem:[#allocation2 + $0x8] sm:$0xff] %v9238
        %9243 = vst [vmem:[#allocation2 + $0x10] sm:$0xff] %v9239
        %9244 = vst [vmem:[#allocation2 + $0x18] sm:$0xff] %v9240
        %v9245 = vld [vmem:[#allocation2] sm:$0xff]
        %v9246 = vld [vmem:[#allocation2 + $0x8] sm:$0xff]
        %v9247 = vld [vmem:[#allocation2 + $0x10] sm:$0xff]
        %v9248 = vld [vmem:[#allocation2 + $0x18] sm:$0xff]
        %v9249 = vld [vmem:[%s3] sm:$0xff]
        %v9250 = vld [vmem:[%s3 + $0x8] sm:$0xff]
        %v9251 = vld [vmem:[%s3 + $0x10] sm:$0xff]
        %v9252 = vld [vmem:[%s3 + $0x18] sm:$0xff]
        %9254 = vset.pattern.permute.xlu0 0
        %9255 = vperm.xlu0 %9254, %v9249
        %v9256 = vpop.permute.xlu0 %9255
        %9259 = vset.pattern.permute.xlu0 0
        %9260 = vperm.xlu0 %9259, %v9250
        %v9261 = vpop.permute.xlu0 %9260
        %9264 = vset.pattern.permute.xlu0 0
        %9265 = vperm.xlu0 %9264, %v9251
        %v9266 = vpop.permute.xlu0 %9265
        %9269 = vset.pattern.permute.xlu0 0
        %9270 = vperm.xlu0 %9269, %v9252
        %v9271 = vpop.permute.xlu0 %9270
        %v9273 = vmul.f32 %v9245, %v9256
        %v9274 = vmul.f32 %v9246, %v9261
        %v9275 = vmul.f32 %v9247, %v9266
        %v9276 = vmul.f32 %v9248, %v9271
        %v9277 = vld [vmem:[%s4] sm:$0xff]
        %v9278 = vld [vmem:[%s4 + $0x8] sm:$0xff]
        %v9279 = vld [vmem:[%s4 + $0x10] sm:$0xff]
        %v9280 = vld [vmem:[%s4 + $0x18] sm:$0xff]
        %9282 = vset.pattern.permute.xlu0 0
        %9283 = vperm.xlu0 %9282, %v9277
        %v9284 = vpop.permute.xlu0 %9283
        %9287 = vset.pattern.permute.xlu0 0
        %9288 = vperm.xlu0 %9287, %v9278
        %v9289 = vpop.permute.xlu0 %9288
        %9292 = vset.pattern.permute.xlu0 0
        %9293 = vperm.xlu0 %9292, %v9279
        %v9294 = vpop.permute.xlu0 %9293
        %9297 = vset.pattern.permute.xlu0 0
        %9298 = vperm.xlu0 %9297, %v9280
        %v9299 = vpop.permute.xlu0 %9298
        %v9301 = vadd.f32 %v9273, %v9284
        %v9302 = vadd.f32 %v9274, %v9289
        %v9303 = vadd.f32 %v9275, %v9294
        %v9304 = vadd.f32 %v9276, %v9299
        %v9305 = vmax.f32 %v9301, 0.0
        %v9306 = vmax.f32 %v9302, 0.0
        %v9307 = vmax.f32 %v9303, 0.0
        %v9308 = vmax.f32 %v9304, 0.0
        %v9309 = vld [vmem:[%s857] sm:$0xff]
        %v9310 = vld [vmem:[%s857 + $0x8] sm:$0xff]
        %v9311 = vld [vmem:[%s857 + $0x10] sm:$0xff]
        %v9312 = vld [vmem:[%s857 + $0x18] sm:$0xff]
        %v9313 = vadd.f32 %v9305, %v9309
        %v9314 = vadd.f32 %v9306, %v9310
        %v9315 = vadd.f32 %v9307, %v9311
        %v9316 = vadd.f32 %v9308, %v9312
        %v9317 = vmax.f32 %v9313, 0.0
        %v9318 = vmax.f32 %v9314, 0.0
        %v9319 = vmax.f32 %v9315, 0.0
        %v9320 = vmax.f32 %v9316, 0.0
        %9321 = vst [vmem:[%s887] sm:$0xff] %v9317
        %9322 = vst [vmem:[%s887 + $0x8] sm:$0xff] %v9318
        %9323 = vst [vmem:[%s887 + $0x10] sm:$0xff] %v9319
        %9324 = vst [vmem:[%s887 + $0x18] sm:$0xff] %v9320
        %s9325 = sand.u32 %s164, 1
        %s9326 = scalar_lea.sflag [#allocation6], %s9325
        %s9327 = sand.u32 %s164, 1
        %s9328 = smul.addr %s9327, 32
        %s9329 = scalar_lea.vmem [#allocation5], %s9328
        // Predicated region
        $region121: #{tpu_custom_call.1} parent=111 // pred_check
          %p9330 = pneg %p174
        $region122: #{tpu_custom_call.1} parent=111 // pred_check_branch
          %9332 = sbr.rel (%p9330) target = $region124
        $region123: #{tpu_custom_call.1} parent=111 // pred_region
          %s9334 = ssub.s32 512, 512
          %9335 = vsyncadd %s9326, %s9334
          %s9336 = smul.addr %s20, 128
          %s9337 = scalar_lea.hbm %s6, %s9336
          %s9338 = sshll.u32 %s9329, 4
          %s9339 = int_to_ptr.vmem [resolvable:$true] %s9338
          %9344 = dma.vmem_to_hbm [thread:$0]  %s9339, 512, %s9337, %s9326, 128, 256, 8
        $region124: #{tpu_custom_call.1} parent=111 // pred_fallthru
          _
      $region112: #{tpu_custom_call.1} parent=5 // pred_fallthru
        _
      %p9345 = scmp.le.s32.totalorder 2, %s15
      // Predicated region
      $region125: #{tpu_custom_call.1} parent=5 // pred_check
        %p9346 = pneg %p9345
      $region126: #{tpu_custom_call.1} parent=5 // pred_check_branch
        %9348 = sbr.rel (%p9346) target = $region128
      $region127: #{tpu_custom_call.1} parent=5 // pred_region
        %s9349 = ssub.s32 %s15, 2
        // Predicated region
        $region129: #{tpu_custom_call.1} parent=127 // pred_check
          %p9350 = pneg %p180
        $region130: #{tpu_custom_call.1} parent=127 // pred_check_branch
          %9352 = sbr.rel (%p9350) target = $region132
        $region131: #{tpu_custom_call.1} parent=127 // pred_region
          %s9353 = sand.u32 %s165, 1
          %s9354 = scalar_lea.sflag [#allocation6], %s9353
          %s9355 = sand.u32 %s165, 1
          %s9356 = smul.addr %s9355, 32
          %s9357 = scalar_lea.vmem [#allocation5], %s9356
          %9358 = dma.done %s9354, 512
        $region132: #{tpu_custom_call.1} parent=127 // pred_fallthru
          _
      $region128: #{tpu_custom_call.1} parent=5 // pred_fallthru
        _
    $region6: #{tpu_custom_call.1} parent=1 // loop_footer
      %s19 = sadd.s32 1, %s15
    $region7: #{tpu_custom_call.1} parent=1 // loop_footer_branch
      %14 = sbr.rel target = $region3
    $region8: #{tpu_custom_call.1} parent=1 // loop_exit
      _
    %9359 = vsyncpa [#allocation6], 1
    %s9360 = scalar_lea.sflag [#allocation6], 1
    %9361 = vsyncpa %s9360, 1

</llo_original>
